<compile_context>
chip_gen: v7x
topology: tpu7x:2x2x1
jax: 0.10.0
libtpu: 0.0.40
codegen_flags: <defaults>
</compile_context>

<pallas_src>
import jax
import jax.numpy as jnp
import numpy as np
from jax.experimental import pallas as pl
from jax.experimental.pallas import tpu as pltpu

CH = (64, 128, 232, 256, 256, 256)   # chw0..chw5 from the PyTorch module
C0P = 128                            # conv0 out-channels padded 64 -> 128
C2P = 256                            # conv2 out-channels padded 232 -> 256
CINP = 16                            # input channels padded 11 -> 16
BF16 = jnp.bfloat16
F32 = jnp.float32


def _im2col_2x2(x):
    """x: (BB, H, W, C) -> (BB, H-1, W-1, 4*C); tap order (0,0),(0,1),(1,0),(1,1)."""
    H, W = x.shape[1], x.shape[2]
    return jnp.concatenate(
        [x[:, 0:H - 1, 0:W - 1, :],
         x[:, 0:H - 1, 1:W, :],
         x[:, 1:H, 0:W - 1, :],
         x[:, 1:H, 1:W, :]], axis=-1)


def _gemm_bias_relu(lhs_bf16, w_ref, b_ref, out_dtype=BF16):
    """bf16 x bf16 MXU GEMM, f32 accumulation, f32 bias+relu, single downcast."""
    y = jnp.dot(lhs_bf16, w_ref[...], preferred_element_type=jnp.float32)
    y = jnp.maximum(y + b_ref[...], 0.0)
    return y.astype(out_dtype)


def _fused_kernel(x_ref, w0_ref, b0_ref, w1_ref, b1_ref, w2_ref, b2_ref,
                  w3_ref, b3_ref, w4_ref, b4_ref, fw1_ref, fb1_ref,
                  fw2_ref, fb2_ref, out_ref, hp_ref):
    BB = hp_ref.shape[0]

    # conv0: 1x1 conv == one (BB*9, 16) @ (16, 128) GEMM (channels pre-padded).
    h0 = _gemm_bias_relu(x_ref[...], w0_ref, b0_ref)             # (BB*9, 128) bf16

    # conv1: 2x2, padding=1.  Stage h0 into a (5,5) bf16 scratch whose border
    # ring is re-zeroed every step (interior always overwritten), then one
    # im2col GEMM with K = 4*128 = 512.  Unconditional zeroing -> safe under
    # "parallel" semantics.
    zr = jnp.zeros((BB, 1, 5, C0P), BF16)
    zc = jnp.zeros((BB, 5, 1, C0P), BF16)
    hp_ref[:, 0:1, :, :] = zr
    hp_ref[:, 4:5, :, :] = zr
    hp_ref[:, :, 0:1, :] = zc
    hp_ref[:, :, 4:5, :] = zc
    hp_ref[:, 1:4, 1:4, :] = h0.reshape(BB, 3, 3, C0P)
    # im2col directly from four static ref views (no full-scratch reload).
    p1 = jnp.concatenate(
        [hp_ref[:, 0:4, 0:4, :], hp_ref[:, 0:4, 1:5, :],
         hp_ref[:, 1:5, 0:4, :], hp_ref[:, 1:5, 1:5, :]],
        axis=-1).reshape(BB * 16, 4 * C0P)
    h1 = _gemm_bias_relu(p1, w1_ref, b1_ref).reshape(BB, 4, 4, CH[1])

    # conv2 (valid): K = 4*128 = 512, Cout padded 232 -> 256 (lane dense).
    p2 = _im2col_2x2(h1).reshape(BB * 9, 4 * CH[1])
    h2 = _gemm_bias_relu(p2, w2_ref, b2_ref).reshape(BB, 3, 3, C2P)

    # conv3 (valid): K = 4*256 = 1024.
    p3 = _im2col_2x2(h2).reshape(BB * 4, 4 * C2P)
    h3 = _gemm_bias_relu(p3, w3_ref, b3_ref).reshape(BB, 2, 2, CH[3])

    # conv4 (valid, 2x2 -> 1x1): K = 1024.
    p4 = _im2col_2x2(h3).reshape(BB, 4 * CH[3])
    h4 = _gemm_bias_relu(p4, w4_ref, b4_ref)                      # (BB, 256) bf16

    # fc1 + relu (f32 output), then fc2 as multiply + lane reduction
    # (avoids an N=1 matmul).  Lane-dense (1, BB) store.
    f1 = _gemm_bias_relu(h4, fw1_ref, fb1_ref, F32)               # (BB, 256) f32
    outv = jnp.sum(f1 * fw2_ref[...], axis=-1).reshape(1, BB) + fb2_ref[...]
    out_ref[...] = outv.astype(out_ref.dtype)


def _tpu_tuning():
    """(BLOCK_B cap, scoped-VMEM limit) per chip generation."""
    try:
        kind = jax.devices()[0].device_kind.lower()
    except Exception:
        kind = ""
    if any(tag in kind for tag in ("v4", "v5", "v6")):
        # 128 MiB VMEM parts: bigger block amortizes per-step overhead.
        return 256, 96 * 1024 * 1024
    # v7x (64 MiB VMEM per TensorCore) and unknown chips: stay conservative.
    return 128, 44 * 1024 * 1024


def _block_b(batch, cap):
    if batch >= cap:
        return cap
    return max(8, ((batch + 7) // 8) * 8)


def prepare_params(params):
    """Pack f32 params into padded, im2col-reshaped bf16 kernel params."""
    (w0, b0, w1, b1, w2, b2, w3, b3, w4, b4, fw1, fb1, fw2, fb2) = params
    w0p = jnp.zeros((CINP, C0P), F32).at[:11, :CH[0]].set(w0).astype(BF16)
    b0p = jnp.zeros((1, C0P), F32).at[:, :CH[0]].set(b0)
    w1p = jnp.zeros((2, 2, C0P, CH[1]), F32).at[:, :, :CH[0], :].set(w1)
    w1c = w1p.reshape(4 * C0P, CH[1]).astype(BF16)
    w2p = jnp.zeros((2, 2, CH[1], C2P), F32).at[..., :CH[2]].set(w2)
    w2c = w2p.reshape(4 * CH[1], C2P).astype(BF16)
    b2p = jnp.zeros((1, C2P), F32).at[:, :CH[2]].set(b2)
    w3p = jnp.zeros((2, 2, C2P, CH[3]), F32).at[:, :, :CH[2], :].set(w3)
    w3c = w3p.reshape(4 * C2P, CH[3]).astype(BF16)
    w4c = w4.reshape(4 * CH[3], CH[4]).astype(BF16)
    fw1b = fw1.astype(BF16)
    fw2row = fw2.reshape(1, CH[5]).astype(F32)   # used as mul + lane-reduce
    return (w0p, b0p, w1c, b1, w2c, b2p, w3c, b3, w4c, b4, fw1b, fb1, fw2row, fb2)


def model_forward(x_in, params):
    """x_in: anything reshapable to (-1, 11, 3, 3) (PyTorch NCHW convention)."""
    x = x_in.reshape(-1, 11, 3, 3).astype(F32)
    batch = x.shape[0]
    # NCHW -> NHWC -> (B, 9, 11) -> pad channels to 16, batch to a block
    # multiple, then ship as bf16 (it is only ever an MXU operand).
    x = jnp.transpose(x, (0, 2, 3, 1)).reshape(batch, 9, 11)
    x = jnp.pad(x, ((0, 0), (0, 0), (0, CINP - 11)))
    cap, vmem_limit = _tpu_tuning()
    bb = _block_b(batch, cap)
    bp = ((batch + bb - 1) // bb) * bb
    if bp != batch:
        x = jnp.pad(x, ((0, bp - batch), (0, 0), (0, 0)))
    x = x.reshape(bp * 9, CINP).astype(BF16)

    kparams = prepare_params(params)
    in_specs = [pl.BlockSpec((bb * 9, CINP), lambda i: (i, 0))]
    # Constant index_maps: weights/biases are fetched once and stay VMEM-resident.
    in_specs += [pl.BlockSpec(p.shape, lambda i: (0, 0)) for p in kparams]

    nblk = bp // bb
    out = pl.pallas_call(
        _fused_kernel,
        out_shape=jax.ShapeDtypeStruct((nblk, bb), F32),
        grid=(nblk,),
        in_specs=in_specs,
        out_specs=pl.BlockSpec((1, bb), lambda i: (i, 0)),
        scratch_shapes=[pltpu.VMEM((bb, 5, 5, C0P), BF16)],
        compiler_params=pltpu.CompilerParams(
            dimension_semantics=("parallel",),
            vmem_limit_bytes=vmem_limit),
    )(x, *kparams)
    return out.reshape(bp, 1)[:batch]


def init_params(key):
    ks = jax.random.split(key, 14)

    def nrm(k, shape, scale):
        return scale * jax.random.normal(k, shape, jnp.float32)

    w0 = nrm(ks[0], (11, CH[0]), 0.30)              # conv0 1x1, stored (Cin,Cout)
    b0 = nrm(ks[1], (1, CH[0]), 0.10)
    w1 = nrm(ks[2], (2, 2, CH[0], CH[1]), 0.06)     # HWIO
    b1 = nrm(ks[3], (1, CH[1]), 0.10)
    w2 = nrm(ks[4], (2, 2, CH[1], CH[2]), 0.04)
    b2 = nrm(ks[5], (1, CH[2]), 0.10)
    w3 = nrm(ks[6], (2, 2, CH[2], CH[3]), 0.03)
    b3 = nrm(ks[7], (1, CH[3]), 0.10)
    w4 = nrm(ks[8], (2, 2, CH[3], CH[4]), 0.03)
    b4 = nrm(ks[9], (1, CH[4]), 0.10)
    fw1 = nrm(ks[10], (CH[4], CH[5]), 0.03)
    fb1 = nrm(ks[11], (1, CH[5]), 0.10)
    fw2 = nrm(ks[12], (CH[5], 1), 0.05)
    fb2 = nrm(ks[13], (1, 1), 0.10)
    return (w0, b0, w1, b1, w2, b2, w3, b3, w4, b4, fw1, fb1, fw2, fb2)


def ref_forward(x_in, params):
    """Pure-JAX reference (XLA convs) with the same bf16-operand / f32-accumulate recipe."""
    (w0, b0, w1, b1, w2, b2, w3, b3, w4, b4, fw1, fb1, fw2, fb2) = params
    x = x_in.reshape(-1, 11, 3, 3).astype(F32)
    batch = x.shape[0]
    x = jnp.transpose(x, (0, 2, 3, 1))
    dn = ('NHWC', 'HWIO', 'NHWC')

    def conv_relu(h, w, b, pad):
        y = jax.lax.conv_general_dilated(
            h.astype(BF16), w.astype(BF16), (1, 1), pad,
            dimension_numbers=dn, preferred_element_type=jnp.float32)
        return jax.nn.relu(y + b)

    h0 = jax.nn.relu(
        jnp.dot(x.reshape(batch * 9, 11).astype(BF16), w0.astype(BF16),
                preferred_element_type=jnp.float32) + b0).reshape(batch, 3, 3, CH[0])
    h1 = conv_relu(h0, w1, b1, [(1, 1), (1, 1)])
    h2 = conv_relu(h1, w2, b2, 'VALID')
    h3 = conv_relu(h2, w3, b3, 'VALID')
    h4 = conv_relu(h3, w4, b4, 'VALID')
    f = h4.reshape(batch, CH[4])
    f1 = jax.nn.relu(jnp.dot(f.astype(BF16), fw1.astype(BF16),
                             preferred_element_type=jnp.float32) + fb1)
    return jnp.dot(f1, fw2) + fb2


if __name__ == "__main__":
    key = jax.random.PRNGKey(0)
    kx, kp = jax.random.split(key)
    B = 2
    # Input in PyTorch NCHW convention (anything reshapable to (-1, 11, 3, 3)).
    x = jax.random.normal(kx, (B, 11, 3, 3), jnp.float32)
    params = init_params(kp)

    fwd = jax.jit(model_forward)
    out = jax.block_until_ready(fwd(x, params))
    ref = jax.block_until_ready(ref_forward(x, params))

    assert out.shape == (B, 1), out.shape
    np.testing.assert_allclose(np.asarray(out), np.asarray(ref),
                               rtol=1e-2, atol=1e-2)
    print("KERNEL_OK")
</pallas_src>

<mosaic_0001>
module attributes {stable_mosaic.version = 11 : i64} {
  func.func @_fused_kernel(%arg0: i32, %arg1: memref<72x16xbf16, #tpu.memory_space<vmem>>, %arg2: memref<16x128xbf16, #tpu.memory_space<vmem>>, %arg3: memref<1x128xf32, #tpu.memory_space<vmem>>, %arg4: memref<512x128xbf16, #tpu.memory_space<vmem>>, %arg5: memref<1x128xf32, #tpu.memory_space<vmem>>, %arg6: memref<512x256xbf16, #tpu.memory_space<vmem>>, %arg7: memref<1x256xf32, #tpu.memory_space<vmem>>, %arg8: memref<1024x256xbf16, #tpu.memory_space<vmem>>, %arg9: memref<1x256xf32, #tpu.memory_space<vmem>>, %arg10: memref<1024x256xbf16, #tpu.memory_space<vmem>>, %arg11: memref<1x256xf32, #tpu.memory_space<vmem>>, %arg12: memref<256x256xbf16, #tpu.memory_space<vmem>>, %arg13: memref<1x256xf32, #tpu.memory_space<vmem>>, %arg14: memref<1x256xf32, #tpu.memory_space<vmem>>, %arg15: memref<1x1xf32, #tpu.memory_space<vmem>>, %arg16: memref<1x8xf32, #tpu.memory_space<vmem>>, %arg17: memref<8x5x5x128xbf16, #tpu.memory_space<vmem>>) attributes {dimension_semantics = [#tpu.dimension_semantics<parallel>], iteration_bounds = array<i64: 1>, scalar_prefetch = 0 : i64, scratch_operands = 1 : i64, tpu.core_type = #tpu.core_type<tc>, window_params = [{transform_indices = @transform_0, window_bounds = array<i64: 72, 16>}, {pipeline_mode = #tpu.pipeline_mode<synchronous>, transform_indices = @transform_1, window_bounds = array<i64: 16, 128>}, {pipeline_mode = #tpu.pipeline_mode<synchronous>, transform_indices = @transform_2, window_bounds = array<i64: 1, 128>}, {pipeline_mode = #tpu.pipeline_mode<synchronous>, transform_indices = @transform_3, window_bounds = array<i64: 512, 128>}, {pipeline_mode = #tpu.pipeline_mode<synchronous>, transform_indices = @transform_4, window_bounds = array<i64: 1, 128>}, {pipeline_mode = #tpu.pipeline_mode<synchronous>, transform_indices = @transform_5, window_bounds = array<i64: 512, 256>}, {pipeline_mode = #tpu.pipeline_mode<synchronous>, transform_indices = @transform_6, window_bounds = array<i64: 1, 256>}, {pipeline_mode = #tpu.pipeline_mode<synchronous>, transform_indices = @transform_7, window_bounds = array<i64: 1024, 256>}, {pipeline_mode = #tpu.pipeline_mode<synchronous>, transform_indices = @transform_8, window_bounds = array<i64: 1, 256>}, {pipeline_mode = #tpu.pipeline_mode<synchronous>, transform_indices = @transform_9, window_bounds = array<i64: 1024, 256>}, {pipeline_mode = #tpu.pipeline_mode<synchronous>, transform_indices = @transform_10, window_bounds = array<i64: 1, 256>}, {pipeline_mode = #tpu.pipeline_mode<synchronous>, transform_indices = @transform_11, window_bounds = array<i64: 256, 256>}, {pipeline_mode = #tpu.pipeline_mode<synchronous>, transform_indices = @transform_12, window_bounds = array<i64: 1, 256>}, {pipeline_mode = #tpu.pipeline_mode<synchronous>, transform_indices = @transform_13, window_bounds = array<i64: 1, 256>}, {pipeline_mode = #tpu.pipeline_mode<synchronous>, transform_indices = @transform_14, window_bounds = array<i64: 1, 1>}, {transform_indices = @transform_15, window_bounds = array<i64: 1, 8>}]} {
    %c0 = arith.constant 0 : index
    %c0_0 = arith.constant 0 : index
    %0 = vector.load %arg1[%c0, %c0_0] : memref<72x16xbf16, #tpu.memory_space<vmem>>, vector<72x16xbf16>
    %c0_1 = arith.constant 0 : index
    %c0_2 = arith.constant 0 : index
    %1 = vector.load %arg2[%c0_1, %c0_2] : memref<16x128xbf16, #tpu.memory_space<vmem>>, vector<16x128xbf16>
    %cst = arith.constant dense<0.000000e+00> : vector<72x128xf32>
    %2 = tpu.matmul %0, %1, %cst {dimension_numbers = #tpu.dot_dimension_numbers<[1], [0], [0], [1], [0, 0, 1, 1], [], []>} : vector<72x16xbf16>, vector<16x128xbf16>, vector<72x128xf32> -> vector<72x128xf32>
    %c0_3 = arith.constant 0 : index
    %c0_4 = arith.constant 0 : index
    %3 = vector.load %arg3[%c0_3, %c0_4] : memref<1x128xf32, #tpu.memory_space<vmem>>, vector<1x128xf32>
    %4 = vector.broadcast %3 : vector<1x128xf32> to vector<72x128xf32>
    %5 = arith.addf %2, %4 : vector<72x128xf32>
    %cst_5 = arith.constant 0.000000e+00 : f32
    %6 = vector.broadcast %cst_5 : f32 to vector<72x128xf32>
    %7 = arith.maximumf %5, %6 : vector<72x128xf32>
    %8 = arith.truncf %7 : vector<72x128xf32> to vector<72x128xbf16>
    %cst_6 = arith.constant 0.000000e+00 : bf16
    %9 = vector.broadcast %cst_6 : bf16 to vector<8x1x5x128xbf16>
    %cst_7 = arith.constant 0.000000e+00 : bf16
    %10 = vector.broadcast %cst_7 : bf16 to vector<8x5x1x128xbf16>
    %c0_8 = arith.constant 0 : index
    %c0_9 = arith.constant 0 : index
    %c0_10 = arith.constant 0 : index
    %c0_11 = arith.constant 0 : index
    %11 = vector.load %arg17[%c0_8, %c0_9, %c0_10, %c0_11] : memref<8x5x5x128xbf16, #tpu.memory_space<vmem>>, vector<8x1x5x128xbf16>
    tpu.vector_store %arg17[%c0_8, %c0_9, %c0_10, %c0_11], %9 {strides = array<i32>} : memref<8x5x5x128xbf16, #tpu.memory_space<vmem>>, vector<8x1x5x128xbf16>,
    %c0_12 = arith.constant 0 : index
    %c4 = arith.constant 4 : index
    %c0_13 = arith.constant 0 : index
    %c0_14 = arith.constant 0 : index
    %12 = vector.load %arg17[%c0_12, %c4, %c0_13, %c0_14] : memref<8x5x5x128xbf16, #tpu.memory_space<vmem>>, vector<8x1x5x128xbf16>
    tpu.vector_store %arg17[%c0_12, %c4, %c0_13, %c0_14], %9 {strides = array<i32>} : memref<8x5x5x128xbf16, #tpu.memory_space<vmem>>, vector<8x1x5x128xbf16>,
    %c0_15 = arith.constant 0 : index
    %c0_16 = arith.constant 0 : index
    %c0_17 = arith.constant 0 : index
    %c0_18 = arith.constant 0 : index
    %13 = vector.load %arg17[%c0_15, %c0_16, %c0_17, %c0_18] : memref<8x5x5x128xbf16, #tpu.memory_space<vmem>>, vector<8x5x1x128xbf16>
    tpu.vector_store %arg17[%c0_15, %c0_16, %c0_17, %c0_18], %10 {strides = array<i32>} : memref<8x5x5x128xbf16, #tpu.memory_space<vmem>>, vector<8x5x1x128xbf16>,
    %c0_19 = arith.constant 0 : index
    %c0_20 = arith.constant 0 : index
    %c4_21 = arith.constant 4 : index
    %c0_22 = arith.constant 0 : index
    %14 = vector.load %arg17[%c0_19, %c0_20, %c4_21, %c0_22] : memref<8x5x5x128xbf16, #tpu.memory_space<vmem>>, vector<8x5x1x128xbf16>
    tpu.vector_store %arg17[%c0_19, %c0_20, %c4_21, %c0_22], %10 {strides = array<i32>} : memref<8x5x5x128xbf16, #tpu.memory_space<vmem>>, vector<8x5x1x128xbf16>,
    %15 = vector.shape_cast %8 : vector<72x128xbf16> to vector<8x3x3x128xbf16>
    %c0_23 = arith.constant 0 : index
    %c1 = arith.constant 1 : index
    %c1_24 = arith.constant 1 : index
    %c0_25 = arith.constant 0 : index
    %16 = vector.load %arg17[%c0_23, %c1, %c1_24, %c0_25] : memref<8x5x5x128xbf16, #tpu.memory_space<vmem>>, vector<8x3x3x128xbf16>
    tpu.vector_store %arg17[%c0_23, %c1, %c1_24, %c0_25], %15 {strides = array<i32>} : memref<8x5x5x128xbf16, #tpu.memory_space<vmem>>, vector<8x3x3x128xbf16>,
    %c0_26 = arith.constant 0 : index
    %c0_27 = arith.constant 0 : index
    %c0_28 = arith.constant 0 : index
    %c0_29 = arith.constant 0 : index
    %17 = vector.load %arg17[%c0_26, %c0_27, %c0_28, %c0_29] : memref<8x5x5x128xbf16, #tpu.memory_space<vmem>>, vector<8x4x4x128xbf16>
    %c0_30 = arith.constant 0 : index
    %c0_31 = arith.constant 0 : index
    %c1_32 = arith.constant 1 : index
    %c0_33 = arith.constant 0 : index
    %18 = vector.load %arg17[%c0_30, %c0_31, %c1_32, %c0_33] : memref<8x5x5x128xbf16, #tpu.memory_space<vmem>>, vector<8x4x4x128xbf16>
    %c0_34 = arith.constant 0 : index
    %c1_35 = arith.constant 1 : index
    %c0_36 = arith.constant 0 : index
    %c0_37 = arith.constant 0 : index
    %19 = vector.load %arg17[%c0_34, %c1_35, %c0_36, %c0_37] : memref<8x5x5x128xbf16, #tpu.memory_space<vmem>>, vector<8x4x4x128xbf16>
    %c0_38 = arith.constant 0 : index
    %c1_39 = arith.constant 1 : index
    %c1_40 = arith.constant 1 : index
    %c0_41 = arith.constant 0 : index
    %20 = vector.load %arg17[%c0_38, %c1_39, %c1_40, %c0_41] : memref<8x5x5x128xbf16, #tpu.memory_space<vmem>>, vector<8x4x4x128xbf16>
    %21 = tpu.concatenate %17, %18, %19, %20 in 3 : vector<8x4x4x128xbf16>, vector<8x4x4x128xbf16>, vector<8x4x4x128xbf16>, vector<8x4x4x128xbf16> -> vector<8x4x4x512xbf16>
    %22 = vector.shape_cast %21 : vector<8x4x4x512xbf16> to vector<128x512xbf16>
    %c0_42 = arith.constant 0 : index
    %c0_43 = arith.constant 0 : index
    %23 = vector.load %arg4[%c0_42, %c0_43] : memref<512x128xbf16, #tpu.memory_space<vmem>>, vector<512x128xbf16>
    %cst_44 = arith.constant dense<0.000000e+00> : vector<128x128xf32>
    %24 = tpu.matmul %22, %23, %cst_44 {dimension_numbers = #tpu.dot_dimension_numbers<[1], [0], [0], [1], [0, 0, 1, 1], [], []>} : vector<128x512xbf16>, vector<512x128xbf16>, vector<128x128xf32> -> vector<128x128xf32>
    %c0_45 = arith.constant 0 : index
    %c0_46 = arith.constant 0 : index
    %25 = vector.load %arg5[%c0_45, %c0_46] : memref<1x128xf32, #tpu.memory_space<vmem>>, vector<1x128xf32>
    %26 = vector.broadcast %25 : vector<1x128xf32> to vector<128x128xf32>
    %27 = arith.addf %24, %26 : vector<128x128xf32>
    %cst_47 = arith.constant 0.000000e+00 : f32
    %28 = vector.broadcast %cst_47 : f32 to vector<128x128xf32>
    %29 = arith.maximumf %27, %28 : vector<128x128xf32>
    %30 = arith.truncf %29 : vector<128x128xf32> to vector<128x128xbf16>
    %31 = vector.shape_cast %30 : vector<128x128xbf16> to vector<8x4x4x128xbf16>
    %32 = vector.extract_strided_slice %31 {offsets = [0, 0, 0, 0], sizes = [8, 3, 3, 128], strides = [1, 1, 1, 1]} : vector<8x4x4x128xbf16> to vector<8x3x3x128xbf16>
    %33 = vector.extract_strided_slice %31 {offsets = [0, 0, 1, 0], sizes = [8, 3, 3, 128], strides = [1, 1, 1, 1]} : vector<8x4x4x128xbf16> to vector<8x3x3x128xbf16>
    %34 = vector.extract_strided_slice %31 {offsets = [0, 1, 0, 0], sizes = [8, 3, 3, 128], strides = [1, 1, 1, 1]} : vector<8x4x4x128xbf16> to vector<8x3x3x128xbf16>
    %35 = vector.extract_strided_slice %31 {offsets = [0, 1, 1, 0], sizes = [8, 3, 3, 128], strides = [1, 1, 1, 1]} : vector<8x4x4x128xbf16> to vector<8x3x3x128xbf16>
    %36 = tpu.concatenate %32, %33, %34, %35 in 3 : vector<8x3x3x128xbf16>, vector<8x3x3x128xbf16>, vector<8x3x3x128xbf16>, vector<8x3x3x128xbf16> -> vector<8x3x3x512xbf16>
    %37 = vector.shape_cast %36 : vector<8x3x3x512xbf16> to vector<72x512xbf16>
    %c0_48 = arith.constant 0 : index
    %c0_49 = arith.constant 0 : index
    %38 = vector.load %arg6[%c0_48, %c0_49] : memref<512x256xbf16, #tpu.memory_space<vmem>>, vector<512x256xbf16>
    %cst_50 = arith.constant dense<0.000000e+00> : vector<72x256xf32>
    %39 = tpu.matmul %37, %38, %cst_50 {dimension_numbers = #tpu.dot_dimension_numbers<[1], [0], [0], [1], [0, 0, 1, 1], [], []>} : vector<72x512xbf16>, vector<512x256xbf16>, vector<72x256xf32> -> vector<72x256xf32>
    %c0_51 = arith.constant 0 : index
    %c0_52 = arith.constant 0 : index
    %40 = vector.load %arg7[%c0_51, %c0_52] : memref<1x256xf32, #tpu.memory_space<vmem>>, vector<1x256xf32>
    %41 = vector.broadcast %40 : vector<1x256xf32> to vector<72x256xf32>
    %42 = arith.addf %39, %41 : vector<72x256xf32>
    %cst_53 = arith.constant 0.000000e+00 : f32
    %43 = vector.broadcast %cst_53 : f32 to vector<72x256xf32>
    %44 = arith.maximumf %42, %43 : vector<72x256xf32>
    %45 = arith.truncf %44 : vector<72x256xf32> to vector<72x256xbf16>
    %46 = vector.shape_cast %45 : vector<72x256xbf16> to vector<8x3x3x256xbf16>
    %47 = vector.extract_strided_slice %46 {offsets = [0, 0, 0, 0], sizes = [8, 2, 2, 256], strides = [1, 1, 1, 1]} : vector<8x3x3x256xbf16> to vector<8x2x2x256xbf16>
    %48 = vector.extract_strided_slice %46 {offsets = [0, 0, 1, 0], sizes = [8, 2, 2, 256], strides = [1, 1, 1, 1]} : vector<8x3x3x256xbf16> to vector<8x2x2x256xbf16>
    %49 = vector.extract_strided_slice %46 {offsets = [0, 1, 0, 0], sizes = [8, 2, 2, 256], strides = [1, 1, 1, 1]} : vector<8x3x3x256xbf16> to vector<8x2x2x256xbf16>
    %50 = vector.extract_strided_slice %46 {offsets = [0, 1, 1, 0], sizes = [8, 2, 2, 256], strides = [1, 1, 1, 1]} : vector<8x3x3x256xbf16> to vector<8x2x2x256xbf16>
    %51 = tpu.concatenate %47, %48, %49, %50 in 3 : vector<8x2x2x256xbf16>, vector<8x2x2x256xbf16>, vector<8x2x2x256xbf16>, vector<8x2x2x256xbf16> -> vector<8x2x2x1024xbf16>
    %52 = vector.shape_cast %51 : vector<8x2x2x1024xbf16> to vector<32x1024xbf16>
    %c0_54 = arith.constant 0 : index
    %c0_55 = arith.constant 0 : index
    %53 = vector.load %arg8[%c0_54, %c0_55] : memref<1024x256xbf16, #tpu.memory_space<vmem>>, vector<1024x256xbf16>
    %cst_56 = arith.constant dense<0.000000e+00> : vector<32x256xf32>
    %54 = tpu.matmul %52, %53, %cst_56 {dimension_numbers = #tpu.dot_dimension_numbers<[1], [0], [0], [1], [0, 0, 1, 1], [], []>} : vector<32x1024xbf16>, vector<1024x256xbf16>, vector<32x256xf32> -> vector<32x256xf32>
    %c0_57 = arith.constant 0 : index
    %c0_58 = arith.constant 0 : index
    %55 = vector.load %arg9[%c0_57, %c0_58] : memref<1x256xf32, #tpu.memory_space<vmem>>, vector<1x256xf32>
    %56 = vector.broadcast %55 : vector<1x256xf32> to vector<32x256xf32>
    %57 = arith.addf %54, %56 : vector<32x256xf32>
    %cst_59 = arith.constant 0.000000e+00 : f32
    %58 = vector.broadcast %cst_59 : f32 to vector<32x256xf32>
    %59 = arith.maximumf %57, %58 : vector<32x256xf32>
    %60 = arith.truncf %59 : vector<32x256xf32> to vector<32x256xbf16>
    %61 = vector.shape_cast %60 : vector<32x256xbf16> to vector<8x2x2x256xbf16>
    %62 = vector.extract_strided_slice %61 {offsets = [0, 0, 0, 0], sizes = [8, 1, 1, 256], strides = [1, 1, 1, 1]} : vector<8x2x2x256xbf16> to vector<8x1x1x256xbf16>
    %63 = vector.extract_strided_slice %61 {offsets = [0, 0, 1, 0], sizes = [8, 1, 1, 256], strides = [1, 1, 1, 1]} : vector<8x2x2x256xbf16> to vector<8x1x1x256xbf16>
    %64 = vector.extract_strided_slice %61 {offsets = [0, 1, 0, 0], sizes = [8, 1, 1, 256], strides = [1, 1, 1, 1]} : vector<8x2x2x256xbf16> to vector<8x1x1x256xbf16>
    %65 = vector.extract_strided_slice %61 {offsets = [0, 1, 1, 0], sizes = [8, 1, 1, 256], strides = [1, 1, 1, 1]} : vector<8x2x2x256xbf16> to vector<8x1x1x256xbf16>
    %66 = tpu.concatenate %62, %63, %64, %65 in 3 : vector<8x1x1x256xbf16>, vector<8x1x1x256xbf16>, vector<8x1x1x256xbf16>, vector<8x1x1x256xbf16> -> vector<8x1x1x1024xbf16>
    %67 = vector.shape_cast %66 : vector<8x1x1x1024xbf16> to vector<8x1024xbf16>
    %c0_60 = arith.constant 0 : index
    %c0_61 = arith.constant 0 : index
    %68 = vector.load %arg10[%c0_60, %c0_61] : memref<1024x256xbf16, #tpu.memory_space<vmem>>, vector<1024x256xbf16>
    %cst_62 = arith.constant dense<0.000000e+00> : vector<8x256xf32>
    %69 = tpu.matmul %67, %68, %cst_62 {dimension_numbers = #tpu.dot_dimension_numbers<[1], [0], [0], [1], [0, 0, 1, 1], [], []>} : vector<8x1024xbf16>, vector<1024x256xbf16>, vector<8x256xf32> -> vector<8x256xf32>
    %c0_63 = arith.constant 0 : index
    %c0_64 = arith.constant 0 : index
    %70 = vector.load %arg11[%c0_63, %c0_64] : memref<1x256xf32, #tpu.memory_space<vmem>>, vector<1x256xf32>
    %71 = vector.broadcast %70 : vector<1x256xf32> to vector<8x256xf32>
    %72 = arith.addf %69, %71 : vector<8x256xf32>
    %cst_65 = arith.constant 0.000000e+00 : f32
    %73 = vector.broadcast %cst_65 : f32 to vector<8x256xf32>
    %74 = arith.maximumf %72, %73 : vector<8x256xf32>
    %75 = arith.truncf %74 : vector<8x256xf32> to vector<8x256xbf16>
    %c0_66 = arith.constant 0 : index
    %c0_67 = arith.constant 0 : index
    %76 = vector.load %arg12[%c0_66, %c0_67] : memref<256x256xbf16, #tpu.memory_space<vmem>>, vector<256x256xbf16>
    %cst_68 = arith.constant dense<0.000000e+00> : vector<8x256xf32>
    %77 = tpu.matmul %75, %76, %cst_68 {dimension_numbers = #tpu.dot_dimension_numbers<[1], [0], [0], [1], [0, 0, 1, 1], [], []>} : vector<8x256xbf16>, vector<256x256xbf16>, vector<8x256xf32> -> vector<8x256xf32>
    %c0_69 = arith.constant 0 : index
    %c0_70 = arith.constant 0 : index
    %78 = vector.load %arg13[%c0_69, %c0_70] : memref<1x256xf32, #tpu.memory_space<vmem>>, vector<1x256xf32>
    %79 = vector.broadcast %78 : vector<1x256xf32> to vector<8x256xf32>
    %80 = arith.addf %77, %79 : vector<8x256xf32>
    %cst_71 = arith.constant 0.000000e+00 : f32
    %81 = vector.broadcast %cst_71 : f32 to vector<8x256xf32>
    %82 = arith.maximumf %80, %81 : vector<8x256xf32>
    %c0_72 = arith.constant 0 : index
    %c0_73 = arith.constant 0 : index
    %83 = vector.load %arg14[%c0_72, %c0_73] : memref<1x256xf32, #tpu.memory_space<vmem>>, vector<1x256xf32>
    %84 = vector.broadcast %83 : vector<1x256xf32> to vector<8x256xf32>
    %85 = arith.mulf %82, %84 : vector<8x256xf32>
    %cst_74 = arith.constant dense<0.000000e+00> : vector<8xf32>
    %86 = vector.multi_reduction <add>, %85, %cst_74 [1] : vector<8x256xf32> to vector<8xf32>
    %87 = vector.shape_cast %86 : vector<8xf32> to vector<1x8xf32>
    %c0_75 = arith.constant 0 : index
    %c0_76 = arith.constant 0 : index
    %88 = vector.load %arg15[%c0_75, %c0_76] : memref<1x1xf32, #tpu.memory_space<vmem>>, vector<1x1xf32>
    %89 = vector.broadcast %88 : vector<1x1xf32> to vector<1x8xf32>
    %90 = arith.addf %87, %89 : vector<1x8xf32>
    %c0_77 = arith.constant 0 : index
    %c0_78 = arith.constant 0 : index
    %91 = vector.load %arg16[%c0_77, %c0_78] : memref<1x8xf32, #tpu.memory_space<vmem>>, vector<1x8xf32>
    tpu.vector_store %arg16[%c0_77, %c0_78], %90 {strides = array<i32>} : memref<1x8xf32, #tpu.memory_space<vmem>>, vector<1x8xf32>,
    return
  }
  func.func @transform_0(%arg0: i32) -> (i32, i32) {
    %c0_i32 = arith.constant 0 : i32
    %c0_i32_0 = arith.constant 0 : i32
    return %arg0, %c0_i32 : i32, i32
  }
  func.func @transform_1(%arg0: i32) -> (i32, i32) {
    %c0_i32 = arith.constant 0 : i32
    %c0_i32_0 = arith.constant 0 : i32
    %c0_i32_1 = arith.constant 0 : i32
    return %c0_i32, %c0_i32_0 : i32, i32
  }
  func.func @transform_2(%arg0: i32) -> (i32, i32) {
    %c0_i32 = arith.constant 0 : i32
    %c0_i32_0 = arith.constant 0 : i32
    %c0_i32_1 = arith.constant 0 : i32
    return %c0_i32, %c0_i32_0 : i32, i32
  }
  func.func @transform_3(%arg0: i32) -> (i32, i32) {
    %c0_i32 = arith.constant 0 : i32
    %c0_i32_0 = arith.constant 0 : i32
    %c0_i32_1 = arith.constant 0 : i32
    return %c0_i32, %c0_i32_0 : i32, i32
  }
  func.func @transform_4(%arg0: i32) -> (i32, i32) {
    %c0_i32 = arith.constant 0 : i32
    %c0_i32_0 = arith.constant 0 : i32
    %c0_i32_1 = arith.constant 0 : i32
    return %c0_i32, %c0_i32_0 : i32, i32
  }
  func.func @transform_5(%arg0: i32) -> (i32, i32) {
    %c0_i32 = arith.constant 0 : i32
    %c0_i32_0 = arith.constant 0 : i32
    %c0_i32_1 = arith.constant 0 : i32
    return %c0_i32, %c0_i32_0 : i32, i32
  }
  func.func @transform_6(%arg0: i32) -> (i32, i32) {
    %c0_i32 = arith.constant 0 : i32
    %c0_i32_0 = arith.constant 0 : i32
    %c0_i32_1 = arith.constant 0 : i32
    return %c0_i32, %c0_i32_0 : i32, i32
  }
  func.func @transform_7(%arg0: i32) -> (i32, i32) {
    %c0_i32 = arith.constant 0 : i32
    %c0_i32_0 = arith.constant 0 : i32
    %c0_i32_1 = arith.constant 0 : i32
    return %c0_i32, %c0_i32_0 : i32, i32
  }
  func.func @transform_8(%arg0: i32) -> (i32, i32) {
    %c0_i32 = arith.constant 0 : i32
    %c0_i32_0 = arith.constant 0 : i32
    %c0_i32_1 = arith.constant 0 : i32
    return %c0_i32, %c0_i32_0 : i32, i32
  }
  func.func @transform_9(%arg0: i32) -> (i32, i32) {
    %c0_i32 = arith.constant 0 : i32
    %c0_i32_0 = arith.constant 0 : i32
    %c0_i32_1 = arith.constant 0 : i32
    return %c0_i32, %c0_i32_0 : i32, i32
  }
  func.func @transform_10(%arg0: i32) -> (i32, i32) {
    %c0_i32 = arith.constant 0 : i32
    %c0_i32_0 = arith.constant 0 : i32
    %c0_i32_1 = arith.constant 0 : i32
    return %c0_i32, %c0_i32_0 : i32, i32
  }
  func.func @transform_11(%arg0: i32) -> (i32, i32) {
    %c0_i32 = arith.constant 0 : i32
    %c0_i32_0 = arith.constant 0 : i32
    %c0_i32_1 = arith.constant 0 : i32
    return %c0_i32, %c0_i32_0 : i32, i32
  }
  func.func @transform_12(%arg0: i32) -> (i32, i32) {
    %c0_i32 = arith.constant 0 : i32
    %c0_i32_0 = arith.constant 0 : i32
    %c0_i32_1 = arith.constant 0 : i32
    return %c0_i32, %c0_i32_0 : i32, i32
  }
  func.func @transform_13(%arg0: i32) -> (i32, i32) {
    %c0_i32 = arith.constant 0 : i32
    %c0_i32_0 = arith.constant 0 : i32
    %c0_i32_1 = arith.constant 0 : i32
    return %c0_i32, %c0_i32_0 : i32, i32
  }
  func.func @transform_14(%arg0: i32) -> (i32, i32) {
    %c0_i32 = arith.constant 0 : i32
    %c0_i32_0 = arith.constant 0 : i32
    %c0_i32_1 = arith.constant 0 : i32
    return %c0_i32, %c0_i32_0 : i32, i32
  }
  func.func @transform_15(%arg0: i32) -> (i32, i32) {
    %c0_i32 = arith.constant 0 : i32
    %c0_i32_0 = arith.constant 0 : i32
    return %arg0, %c0_i32 : i32, i32
  }
}

</mosaic_0001>

<llo_original>
// kernel: model_forward.1
$region0: #{model_forward.1}
  #allocation0 [shape = 'u32[]', space=smem, size = 0x4, offset = 0x4, fixed_abs, tag = 'smem constant byte address 0x4 - core index']
  #allocation1 [shape = 'u32[144,128]{1,0:T(1,128)}', space=vmem, size = 0x12000, scoped, tag = 'internal scratch']
  #allocation2 [shape = 'bf16[8,5,5,128]{3,2,1,0:T(8,128)(2,1)}', space=vmem, size = 0x14000, scoped, tag = 'scratch operand']
  #allocation3 [shape = 'f32[1,1]{1,0:T(1,128)S(1)}', space=vmem, size = 0x200, scoped, tag = 'scoped memory for model_forward.1']
  %s0 = inlined_call_operand.vmem [shape: bf16[72,16], index: 0, kind: input, shape index: {}]
  %s1 = inlined_call_operand.vmem [shape: bf16[16,128], index: 1, kind: input, shape index: {}]
  %s2 = inlined_call_operand.vmem [shape: f32[1,128], index: 2, kind: input, shape index: {}]
  %s3 = inlined_call_operand.vmem [shape: bf16[512,128], index: 3, kind: input, shape index: {}]
  %s4 = inlined_call_operand.vmem [shape: f32[1,128], index: 4, kind: input, shape index: {}]
  %s5 = inlined_call_operand.vmem [shape: bf16[512,256], index: 5, kind: input, shape index: {}]
  %s6 = inlined_call_operand.vmem [shape: f32[1,256], index: 6, kind: input, shape index: {}]
  %s7 = inlined_call_operand.vmem [shape: bf16[1024,256], index: 7, kind: input, shape index: {}]
  %s8 = inlined_call_operand.vmem [shape: f32[1,256], index: 8, kind: input, shape index: {}]
  %s9 = inlined_call_operand.vmem [shape: bf16[1024,256], index: 9, kind: input, shape index: {}]
  %s10 = inlined_call_operand.vmem [shape: f32[1,256], index: 10, kind: input, shape index: {}]
  %s11 = inlined_call_operand.vmem [shape: bf16[256,256], index: 11, kind: input, shape index: {}]
  %s12 = inlined_call_operand.vmem [shape: f32[1,256], index: 12, kind: input, shape index: {}]
  %s13 = inlined_call_operand.vmem [shape: f32[1,256], index: 13, kind: input, shape index: {}]
  %s14 = inlined_call_operand.<no memory space> [shape: f32[1,1], index: 14, kind: input, shape index: {}]
  %s15 = inlined_call_operand.vmem [shape: f32[1,8], index: 15, kind: output, shape index: {}]
  %s16 = sld [smem:[#allocation0]]
  $region70: #{model_forward.1} parent=0
    _
  %s18 = ssub.s32 1, %s16
  %s19 = scalar_select 0, %s18, %s16
  %v20 = vstv %s14
  %21 = vst [vmem:[#allocation3] sm:$0x1] %v20
  // Predicated region
  $region2: #{model_forward.1} parent=0 // pred_check
    _
  $region3: #{model_forward.1} parent=0 // pred_check_branch
    %23 = sbr.rel (0) target = $region5
  $region4: #{model_forward.1} parent=0 // pred_region
    _
  $region5: #{model_forward.1} parent=0 // pred_fallthru
    _
  // Predicated region
  $region6: #{model_forward.1} parent=0 // pred_check
    _
  $region7: #{model_forward.1} parent=0 // pred_check_branch
    %25 = sbr.rel (0) target = $region9
  $region8: #{model_forward.1} parent=0 // pred_region
    _
  $region9: #{model_forward.1} parent=0 // pred_fallthru
    _
  // Predicated region
  $region10: #{model_forward.1} parent=0 // pred_check
    _
  $region11: #{model_forward.1} parent=0 // pred_check_branch
    %27 = sbr.rel (0) target = $region13
  $region12: #{model_forward.1} parent=0 // pred_region
    _
  $region13: #{model_forward.1} parent=0 // pred_fallthru
    _
  // Predicated region
  $region14: #{model_forward.1} parent=0 // pred_check
    _
  $region15: #{model_forward.1} parent=0 // pred_check_branch
    %29 = sbr.rel (0) target = $region17
  $region16: #{model_forward.1} parent=0 // pred_region
    _
  $region17: #{model_forward.1} parent=0 // pred_fallthru
    _
  // Predicated region
  $region18: #{model_forward.1} parent=0 // pred_check
    _
  $region19: #{model_forward.1} parent=0 // pred_check_branch
    %31 = sbr.rel (0) target = $region21
  $region20: #{model_forward.1} parent=0 // pred_region
    _
  $region21: #{model_forward.1} parent=0 // pred_fallthru
    _
  // Predicated region
  $region22: #{model_forward.1} parent=0 // pred_check
    _
  $region23: #{model_forward.1} parent=0 // pred_check_branch
    %33 = sbr.rel (0) target = $region25
  $region24: #{model_forward.1} parent=0 // pred_region
    _
  $region25: #{model_forward.1} parent=0 // pred_fallthru
    _
  // Predicated region
  $region26: #{model_forward.1} parent=0 // pred_check
    _
  $region27: #{model_forward.1} parent=0 // pred_check_branch
    %35 = sbr.rel (0) target = $region29
  $region28: #{model_forward.1} parent=0 // pred_region
    _
  $region29: #{model_forward.1} parent=0 // pred_fallthru
    _
  // Predicated region
  $region30: #{model_forward.1} parent=0 // pred_check
    _
  $region31: #{model_forward.1} parent=0 // pred_check_branch
    %37 = sbr.rel (0) target = $region33
  $region32: #{model_forward.1} parent=0 // pred_region
    _
  $region33: #{model_forward.1} parent=0 // pred_fallthru
    _
  // Predicated region
  $region34: #{model_forward.1} parent=0 // pred_check
    _
  $region35: #{model_forward.1} parent=0 // pred_check_branch
    %39 = sbr.rel (0) target = $region37
  $region36: #{model_forward.1} parent=0 // pred_region
    _
  $region37: #{model_forward.1} parent=0 // pred_fallthru
    _
  // Predicated region
  $region38: #{model_forward.1} parent=0 // pred_check
    _
  $region39: #{model_forward.1} parent=0 // pred_check_branch
    %41 = sbr.rel (0) target = $region41
  $region40: #{model_forward.1} parent=0 // pred_region
    _
  $region41: #{model_forward.1} parent=0 // pred_fallthru
    _
  // Predicated region
  $region42: #{model_forward.1} parent=0 // pred_check
    _
  $region43: #{model_forward.1} parent=0 // pred_check_branch
    %43 = sbr.rel (0) target = $region45
  $region44: #{model_forward.1} parent=0 // pred_region
    _
  $region45: #{model_forward.1} parent=0 // pred_fallthru
    _
  // Predicated region
  $region46: #{model_forward.1} parent=0 // pred_check
    _
  $region47: #{model_forward.1} parent=0 // pred_check_branch
    %45 = sbr.rel (0) target = $region49
  $region48: #{model_forward.1} parent=0 // pred_region
    _
  $region49: #{model_forward.1} parent=0 // pred_fallthru
    _
  // Predicated region
  $region50: #{model_forward.1} parent=0 // pred_check
    _
  $region51: #{model_forward.1} parent=0 // pred_check_branch
    %47 = sbr.rel (0) target = $region53
  $region52: #{model_forward.1} parent=0 // pred_region
    _
  $region53: #{model_forward.1} parent=0 // pred_fallthru
    _
  // Predicated region
  $region54: #{model_forward.1} parent=0 // pred_check
    _
  $region55: #{model_forward.1} parent=0 // pred_check_branch
    %49 = sbr.rel (0) target = $region57
  $region56: #{model_forward.1} parent=0 // pred_region
    _
  $region57: #{model_forward.1} parent=0 // pred_fallthru
    _
  // Predicated region
  $region58: #{model_forward.1} parent=0 // pred_check
    _
  $region59: #{model_forward.1} parent=0 // pred_check_branch
    %51 = sbr.rel (0) target = $region61
  $region60: #{model_forward.1} parent=0 // pred_region
    _
  $region61: #{model_forward.1} parent=0 // pred_fallthru
    _
  %v53 = vld [vmem:[%s0] sm:$0xf]
  %v54 = vld [vmem:[%s0 + $0x4] sm:$0xf]
  %v55 = vld [vmem:[%s0 + $0x8] sm:$0xf]
  %v56 = vld [vmem:[%s0 + $0xc] sm:$0xf]
  %v57 = vld [vmem:[%s0 + $0x10] sm:$0xf]
  %v58 = vld [vmem:[%s0 + $0x14] sm:$0xf]
  %v59 = vld [vmem:[%s0 + $0x18] sm:$0xf]
  %v60 = vld [vmem:[%s0 + $0x1c] sm:$0xf]
  %v61 = vld [vmem:[%s0 + $0x20] sm:$0xf]
  %v62 = vld [vmem:[%s1] sm:$0xf]
  %v63 = vld [vmem:[%s1 + $0x4] sm:$0xf]
  %v64 = vld [vmem:[%s2] sm:$0x1]
  %v66 = vlaneseq
  %v67 = vshrl.u32 %v66, 7
  %v68 = vsub.s32 0, %v67
  %v69 = vrot.slane %v64, %v68
  %v80 = vunpack.c.l.b16 %v53
  %v81 = vunpack.c.l.b16 %v54
  %v82 = vunpack.c.l.b16 %v55
  %v83 = vunpack.c.l.b16 %v56
  %v84 = vunpack.c.l.b16 %v57
  %v85 = vunpack.c.l.b16 %v58
  %v86 = vunpack.c.l.b16 %v59
  %v87 = vunpack.c.l.b16 %v60
  %v88 = vunpack.c.l.b16 %v61
  %v89 = vpack.c.b16 %v81, %v80
  %v90 = vpack.c.b16 %v83, %v82
  %v91 = vpack.c.b16 %v85, %v84
  %v92 = vpack.c.b16 %v87, %v86
  %v93 = vpack.c.b16 %v88, %v88
  %v96 = vunpack.c.l.b16 %v62
  %v97 = vunpack.c.l.b16 %v63
  %v98 = vpack.c.b16 %v97, %v96
  %vm100 = vcmask 130048
  %v102 = vsel %vm100, %v89, 0
  %v105 = vsel %vm100, %v90, 0
  %v108 = vsel %vm100, %v91, 0
  %v111 = vsel %vm100, %v92, 0
  %v114 = vsel %vm100, %v93, 0
  %116 = vmatprep.subr.bf16.mxu0 0
  %117 = vmatpush1.bf16.msra.mxu0 %v98
  %118 = vmatprep.subr.bf16.mxu0 0
  %119 = vmatpush1.bf16.msra.mxu0 0
  %120 = vmatprep.subr.bf16.mxu0 0
  %121 = vmatpush1.bf16.msra.mxu0 0
  %122 = vmatprep.subr.bf16.mxu0 0
  %123 = vmatpush1.bf16.msra.mxu0 0
  %124 = vmatprep.subr.bf16.mxu0 0
  %125 = vmatpush1.bf16.msra.mxu0 0
  %126 = vmatprep.subr.bf16.mxu0 0
  %127 = vmatpush1.bf16.msra.mxu0 0
  %128 = vmatprep.subr.bf16.mxu0 0
  %129 = vmatpush1.bf16.msra.mxu0 0
  %130 = vmatprep.subr.bf16.mxu0 0
  %131 = vmatpush1.bf16.msra.mxu0 0
  %132 = vmatprep.subr.bf16.mxu0 0
  %133 = vmatpush1.bf16.msra.mxu0 0
  %134 = vmatprep.subr.bf16.mxu0 0
  %135 = vmatpush1.bf16.msra.mxu0 0
  %136 = vmatprep.subr.bf16.mxu0 0
  %137 = vmatpush1.bf16.msra.mxu0 0
  %138 = vmatprep.subr.bf16.mxu0 0
  %139 = vmatpush1.bf16.msra.mxu0 0
  %140 = vmatprep.subr.bf16.mxu0 0
  %141 = vmatpush1.bf16.msra.mxu0 0
  %142 = vmatprep.subr.bf16.mxu0 0
  %143 = vmatpush1.bf16.msra.mxu0 0
  %144 = vmatprep.subr.bf16.mxu0 0
  %145 = vmatpush1.bf16.msra.mxu0 0
  %146 = vmatprep.subr.bf16.mxu0 0
  %147 = vmatpush1.bf16.msra.mxu0 0
  %148 = vmatprep.mubr.bf16.mxu0 0
  %149 = vmatmul.mubr.bf16.gmra.mrb[0].mxu0 %v102
  %v150 = vpop.f32.mrb[0].mxu0
  %v151 = vadd.f32 %v69, %v150
  %v152 = vpop.f32.mrb[0].mxu0
  %v153 = vpop.f32.mrb[0].mxu0
  %v154 = vadd.f32 %v69, %v153
  %v155 = vpop.f32.mrb[0].mxu0
  %156 = vmatprep.mubr.bf16.mxu0 0
  %157 = vmatmul.mubr.bf16.gmra.mrb[0].mxu0 %v105
  %v158 = vpop.f32.mrb[0].mxu0
  %v159 = vadd.f32 %v69, %v158
  %v160 = vpop.f32.mrb[0].mxu0
  %v161 = vpop.f32.mrb[0].mxu0
  %v162 = vadd.f32 %v69, %v161
  %v163 = vpop.f32.mrb[0].mxu0
  %164 = vmatprep.mubr.bf16.mxu0 0
  %165 = vmatmul.mubr.bf16.gmra.mrb[0].mxu0 %v108
  %v166 = vpop.f32.mrb[0].mxu0
  %v167 = vadd.f32 %v69, %v166
  %v168 = vpop.f32.mrb[0].mxu0
  %v169 = vpop.f32.mrb[0].mxu0
  %v170 = vadd.f32 %v69, %v169
  %v171 = vpop.f32.mrb[0].mxu0
  %172 = vmatprep.mubr.bf16.mxu0 0
  %173 = vmatmul.mubr.bf16.gmra.mrb[0].mxu0 %v111
  %v174 = vpop.f32.mrb[0].mxu0
  %v175 = vadd.f32 %v69, %v174
  %v176 = vpop.f32.mrb[0].mxu0
  %v177 = vpop.f32.mrb[0].mxu0
  %v178 = vadd.f32 %v69, %v177
  %v179 = vpop.f32.mrb[0].mxu0
  %180 = vmatprep.mubr.bf16.mxu0 0
  %181 = vmatmul.mubr.bf16.gmra.mrb[0].mxu0 %v114
  %v182 = vpop.f32.mrb[0].mxu0
  %v183 = vadd.f32 %v69, %v182
  %v184 = vpop.f32.mrb[0].mxu0
  %v185 = vpop.f32.mrb[0].mxu0
  %v186 = vpop.f32.mrb[0].mxu0
  %187 = vdwg.mxu0
  %v188 = vmax.f32 %v151, 0.0
  %v189 = vmax.f32 %v154, 0.0
  %v190 = vmax.f32 %v159, 0.0
  %v191 = vmax.f32 %v162, 0.0
  %v192 = vmax.f32 %v167, 0.0
  %v193 = vmax.f32 %v170, 0.0
  %v194 = vmax.f32 %v175, 0.0
  %v195 = vmax.f32 %v178, 0.0
  %v196 = vmax.f32 %v183, 0.0
  %v197 = vpack.c.bf16 %v189, %v188
  %v198 = vpack.c.bf16 %v191, %v190
  %v199 = vpack.c.bf16 %v193, %v192
  %v200 = vpack.c.bf16 %v195, %v194
  %v201 = vpack.c.bf16 %v196, %v196
  %vm202 = vcmask 1042432
  %vm203 = vsmask.f32 2304
  %vm204 = vmand %vm202, %vm203
  %v205 = vld [vmem:[#allocation2] sm:$0x7]
  %v206 = vsel %vm204, 0, %v205
  %207 = vst [vmem:[#allocation2] sm:$0x7] %v206
  %v208 = vld [vmem:[#allocation2 + $0x14] sm:$0x7]
  %v209 = vsel %vm204, 0, %v208
  %210 = vst [vmem:[#allocation2 + $0x14] sm:$0x7] %v209
  %v211 = vld [vmem:[#allocation2 + $0x28] sm:$0x7]
  %v212 = vsel %vm204, 0, %v211
  %213 = vst [vmem:[#allocation2 + $0x28] sm:$0x7] %v212
  %v214 = vld [vmem:[#allocation2 + $0x3c] sm:$0x7]
  %v215 = vsel %vm204, 0, %v214
  %216 = vst [vmem:[#allocation2 + $0x3c] sm:$0x7] %v215
  %v217 = vld [vmem:[#allocation2 + $0x50] sm:$0x7]
  %v218 = vsel %vm204, 0, %v217
  %219 = vst [vmem:[#allocation2 + $0x50] sm:$0x7] %v218
  %v220 = vld [vmem:[#allocation2 + $0x64] sm:$0x7]
  %v221 = vsel %vm204, 0, %v220
  %222 = vst [vmem:[#allocation2 + $0x64] sm:$0x7] %v221
  %v223 = vld [vmem:[#allocation2 + $0x78] sm:$0x7]
  %v224 = vsel %vm204, 0, %v223
  %225 = vst [vmem:[#allocation2 + $0x78] sm:$0x7] %v224
  %v226 = vld [vmem:[#allocation2 + $0x8c] sm:$0x7]
  %v227 = vsel %vm204, 0, %v226
  %228 = vst [vmem:[#allocation2 + $0x8c] sm:$0x7] %v227
  %s229 = scalar_lea.vmem [#allocation2], 16
  %v230 = vld [vmem:[%s229] sm:$0x7]
  %v231 = vsel %vm204, 0, %v230
  %232 = vst [vmem:[%s229] sm:$0x7] %v231
  %v233 = vld [vmem:[%s229 + $0x14] sm:$0x7]
  %v234 = vsel %vm204, 0, %v233
  %235 = vst [vmem:[%s229 + $0x14] sm:$0x7] %v234
  %v236 = vld [vmem:[%s229 + $0x28] sm:$0x7]
  %v237 = vsel %vm204, 0, %v236
  %238 = vst [vmem:[%s229 + $0x28] sm:$0x7] %v237
  %v239 = vld [vmem:[%s229 + $0x3c] sm:$0x7]
  %v240 = vsel %vm204, 0, %v239
  %241 = vst [vmem:[%s229 + $0x3c] sm:$0x7] %v240
  %v242 = vld [vmem:[%s229 + $0x50] sm:$0x7]
  %v243 = vsel %vm204, 0, %v242
  %244 = vst [vmem:[%s229 + $0x50] sm:$0x7] %v243
  %v245 = vld [vmem:[%s229 + $0x64] sm:$0x7]
  %v246 = vsel %vm204, 0, %v245
  %247 = vst [vmem:[%s229 + $0x64] sm:$0x7] %v246
  %v248 = vld [vmem:[%s229 + $0x78] sm:$0x7]
  %v249 = vsel %vm204, 0, %v248
  %250 = vst [vmem:[%s229 + $0x78] sm:$0x7] %v249
  %v251 = vld [vmem:[%s229 + $0x8c] sm:$0x7]
  %v252 = vsel %vm204, 0, %v251
  %253 = vst [vmem:[%s229 + $0x8c] sm:$0x7] %v252
  %vm254 = vcmask 1040384
  %vm255 = vsmask.f32 256
  %vm256 = vmand %vm254, %vm255
  %v257 = vld [vmem:[#allocation2] sm:$0x1]
  %v258 = vsel %vm256, 0, %v257
  %259 = vst [vmem:[#allocation2] sm:$0x1] %v258
  %v260 = vld [vmem:[#allocation2 + $0x4] sm:$0x1]
  %v261 = vsel %vm256, 0, %v260
  %262 = vst [vmem:[#allocation2 + $0x4] sm:$0x1] %v261
  %v263 = vld [vmem:[#allocation2 + $0x8] sm:$0x1]
  %v264 = vsel %vm256, 0, %v263
  %265 = vst [vmem:[#allocation2 + $0x8] sm:$0x1] %v264
  %v266 = vld [vmem:[#allocation2 + $0xc] sm:$0x1]
  %v267 = vsel %vm256, 0, %v266
  %268 = vst [vmem:[#allocation2 + $0xc] sm:$0x1] %v267
  %v269 = vld [vmem:[#allocation2 + $0x10] sm:$0x1]
  %v270 = vsel %vm256, 0, %v269
  %271 = vst [vmem:[#allocation2 + $0x10] sm:$0x1] %v270
  %v272 = vld [vmem:[#allocation2 + $0x14] sm:$0x1]
  %v273 = vsel %vm256, 0, %v272
  %274 = vst [vmem:[#allocation2 + $0x14] sm:$0x1] %v273
  %v275 = vld [vmem:[#allocation2 + $0x18] sm:$0x1]
  %v276 = vsel %vm256, 0, %v275
  %277 = vst [vmem:[#allocation2 + $0x18] sm:$0x1] %v276
  %v278 = vld [vmem:[#allocation2 + $0x1c] sm:$0x1]
  %v279 = vsel %vm256, 0, %v278
  %280 = vst [vmem:[#allocation2 + $0x1c] sm:$0x1] %v279
  %v281 = vld [vmem:[#allocation2 + $0x20] sm:$0x1]
  %v282 = vsel %vm256, 0, %v281
  %283 = vst [vmem:[#allocation2 + $0x20] sm:$0x1] %v282
  %v284 = vld [vmem:[#allocation2 + $0x24] sm:$0x1]
  %v285 = vsel %vm256, 0, %v284
  %286 = vst [vmem:[#allocation2 + $0x24] sm:$0x1] %v285
  %v287 = vld [vmem:[#allocation2 + $0x28] sm:$0x1]
  %v288 = vsel %vm256, 0, %v287
  %289 = vst [vmem:[#allocation2 + $0x28] sm:$0x1] %v288
  %v290 = vld [vmem:[#allocation2 + $0x2c] sm:$0x1]
  %v291 = vsel %vm256, 0, %v290
  %292 = vst [vmem:[#allocation2 + $0x2c] sm:$0x1] %v291
  %v293 = vld [vmem:[#allocation2 + $0x30] sm:$0x1]
  %v294 = vsel %vm256, 0, %v293
  %295 = vst [vmem:[#allocation2 + $0x30] sm:$0x1] %v294
  %v296 = vld [vmem:[#allocation2 + $0x34] sm:$0x1]
  %v297 = vsel %vm256, 0, %v296
  %298 = vst [vmem:[#allocation2 + $0x34] sm:$0x1] %v297
  %v299 = vld [vmem:[#allocation2 + $0x38] sm:$0x1]
  %v300 = vsel %vm256, 0, %v299
  %301 = vst [vmem:[#allocation2 + $0x38] sm:$0x1] %v300
  %v302 = vld [vmem:[#allocation2 + $0x3c] sm:$0x1]
  %v303 = vsel %vm256, 0, %v302
  %304 = vst [vmem:[#allocation2 + $0x3c] sm:$0x1] %v303
  %v305 = vld [vmem:[#allocation2 + $0x40] sm:$0x1]
  %v306 = vsel %vm256, 0, %v305
  %307 = vst [vmem:[#allocation2 + $0x40] sm:$0x1] %v306
  %v308 = vld [vmem:[#allocation2 + $0x44] sm:$0x1]
  %v309 = vsel %vm256, 0, %v308
  %310 = vst [vmem:[#allocation2 + $0x44] sm:$0x1] %v309
  %v311 = vld [vmem:[#allocation2 + $0x48] sm:$0x1]
  %v312 = vsel %vm256, 0, %v311
  %313 = vst [vmem:[#allocation2 + $0x48] sm:$0x1] %v312
  %v314 = vld [vmem:[#allocation2 + $0x4c] sm:$0x1]
  %v315 = vsel %vm256, 0, %v314
  %316 = vst [vmem:[#allocation2 + $0x4c] sm:$0x1] %v315
  %v317 = vld [vmem:[#allocation2 + $0x50] sm:$0x1]
  %v318 = vsel %vm256, 0, %v317
  %319 = vst [vmem:[#allocation2 + $0x50] sm:$0x1] %v318
  %v320 = vld [vmem:[#allocation2 + $0x54] sm:$0x1]
  %v321 = vsel %vm256, 0, %v320
  %322 = vst [vmem:[#allocation2 + $0x54] sm:$0x1] %v321
  %v323 = vld [vmem:[#allocation2 + $0x58] sm:$0x1]
  %v324 = vsel %vm256, 0, %v323
  %325 = vst [vmem:[#allocation2 + $0x58] sm:$0x1] %v324
  %v326 = vld [vmem:[#allocation2 + $0x5c] sm:$0x1]
  %v327 = vsel %vm256, 0, %v326
  %328 = vst [vmem:[#allocation2 + $0x5c] sm:$0x1] %v327
  %v329 = vld [vmem:[#allocation2 + $0x60] sm:$0x1]
  %v330 = vsel %vm256, 0, %v329
  %331 = vst [vmem:[#allocation2 + $0x60] sm:$0x1] %v330
  %v332 = vld [vmem:[#allocation2 + $0x64] sm:$0x1]
  %v333 = vsel %vm256, 0, %v332
  %334 = vst [vmem:[#allocation2 + $0x64] sm:$0x1] %v333
  %v335 = vld [vmem:[#allocation2 + $0x68] sm:$0x1]
  %v336 = vsel %vm256, 0, %v335
  %337 = vst [vmem:[#allocation2 + $0x68] sm:$0x1] %v336
  %v338 = vld [vmem:[#allocation2 + $0x6c] sm:$0x1]
  %v339 = vsel %vm256, 0, %v338
  %340 = vst [vmem:[#allocation2 + $0x6c] sm:$0x1] %v339
  %v341 = vld [vmem:[#allocation2 + $0x70] sm:$0x1]
  %v342 = vsel %vm256, 0, %v341
  %343 = vst [vmem:[#allocation2 + $0x70] sm:$0x1] %v342
  %v344 = vld [vmem:[#allocation2 + $0x74] sm:$0x1]
  %v345 = vsel %vm256, 0, %v344
  %346 = vst [vmem:[#allocation2 + $0x74] sm:$0x1] %v345
  %v347 = vld [vmem:[#allocation2 + $0x78] sm:$0x1]
  %v348 = vsel %vm256, 0, %v347
  %349 = vst [vmem:[#allocation2 + $0x78] sm:$0x1] %v348
  %v350 = vld [vmem:[#allocation2 + $0x7c] sm:$0x1]
  %v351 = vsel %vm256, 0, %v350
  %352 = vst [vmem:[#allocation2 + $0x7c] sm:$0x1] %v351
  %v353 = vld [vmem:[#allocation2 + $0x80] sm:$0x1]
  %v354 = vsel %vm256, 0, %v353
  %355 = vst [vmem:[#allocation2 + $0x80] sm:$0x1] %v354
  %v356 = vld [vmem:[#allocation2 + $0x84] sm:$0x1]
  %v357 = vsel %vm256, 0, %v356
  %358 = vst [vmem:[#allocation2 + $0x84] sm:$0x1] %v357
  %v359 = vld [vmem:[#allocation2 + $0x88] sm:$0x1]
  %v360 = vsel %vm256, 0, %v359
  %361 = vst [vmem:[#allocation2 + $0x88] sm:$0x1] %v360
  %v362 = vld [vmem:[#allocation2 + $0x8c] sm:$0x1]
  %v363 = vsel %vm256, 0, %v362
  %364 = vst [vmem:[#allocation2 + $0x8c] sm:$0x1] %v363
  %v365 = vld [vmem:[#allocation2 + $0x90] sm:$0x1]
  %v366 = vsel %vm256, 0, %v365
  %367 = vst [vmem:[#allocation2 + $0x90] sm:$0x1] %v366
  %v368 = vld [vmem:[#allocation2 + $0x94] sm:$0x1]
  %v369 = vsel %vm256, 0, %v368
  %370 = vst [vmem:[#allocation2 + $0x94] sm:$0x1] %v369
  %v371 = vld [vmem:[#allocation2 + $0x98] sm:$0x1]
  %v372 = vsel %vm256, 0, %v371
  %373 = vst [vmem:[#allocation2 + $0x98] sm:$0x1] %v372
  %v374 = vld [vmem:[#allocation2 + $0x9c] sm:$0x1]
  %v375 = vsel %vm256, 0, %v374
  %376 = vst [vmem:[#allocation2 + $0x9c] sm:$0x1] %v375
  %vm377 = vcmask 1042434
  %vm378 = vmand %vm377, %vm203
  %v379 = vld [vmem:[#allocation2] sm:$0x4]
  %v380 = vsel %vm378, 0, %v379
  %381 = vst [vmem:[#allocation2] sm:$0x4] %v380
  %v382 = vld [vmem:[#allocation2 + $0x4] sm:$0x4]
  %v383 = vsel %vm378, 0, %v382
  %384 = vst [vmem:[#allocation2 + $0x4] sm:$0x4] %v383
  %v385 = vld [vmem:[#allocation2 + $0x8] sm:$0x4]
  %v386 = vsel %vm378, 0, %v385
  %387 = vst [vmem:[#allocation2 + $0x8] sm:$0x4] %v386
  %v388 = vld [vmem:[#allocation2 + $0xc] sm:$0x4]
  %v389 = vsel %vm378, 0, %v388
  %390 = vst [vmem:[#allocation2 + $0xc] sm:$0x4] %v389
  %v391 = vld [vmem:[#allocation2 + $0x10] sm:$0x4]
  %v392 = vsel %vm378, 0, %v391
  %393 = vst [vmem:[#allocation2 + $0x10] sm:$0x4] %v392
  %v394 = vld [vmem:[#allocation2 + $0x14] sm:$0x4]
  %v395 = vsel %vm378, 0, %v394
  %396 = vst [vmem:[#allocation2 + $0x14] sm:$0x4] %v395
  %v397 = vld [vmem:[#allocation2 + $0x18] sm:$0x4]
  %v398 = vsel %vm378, 0, %v397
  %399 = vst [vmem:[#allocation2 + $0x18] sm:$0x4] %v398
  %v400 = vld [vmem:[#allocation2 + $0x1c] sm:$0x4]
  %v401 = vsel %vm378, 0, %v400
  %402 = vst [vmem:[#allocation2 + $0x1c] sm:$0x4] %v401
  %v403 = vld [vmem:[#allocation2 + $0x20] sm:$0x4]
  %v404 = vsel %vm378, 0, %v403
  %405 = vst [vmem:[#allocation2 + $0x20] sm:$0x4] %v404
  %v406 = vld [vmem:[#allocation2 + $0x24] sm:$0x4]
  %v407 = vsel %vm378, 0, %v406
  %408 = vst [vmem:[#allocation2 + $0x24] sm:$0x4] %v407
  %v409 = vld [vmem:[#allocation2 + $0x28] sm:$0x4]
  %v410 = vsel %vm378, 0, %v409
  %411 = vst [vmem:[#allocation2 + $0x28] sm:$0x4] %v410
  %v412 = vld [vmem:[#allocation2 + $0x2c] sm:$0x4]
  %v413 = vsel %vm378, 0, %v412
  %414 = vst [vmem:[#allocation2 + $0x2c] sm:$0x4] %v413
  %v415 = vld [vmem:[#allocation2 + $0x30] sm:$0x4]
  %v416 = vsel %vm378, 0, %v415
  %417 = vst [vmem:[#allocation2 + $0x30] sm:$0x4] %v416
  %v418 = vld [vmem:[#allocation2 + $0x34] sm:$0x4]
  %v419 = vsel %vm378, 0, %v418
  %420 = vst [vmem:[#allocation2 + $0x34] sm:$0x4] %v419
  %v421 = vld [vmem:[#allocation2 + $0x38] sm:$0x4]
  %v422 = vsel %vm378, 0, %v421
  %423 = vst [vmem:[#allocation2 + $0x38] sm:$0x4] %v422
  %v424 = vld [vmem:[#allocation2 + $0x3c] sm:$0x4]
  %v425 = vsel %vm378, 0, %v424
  %426 = vst [vmem:[#allocation2 + $0x3c] sm:$0x4] %v425
  %v427 = vld [vmem:[#allocation2 + $0x40] sm:$0x4]
  %v428 = vsel %vm378, 0, %v427
  %429 = vst [vmem:[#allocation2 + $0x40] sm:$0x4] %v428
  %v430 = vld [vmem:[#allocation2 + $0x44] sm:$0x4]
  %v431 = vsel %vm378, 0, %v430
  %432 = vst [vmem:[#allocation2 + $0x44] sm:$0x4] %v431
  %v433 = vld [vmem:[#allocation2 + $0x48] sm:$0x4]
  %v434 = vsel %vm378, 0, %v433
  %435 = vst [vmem:[#allocation2 + $0x48] sm:$0x4] %v434
  %v436 = vld [vmem:[#allocation2 + $0x4c] sm:$0x4]
  %v437 = vsel %vm378, 0, %v436
  %438 = vst [vmem:[#allocation2 + $0x4c] sm:$0x4] %v437
  %v439 = vld [vmem:[#allocation2 + $0x50] sm:$0x4]
  %v440 = vsel %vm378, 0, %v439
  %441 = vst [vmem:[#allocation2 + $0x50] sm:$0x4] %v440
  %v442 = vld [vmem:[#allocation2 + $0x54] sm:$0x4]
  %v443 = vsel %vm378, 0, %v442
  %444 = vst [vmem:[#allocation2 + $0x54] sm:$0x4] %v443
  %v445 = vld [vmem:[#allocation2 + $0x58] sm:$0x4]
  %v446 = vsel %vm378, 0, %v445
  %447 = vst [vmem:[#allocation2 + $0x58] sm:$0x4] %v446
  %v448 = vld [vmem:[#allocation2 + $0x5c] sm:$0x4]
  %v449 = vsel %vm378, 0, %v448
  %450 = vst [vmem:[#allocation2 + $0x5c] sm:$0x4] %v449
  %v451 = vld [vmem:[#allocation2 + $0x60] sm:$0x4]
  %v452 = vsel %vm378, 0, %v451
  %453 = vst [vmem:[#allocation2 + $0x60] sm:$0x4] %v452
  %v454 = vld [vmem:[#allocation2 + $0x64] sm:$0x4]
  %v455 = vsel %vm378, 0, %v454
  %456 = vst [vmem:[#allocation2 + $0x64] sm:$0x4] %v455
  %v457 = vld [vmem:[#allocation2 + $0x68] sm:$0x4]
  %v458 = vsel %vm378, 0, %v457
  %459 = vst [vmem:[#allocation2 + $0x68] sm:$0x4] %v458
  %v460 = vld [vmem:[#allocation2 + $0x6c] sm:$0x4]
  %v461 = vsel %vm378, 0, %v460
  %462 = vst [vmem:[#allocation2 + $0x6c] sm:$0x4] %v461
  %v463 = vld [vmem:[#allocation2 + $0x70] sm:$0x4]
  %v464 = vsel %vm378, 0, %v463
  %465 = vst [vmem:[#allocation2 + $0x70] sm:$0x4] %v464
  %v466 = vld [vmem:[#allocation2 + $0x74] sm:$0x4]
  %v467 = vsel %vm378, 0, %v466
  %468 = vst [vmem:[#allocation2 + $0x74] sm:$0x4] %v467
  %v469 = vld [vmem:[#allocation2 + $0x78] sm:$0x4]
  %v470 = vsel %vm378, 0, %v469
  %471 = vst [vmem:[#allocation2 + $0x78] sm:$0x4] %v470
  %v472 = vld [vmem:[#allocation2 + $0x7c] sm:$0x4]
  %v473 = vsel %vm378, 0, %v472
  %474 = vst [vmem:[#allocation2 + $0x7c] sm:$0x4] %v473
  %v475 = vld [vmem:[#allocation2 + $0x80] sm:$0x4]
  %v476 = vsel %vm378, 0, %v475
  %477 = vst [vmem:[#allocation2 + $0x80] sm:$0x4] %v476
  %v478 = vld [vmem:[#allocation2 + $0x84] sm:$0x4]
  %v479 = vsel %vm378, 0, %v478
  %480 = vst [vmem:[#allocation2 + $0x84] sm:$0x4] %v479
  %v481 = vld [vmem:[#allocation2 + $0x88] sm:$0x4]
  %v482 = vsel %vm378, 0, %v481
  %483 = vst [vmem:[#allocation2 + $0x88] sm:$0x4] %v482
  %v484 = vld [vmem:[#allocation2 + $0x8c] sm:$0x4]
  %v485 = vsel %vm378, 0, %v484
  %486 = vst [vmem:[#allocation2 + $0x8c] sm:$0x4] %v485
  %v487 = vld [vmem:[#allocation2 + $0x90] sm:$0x4]
  %v488 = vsel %vm378, 0, %v487
  %489 = vst [vmem:[#allocation2 + $0x90] sm:$0x4] %v488
  %v490 = vld [vmem:[#allocation2 + $0x94] sm:$0x4]
  %v491 = vsel %vm378, 0, %v490
  %492 = vst [vmem:[#allocation2 + $0x94] sm:$0x4] %v491
  %v493 = vld [vmem:[#allocation2 + $0x98] sm:$0x4]
  %v494 = vsel %vm378, 0, %v493
  %495 = vst [vmem:[#allocation2 + $0x98] sm:$0x4] %v494
  %v496 = vld [vmem:[#allocation2 + $0x9c] sm:$0x4]
  %v497 = vsel %vm378, 0, %v496
  %498 = vst [vmem:[#allocation2 + $0x9c] sm:$0x4] %v497
  %v504 = vcombine.high %v197, %v197
  %v506 = vunpack.c.l.s4 1966171168
  %v507 = vunpack.c.0.s8 %v506
  %v508 = vlaneseq
  %v509 = vshrl.u32 %v508, 7
  %v510 = vsub.s32 %v507, %v509
  %v511 = vrot.slane %v197, %v510
  %v513 = vunpack.c.l.s4 1966171168
  %v514 = vunpack.c.0.s8 %v513
  %v515 = vlaneseq
  %v516 = vshrl.u32 %v515, 7
  %v517 = vsub.s32 %v514, %v516
  %v518 = vrot.slane %v504, %v517
  %v519 = vcombine.high %v511, %v511
  %v520 = vcombine.high %v518, %v518
  %v522 = vunpack.c.l.s4 1966171168
  %v523 = vunpack.c.0.s8 %v522
  %v524 = vlaneseq
  %v525 = vshrl.u32 %v524, 7
  %v526 = vsub.s32 %v523, %v525
  %v527 = vrot.slane %v511, %v526
  %v529 = vunpack.c.l.s4 1966171168
  %v530 = vunpack.c.0.s8 %v529
  %v531 = vlaneseq
  %v532 = vshrl.u32 %v531, 7
  %v533 = vsub.s32 %v530, %v532
  %v534 = vrot.slane %v518, %v533
  %v536 = vunpack.c.l.s4 1966171168
  %v537 = vunpack.c.0.s8 %v536
  %v538 = vlaneseq
  %v539 = vshrl.u32 %v538, 7
  %v540 = vsub.s32 %v537, %v539
  %v541 = vrot.slane %v519, %v540
  %v543 = vunpack.c.l.s4 1966171168
  %v544 = vunpack.c.0.s8 %v543
  %v545 = vlaneseq
  %v546 = vshrl.u32 %v545, 7
  %v547 = vsub.s32 %v544, %v546
  %v548 = vrot.slane %v520, %v547
  %v549 = vcombine.high %v527, %v527
  %v550 = vcombine.high %v534, %v534
  %v551 = vcombine.high %v541, %v541
  %v552 = vcombine.high %v548, %v548
  %v553 = vcombine.high %v198, %v198
  %v555 = vunpack.c.l.s4 1966171168
  %v556 = vunpack.c.0.s8 %v555
  %v557 = vlaneseq
  %v558 = vshrl.u32 %v557, 7
  %v559 = vsub.s32 %v556, %v558
  %v560 = vrot.slane %v198, %v559
  %v562 = vunpack.c.l.s4 1966171168
  %v563 = vunpack.c.0.s8 %v562
  %v564 = vlaneseq
  %v565 = vshrl.u32 %v564, 7
  %v566 = vsub.s32 %v563, %v565
  %v567 = vrot.slane %v553, %v566
  %v568 = vcombine.high %v560, %v560
  %v569 = vcombine.high %v567, %v567
  %v571 = vunpack.c.l.s4 1966171168
  %v572 = vunpack.c.0.s8 %v571
  %v573 = vlaneseq
  %v574 = vshrl.u32 %v573, 7
  %v575 = vsub.s32 %v572, %v574
  %v576 = vrot.slane %v560, %v575
  %v578 = vunpack.c.l.s4 1966171168
  %v579 = vunpack.c.0.s8 %v578
  %v580 = vlaneseq
  %v581 = vshrl.u32 %v580, 7
  %v582 = vsub.s32 %v579, %v581
  %v583 = vrot.slane %v567, %v582
  %v585 = vunpack.c.l.s4 1966171168
  %v586 = vunpack.c.0.s8 %v585
  %v587 = vlaneseq
  %v588 = vshrl.u32 %v587, 7
  %v589 = vsub.s32 %v586, %v588
  %v590 = vrot.slane %v568, %v589
  %v592 = vunpack.c.l.s4 1966171168
  %v593 = vunpack.c.0.s8 %v592
  %v594 = vlaneseq
  %v595 = vshrl.u32 %v594, 7
  %v596 = vsub.s32 %v593, %v595
  %v597 = vrot.slane %v569, %v596
  %v598 = vcombine.high %v576, %v576
  %v599 = vcombine.high %v583, %v583
  %v600 = vcombine.high %v590, %v590
  %v601 = vcombine.high %v597, %v597
  %v602 = vcombine.high %v199, %v199
  %v604 = vunpack.c.l.s4 1966171168
  %v605 = vunpack.c.0.s8 %v604
  %v606 = vlaneseq
  %v607 = vshrl.u32 %v606, 7
  %v608 = vsub.s32 %v605, %v607
  %v609 = vrot.slane %v199, %v608
  %v611 = vunpack.c.l.s4 1966171168
  %v612 = vunpack.c.0.s8 %v611
  %v613 = vlaneseq
  %v614 = vshrl.u32 %v613, 7
  %v615 = vsub.s32 %v612, %v614
  %v616 = vrot.slane %v602, %v615
  %v617 = vcombine.high %v609, %v609
  %v618 = vcombine.high %v616, %v616
  %v620 = vunpack.c.l.s4 1966171168
  %v621 = vunpack.c.0.s8 %v620
  %v622 = vlaneseq
  %v623 = vshrl.u32 %v622, 7
  %v624 = vsub.s32 %v621, %v623
  %v625 = vrot.slane %v609, %v624
  %v627 = vunpack.c.l.s4 1966171168
  %v628 = vunpack.c.0.s8 %v627
  %v629 = vlaneseq
  %v630 = vshrl.u32 %v629, 7
  %v631 = vsub.s32 %v628, %v630
  %v632 = vrot.slane %v616, %v631
  %v634 = vunpack.c.l.s4 1966171168
  %v635 = vunpack.c.0.s8 %v634
  %v636 = vlaneseq
  %v637 = vshrl.u32 %v636, 7
  %v638 = vsub.s32 %v635, %v637
  %v639 = vrot.slane %v617, %v638
  %v641 = vunpack.c.l.s4 1966171168
  %v642 = vunpack.c.0.s8 %v641
  %v643 = vlaneseq
  %v644 = vshrl.u32 %v643, 7
  %v645 = vsub.s32 %v642, %v644
  %v646 = vrot.slane %v618, %v645
  %v647 = vcombine.high %v625, %v625
  %v648 = vcombine.high %v632, %v632
  %v649 = vcombine.high %v639, %v639
  %v650 = vcombine.high %v646, %v646
  %v651 = vcombine.high %v200, %v200
  %v653 = vunpack.c.l.s4 1966171168
  %v654 = vunpack.c.0.s8 %v653
  %v655 = vlaneseq
  %v656 = vshrl.u32 %v655, 7
  %v657 = vsub.s32 %v654, %v656
  %v658 = vrot.slane %v200, %v657
  %v660 = vunpack.c.l.s4 1966171168
  %v661 = vunpack.c.0.s8 %v660
  %v662 = vlaneseq
  %v663 = vshrl.u32 %v662, 7
  %v664 = vsub.s32 %v661, %v663
  %v665 = vrot.slane %v651, %v664
  %v666 = vcombine.high %v658, %v658
  %v667 = vcombine.high %v665, %v665
  %v669 = vunpack.c.l.s4 1966171168
  %v670 = vunpack.c.0.s8 %v669
  %v671 = vlaneseq
  %v672 = vshrl.u32 %v671, 7
  %v673 = vsub.s32 %v670, %v672
  %v674 = vrot.slane %v658, %v673
  %v676 = vunpack.c.l.s4 1966171168
  %v677 = vunpack.c.0.s8 %v676
  %v678 = vlaneseq
  %v679 = vshrl.u32 %v678, 7
  %v680 = vsub.s32 %v677, %v679
  %v681 = vrot.slane %v665, %v680
  %v683 = vunpack.c.l.s4 1966171168
  %v684 = vunpack.c.0.s8 %v683
  %v685 = vlaneseq
  %v686 = vshrl.u32 %v685, 7
  %v687 = vsub.s32 %v684, %v686
  %v688 = vrot.slane %v666, %v687
  %v690 = vunpack.c.l.s4 1966171168
  %v691 = vunpack.c.0.s8 %v690
  %v692 = vlaneseq
  %v693 = vshrl.u32 %v692, 7
  %v694 = vsub.s32 %v691, %v693
  %v695 = vrot.slane %v667, %v694
  %v696 = vcombine.high %v674, %v674
  %v697 = vcombine.high %v681, %v681
  %v698 = vcombine.high %v688, %v688
  %v699 = vcombine.high %v695, %v695
  %v701 = vunpack.c.l.s4 1966171168
  %v702 = vunpack.c.0.s8 %v701
  %v703 = vlaneseq
  %v704 = vshrl.u32 %v703, 7
  %v705 = vsub.s32 %v702, %v704
  %v706 = vrot.slane %v201, %v705
  %v707 = vcombine.high %v706, %v706
  %v709 = vunpack.c.l.s4 1966171168
  %v710 = vunpack.c.0.s8 %v709
  %v711 = vlaneseq
  %v712 = vshrl.u32 %v711, 7
  %v713 = vsub.s32 %v710, %v712
  %v714 = vrot.slane %v706, %v713
  %v716 = vunpack.c.l.s4 1966171168
  %v717 = vunpack.c.0.s8 %v716
  %v718 = vlaneseq
  %v719 = vshrl.u32 %v718, 7
  %v720 = vsub.s32 %v717, %v719
  %v721 = vrot.slane %v707, %v720
  %v722 = vcombine.high %v714, %v714
  %v723 = vcombine.high %v721, %v721
  %v724 = vunpack.i.l.s16 %v527
  %v725 = vunpack.i.h.s16 %v527
  %v726 = vunpack.i.l.s16 %v541
  %v727 = vunpack.i.h.s16 %v541
  %v728 = vunpack.i.l.s16 %v549
  %v729 = vunpack.i.h.s16 %v549
  %v730 = vunpack.i.l.s16 %v551
  %v731 = vunpack.i.h.s16 %v551
  %v732 = vunpack.i.l.s16 %v534
  %v733 = vunpack.i.h.s16 %v534
  %v734 = vunpack.i.l.s16 %v548
  %v735 = vunpack.i.h.s16 %v548
  %v736 = vunpack.i.l.s16 %v550
  %v737 = vunpack.i.h.s16 %v550
  %v738 = vunpack.i.l.s16 %v552
  %v739 = vunpack.i.h.s16 %v552
  %v740 = vunpack.i.l.s16 %v576
  %v741 = vunpack.i.h.s16 %v576
  %v742 = vunpack.i.l.s16 %v590
  %v743 = vunpack.i.h.s16 %v590
  %v744 = vunpack.i.l.s16 %v598
  %v745 = vunpack.i.h.s16 %v598
  %v746 = vunpack.i.l.s16 %v600
  %v747 = vunpack.i.h.s16 %v600
  %v748 = vunpack.i.l.s16 %v583
  %v749 = vunpack.i.h.s16 %v583
  %v750 = vunpack.i.l.s16 %v597
  %v751 = vunpack.i.h.s16 %v597
  %v752 = vunpack.i.l.s16 %v599
  %v753 = vunpack.i.h.s16 %v599
  %v754 = vunpack.i.l.s16 %v601
  %v755 = vunpack.i.h.s16 %v601
  %v756 = vunpack.i.l.s16 %v625
  %v757 = vunpack.i.h.s16 %v625
  %v758 = vunpack.i.l.s16 %v639
  %v759 = vunpack.i.h.s16 %v639
  %v760 = vunpack.i.l.s16 %v647
  %v761 = vunpack.i.h.s16 %v647
  %v762 = vunpack.i.l.s16 %v649
  %v763 = vunpack.i.h.s16 %v649
  %v764 = vunpack.i.l.s16 %v632
  %v765 = vunpack.i.h.s16 %v632
  %v766 = vunpack.i.l.s16 %v646
  %v767 = vunpack.i.h.s16 %v646
  %v768 = vunpack.i.l.s16 %v648
  %v769 = vunpack.i.h.s16 %v648
  %v770 = vunpack.i.l.s16 %v650
  %v771 = vunpack.i.h.s16 %v650
  %v772 = vunpack.i.l.s16 %v674
  %v773 = vunpack.i.h.s16 %v674
  %v774 = vunpack.i.l.s16 %v688
  %v775 = vunpack.i.h.s16 %v688
  %v776 = vunpack.i.l.s16 %v696
  %v777 = vunpack.i.h.s16 %v696
  %v778 = vunpack.i.l.s16 %v698
  %v779 = vunpack.i.h.s16 %v698
  %v780 = vunpack.i.l.s16 %v681
  %v781 = vunpack.i.h.s16 %v681
  %v782 = vunpack.i.l.s16 %v695
  %v783 = vunpack.i.h.s16 %v695
  %v784 = vunpack.i.l.s16 %v697
  %v785 = vunpack.i.h.s16 %v697
  %v786 = vunpack.i.l.s16 %v699
  %v787 = vunpack.i.h.s16 %v699
  %v788 = vunpack.i.l.s16 %v714
  %v789 = vunpack.i.h.s16 %v714
  %v790 = vunpack.i.l.s16 %v721
  %v791 = vunpack.i.h.s16 %v721
  %v792 = vunpack.i.l.s16 %v722
  %v793 = vunpack.i.h.s16 %v722
  %v794 = vunpack.i.l.s16 %v723
  %v795 = vunpack.i.h.s16 %v723
  %v796 = vpack.i.b16 %v724, %v724
  %v797 = vpack.i.b16 %v726, %v725
  %v798 = vpack.i.b16 %v727, %v727
  %v799 = vpack.i.b16 %v729, %v728
  %v800 = vpack.i.b16 %v730, %v730
  %v801 = vpack.i.b16 %v732, %v731
  %v802 = vpack.i.b16 %v733, %v733
  %v803 = vpack.i.b16 %v735, %v734
  %v804 = vpack.i.b16 %v736, %v736
  %v805 = vpack.i.b16 %v738, %v737
  %v806 = vpack.i.b16 %v739, %v739
  %v807 = vpack.i.b16 %v741, %v740
  %v808 = vpack.i.b16 %v742, %v742
  %v809 = vpack.i.b16 %v744, %v743
  %v810 = vpack.i.b16 %v745, %v745
  %v811 = vpack.i.b16 %v747, %v746
  %v812 = vpack.i.b16 %v748, %v748
  %v813 = vpack.i.b16 %v750, %v749
  %v814 = vpack.i.b16 %v751, %v751
  %v815 = vpack.i.b16 %v753, %v752
  %v816 = vpack.i.b16 %v754, %v754
  %v817 = vpack.i.b16 %v756, %v755
  %v818 = vpack.i.b16 %v757, %v757
  %v819 = vpack.i.b16 %v759, %v758
  %v820 = vpack.i.b16 %v760, %v760
  %v821 = vpack.i.b16 %v762, %v761
  %v822 = vpack.i.b16 %v763, %v763
  %v823 = vpack.i.b16 %v765, %v764
  %v824 = vpack.i.b16 %v766, %v766
  %v825 = vpack.i.b16 %v768, %v767
  %v826 = vpack.i.b16 %v769, %v769
  %v827 = vpack.i.b16 %v771, %v770
  %v828 = vpack.i.b16 %v772, %v772
  %v829 = vpack.i.b16 %v774, %v773
  %v830 = vpack.i.b16 %v775, %v775
  %v831 = vpack.i.b16 %v777, %v776
  %v832 = vpack.i.b16 %v778, %v778
  %v833 = vpack.i.b16 %v780, %v779
  %v834 = vpack.i.b16 %v781, %v781
  %v835 = vpack.i.b16 %v783, %v782
  %v836 = vpack.i.b16 %v784, %v784
  %v837 = vpack.i.b16 %v786, %v785
  %v838 = vpack.i.b16 %v787, %v787
  %v839 = vpack.i.b16 %v789, %v788
  %v840 = vpack.i.b16 %v790, %v790
  %v841 = vpack.i.b16 %v792, %v791
  %v842 = vpack.i.b16 %v793, %v793
  %v843 = vpack.i.b16 %v795, %v794
  %v845 = vunpack.c.l.s4 1935823168
  %v846 = vunpack.c.0.s8 %v845
  %v847 = vlaneseq
  %v848 = vshrl.u32 %v847, 7
  %v849 = vsub.s32 %v846, %v848
  %v850 = vrot.slane %v796, %v849
  %v852 = vunpack.c.l.s4 1935823168
  %v853 = vunpack.c.0.s8 %v852
  %v854 = vlaneseq
  %v855 = vshrl.u32 %v854, 7
  %v856 = vsub.s32 %v853, %v855
  %v857 = vrot.slane %v797, %v856
  %v858 = vcombine.low %v850, %v857
  %v860 = vunpack.c.l.s4 1935823168
  %v861 = vunpack.c.0.s8 %v860
  %v862 = vlaneseq
  %v863 = vshrl.u32 %v862, 7
  %v864 = vsub.s32 %v861, %v863
  %v865 = vrot.slane %v858, %v864
  %v867 = vunpack.c.l.s4 1935823168
  %v868 = vunpack.c.0.s8 %v867
  %v869 = vlaneseq
  %v870 = vshrl.u32 %v869, 7
  %v871 = vsub.s32 %v868, %v870
  %v872 = vrot.slane %v798, %v871
  %v874 = vunpack.c.l.s4 1935823168
  %v875 = vunpack.c.0.s8 %v874
  %v876 = vlaneseq
  %v877 = vshrl.u32 %v876, 7
  %v878 = vsub.s32 %v875, %v877
  %v879 = vrot.slane %v799, %v878
  %v880 = vcombine.low %v872, %v879
  %v882 = vunpack.c.l.s4 1935823168
  %v883 = vunpack.c.0.s8 %v882
  %v884 = vlaneseq
  %v885 = vshrl.u32 %v884, 7
  %v886 = vsub.s32 %v883, %v885
  %v887 = vrot.slane %v880, %v886
  %v889 = vunpack.c.l.s4 1935823168
  %v890 = vunpack.c.0.s8 %v889
  %v891 = vlaneseq
  %v892 = vshrl.u32 %v891, 7
  %v893 = vsub.s32 %v890, %v892
  %v894 = vrot.slane %v800, %v893
  %v896 = vunpack.c.l.s4 1935823168
  %v897 = vunpack.c.0.s8 %v896
  %v898 = vlaneseq
  %v899 = vshrl.u32 %v898, 7
  %v900 = vsub.s32 %v897, %v899
  %v901 = vrot.slane %v801, %v900
  %v902 = vcombine.low %v894, %v901
  %v904 = vunpack.c.l.s4 1935823168
  %v905 = vunpack.c.0.s8 %v904
  %v906 = vlaneseq
  %v907 = vshrl.u32 %v906, 7
  %v908 = vsub.s32 %v905, %v907
  %v909 = vrot.slane %v902, %v908
  %v911 = vunpack.c.l.s4 1935823168
  %v912 = vunpack.c.0.s8 %v911
  %v913 = vlaneseq
  %v914 = vshrl.u32 %v913, 7
  %v915 = vsub.s32 %v912, %v914
  %v916 = vrot.slane %v802, %v915
  %v918 = vunpack.c.l.s4 1935823168
  %v919 = vunpack.c.0.s8 %v918
  %v920 = vlaneseq
  %v921 = vshrl.u32 %v920, 7
  %v922 = vsub.s32 %v919, %v921
  %v923 = vrot.slane %v803, %v922
  %v924 = vcombine.low %v916, %v923
  %v926 = vunpack.c.l.s4 1935823168
  %v927 = vunpack.c.0.s8 %v926
  %v928 = vlaneseq
  %v929 = vshrl.u32 %v928, 7
  %v930 = vsub.s32 %v927, %v929
  %v931 = vrot.slane %v924, %v930
  %v933 = vunpack.c.l.s4 1935823168
  %v934 = vunpack.c.0.s8 %v933
  %v935 = vlaneseq
  %v936 = vshrl.u32 %v935, 7
  %v937 = vsub.s32 %v934, %v936
  %v938 = vrot.slane %v804, %v937
  %v940 = vunpack.c.l.s4 1935823168
  %v941 = vunpack.c.0.s8 %v940
  %v942 = vlaneseq
  %v943 = vshrl.u32 %v942, 7
  %v944 = vsub.s32 %v941, %v943
  %v945 = vrot.slane %v805, %v944
  %v946 = vcombine.low %v938, %v945
  %v948 = vunpack.c.l.s4 1935823168
  %v949 = vunpack.c.0.s8 %v948
  %v950 = vlaneseq
  %v951 = vshrl.u32 %v950, 7
  %v952 = vsub.s32 %v949, %v951
  %v953 = vrot.slane %v946, %v952
  %v955 = vunpack.c.l.s4 1935823168
  %v956 = vunpack.c.0.s8 %v955
  %v957 = vlaneseq
  %v958 = vshrl.u32 %v957, 7
  %v959 = vsub.s32 %v956, %v958
  %v960 = vrot.slane %v806, %v959
  %v962 = vunpack.c.l.s4 1935823168
  %v963 = vunpack.c.0.s8 %v962
  %v964 = vlaneseq
  %v965 = vshrl.u32 %v964, 7
  %v966 = vsub.s32 %v963, %v965
  %v967 = vrot.slane %v807, %v966
  %v968 = vcombine.low %v960, %v967
  %v970 = vunpack.c.l.s4 1935823168
  %v971 = vunpack.c.0.s8 %v970
  %v972 = vlaneseq
  %v973 = vshrl.u32 %v972, 7
  %v974 = vsub.s32 %v971, %v973
  %v975 = vrot.slane %v968, %v974
  %v977 = vunpack.c.l.s4 1935823168
  %v978 = vunpack.c.0.s8 %v977
  %v979 = vlaneseq
  %v980 = vshrl.u32 %v979, 7
  %v981 = vsub.s32 %v978, %v980
  %v982 = vrot.slane %v808, %v981
  %v984 = vunpack.c.l.s4 1935823168
  %v985 = vunpack.c.0.s8 %v984
  %v986 = vlaneseq
  %v987 = vshrl.u32 %v986, 7
  %v988 = vsub.s32 %v985, %v987
  %v989 = vrot.slane %v809, %v988
  %v990 = vcombine.low %v982, %v989
  %v992 = vunpack.c.l.s4 1935823168
  %v993 = vunpack.c.0.s8 %v992
  %v994 = vlaneseq
  %v995 = vshrl.u32 %v994, 7
  %v996 = vsub.s32 %v993, %v995
  %v997 = vrot.slane %v990, %v996
  %v999 = vunpack.c.l.s4 1935823168
  %v1000 = vunpack.c.0.s8 %v999
  %v1001 = vlaneseq
  %v1002 = vshrl.u32 %v1001, 7
  %v1003 = vsub.s32 %v1000, %v1002
  %v1004 = vrot.slane %v810, %v1003
  %v1006 = vunpack.c.l.s4 1935823168
  %v1007 = vunpack.c.0.s8 %v1006
  %v1008 = vlaneseq
  %v1009 = vshrl.u32 %v1008, 7
  %v1010 = vsub.s32 %v1007, %v1009
  %v1011 = vrot.slane %v811, %v1010
  %v1012 = vcombine.low %v1004, %v1011
  %v1014 = vunpack.c.l.s4 1935823168
  %v1015 = vunpack.c.0.s8 %v1014
  %v1016 = vlaneseq
  %v1017 = vshrl.u32 %v1016, 7
  %v1018 = vsub.s32 %v1015, %v1017
  %v1019 = vrot.slane %v1012, %v1018
  %v1021 = vunpack.c.l.s4 1935823168
  %v1022 = vunpack.c.0.s8 %v1021
  %v1023 = vlaneseq
  %v1024 = vshrl.u32 %v1023, 7
  %v1025 = vsub.s32 %v1022, %v1024
  %v1026 = vrot.slane %v812, %v1025
  %v1028 = vunpack.c.l.s4 1935823168
  %v1029 = vunpack.c.0.s8 %v1028
  %v1030 = vlaneseq
  %v1031 = vshrl.u32 %v1030, 7
  %v1032 = vsub.s32 %v1029, %v1031
  %v1033 = vrot.slane %v813, %v1032
  %v1034 = vcombine.low %v1026, %v1033
  %v1036 = vunpack.c.l.s4 1935823168
  %v1037 = vunpack.c.0.s8 %v1036
  %v1038 = vlaneseq
  %v1039 = vshrl.u32 %v1038, 7
  %v1040 = vsub.s32 %v1037, %v1039
  %v1041 = vrot.slane %v1034, %v1040
  %v1043 = vunpack.c.l.s4 1935823168
  %v1044 = vunpack.c.0.s8 %v1043
  %v1045 = vlaneseq
  %v1046 = vshrl.u32 %v1045, 7
  %v1047 = vsub.s32 %v1044, %v1046
  %v1048 = vrot.slane %v814, %v1047
  %v1050 = vunpack.c.l.s4 1935823168
  %v1051 = vunpack.c.0.s8 %v1050
  %v1052 = vlaneseq
  %v1053 = vshrl.u32 %v1052, 7
  %v1054 = vsub.s32 %v1051, %v1053
  %v1055 = vrot.slane %v815, %v1054
  %v1056 = vcombine.low %v1048, %v1055
  %v1058 = vunpack.c.l.s4 1935823168
  %v1059 = vunpack.c.0.s8 %v1058
  %v1060 = vlaneseq
  %v1061 = vshrl.u32 %v1060, 7
  %v1062 = vsub.s32 %v1059, %v1061
  %v1063 = vrot.slane %v1056, %v1062
  %v1065 = vunpack.c.l.s4 1935823168
  %v1066 = vunpack.c.0.s8 %v1065
  %v1067 = vlaneseq
  %v1068 = vshrl.u32 %v1067, 7
  %v1069 = vsub.s32 %v1066, %v1068
  %v1070 = vrot.slane %v816, %v1069
  %v1072 = vunpack.c.l.s4 1935823168
  %v1073 = vunpack.c.0.s8 %v1072
  %v1074 = vlaneseq
  %v1075 = vshrl.u32 %v1074, 7
  %v1076 = vsub.s32 %v1073, %v1075
  %v1077 = vrot.slane %v817, %v1076
  %v1078 = vcombine.low %v1070, %v1077
  %v1080 = vunpack.c.l.s4 1935823168
  %v1081 = vunpack.c.0.s8 %v1080
  %v1082 = vlaneseq
  %v1083 = vshrl.u32 %v1082, 7
  %v1084 = vsub.s32 %v1081, %v1083
  %v1085 = vrot.slane %v1078, %v1084
  %v1087 = vunpack.c.l.s4 1935823168
  %v1088 = vunpack.c.0.s8 %v1087
  %v1089 = vlaneseq
  %v1090 = vshrl.u32 %v1089, 7
  %v1091 = vsub.s32 %v1088, %v1090
  %v1092 = vrot.slane %v818, %v1091
  %v1094 = vunpack.c.l.s4 1935823168
  %v1095 = vunpack.c.0.s8 %v1094
  %v1096 = vlaneseq
  %v1097 = vshrl.u32 %v1096, 7
  %v1098 = vsub.s32 %v1095, %v1097
  %v1099 = vrot.slane %v819, %v1098
  %v1100 = vcombine.low %v1092, %v1099
  %v1102 = vunpack.c.l.s4 1935823168
  %v1103 = vunpack.c.0.s8 %v1102
  %v1104 = vlaneseq
  %v1105 = vshrl.u32 %v1104, 7
  %v1106 = vsub.s32 %v1103, %v1105
  %v1107 = vrot.slane %v1100, %v1106
  %v1109 = vunpack.c.l.s4 1935823168
  %v1110 = vunpack.c.0.s8 %v1109
  %v1111 = vlaneseq
  %v1112 = vshrl.u32 %v1111, 7
  %v1113 = vsub.s32 %v1110, %v1112
  %v1114 = vrot.slane %v820, %v1113
  %v1116 = vunpack.c.l.s4 1935823168
  %v1117 = vunpack.c.0.s8 %v1116
  %v1118 = vlaneseq
  %v1119 = vshrl.u32 %v1118, 7
  %v1120 = vsub.s32 %v1117, %v1119
  %v1121 = vrot.slane %v821, %v1120
  %v1122 = vcombine.low %v1114, %v1121
  %v1124 = vunpack.c.l.s4 1935823168
  %v1125 = vunpack.c.0.s8 %v1124
  %v1126 = vlaneseq
  %v1127 = vshrl.u32 %v1126, 7
  %v1128 = vsub.s32 %v1125, %v1127
  %v1129 = vrot.slane %v1122, %v1128
  %v1131 = vunpack.c.l.s4 1935823168
  %v1132 = vunpack.c.0.s8 %v1131
  %v1133 = vlaneseq
  %v1134 = vshrl.u32 %v1133, 7
  %v1135 = vsub.s32 %v1132, %v1134
  %v1136 = vrot.slane %v822, %v1135
  %v1138 = vunpack.c.l.s4 1935823168
  %v1139 = vunpack.c.0.s8 %v1138
  %v1140 = vlaneseq
  %v1141 = vshrl.u32 %v1140, 7
  %v1142 = vsub.s32 %v1139, %v1141
  %v1143 = vrot.slane %v823, %v1142
  %v1144 = vcombine.low %v1136, %v1143
  %v1146 = vunpack.c.l.s4 1935823168
  %v1147 = vunpack.c.0.s8 %v1146
  %v1148 = vlaneseq
  %v1149 = vshrl.u32 %v1148, 7
  %v1150 = vsub.s32 %v1147, %v1149
  %v1151 = vrot.slane %v1144, %v1150
  %v1153 = vunpack.c.l.s4 1935823168
  %v1154 = vunpack.c.0.s8 %v1153
  %v1155 = vlaneseq
  %v1156 = vshrl.u32 %v1155, 7
  %v1157 = vsub.s32 %v1154, %v1156
  %v1158 = vrot.slane %v824, %v1157
  %v1160 = vunpack.c.l.s4 1935823168
  %v1161 = vunpack.c.0.s8 %v1160
  %v1162 = vlaneseq
  %v1163 = vshrl.u32 %v1162, 7
  %v1164 = vsub.s32 %v1161, %v1163
  %v1165 = vrot.slane %v825, %v1164
  %v1166 = vcombine.low %v1158, %v1165
  %v1168 = vunpack.c.l.s4 1935823168
  %v1169 = vunpack.c.0.s8 %v1168
  %v1170 = vlaneseq
  %v1171 = vshrl.u32 %v1170, 7
  %v1172 = vsub.s32 %v1169, %v1171
  %v1173 = vrot.slane %v1166, %v1172
  %v1175 = vunpack.c.l.s4 1935823168
  %v1176 = vunpack.c.0.s8 %v1175
  %v1177 = vlaneseq
  %v1178 = vshrl.u32 %v1177, 7
  %v1179 = vsub.s32 %v1176, %v1178
  %v1180 = vrot.slane %v826, %v1179
  %v1182 = vunpack.c.l.s4 1935823168
  %v1183 = vunpack.c.0.s8 %v1182
  %v1184 = vlaneseq
  %v1185 = vshrl.u32 %v1184, 7
  %v1186 = vsub.s32 %v1183, %v1185
  %v1187 = vrot.slane %v827, %v1186
  %v1188 = vcombine.low %v1180, %v1187
  %v1190 = vunpack.c.l.s4 1935823168
  %v1191 = vunpack.c.0.s8 %v1190
  %v1192 = vlaneseq
  %v1193 = vshrl.u32 %v1192, 7
  %v1194 = vsub.s32 %v1191, %v1193
  %v1195 = vrot.slane %v1188, %v1194
  %v1197 = vunpack.c.l.s4 1935823168
  %v1198 = vunpack.c.0.s8 %v1197
  %v1199 = vlaneseq
  %v1200 = vshrl.u32 %v1199, 7
  %v1201 = vsub.s32 %v1198, %v1200
  %v1202 = vrot.slane %v828, %v1201
  %v1204 = vunpack.c.l.s4 1935823168
  %v1205 = vunpack.c.0.s8 %v1204
  %v1206 = vlaneseq
  %v1207 = vshrl.u32 %v1206, 7
  %v1208 = vsub.s32 %v1205, %v1207
  %v1209 = vrot.slane %v829, %v1208
  %v1210 = vcombine.low %v1202, %v1209
  %v1212 = vunpack.c.l.s4 1935823168
  %v1213 = vunpack.c.0.s8 %v1212
  %v1214 = vlaneseq
  %v1215 = vshrl.u32 %v1214, 7
  %v1216 = vsub.s32 %v1213, %v1215
  %v1217 = vrot.slane %v1210, %v1216
  %v1219 = vunpack.c.l.s4 1935823168
  %v1220 = vunpack.c.0.s8 %v1219
  %v1221 = vlaneseq
  %v1222 = vshrl.u32 %v1221, 7
  %v1223 = vsub.s32 %v1220, %v1222
  %v1224 = vrot.slane %v830, %v1223
  %v1226 = vunpack.c.l.s4 1935823168
  %v1227 = vunpack.c.0.s8 %v1226
  %v1228 = vlaneseq
  %v1229 = vshrl.u32 %v1228, 7
  %v1230 = vsub.s32 %v1227, %v1229
  %v1231 = vrot.slane %v831, %v1230
  %v1232 = vcombine.low %v1224, %v1231
  %v1234 = vunpack.c.l.s4 1935823168
  %v1235 = vunpack.c.0.s8 %v1234
  %v1236 = vlaneseq
  %v1237 = vshrl.u32 %v1236, 7
  %v1238 = vsub.s32 %v1235, %v1237
  %v1239 = vrot.slane %v1232, %v1238
  %v1241 = vunpack.c.l.s4 1935823168
  %v1242 = vunpack.c.0.s8 %v1241
  %v1243 = vlaneseq
  %v1244 = vshrl.u32 %v1243, 7
  %v1245 = vsub.s32 %v1242, %v1244
  %v1246 = vrot.slane %v832, %v1245
  %v1248 = vunpack.c.l.s4 1935823168
  %v1249 = vunpack.c.0.s8 %v1248
  %v1250 = vlaneseq
  %v1251 = vshrl.u32 %v1250, 7
  %v1252 = vsub.s32 %v1249, %v1251
  %v1253 = vrot.slane %v833, %v1252
  %v1254 = vcombine.low %v1246, %v1253
  %v1256 = vunpack.c.l.s4 1935823168
  %v1257 = vunpack.c.0.s8 %v1256
  %v1258 = vlaneseq
  %v1259 = vshrl.u32 %v1258, 7
  %v1260 = vsub.s32 %v1257, %v1259
  %v1261 = vrot.slane %v1254, %v1260
  %v1263 = vunpack.c.l.s4 1935823168
  %v1264 = vunpack.c.0.s8 %v1263
  %v1265 = vlaneseq
  %v1266 = vshrl.u32 %v1265, 7
  %v1267 = vsub.s32 %v1264, %v1266
  %v1268 = vrot.slane %v834, %v1267
  %v1270 = vunpack.c.l.s4 1935823168
  %v1271 = vunpack.c.0.s8 %v1270
  %v1272 = vlaneseq
  %v1273 = vshrl.u32 %v1272, 7
  %v1274 = vsub.s32 %v1271, %v1273
  %v1275 = vrot.slane %v835, %v1274
  %v1276 = vcombine.low %v1268, %v1275
  %v1278 = vunpack.c.l.s4 1935823168
  %v1279 = vunpack.c.0.s8 %v1278
  %v1280 = vlaneseq
  %v1281 = vshrl.u32 %v1280, 7
  %v1282 = vsub.s32 %v1279, %v1281
  %v1283 = vrot.slane %v1276, %v1282
  %v1285 = vunpack.c.l.s4 1935823168
  %v1286 = vunpack.c.0.s8 %v1285
  %v1287 = vlaneseq
  %v1288 = vshrl.u32 %v1287, 7
  %v1289 = vsub.s32 %v1286, %v1288
  %v1290 = vrot.slane %v836, %v1289
  %v1292 = vunpack.c.l.s4 1935823168
  %v1293 = vunpack.c.0.s8 %v1292
  %v1294 = vlaneseq
  %v1295 = vshrl.u32 %v1294, 7
  %v1296 = vsub.s32 %v1293, %v1295
  %v1297 = vrot.slane %v837, %v1296
  %v1298 = vcombine.low %v1290, %v1297
  %v1300 = vunpack.c.l.s4 1935823168
  %v1301 = vunpack.c.0.s8 %v1300
  %v1302 = vlaneseq
  %v1303 = vshrl.u32 %v1302, 7
  %v1304 = vsub.s32 %v1301, %v1303
  %v1305 = vrot.slane %v1298, %v1304
  %v1307 = vunpack.c.l.s4 1935823168
  %v1308 = vunpack.c.0.s8 %v1307
  %v1309 = vlaneseq
  %v1310 = vshrl.u32 %v1309, 7
  %v1311 = vsub.s32 %v1308, %v1310
  %v1312 = vrot.slane %v838, %v1311
  %v1314 = vunpack.c.l.s4 1935823168
  %v1315 = vunpack.c.0.s8 %v1314
  %v1316 = vlaneseq
  %v1317 = vshrl.u32 %v1316, 7
  %v1318 = vsub.s32 %v1315, %v1317
  %v1319 = vrot.slane %v839, %v1318
  %v1320 = vcombine.low %v1312, %v1319
  %v1322 = vunpack.c.l.s4 1935823168
  %v1323 = vunpack.c.0.s8 %v1322
  %v1324 = vlaneseq
  %v1325 = vshrl.u32 %v1324, 7
  %v1326 = vsub.s32 %v1323, %v1325
  %v1327 = vrot.slane %v1320, %v1326
  %v1329 = vunpack.c.l.s4 1935823168
  %v1330 = vunpack.c.0.s8 %v1329
  %v1331 = vlaneseq
  %v1332 = vshrl.u32 %v1331, 7
  %v1333 = vsub.s32 %v1330, %v1332
  %v1334 = vrot.slane %v840, %v1333
  %v1336 = vunpack.c.l.s4 1935823168
  %v1337 = vunpack.c.0.s8 %v1336
  %v1338 = vlaneseq
  %v1339 = vshrl.u32 %v1338, 7
  %v1340 = vsub.s32 %v1337, %v1339
  %v1341 = vrot.slane %v841, %v1340
  %v1342 = vcombine.low %v1334, %v1341
  %v1344 = vunpack.c.l.s4 1935823168
  %v1345 = vunpack.c.0.s8 %v1344
  %v1346 = vlaneseq
  %v1347 = vshrl.u32 %v1346, 7
  %v1348 = vsub.s32 %v1345, %v1347
  %v1349 = vrot.slane %v1342, %v1348
  %v1351 = vunpack.c.l.s4 1935823168
  %v1352 = vunpack.c.0.s8 %v1351
  %v1353 = vlaneseq
  %v1354 = vshrl.u32 %v1353, 7
  %v1355 = vsub.s32 %v1352, %v1354
  %v1356 = vrot.slane %v842, %v1355
  %v1358 = vunpack.c.l.s4 1935823168
  %v1359 = vunpack.c.0.s8 %v1358
  %v1360 = vlaneseq
  %v1361 = vshrl.u32 %v1360, 7
  %v1362 = vsub.s32 %v1359, %v1361
  %v1363 = vrot.slane %v843, %v1362
  %v1364 = vcombine.low %v1356, %v1363
  %v1366 = vunpack.c.l.s4 1935823168
  %v1367 = vunpack.c.0.s8 %v1366
  %v1368 = vlaneseq
  %v1369 = vshrl.u32 %v1368, 7
  %v1370 = vsub.s32 %v1367, %v1369
  %v1371 = vrot.slane %v1364, %v1370
  %s1396 = scalar_lea.vmem [#allocation2], 4
  %vm1397 = vcmask 1041408
  %vm1398 = vsmask.f32 7938
  %vm1399 = vmand %vm1397, %vm1398
  %v1400 = vld [vmem:[%s1396] sm:$0x3]
  %v1401 = vsel %vm1399, %v865, %v1400
  %1402 = vst [vmem:[%s1396] sm:$0x3] %v1401
  %v1403 = vld [vmem:[%s1396 + $0x4] sm:$0x3]
  %v1404 = vsel %vm1399, %v887, %v1403
  %1405 = vst [vmem:[%s1396 + $0x4] sm:$0x3] %v1404
  %v1406 = vld [vmem:[%s1396 + $0x8] sm:$0x3]
  %v1407 = vsel %vm1399, %v909, %v1406
  %1408 = vst [vmem:[%s1396 + $0x8] sm:$0x3] %v1407
  %v1409 = vld [vmem:[%s1396 + $0x14] sm:$0x3]
  %v1410 = vsel %vm1399, %v931, %v1409
  %1411 = vst [vmem:[%s1396 + $0x14] sm:$0x3] %v1410
  %v1412 = vld [vmem:[%s1396 + $0x18] sm:$0x3]
  %v1413 = vsel %vm1399, %v953, %v1412
  %1414 = vst [vmem:[%s1396 + $0x18] sm:$0x3] %v1413
  %v1415 = vld [vmem:[%s1396 + $0x1c] sm:$0x3]
  %v1416 = vsel %vm1399, %v975, %v1415
  %1417 = vst [vmem:[%s1396 + $0x1c] sm:$0x3] %v1416
  %v1418 = vld [vmem:[%s1396 + $0x28] sm:$0x3]
  %v1419 = vsel %vm1399, %v997, %v1418
  %1420 = vst [vmem:[%s1396 + $0x28] sm:$0x3] %v1419
  %v1421 = vld [vmem:[%s1396 + $0x2c] sm:$0x3]
  %v1422 = vsel %vm1399, %v1019, %v1421
  %1423 = vst [vmem:[%s1396 + $0x2c] sm:$0x3] %v1422
  %v1424 = vld [vmem:[%s1396 + $0x30] sm:$0x3]
  %v1425 = vsel %vm1399, %v1041, %v1424
  %1426 = vst [vmem:[%s1396 + $0x30] sm:$0x3] %v1425
  %v1427 = vld [vmem:[%s1396 + $0x3c] sm:$0x3]
  %v1428 = vsel %vm1399, %v1063, %v1427
  %1429 = vst [vmem:[%s1396 + $0x3c] sm:$0x3] %v1428
  %v1430 = vld [vmem:[%s1396 + $0x40] sm:$0x3]
  %v1431 = vsel %vm1399, %v1085, %v1430
  %1432 = vst [vmem:[%s1396 + $0x40] sm:$0x3] %v1431
  %v1433 = vld [vmem:[%s1396 + $0x44] sm:$0x3]
  %v1434 = vsel %vm1399, %v1107, %v1433
  %1435 = vst [vmem:[%s1396 + $0x44] sm:$0x3] %v1434
  %v1436 = vld [vmem:[%s1396 + $0x50] sm:$0x3]
  %v1437 = vsel %vm1399, %v1129, %v1436
  %1438 = vst [vmem:[%s1396 + $0x50] sm:$0x3] %v1437
  %v1439 = vld [vmem:[%s1396 + $0x54] sm:$0x3]
  %v1440 = vsel %vm1399, %v1151, %v1439
  %1441 = vst [vmem:[%s1396 + $0x54] sm:$0x3] %v1440
  %v1442 = vld [vmem:[%s1396 + $0x58] sm:$0x3]
  %v1443 = vsel %vm1399, %v1173, %v1442
  %1444 = vst [vmem:[%s1396 + $0x58] sm:$0x3] %v1443
  %v1445 = vld [vmem:[%s1396 + $0x64] sm:$0x3]
  %v1446 = vsel %vm1399, %v1195, %v1445
  %1447 = vst [vmem:[%s1396 + $0x64] sm:$0x3] %v1446
  %v1448 = vld [vmem:[%s1396 + $0x68] sm:$0x3]
  %v1449 = vsel %vm1399, %v1217, %v1448
  %1450 = vst [vmem:[%s1396 + $0x68] sm:$0x3] %v1449
  %v1451 = vld [vmem:[%s1396 + $0x6c] sm:$0x3]
  %v1452 = vsel %vm1399, %v1239, %v1451
  %1453 = vst [vmem:[%s1396 + $0x6c] sm:$0x3] %v1452
  %v1454 = vld [vmem:[%s1396 + $0x78] sm:$0x3]
  %v1455 = vsel %vm1399, %v1261, %v1454
  %1456 = vst [vmem:[%s1396 + $0x78] sm:$0x3] %v1455
  %v1457 = vld [vmem:[%s1396 + $0x7c] sm:$0x3]
  %v1458 = vsel %vm1399, %v1283, %v1457
  %1459 = vst [vmem:[%s1396 + $0x7c] sm:$0x3] %v1458
  %v1460 = vld [vmem:[%s1396 + $0x80] sm:$0x3]
  %v1461 = vsel %vm1399, %v1305, %v1460
  %1462 = vst [vmem:[%s1396 + $0x80] sm:$0x3] %v1461
  %v1463 = vld [vmem:[%s1396 + $0x8c] sm:$0x3]
  %v1464 = vsel %vm1399, %v1327, %v1463
  %1465 = vst [vmem:[%s1396 + $0x8c] sm:$0x3] %v1464
  %v1466 = vld [vmem:[%s1396 + $0x90] sm:$0x3]
  %v1467 = vsel %vm1399, %v1349, %v1466
  %1468 = vst [vmem:[%s1396 + $0x90] sm:$0x3] %v1467
  %v1469 = vld [vmem:[%s1396 + $0x94] sm:$0x3]
  %v1470 = vsel %vm1399, %v1371, %v1469
  %1471 = vst [vmem:[%s1396 + $0x94] sm:$0x3] %v1470
  %v1472 = vld [vmem:[#allocation2] sm:$0x3]
  %v1473 = vld [vmem:[#allocation2 + $0x4] sm:$0x3]
  %v1474 = vld [vmem:[#allocation2 + $0x8] sm:$0x3]
  %v1475 = vld [vmem:[#allocation2 + $0xc] sm:$0x3]
  %v1476 = vld [vmem:[#allocation2 + $0x14] sm:$0x3]
  %v1477 = vld [vmem:[#allocation2 + $0x18] sm:$0x3]
  %v1478 = vld [vmem:[#allocation2 + $0x1c] sm:$0x3]
  %v1479 = vld [vmem:[#allocation2 + $0x20] sm:$0x3]
  %v1480 = vld [vmem:[#allocation2 + $0x28] sm:$0x3]
  %v1481 = vld [vmem:[#allocation2 + $0x2c] sm:$0x3]
  %v1482 = vld [vmem:[#allocation2 + $0x30] sm:$0x3]
  %v1483 = vld [vmem:[#allocation2 + $0x34] sm:$0x3]
  %v1484 = vld [vmem:[#allocation2 + $0x3c] sm:$0x3]
  %v1485 = vld [vmem:[#allocation2 + $0x40] sm:$0x3]
  %v1486 = vld [vmem:[#allocation2 + $0x44] sm:$0x3]
  %v1487 = vld [vmem:[#allocation2 + $0x48] sm:$0x3]
  %v1488 = vld [vmem:[#allocation2 + $0x50] sm:$0x3]
  %v1489 = vld [vmem:[#allocation2 + $0x54] sm:$0x3]
  %v1490 = vld [vmem:[#allocation2 + $0x58] sm:$0x3]
  %v1491 = vld [vmem:[#allocation2 + $0x5c] sm:$0x3]
  %v1492 = vld [vmem:[#allocation2 + $0x64] sm:$0x3]
  %v1493 = vld [vmem:[#allocation2 + $0x68] sm:$0x3]
  %v1494 = vld [vmem:[#allocation2 + $0x6c] sm:$0x3]
  %v1495 = vld [vmem:[#allocation2 + $0x70] sm:$0x3]
  %v1496 = vld [vmem:[#allocation2 + $0x78] sm:$0x3]
  %v1497 = vld [vmem:[#allocation2 + $0x7c] sm:$0x3]
  %v1498 = vld [vmem:[#allocation2 + $0x80] sm:$0x3]
  %v1499 = vld [vmem:[#allocation2 + $0x84] sm:$0x3]
  %v1500 = vld [vmem:[#allocation2 + $0x8c] sm:$0x3]
  %v1501 = vld [vmem:[#allocation2 + $0x90] sm:$0x3]
  %v1502 = vld [vmem:[#allocation2 + $0x94] sm:$0x3]
  %v1503 = vld [vmem:[#allocation2 + $0x98] sm:$0x3]
  %v1504 = vld [vmem:[#allocation2] sm:$0x7]
  %v1505 = vld [vmem:[#allocation2 + $0x4] sm:$0x7]
  %v1506 = vld [vmem:[#allocation2 + $0x8] sm:$0x7]
  %v1507 = vld [vmem:[#allocation2 + $0xc] sm:$0x7]
  %v1508 = vld [vmem:[#allocation2 + $0x14] sm:$0x7]
  %v1509 = vld [vmem:[#allocation2 + $0x18] sm:$0x7]
  %v1510 = vld [vmem:[#allocation2 + $0x1c] sm:$0x7]
  %v1511 = vld [vmem:[#allocation2 + $0x20] sm:$0x7]
  %v1512 = vld [vmem:[#allocation2 + $0x28] sm:$0x7]
  %v1513 = vld [vmem:[#allocation2 + $0x2c] sm:$0x7]
  %v1514 = vld [vmem:[#allocation2 + $0x30] sm:$0x7]
  %v1515 = vld [vmem:[#allocation2 + $0x34] sm:$0x7]
  %v1516 = vld [vmem:[#allocation2 + $0x3c] sm:$0x7]
  %v1517 = vld [vmem:[#allocation2 + $0x40] sm:$0x7]
  %v1518 = vld [vmem:[#allocation2 + $0x44] sm:$0x7]
  %v1519 = vld [vmem:[#allocation2 + $0x48] sm:$0x7]
  %v1520 = vld [vmem:[#allocation2 + $0x50] sm:$0x7]
  %v1521 = vld [vmem:[#allocation2 + $0x54] sm:$0x7]
  %v1522 = vld [vmem:[#allocation2 + $0x58] sm:$0x7]
  %v1523 = vld [vmem:[#allocation2 + $0x5c] sm:$0x7]
  %v1524 = vld [vmem:[#allocation2 + $0x64] sm:$0x7]
  %v1525 = vld [vmem:[#allocation2 + $0x68] sm:$0x7]
  %v1526 = vld [vmem:[#allocation2 + $0x6c] sm:$0x7]
  %v1527 = vld [vmem:[#allocation2 + $0x70] sm:$0x7]
  %v1528 = vld [vmem:[#allocation2 + $0x78] sm:$0x7]
  %v1529 = vld [vmem:[#allocation2 + $0x7c] sm:$0x7]
  %v1530 = vld [vmem:[#allocation2 + $0x80] sm:$0x7]
  %v1531 = vld [vmem:[#allocation2 + $0x84] sm:$0x7]
  %v1532 = vld [vmem:[#allocation2 + $0x8c] sm:$0x7]
  %v1533 = vld [vmem:[#allocation2 + $0x90] sm:$0x7]
  %v1534 = vld [vmem:[#allocation2 + $0x94] sm:$0x7]
  %v1535 = vld [vmem:[#allocation2 + $0x98] sm:$0x7]
  %v1536 = vld [vmem:[%s1396] sm:$0x3]
  %v1537 = vld [vmem:[%s1396 + $0x4] sm:$0x3]
  %v1538 = vld [vmem:[%s1396 + $0x8] sm:$0x3]
  %v1539 = vld [vmem:[%s1396 + $0xc] sm:$0x3]
  %v1540 = vld [vmem:[%s1396 + $0x14] sm:$0x3]
  %v1541 = vld [vmem:[%s1396 + $0x18] sm:$0x3]
  %v1542 = vld [vmem:[%s1396 + $0x1c] sm:$0x3]
  %v1543 = vld [vmem:[%s1396 + $0x20] sm:$0x3]
  %v1544 = vld [vmem:[%s1396 + $0x28] sm:$0x3]
  %v1545 = vld [vmem:[%s1396 + $0x2c] sm:$0x3]
  %v1546 = vld [vmem:[%s1396 + $0x30] sm:$0x3]
  %v1547 = vld [vmem:[%s1396 + $0x34] sm:$0x3]
  %v1548 = vld [vmem:[%s1396 + $0x3c] sm:$0x3]
  %v1549 = vld [vmem:[%s1396 + $0x40] sm:$0x3]
  %v1550 = vld [vmem:[%s1396 + $0x44] sm:$0x3]
  %v1551 = vld [vmem:[%s1396 + $0x48] sm:$0x3]
  %v1552 = vld [vmem:[%s1396 + $0x50] sm:$0x3]
  %v1553 = vld [vmem:[%s1396 + $0x54] sm:$0x3]
  %v1554 = vld [vmem:[%s1396 + $0x58] sm:$0x3]
  %v1555 = vld [vmem:[%s1396 + $0x5c] sm:$0x3]
  %v1556 = vld [vmem:[%s1396 + $0x64] sm:$0x3]
  %v1557 = vld [vmem:[%s1396 + $0x68] sm:$0x3]
  %v1558 = vld [vmem:[%s1396 + $0x6c] sm:$0x3]
  %v1559 = vld [vmem:[%s1396 + $0x70] sm:$0x3]
  %v1560 = vld [vmem:[%s1396 + $0x78] sm:$0x3]
  %v1561 = vld [vmem:[%s1396 + $0x7c] sm:$0x3]
  %v1562 = vld [vmem:[%s1396 + $0x80] sm:$0x3]
  %v1563 = vld [vmem:[%s1396 + $0x84] sm:$0x3]
  %v1564 = vld [vmem:[%s1396 + $0x8c] sm:$0x3]
  %v1565 = vld [vmem:[%s1396 + $0x90] sm:$0x3]
  %v1566 = vld [vmem:[%s1396 + $0x94] sm:$0x3]
  %v1567 = vld [vmem:[%s1396 + $0x98] sm:$0x3]
  %v1568 = vld [vmem:[%s1396] sm:$0x7]
  %v1569 = vld [vmem:[%s1396 + $0x4] sm:$0x7]
  %v1570 = vld [vmem:[%s1396 + $0x8] sm:$0x7]
  %v1571 = vld [vmem:[%s1396 + $0xc] sm:$0x7]
  %v1572 = vld [vmem:[%s1396 + $0x14] sm:$0x7]
  %v1573 = vld [vmem:[%s1396 + $0x18] sm:$0x7]
  %v1574 = vld [vmem:[%s1396 + $0x1c] sm:$0x7]
  %v1575 = vld [vmem:[%s1396 + $0x20] sm:$0x7]
  %v1576 = vld [vmem:[%s1396 + $0x28] sm:$0x7]
  %v1577 = vld [vmem:[%s1396 + $0x2c] sm:$0x7]
  %v1578 = vld [vmem:[%s1396 + $0x30] sm:$0x7]
  %v1579 = vld [vmem:[%s1396 + $0x34] sm:$0x7]
  %v1580 = vld [vmem:[%s1396 + $0x3c] sm:$0x7]
  %v1581 = vld [vmem:[%s1396 + $0x40] sm:$0x7]
  %v1582 = vld [vmem:[%s1396 + $0x44] sm:$0x7]
  %v1583 = vld [vmem:[%s1396 + $0x48] sm:$0x7]
  %v1584 = vld [vmem:[%s1396 + $0x50] sm:$0x7]
  %v1585 = vld [vmem:[%s1396 + $0x54] sm:$0x7]
  %v1586 = vld [vmem:[%s1396 + $0x58] sm:$0x7]
  %v1587 = vld [vmem:[%s1396 + $0x5c] sm:$0x7]
  %v1588 = vld [vmem:[%s1396 + $0x64] sm:$0x7]
  %v1589 = vld [vmem:[%s1396 + $0x68] sm:$0x7]
  %v1590 = vld [vmem:[%s1396 + $0x6c] sm:$0x7]
  %v1591 = vld [vmem:[%s1396 + $0x70] sm:$0x7]
  %v1592 = vld [vmem:[%s1396 + $0x78] sm:$0x7]
  %v1593 = vld [vmem:[%s1396 + $0x7c] sm:$0x7]
  %v1594 = vld [vmem:[%s1396 + $0x80] sm:$0x7]
  %v1595 = vld [vmem:[%s1396 + $0x84] sm:$0x7]
  %v1596 = vld [vmem:[%s1396 + $0x8c] sm:$0x7]
  %v1597 = vld [vmem:[%s1396 + $0x90] sm:$0x7]
  %v1598 = vld [vmem:[%s1396 + $0x94] sm:$0x7]
  %v1599 = vld [vmem:[%s1396 + $0x98] sm:$0x7]
  %v1632 = vunpack.c.l.b16 %v1504
  %v1633 = vunpack.c.l.b16 %v1505
  %v1634 = vunpack.c.l.b16 %v1506
  %v1635 = vunpack.c.l.b16 %v1507
  %v1636 = vunpack.c.l.b16 %v1508
  %v1637 = vunpack.c.l.b16 %v1509
  %v1638 = vunpack.c.l.b16 %v1510
  %v1639 = vunpack.c.l.b16 %v1511
  %v1640 = vunpack.c.l.b16 %v1512
  %v1641 = vunpack.c.l.b16 %v1513
  %v1642 = vunpack.c.l.b16 %v1514
  %v1643 = vunpack.c.l.b16 %v1515
  %v1644 = vunpack.c.l.b16 %v1516
  %v1645 = vunpack.c.l.b16 %v1517
  %v1646 = vunpack.c.l.b16 %v1518
  %v1647 = vunpack.c.l.b16 %v1519
  %v1648 = vunpack.c.l.b16 %v1520
  %v1649 = vunpack.c.l.b16 %v1521
  %v1650 = vunpack.c.l.b16 %v1522
  %v1651 = vunpack.c.l.b16 %v1523
  %v1652 = vunpack.c.l.b16 %v1524
  %v1653 = vunpack.c.l.b16 %v1525
  %v1654 = vunpack.c.l.b16 %v1526
  %v1655 = vunpack.c.l.b16 %v1527
  %v1656 = vunpack.c.l.b16 %v1528
  %v1657 = vunpack.c.l.b16 %v1529
  %v1658 = vunpack.c.l.b16 %v1530
  %v1659 = vunpack.c.l.b16 %v1531
  %v1660 = vunpack.c.l.b16 %v1532
  %v1661 = vunpack.c.l.b16 %v1533
  %v1662 = vunpack.c.l.b16 %v1534
  %v1663 = vunpack.c.l.b16 %v1535
  %v1664 = vpack.c.b16 %v1632, %v1632
  %v1665 = vpack.c.b16 %v1633, %v1633
  %v1666 = vpack.c.b16 %v1634, %v1634
  %v1667 = vpack.c.b16 %v1635, %v1635
  %v1668 = vpack.c.b16 %v1636, %v1636
  %v1669 = vpack.c.b16 %v1637, %v1637
  %v1670 = vpack.c.b16 %v1638, %v1638
  %v1671 = vpack.c.b16 %v1639, %v1639
  %v1672 = vpack.c.b16 %v1640, %v1640
  %v1673 = vpack.c.b16 %v1641, %v1641
  %v1674 = vpack.c.b16 %v1642, %v1642
  %v1675 = vpack.c.b16 %v1643, %v1643
  %v1676 = vpack.c.b16 %v1644, %v1644
  %v1677 = vpack.c.b16 %v1645, %v1645
  %v1678 = vpack.c.b16 %v1646, %v1646
  %v1679 = vpack.c.b16 %v1647, %v1647
  %v1680 = vpack.c.b16 %v1648, %v1648
  %v1681 = vpack.c.b16 %v1649, %v1649
  %v1682 = vpack.c.b16 %v1650, %v1650
  %v1683 = vpack.c.b16 %v1651, %v1651
  %v1684 = vpack.c.b16 %v1652, %v1652
  %v1685 = vpack.c.b16 %v1653, %v1653
  %v1686 = vpack.c.b16 %v1654, %v1654
  %v1687 = vpack.c.b16 %v1655, %v1655
  %v1688 = vpack.c.b16 %v1656, %v1656
  %v1689 = vpack.c.b16 %v1657, %v1657
  %v1690 = vpack.c.b16 %v1658, %v1658
  %v1691 = vpack.c.b16 %v1659, %v1659
  %v1692 = vpack.c.b16 %v1660, %v1660
  %v1693 = vpack.c.b16 %v1661, %v1661
  %v1694 = vpack.c.b16 %v1662, %v1662
  %v1695 = vpack.c.b16 %v1663, %v1663
  %v1697 = vshrl.u32 %v1664, 16
  %v1699 = vshll.u32 %v1664, 16
  %v1701 = vrot.slane %v1699, 1
  %v1702 = vor.u32 %v1697, %v1701
  %v1704 = vshrl.u32 %v1665, 16
  %v1706 = vshll.u32 %v1665, 16
  %v1708 = vrot.slane %v1706, 1
  %v1709 = vor.u32 %v1704, %v1708
  %v1711 = vshrl.u32 %v1666, 16
  %v1713 = vshll.u32 %v1666, 16
  %v1715 = vrot.slane %v1713, 1
  %v1716 = vor.u32 %v1711, %v1715
  %v1718 = vshrl.u32 %v1667, 16
  %v1720 = vshll.u32 %v1667, 16
  %v1722 = vrot.slane %v1720, 1
  %v1723 = vor.u32 %v1718, %v1722
  %v1725 = vshrl.u32 %v1668, 16
  %v1727 = vshll.u32 %v1668, 16
  %v1729 = vrot.slane %v1727, 1
  %v1730 = vor.u32 %v1725, %v1729
  %v1732 = vshrl.u32 %v1669, 16
  %v1734 = vshll.u32 %v1669, 16
  %v1736 = vrot.slane %v1734, 1
  %v1737 = vor.u32 %v1732, %v1736
  %v1739 = vshrl.u32 %v1670, 16
  %v1741 = vshll.u32 %v1670, 16
  %v1743 = vrot.slane %v1741, 1
  %v1744 = vor.u32 %v1739, %v1743
  %v1746 = vshrl.u32 %v1671, 16
  %v1748 = vshll.u32 %v1671, 16
  %v1750 = vrot.slane %v1748, 1
  %v1751 = vor.u32 %v1746, %v1750
  %v1753 = vshrl.u32 %v1672, 16
  %v1755 = vshll.u32 %v1672, 16
  %v1757 = vrot.slane %v1755, 1
  %v1758 = vor.u32 %v1753, %v1757
  %v1760 = vshrl.u32 %v1673, 16
  %v1762 = vshll.u32 %v1673, 16
  %v1764 = vrot.slane %v1762, 1
  %v1765 = vor.u32 %v1760, %v1764
  %v1767 = vshrl.u32 %v1674, 16
  %v1769 = vshll.u32 %v1674, 16
  %v1771 = vrot.slane %v1769, 1
  %v1772 = vor.u32 %v1767, %v1771
  %v1774 = vshrl.u32 %v1675, 16
  %v1776 = vshll.u32 %v1675, 16
  %v1778 = vrot.slane %v1776, 1
  %v1779 = vor.u32 %v1774, %v1778
  %v1781 = vshrl.u32 %v1676, 16
  %v1783 = vshll.u32 %v1676, 16
  %v1785 = vrot.slane %v1783, 1
  %v1786 = vor.u32 %v1781, %v1785
  %v1788 = vshrl.u32 %v1677, 16
  %v1790 = vshll.u32 %v1677, 16
  %v1792 = vrot.slane %v1790, 1
  %v1793 = vor.u32 %v1788, %v1792
  %v1795 = vshrl.u32 %v1678, 16
  %v1797 = vshll.u32 %v1678, 16
  %v1799 = vrot.slane %v1797, 1
  %v1800 = vor.u32 %v1795, %v1799
  %v1802 = vshrl.u32 %v1679, 16
  %v1804 = vshll.u32 %v1679, 16
  %v1806 = vrot.slane %v1804, 1
  %v1807 = vor.u32 %v1802, %v1806
  %v1809 = vshrl.u32 %v1680, 16
  %v1811 = vshll.u32 %v1680, 16
  %v1813 = vrot.slane %v1811, 1
  %v1814 = vor.u32 %v1809, %v1813
  %v1816 = vshrl.u32 %v1681, 16
  %v1818 = vshll.u32 %v1681, 16
  %v1820 = vrot.slane %v1818, 1
  %v1821 = vor.u32 %v1816, %v1820
  %v1823 = vshrl.u32 %v1682, 16
  %v1825 = vshll.u32 %v1682, 16
  %v1827 = vrot.slane %v1825, 1
  %v1828 = vor.u32 %v1823, %v1827
  %v1830 = vshrl.u32 %v1683, 16
  %v1832 = vshll.u32 %v1683, 16
  %v1834 = vrot.slane %v1832, 1
  %v1835 = vor.u32 %v1830, %v1834
  %v1837 = vshrl.u32 %v1684, 16
  %v1839 = vshll.u32 %v1684, 16
  %v1841 = vrot.slane %v1839, 1
  %v1842 = vor.u32 %v1837, %v1841
  %v1844 = vshrl.u32 %v1685, 16
  %v1846 = vshll.u32 %v1685, 16
  %v1848 = vrot.slane %v1846, 1
  %v1849 = vor.u32 %v1844, %v1848
  %v1851 = vshrl.u32 %v1686, 16
  %v1853 = vshll.u32 %v1686, 16
  %v1855 = vrot.slane %v1853, 1
  %v1856 = vor.u32 %v1851, %v1855
  %v1858 = vshrl.u32 %v1687, 16
  %v1860 = vshll.u32 %v1687, 16
  %v1862 = vrot.slane %v1860, 1
  %v1863 = vor.u32 %v1858, %v1862
  %v1865 = vshrl.u32 %v1688, 16
  %v1867 = vshll.u32 %v1688, 16
  %v1869 = vrot.slane %v1867, 1
  %v1870 = vor.u32 %v1865, %v1869
  %v1872 = vshrl.u32 %v1689, 16
  %v1874 = vshll.u32 %v1689, 16
  %v1876 = vrot.slane %v1874, 1
  %v1877 = vor.u32 %v1872, %v1876
  %v1879 = vshrl.u32 %v1690, 16
  %v1881 = vshll.u32 %v1690, 16
  %v1883 = vrot.slane %v1881, 1
  %v1884 = vor.u32 %v1879, %v1883
  %v1886 = vshrl.u32 %v1691, 16
  %v1888 = vshll.u32 %v1691, 16
  %v1890 = vrot.slane %v1888, 1
  %v1891 = vor.u32 %v1886, %v1890
  %v1893 = vshrl.u32 %v1692, 16
  %v1895 = vshll.u32 %v1692, 16
  %v1897 = vrot.slane %v1895, 1
  %v1898 = vor.u32 %v1893, %v1897
  %v1900 = vshrl.u32 %v1693, 16
  %v1902 = vshll.u32 %v1693, 16
  %v1904 = vrot.slane %v1902, 1
  %v1905 = vor.u32 %v1900, %v1904
  %v1907 = vshrl.u32 %v1694, 16
  %v1909 = vshll.u32 %v1694, 16
  %v1911 = vrot.slane %v1909, 1
  %v1912 = vor.u32 %v1907, %v1911
  %v1914 = vshrl.u32 %v1695, 16
  %v1916 = vshll.u32 %v1695, 16
  %v1918 = vrot.slane %v1916, 1
  %v1919 = vor.u32 %v1914, %v1918
  %v1952 = vunpack.c.l.b16 %v1568
  %v1953 = vunpack.c.l.b16 %v1569
  %v1954 = vunpack.c.l.b16 %v1570
  %v1955 = vunpack.c.l.b16 %v1571
  %v1956 = vunpack.c.l.b16 %v1572
  %v1957 = vunpack.c.l.b16 %v1573
  %v1958 = vunpack.c.l.b16 %v1574
  %v1959 = vunpack.c.l.b16 %v1575
  %v1960 = vunpack.c.l.b16 %v1576
  %v1961 = vunpack.c.l.b16 %v1577
  %v1962 = vunpack.c.l.b16 %v1578
  %v1963 = vunpack.c.l.b16 %v1579
  %v1964 = vunpack.c.l.b16 %v1580
  %v1965 = vunpack.c.l.b16 %v1581
  %v1966 = vunpack.c.l.b16 %v1582
  %v1967 = vunpack.c.l.b16 %v1583
  %v1968 = vunpack.c.l.b16 %v1584
  %v1969 = vunpack.c.l.b16 %v1585
  %v1970 = vunpack.c.l.b16 %v1586
  %v1971 = vunpack.c.l.b16 %v1587
  %v1972 = vunpack.c.l.b16 %v1588
  %v1973 = vunpack.c.l.b16 %v1589
  %v1974 = vunpack.c.l.b16 %v1590
  %v1975 = vunpack.c.l.b16 %v1591
  %v1976 = vunpack.c.l.b16 %v1592
  %v1977 = vunpack.c.l.b16 %v1593
  %v1978 = vunpack.c.l.b16 %v1594
  %v1979 = vunpack.c.l.b16 %v1595
  %v1980 = vunpack.c.l.b16 %v1596
  %v1981 = vunpack.c.l.b16 %v1597
  %v1982 = vunpack.c.l.b16 %v1598
  %v1983 = vunpack.c.l.b16 %v1599
  %v1984 = vpack.c.b16 %v1952, %v1952
  %v1985 = vpack.c.b16 %v1953, %v1953
  %v1986 = vpack.c.b16 %v1954, %v1954
  %v1987 = vpack.c.b16 %v1955, %v1955
  %v1988 = vpack.c.b16 %v1956, %v1956
  %v1989 = vpack.c.b16 %v1957, %v1957
  %v1990 = vpack.c.b16 %v1958, %v1958
  %v1991 = vpack.c.b16 %v1959, %v1959
  %v1992 = vpack.c.b16 %v1960, %v1960
  %v1993 = vpack.c.b16 %v1961, %v1961
  %v1994 = vpack.c.b16 %v1962, %v1962
  %v1995 = vpack.c.b16 %v1963, %v1963
  %v1996 = vpack.c.b16 %v1964, %v1964
  %v1997 = vpack.c.b16 %v1965, %v1965
  %v1998 = vpack.c.b16 %v1966, %v1966
  %v1999 = vpack.c.b16 %v1967, %v1967
  %v2000 = vpack.c.b16 %v1968, %v1968
  %v2001 = vpack.c.b16 %v1969, %v1969
  %v2002 = vpack.c.b16 %v1970, %v1970
  %v2003 = vpack.c.b16 %v1971, %v1971
  %v2004 = vpack.c.b16 %v1972, %v1972
  %v2005 = vpack.c.b16 %v1973, %v1973
  %v2006 = vpack.c.b16 %v1974, %v1974
  %v2007 = vpack.c.b16 %v1975, %v1975
  %v2008 = vpack.c.b16 %v1976, %v1976
  %v2009 = vpack.c.b16 %v1977, %v1977
  %v2010 = vpack.c.b16 %v1978, %v1978
  %v2011 = vpack.c.b16 %v1979, %v1979
  %v2012 = vpack.c.b16 %v1980, %v1980
  %v2013 = vpack.c.b16 %v1981, %v1981
  %v2014 = vpack.c.b16 %v1982, %v1982
  %v2015 = vpack.c.b16 %v1983, %v1983
  %v2017 = vshrl.u32 %v1984, 16
  %v2019 = vshll.u32 %v1984, 16
  %v2021 = vrot.slane %v2019, 1
  %v2022 = vor.u32 %v2017, %v2021
  %v2024 = vshrl.u32 %v1985, 16
  %v2026 = vshll.u32 %v1985, 16
  %v2028 = vrot.slane %v2026, 1
  %v2029 = vor.u32 %v2024, %v2028
  %v2031 = vshrl.u32 %v1986, 16
  %v2033 = vshll.u32 %v1986, 16
  %v2035 = vrot.slane %v2033, 1
  %v2036 = vor.u32 %v2031, %v2035
  %v2038 = vshrl.u32 %v1987, 16
  %v2040 = vshll.u32 %v1987, 16
  %v2042 = vrot.slane %v2040, 1
  %v2043 = vor.u32 %v2038, %v2042
  %v2045 = vshrl.u32 %v1988, 16
  %v2047 = vshll.u32 %v1988, 16
  %v2049 = vrot.slane %v2047, 1
  %v2050 = vor.u32 %v2045, %v2049
  %v2052 = vshrl.u32 %v1989, 16
  %v2054 = vshll.u32 %v1989, 16
  %v2056 = vrot.slane %v2054, 1
  %v2057 = vor.u32 %v2052, %v2056
  %v2059 = vshrl.u32 %v1990, 16
  %v2061 = vshll.u32 %v1990, 16
  %v2063 = vrot.slane %v2061, 1
  %v2064 = vor.u32 %v2059, %v2063
  %v2066 = vshrl.u32 %v1991, 16
  %v2068 = vshll.u32 %v1991, 16
  %v2070 = vrot.slane %v2068, 1
  %v2071 = vor.u32 %v2066, %v2070
  %v2073 = vshrl.u32 %v1992, 16
  %v2075 = vshll.u32 %v1992, 16
  %v2077 = vrot.slane %v2075, 1
  %v2078 = vor.u32 %v2073, %v2077
  %v2080 = vshrl.u32 %v1993, 16
  %v2082 = vshll.u32 %v1993, 16
  %v2084 = vrot.slane %v2082, 1
  %v2085 = vor.u32 %v2080, %v2084
  %v2087 = vshrl.u32 %v1994, 16
  %v2089 = vshll.u32 %v1994, 16
  %v2091 = vrot.slane %v2089, 1
  %v2092 = vor.u32 %v2087, %v2091
  %v2094 = vshrl.u32 %v1995, 16
  %v2096 = vshll.u32 %v1995, 16
  %v2098 = vrot.slane %v2096, 1
  %v2099 = vor.u32 %v2094, %v2098
  %v2101 = vshrl.u32 %v1996, 16
  %v2103 = vshll.u32 %v1996, 16
  %v2105 = vrot.slane %v2103, 1
  %v2106 = vor.u32 %v2101, %v2105
  %v2108 = vshrl.u32 %v1997, 16
  %v2110 = vshll.u32 %v1997, 16
  %v2112 = vrot.slane %v2110, 1
  %v2113 = vor.u32 %v2108, %v2112
  %v2115 = vshrl.u32 %v1998, 16
  %v2117 = vshll.u32 %v1998, 16
  %v2119 = vrot.slane %v2117, 1
  %v2120 = vor.u32 %v2115, %v2119
  %v2122 = vshrl.u32 %v1999, 16
  %v2124 = vshll.u32 %v1999, 16
  %v2126 = vrot.slane %v2124, 1
  %v2127 = vor.u32 %v2122, %v2126
  %v2129 = vshrl.u32 %v2000, 16
  %v2131 = vshll.u32 %v2000, 16
  %v2133 = vrot.slane %v2131, 1
  %v2134 = vor.u32 %v2129, %v2133
  %v2136 = vshrl.u32 %v2001, 16
  %v2138 = vshll.u32 %v2001, 16
  %v2140 = vrot.slane %v2138, 1
  %v2141 = vor.u32 %v2136, %v2140
  %v2143 = vshrl.u32 %v2002, 16
  %v2145 = vshll.u32 %v2002, 16
  %v2147 = vrot.slane %v2145, 1
  %v2148 = vor.u32 %v2143, %v2147
  %v2150 = vshrl.u32 %v2003, 16
  %v2152 = vshll.u32 %v2003, 16
  %v2154 = vrot.slane %v2152, 1
  %v2155 = vor.u32 %v2150, %v2154
  %v2157 = vshrl.u32 %v2004, 16
  %v2159 = vshll.u32 %v2004, 16
  %v2161 = vrot.slane %v2159, 1
  %v2162 = vor.u32 %v2157, %v2161
  %v2164 = vshrl.u32 %v2005, 16
  %v2166 = vshll.u32 %v2005, 16
  %v2168 = vrot.slane %v2166, 1
  %v2169 = vor.u32 %v2164, %v2168
  %v2171 = vshrl.u32 %v2006, 16
  %v2173 = vshll.u32 %v2006, 16
  %v2175 = vrot.slane %v2173, 1
  %v2176 = vor.u32 %v2171, %v2175
  %v2178 = vshrl.u32 %v2007, 16
  %v2180 = vshll.u32 %v2007, 16
  %v2182 = vrot.slane %v2180, 1
  %v2183 = vor.u32 %v2178, %v2182
  %v2185 = vshrl.u32 %v2008, 16
  %v2187 = vshll.u32 %v2008, 16
  %v2189 = vrot.slane %v2187, 1
  %v2190 = vor.u32 %v2185, %v2189
  %v2192 = vshrl.u32 %v2009, 16
  %v2194 = vshll.u32 %v2009, 16
  %v2196 = vrot.slane %v2194, 1
  %v2197 = vor.u32 %v2192, %v2196
  %v2199 = vshrl.u32 %v2010, 16
  %v2201 = vshll.u32 %v2010, 16
  %v2203 = vrot.slane %v2201, 1
  %v2204 = vor.u32 %v2199, %v2203
  %v2206 = vshrl.u32 %v2011, 16
  %v2208 = vshll.u32 %v2011, 16
  %v2210 = vrot.slane %v2208, 1
  %v2211 = vor.u32 %v2206, %v2210
  %v2213 = vshrl.u32 %v2012, 16
  %v2215 = vshll.u32 %v2012, 16
  %v2217 = vrot.slane %v2215, 1
  %v2218 = vor.u32 %v2213, %v2217
  %v2220 = vshrl.u32 %v2013, 16
  %v2222 = vshll.u32 %v2013, 16
  %v2224 = vrot.slane %v2222, 1
  %v2225 = vor.u32 %v2220, %v2224
  %v2227 = vshrl.u32 %v2014, 16
  %v2229 = vshll.u32 %v2014, 16
  %v2231 = vrot.slane %v2229, 1
  %v2232 = vor.u32 %v2227, %v2231
  %v2234 = vshrl.u32 %v2015, 16
  %v2236 = vshll.u32 %v2015, 16
  %v2238 = vrot.slane %v2236, 1
  %v2239 = vor.u32 %v2234, %v2238
  %v2304 = vcombine.low %v1472, %v1702
  %v2305 = vcombine.low %v1536, %v2022
  %v2307 = vunpack.c.l.s4 1983009808
  %v2308 = vunpack.c.0.s8 %v2307
  %v2309 = vlaneseq
  %v2310 = vshrl.u32 %v2309, 7
  %v2311 = vsub.s32 %v2308, %v2310
  %v2312 = vrot.slane %v2304, %v2311
  %v2314 = vunpack.c.l.s4 1983009808
  %v2315 = vunpack.c.0.s8 %v2314
  %v2316 = vlaneseq
  %v2317 = vshrl.u32 %v2316, 7
  %v2318 = vsub.s32 %v2315, %v2317
  %v2319 = vrot.slane %v2305, %v2318
  %v2320 = vcombine.low %v2312, %v2319
  %v2321 = vcombine.low %v1473, %v1709
  %v2322 = vcombine.low %v1537, %v2029
  %v2324 = vunpack.c.l.s4 1983009808
  %v2325 = vunpack.c.0.s8 %v2324
  %v2326 = vlaneseq
  %v2327 = vshrl.u32 %v2326, 7
  %v2328 = vsub.s32 %v2325, %v2327
  %v2329 = vrot.slane %v2321, %v2328
  %v2331 = vunpack.c.l.s4 1983009808
  %v2332 = vunpack.c.0.s8 %v2331
  %v2333 = vlaneseq
  %v2334 = vshrl.u32 %v2333, 7
  %v2335 = vsub.s32 %v2332, %v2334
  %v2336 = vrot.slane %v2322, %v2335
  %v2337 = vcombine.low %v2329, %v2336
  %v2338 = vcombine.low %v1474, %v1716
  %v2339 = vcombine.low %v1538, %v2036
  %v2341 = vunpack.c.l.s4 1983009808
  %v2342 = vunpack.c.0.s8 %v2341
  %v2343 = vlaneseq
  %v2344 = vshrl.u32 %v2343, 7
  %v2345 = vsub.s32 %v2342, %v2344
  %v2346 = vrot.slane %v2338, %v2345
  %v2348 = vunpack.c.l.s4 1983009808
  %v2349 = vunpack.c.0.s8 %v2348
  %v2350 = vlaneseq
  %v2351 = vshrl.u32 %v2350, 7
  %v2352 = vsub.s32 %v2349, %v2351
  %v2353 = vrot.slane %v2339, %v2352
  %v2354 = vcombine.low %v2346, %v2353
  %v2355 = vcombine.low %v1475, %v1723
  %v2356 = vcombine.low %v1539, %v2043
  %v2358 = vunpack.c.l.s4 1983009808
  %v2359 = vunpack.c.0.s8 %v2358
  %v2360 = vlaneseq
  %v2361 = vshrl.u32 %v2360, 7
  %v2362 = vsub.s32 %v2359, %v2361
  %v2363 = vrot.slane %v2355, %v2362
  %v2365 = vunpack.c.l.s4 1983009808
  %v2366 = vunpack.c.0.s8 %v2365
  %v2367 = vlaneseq
  %v2368 = vshrl.u32 %v2367, 7
  %v2369 = vsub.s32 %v2366, %v2368
  %v2370 = vrot.slane %v2356, %v2369
  %v2371 = vcombine.low %v2363, %v2370
  %v2372 = vcombine.low %v1476, %v1730
  %v2373 = vcombine.low %v1540, %v2050
  %v2375 = vunpack.c.l.s4 1983009808
  %v2376 = vunpack.c.0.s8 %v2375
  %v2377 = vlaneseq
  %v2378 = vshrl.u32 %v2377, 7
  %v2379 = vsub.s32 %v2376, %v2378
  %v2380 = vrot.slane %v2372, %v2379
  %v2382 = vunpack.c.l.s4 1983009808
  %v2383 = vunpack.c.0.s8 %v2382
  %v2384 = vlaneseq
  %v2385 = vshrl.u32 %v2384, 7
  %v2386 = vsub.s32 %v2383, %v2385
  %v2387 = vrot.slane %v2373, %v2386
  %v2388 = vcombine.low %v2380, %v2387
  %v2389 = vcombine.low %v1477, %v1737
  %v2390 = vcombine.low %v1541, %v2057
  %v2392 = vunpack.c.l.s4 1983009808
  %v2393 = vunpack.c.0.s8 %v2392
  %v2394 = vlaneseq
  %v2395 = vshrl.u32 %v2394, 7
  %v2396 = vsub.s32 %v2393, %v2395
  %v2397 = vrot.slane %v2389, %v2396
  %v2399 = vunpack.c.l.s4 1983009808
  %v2400 = vunpack.c.0.s8 %v2399
  %v2401 = vlaneseq
  %v2402 = vshrl.u32 %v2401, 7
  %v2403 = vsub.s32 %v2400, %v2402
  %v2404 = vrot.slane %v2390, %v2403
  %v2405 = vcombine.low %v2397, %v2404
  %v2406 = vcombine.low %v1478, %v1744
  %v2407 = vcombine.low %v1542, %v2064
  %v2409 = vunpack.c.l.s4 1983009808
  %v2410 = vunpack.c.0.s8 %v2409
  %v2411 = vlaneseq
  %v2412 = vshrl.u32 %v2411, 7
  %v2413 = vsub.s32 %v2410, %v2412
  %v2414 = vrot.slane %v2406, %v2413
  %v2416 = vunpack.c.l.s4 1983009808
  %v2417 = vunpack.c.0.s8 %v2416
  %v2418 = vlaneseq
  %v2419 = vshrl.u32 %v2418, 7
  %v2420 = vsub.s32 %v2417, %v2419
  %v2421 = vrot.slane %v2407, %v2420
  %v2422 = vcombine.low %v2414, %v2421
  %v2423 = vcombine.low %v1479, %v1751
  %v2424 = vcombine.low %v1543, %v2071
  %v2426 = vunpack.c.l.s4 1983009808
  %v2427 = vunpack.c.0.s8 %v2426
  %v2428 = vlaneseq
  %v2429 = vshrl.u32 %v2428, 7
  %v2430 = vsub.s32 %v2427, %v2429
  %v2431 = vrot.slane %v2423, %v2430
  %v2433 = vunpack.c.l.s4 1983009808
  %v2434 = vunpack.c.0.s8 %v2433
  %v2435 = vlaneseq
  %v2436 = vshrl.u32 %v2435, 7
  %v2437 = vsub.s32 %v2434, %v2436
  %v2438 = vrot.slane %v2424, %v2437
  %v2439 = vcombine.low %v2431, %v2438
  %v2440 = vcombine.low %v1480, %v1758
  %v2441 = vcombine.low %v1544, %v2078
  %v2443 = vunpack.c.l.s4 1983009808
  %v2444 = vunpack.c.0.s8 %v2443
  %v2445 = vlaneseq
  %v2446 = vshrl.u32 %v2445, 7
  %v2447 = vsub.s32 %v2444, %v2446
  %v2448 = vrot.slane %v2440, %v2447
  %v2450 = vunpack.c.l.s4 1983009808
  %v2451 = vunpack.c.0.s8 %v2450
  %v2452 = vlaneseq
  %v2453 = vshrl.u32 %v2452, 7
  %v2454 = vsub.s32 %v2451, %v2453
  %v2455 = vrot.slane %v2441, %v2454
  %v2456 = vcombine.low %v2448, %v2455
  %v2457 = vcombine.low %v1481, %v1765
  %v2458 = vcombine.low %v1545, %v2085
  %v2460 = vunpack.c.l.s4 1983009808
  %v2461 = vunpack.c.0.s8 %v2460
  %v2462 = vlaneseq
  %v2463 = vshrl.u32 %v2462, 7
  %v2464 = vsub.s32 %v2461, %v2463
  %v2465 = vrot.slane %v2457, %v2464
  %v2467 = vunpack.c.l.s4 1983009808
  %v2468 = vunpack.c.0.s8 %v2467
  %v2469 = vlaneseq
  %v2470 = vshrl.u32 %v2469, 7
  %v2471 = vsub.s32 %v2468, %v2470
  %v2472 = vrot.slane %v2458, %v2471
  %v2473 = vcombine.low %v2465, %v2472
  %v2474 = vcombine.low %v1482, %v1772
  %v2475 = vcombine.low %v1546, %v2092
  %v2477 = vunpack.c.l.s4 1983009808
  %v2478 = vunpack.c.0.s8 %v2477
  %v2479 = vlaneseq
  %v2480 = vshrl.u32 %v2479, 7
  %v2481 = vsub.s32 %v2478, %v2480
  %v2482 = vrot.slane %v2474, %v2481
  %v2484 = vunpack.c.l.s4 1983009808
  %v2485 = vunpack.c.0.s8 %v2484
  %v2486 = vlaneseq
  %v2487 = vshrl.u32 %v2486, 7
  %v2488 = vsub.s32 %v2485, %v2487
  %v2489 = vrot.slane %v2475, %v2488
  %v2490 = vcombine.low %v2482, %v2489
  %v2491 = vcombine.low %v1483, %v1779
  %v2492 = vcombine.low %v1547, %v2099
  %v2494 = vunpack.c.l.s4 1983009808
  %v2495 = vunpack.c.0.s8 %v2494
  %v2496 = vlaneseq
  %v2497 = vshrl.u32 %v2496, 7
  %v2498 = vsub.s32 %v2495, %v2497
  %v2499 = vrot.slane %v2491, %v2498
  %v2501 = vunpack.c.l.s4 1983009808
  %v2502 = vunpack.c.0.s8 %v2501
  %v2503 = vlaneseq
  %v2504 = vshrl.u32 %v2503, 7
  %v2505 = vsub.s32 %v2502, %v2504
  %v2506 = vrot.slane %v2492, %v2505
  %v2507 = vcombine.low %v2499, %v2506
  %v2508 = vcombine.low %v1484, %v1786
  %v2509 = vcombine.low %v1548, %v2106
  %v2511 = vunpack.c.l.s4 1983009808
  %v2512 = vunpack.c.0.s8 %v2511
  %v2513 = vlaneseq
  %v2514 = vshrl.u32 %v2513, 7
  %v2515 = vsub.s32 %v2512, %v2514
  %v2516 = vrot.slane %v2508, %v2515
  %v2518 = vunpack.c.l.s4 1983009808
  %v2519 = vunpack.c.0.s8 %v2518
  %v2520 = vlaneseq
  %v2521 = vshrl.u32 %v2520, 7
  %v2522 = vsub.s32 %v2519, %v2521
  %v2523 = vrot.slane %v2509, %v2522
  %v2524 = vcombine.low %v2516, %v2523
  %v2525 = vcombine.low %v1485, %v1793
  %v2526 = vcombine.low %v1549, %v2113
  %v2528 = vunpack.c.l.s4 1983009808
  %v2529 = vunpack.c.0.s8 %v2528
  %v2530 = vlaneseq
  %v2531 = vshrl.u32 %v2530, 7
  %v2532 = vsub.s32 %v2529, %v2531
  %v2533 = vrot.slane %v2525, %v2532
  %v2535 = vunpack.c.l.s4 1983009808
  %v2536 = vunpack.c.0.s8 %v2535
  %v2537 = vlaneseq
  %v2538 = vshrl.u32 %v2537, 7
  %v2539 = vsub.s32 %v2536, %v2538
  %v2540 = vrot.slane %v2526, %v2539
  %v2541 = vcombine.low %v2533, %v2540
  %v2542 = vcombine.low %v1486, %v1800
  %v2543 = vcombine.low %v1550, %v2120
  %v2545 = vunpack.c.l.s4 1983009808
  %v2546 = vunpack.c.0.s8 %v2545
  %v2547 = vlaneseq
  %v2548 = vshrl.u32 %v2547, 7
  %v2549 = vsub.s32 %v2546, %v2548
  %v2550 = vrot.slane %v2542, %v2549
  %v2552 = vunpack.c.l.s4 1983009808
  %v2553 = vunpack.c.0.s8 %v2552
  %v2554 = vlaneseq
  %v2555 = vshrl.u32 %v2554, 7
  %v2556 = vsub.s32 %v2553, %v2555
  %v2557 = vrot.slane %v2543, %v2556
  %v2558 = vcombine.low %v2550, %v2557
  %v2559 = vcombine.low %v1487, %v1807
  %v2560 = vcombine.low %v1551, %v2127
  %v2562 = vunpack.c.l.s4 1983009808
  %v2563 = vunpack.c.0.s8 %v2562
  %v2564 = vlaneseq
  %v2565 = vshrl.u32 %v2564, 7
  %v2566 = vsub.s32 %v2563, %v2565
  %v2567 = vrot.slane %v2559, %v2566
  %v2569 = vunpack.c.l.s4 1983009808
  %v2570 = vunpack.c.0.s8 %v2569
  %v2571 = vlaneseq
  %v2572 = vshrl.u32 %v2571, 7
  %v2573 = vsub.s32 %v2570, %v2572
  %v2574 = vrot.slane %v2560, %v2573
  %v2575 = vcombine.low %v2567, %v2574
  %v2576 = vcombine.low %v1488, %v1814
  %v2577 = vcombine.low %v1552, %v2134
  %v2579 = vunpack.c.l.s4 1983009808
  %v2580 = vunpack.c.0.s8 %v2579
  %v2581 = vlaneseq
  %v2582 = vshrl.u32 %v2581, 7
  %v2583 = vsub.s32 %v2580, %v2582
  %v2584 = vrot.slane %v2576, %v2583
  %v2586 = vunpack.c.l.s4 1983009808
  %v2587 = vunpack.c.0.s8 %v2586
  %v2588 = vlaneseq
  %v2589 = vshrl.u32 %v2588, 7
  %v2590 = vsub.s32 %v2587, %v2589
  %v2591 = vrot.slane %v2577, %v2590
  %v2592 = vcombine.low %v2584, %v2591
  %v2593 = vcombine.low %v1489, %v1821
  %v2594 = vcombine.low %v1553, %v2141
  %v2596 = vunpack.c.l.s4 1983009808
  %v2597 = vunpack.c.0.s8 %v2596
  %v2598 = vlaneseq
  %v2599 = vshrl.u32 %v2598, 7
  %v2600 = vsub.s32 %v2597, %v2599
  %v2601 = vrot.slane %v2593, %v2600
  %v2603 = vunpack.c.l.s4 1983009808
  %v2604 = vunpack.c.0.s8 %v2603
  %v2605 = vlaneseq
  %v2606 = vshrl.u32 %v2605, 7
  %v2607 = vsub.s32 %v2604, %v2606
  %v2608 = vrot.slane %v2594, %v2607
  %v2609 = vcombine.low %v2601, %v2608
  %v2610 = vcombine.low %v1490, %v1828
  %v2611 = vcombine.low %v1554, %v2148
  %v2613 = vunpack.c.l.s4 1983009808
  %v2614 = vunpack.c.0.s8 %v2613
  %v2615 = vlaneseq
  %v2616 = vshrl.u32 %v2615, 7
  %v2617 = vsub.s32 %v2614, %v2616
  %v2618 = vrot.slane %v2610, %v2617
  %v2620 = vunpack.c.l.s4 1983009808
  %v2621 = vunpack.c.0.s8 %v2620
  %v2622 = vlaneseq
  %v2623 = vshrl.u32 %v2622, 7
  %v2624 = vsub.s32 %v2621, %v2623
  %v2625 = vrot.slane %v2611, %v2624
  %v2626 = vcombine.low %v2618, %v2625
  %v2627 = vcombine.low %v1491, %v1835
  %v2628 = vcombine.low %v1555, %v2155
  %v2630 = vunpack.c.l.s4 1983009808
  %v2631 = vunpack.c.0.s8 %v2630
  %v2632 = vlaneseq
  %v2633 = vshrl.u32 %v2632, 7
  %v2634 = vsub.s32 %v2631, %v2633
  %v2635 = vrot.slane %v2627, %v2634
  %v2637 = vunpack.c.l.s4 1983009808
  %v2638 = vunpack.c.0.s8 %v2637
  %v2639 = vlaneseq
  %v2640 = vshrl.u32 %v2639, 7
  %v2641 = vsub.s32 %v2638, %v2640
  %v2642 = vrot.slane %v2628, %v2641
  %v2643 = vcombine.low %v2635, %v2642
  %v2644 = vcombine.low %v1492, %v1842
  %v2645 = vcombine.low %v1556, %v2162
  %v2647 = vunpack.c.l.s4 1983009808
  %v2648 = vunpack.c.0.s8 %v2647
  %v2649 = vlaneseq
  %v2650 = vshrl.u32 %v2649, 7
  %v2651 = vsub.s32 %v2648, %v2650
  %v2652 = vrot.slane %v2644, %v2651
  %v2654 = vunpack.c.l.s4 1983009808
  %v2655 = vunpack.c.0.s8 %v2654
  %v2656 = vlaneseq
  %v2657 = vshrl.u32 %v2656, 7
  %v2658 = vsub.s32 %v2655, %v2657
  %v2659 = vrot.slane %v2645, %v2658
  %v2660 = vcombine.low %v2652, %v2659
  %v2661 = vcombine.low %v1493, %v1849
  %v2662 = vcombine.low %v1557, %v2169
  %v2664 = vunpack.c.l.s4 1983009808
  %v2665 = vunpack.c.0.s8 %v2664
  %v2666 = vlaneseq
  %v2667 = vshrl.u32 %v2666, 7
  %v2668 = vsub.s32 %v2665, %v2667
  %v2669 = vrot.slane %v2661, %v2668
  %v2671 = vunpack.c.l.s4 1983009808
  %v2672 = vunpack.c.0.s8 %v2671
  %v2673 = vlaneseq
  %v2674 = vshrl.u32 %v2673, 7
  %v2675 = vsub.s32 %v2672, %v2674
  %v2676 = vrot.slane %v2662, %v2675
  %v2677 = vcombine.low %v2669, %v2676
  %v2678 = vcombine.low %v1494, %v1856
  %v2679 = vcombine.low %v1558, %v2176
  %v2681 = vunpack.c.l.s4 1983009808
  %v2682 = vunpack.c.0.s8 %v2681
  %v2683 = vlaneseq
  %v2684 = vshrl.u32 %v2683, 7
  %v2685 = vsub.s32 %v2682, %v2684
  %v2686 = vrot.slane %v2678, %v2685
  %v2688 = vunpack.c.l.s4 1983009808
  %v2689 = vunpack.c.0.s8 %v2688
  %v2690 = vlaneseq
  %v2691 = vshrl.u32 %v2690, 7
  %v2692 = vsub.s32 %v2689, %v2691
  %v2693 = vrot.slane %v2679, %v2692
  %v2694 = vcombine.low %v2686, %v2693
  %v2695 = vcombine.low %v1495, %v1863
  %v2696 = vcombine.low %v1559, %v2183
  %v2698 = vunpack.c.l.s4 1983009808
  %v2699 = vunpack.c.0.s8 %v2698
  %v2700 = vlaneseq
  %v2701 = vshrl.u32 %v2700, 7
  %v2702 = vsub.s32 %v2699, %v2701
  %v2703 = vrot.slane %v2695, %v2702
  %v2705 = vunpack.c.l.s4 1983009808
  %v2706 = vunpack.c.0.s8 %v2705
  %v2707 = vlaneseq
  %v2708 = vshrl.u32 %v2707, 7
  %v2709 = vsub.s32 %v2706, %v2708
  %v2710 = vrot.slane %v2696, %v2709
  %v2711 = vcombine.low %v2703, %v2710
  %v2712 = vcombine.low %v1496, %v1870
  %v2713 = vcombine.low %v1560, %v2190
  %v2715 = vunpack.c.l.s4 1983009808
  %v2716 = vunpack.c.0.s8 %v2715
  %v2717 = vlaneseq
  %v2718 = vshrl.u32 %v2717, 7
  %v2719 = vsub.s32 %v2716, %v2718
  %v2720 = vrot.slane %v2712, %v2719
  %v2722 = vunpack.c.l.s4 1983009808
  %v2723 = vunpack.c.0.s8 %v2722
  %v2724 = vlaneseq
  %v2725 = vshrl.u32 %v2724, 7
  %v2726 = vsub.s32 %v2723, %v2725
  %v2727 = vrot.slane %v2713, %v2726
  %v2728 = vcombine.low %v2720, %v2727
  %v2729 = vcombine.low %v1497, %v1877
  %v2730 = vcombine.low %v1561, %v2197
  %v2732 = vunpack.c.l.s4 1983009808
  %v2733 = vunpack.c.0.s8 %v2732
  %v2734 = vlaneseq
  %v2735 = vshrl.u32 %v2734, 7
  %v2736 = vsub.s32 %v2733, %v2735
  %v2737 = vrot.slane %v2729, %v2736
  %v2739 = vunpack.c.l.s4 1983009808
  %v2740 = vunpack.c.0.s8 %v2739
  %v2741 = vlaneseq
  %v2742 = vshrl.u32 %v2741, 7
  %v2743 = vsub.s32 %v2740, %v2742
  %v2744 = vrot.slane %v2730, %v2743
  %v2745 = vcombine.low %v2737, %v2744
  %v2746 = vcombine.low %v1498, %v1884
  %v2747 = vcombine.low %v1562, %v2204
  %v2749 = vunpack.c.l.s4 1983009808
  %v2750 = vunpack.c.0.s8 %v2749
  %v2751 = vlaneseq
  %v2752 = vshrl.u32 %v2751, 7
  %v2753 = vsub.s32 %v2750, %v2752
  %v2754 = vrot.slane %v2746, %v2753
  %v2756 = vunpack.c.l.s4 1983009808
  %v2757 = vunpack.c.0.s8 %v2756
  %v2758 = vlaneseq
  %v2759 = vshrl.u32 %v2758, 7
  %v2760 = vsub.s32 %v2757, %v2759
  %v2761 = vrot.slane %v2747, %v2760
  %v2762 = vcombine.low %v2754, %v2761
  %v2763 = vcombine.low %v1499, %v1891
  %v2764 = vcombine.low %v1563, %v2211
  %v2766 = vunpack.c.l.s4 1983009808
  %v2767 = vunpack.c.0.s8 %v2766
  %v2768 = vlaneseq
  %v2769 = vshrl.u32 %v2768, 7
  %v2770 = vsub.s32 %v2767, %v2769
  %v2771 = vrot.slane %v2763, %v2770
  %v2773 = vunpack.c.l.s4 1983009808
  %v2774 = vunpack.c.0.s8 %v2773
  %v2775 = vlaneseq
  %v2776 = vshrl.u32 %v2775, 7
  %v2777 = vsub.s32 %v2774, %v2776
  %v2778 = vrot.slane %v2764, %v2777
  %v2779 = vcombine.low %v2771, %v2778
  %v2780 = vcombine.low %v1500, %v1898
  %v2781 = vcombine.low %v1564, %v2218
  %v2783 = vunpack.c.l.s4 1983009808
  %v2784 = vunpack.c.0.s8 %v2783
  %v2785 = vlaneseq
  %v2786 = vshrl.u32 %v2785, 7
  %v2787 = vsub.s32 %v2784, %v2786
  %v2788 = vrot.slane %v2780, %v2787
  %v2790 = vunpack.c.l.s4 1983009808
  %v2791 = vunpack.c.0.s8 %v2790
  %v2792 = vlaneseq
  %v2793 = vshrl.u32 %v2792, 7
  %v2794 = vsub.s32 %v2791, %v2793
  %v2795 = vrot.slane %v2781, %v2794
  %v2796 = vcombine.low %v2788, %v2795
  %v2797 = vcombine.low %v1501, %v1905
  %v2798 = vcombine.low %v1565, %v2225
  %v2800 = vunpack.c.l.s4 1983009808
  %v2801 = vunpack.c.0.s8 %v2800
  %v2802 = vlaneseq
  %v2803 = vshrl.u32 %v2802, 7
  %v2804 = vsub.s32 %v2801, %v2803
  %v2805 = vrot.slane %v2797, %v2804
  %v2807 = vunpack.c.l.s4 1983009808
  %v2808 = vunpack.c.0.s8 %v2807
  %v2809 = vlaneseq
  %v2810 = vshrl.u32 %v2809, 7
  %v2811 = vsub.s32 %v2808, %v2810
  %v2812 = vrot.slane %v2798, %v2811
  %v2813 = vcombine.low %v2805, %v2812
  %v2814 = vcombine.low %v1502, %v1912
  %v2815 = vcombine.low %v1566, %v2232
  %v2817 = vunpack.c.l.s4 1983009808
  %v2818 = vunpack.c.0.s8 %v2817
  %v2819 = vlaneseq
  %v2820 = vshrl.u32 %v2819, 7
  %v2821 = vsub.s32 %v2818, %v2820
  %v2822 = vrot.slane %v2814, %v2821
  %v2824 = vunpack.c.l.s4 1983009808
  %v2825 = vunpack.c.0.s8 %v2824
  %v2826 = vlaneseq
  %v2827 = vshrl.u32 %v2826, 7
  %v2828 = vsub.s32 %v2825, %v2827
  %v2829 = vrot.slane %v2815, %v2828
  %v2830 = vcombine.low %v2822, %v2829
  %v2831 = vcombine.low %v1503, %v1919
  %v2832 = vcombine.low %v1567, %v2239
  %v2834 = vunpack.c.l.s4 1983009808
  %v2835 = vunpack.c.0.s8 %v2834
  %v2836 = vlaneseq
  %v2837 = vshrl.u32 %v2836, 7
  %v2838 = vsub.s32 %v2835, %v2837
  %v2839 = vrot.slane %v2831, %v2838
  %v2841 = vunpack.c.l.s4 1983009808
  %v2842 = vunpack.c.0.s8 %v2841
  %v2843 = vlaneseq
  %v2844 = vshrl.u32 %v2843, 7
  %v2845 = vsub.s32 %v2842, %v2844
  %v2846 = vrot.slane %v2832, %v2845
  %v2847 = vcombine.low %v2839, %v2846
  %v2848 = vld [vmem:[%s3] sm:$0xf]
  %v2849 = vld [vmem:[%s3 + $0x4] sm:$0xf]
  %v2850 = vld [vmem:[%s3 + $0x8] sm:$0xf]
  %v2851 = vld [vmem:[%s3 + $0xc] sm:$0xf]
  %v2852 = vld [vmem:[%s3 + $0x10] sm:$0xf]
  %v2853 = vld [vmem:[%s3 + $0x14] sm:$0xf]
  %v2854 = vld [vmem:[%s3 + $0x18] sm:$0xf]
  %v2855 = vld [vmem:[%s3 + $0x1c] sm:$0xf]
  %v2856 = vld [vmem:[%s3 + $0x20] sm:$0xf]
  %v2857 = vld [vmem:[%s3 + $0x24] sm:$0xf]
  %v2858 = vld [vmem:[%s3 + $0x28] sm:$0xf]
  %v2859 = vld [vmem:[%s3 + $0x2c] sm:$0xf]
  %v2860 = vld [vmem:[%s3 + $0x30] sm:$0xf]
  %v2861 = vld [vmem:[%s3 + $0x34] sm:$0xf]
  %v2862 = vld [vmem:[%s3 + $0x38] sm:$0xf]
  %v2863 = vld [vmem:[%s3 + $0x3c] sm:$0xf]
  %v2864 = vld [vmem:[%s3 + $0x40] sm:$0xf]
  %v2865 = vld [vmem:[%s3 + $0x44] sm:$0xf]
  %v2866 = vld [vmem:[%s3 + $0x48] sm:$0xf]
  %v2867 = vld [vmem:[%s3 + $0x4c] sm:$0xf]
  %v2868 = vld [vmem:[%s3 + $0x50] sm:$0xf]
  %v2869 = vld [vmem:[%s3 + $0x54] sm:$0xf]
  %v2870 = vld [vmem:[%s3 + $0x58] sm:$0xf]
  %v2871 = vld [vmem:[%s3 + $0x5c] sm:$0xf]
  %v2872 = vld [vmem:[%s3 + $0x60] sm:$0xf]
  %v2873 = vld [vmem:[%s3 + $0x64] sm:$0xf]
  %v2874 = vld [vmem:[%s3 + $0x68] sm:$0xf]
  %v2875 = vld [vmem:[%s3 + $0x6c] sm:$0xf]
  %v2876 = vld [vmem:[%s3 + $0x70] sm:$0xf]
  %v2877 = vld [vmem:[%s3 + $0x74] sm:$0xf]
  %v2878 = vld [vmem:[%s3 + $0x78] sm:$0xf]
  %v2879 = vld [vmem:[%s3 + $0x7c] sm:$0xf]
  %v2880 = vld [vmem:[%s3 + $0x80] sm:$0xf]
  %v2881 = vld [vmem:[%s3 + $0x84] sm:$0xf]
  %v2882 = vld [vmem:[%s3 + $0x88] sm:$0xf]
  %v2883 = vld [vmem:[%s3 + $0x8c] sm:$0xf]
  %v2884 = vld [vmem:[%s3 + $0x90] sm:$0xf]
  %v2885 = vld [vmem:[%s3 + $0x94] sm:$0xf]
  %v2886 = vld [vmem:[%s3 + $0x98] sm:$0xf]
  %v2887 = vld [vmem:[%s3 + $0x9c] sm:$0xf]
  %v2888 = vld [vmem:[%s3 + $0xa0] sm:$0xf]
  %v2889 = vld [vmem:[%s3 + $0xa4] sm:$0xf]
  %v2890 = vld [vmem:[%s3 + $0xa8] sm:$0xf]
  %v2891 = vld [vmem:[%s3 + $0xac] sm:$0xf]
  %v2892 = vld [vmem:[%s3 + $0xb0] sm:$0xf]
  %v2893 = vld [vmem:[%s3 + $0xb4] sm:$0xf]
  %v2894 = vld [vmem:[%s3 + $0xb8] sm:$0xf]
  %v2895 = vld [vmem:[%s3 + $0xbc] sm:$0xf]
  %v2896 = vld [vmem:[%s3 + $0xc0] sm:$0xf]
  %v2897 = vld [vmem:[%s3 + $0xc4] sm:$0xf]
  %v2898 = vld [vmem:[%s3 + $0xc8] sm:$0xf]
  %v2899 = vld [vmem:[%s3 + $0xcc] sm:$0xf]
  %v2900 = vld [vmem:[%s3 + $0xd0] sm:$0xf]
  %v2901 = vld [vmem:[%s3 + $0xd4] sm:$0xf]
  %v2902 = vld [vmem:[%s3 + $0xd8] sm:$0xf]
  %v2903 = vld [vmem:[%s3 + $0xdc] sm:$0xf]
  %v2904 = vld [vmem:[%s3 + $0xe0] sm:$0xf]
  %v2905 = vld [vmem:[%s3 + $0xe4] sm:$0xf]
  %v2906 = vld [vmem:[%s3 + $0xe8] sm:$0xf]
  %v2907 = vld [vmem:[%s3 + $0xec] sm:$0xf]
  %v2908 = vld [vmem:[%s3 + $0xf0] sm:$0xf]
  %v2909 = vld [vmem:[%s3 + $0xf4] sm:$0xf]
  %v2910 = vld [vmem:[%s3 + $0xf8] sm:$0xf]
  %v2911 = vld [vmem:[%s3 + $0xfc] sm:$0xf]
  %v2912 = vld [vmem:[%s4] sm:$0x1]
  %v2914 = vlaneseq
  %v2915 = vshrl.u32 %v2914, 7
  %v2916 = vsub.s32 0, %v2915
  %v2917 = vrot.slane %v2912, %v2916
  %v2919 = vcombine.low %v2320, %v2337
  %v2920 = vcombine.high %v2320, %v2337
  %v2921 = vcombine.low %v2354, %v2371
  %v2922 = vcombine.high %v2354, %v2371
  %v2924 = vunpack.c.l.s4 1983009808
  %v2925 = vunpack.c.0.s8 %v2924
  %v2926 = vlaneseq
  %v2927 = vshrl.u32 %v2926, 7
  %v2928 = vsub.s32 %v2925, %v2927
  %v2929 = vrot.slane %v2919, %v2928
  %v2931 = vunpack.c.l.s4 1983009808
  %v2932 = vunpack.c.0.s8 %v2931
  %v2933 = vlaneseq
  %v2934 = vshrl.u32 %v2933, 7
  %v2935 = vsub.s32 %v2932, %v2934
  %v2936 = vrot.slane %v2920, %v2935
  %v2938 = vunpack.c.l.s4 1983009808
  %v2939 = vunpack.c.0.s8 %v2938
  %v2940 = vlaneseq
  %v2941 = vshrl.u32 %v2940, 7
  %v2942 = vsub.s32 %v2939, %v2941
  %v2943 = vrot.slane %v2921, %v2942
  %v2945 = vunpack.c.l.s4 1983009808
  %v2946 = vunpack.c.0.s8 %v2945
  %v2947 = vlaneseq
  %v2948 = vshrl.u32 %v2947, 7
  %v2949 = vsub.s32 %v2946, %v2948
  %v2950 = vrot.slane %v2922, %v2949
  %v2951 = vcombine.low %v2929, %v2943
  %v2952 = vcombine.high %v2929, %v2943
  %v2953 = vcombine.low %v2936, %v2950
  %v2954 = vcombine.high %v2936, %v2950
  %v2955 = vcombine.low %v2388, %v2405
  %v2956 = vcombine.high %v2388, %v2405
  %v2957 = vcombine.low %v2422, %v2439
  %v2958 = vcombine.high %v2422, %v2439
  %v2960 = vunpack.c.l.s4 1983009808
  %v2961 = vunpack.c.0.s8 %v2960
  %v2962 = vlaneseq
  %v2963 = vshrl.u32 %v2962, 7
  %v2964 = vsub.s32 %v2961, %v2963
  %v2965 = vrot.slane %v2955, %v2964
  %v2967 = vunpack.c.l.s4 1983009808
  %v2968 = vunpack.c.0.s8 %v2967
  %v2969 = vlaneseq
  %v2970 = vshrl.u32 %v2969, 7
  %v2971 = vsub.s32 %v2968, %v2970
  %v2972 = vrot.slane %v2956, %v2971
  %v2974 = vunpack.c.l.s4 1983009808
  %v2975 = vunpack.c.0.s8 %v2974
  %v2976 = vlaneseq
  %v2977 = vshrl.u32 %v2976, 7
  %v2978 = vsub.s32 %v2975, %v2977
  %v2979 = vrot.slane %v2957, %v2978
  %v2981 = vunpack.c.l.s4 1983009808
  %v2982 = vunpack.c.0.s8 %v2981
  %v2983 = vlaneseq
  %v2984 = vshrl.u32 %v2983, 7
  %v2985 = vsub.s32 %v2982, %v2984
  %v2986 = vrot.slane %v2958, %v2985
  %v2987 = vcombine.low %v2965, %v2979
  %v2988 = vcombine.high %v2965, %v2979
  %v2989 = vcombine.low %v2972, %v2986
  %v2990 = vcombine.high %v2972, %v2986
  %v2991 = vcombine.low %v2456, %v2473
  %v2992 = vcombine.high %v2456, %v2473
  %v2993 = vcombine.low %v2490, %v2507
  %v2994 = vcombine.high %v2490, %v2507
  %v2996 = vunpack.c.l.s4 1983009808
  %v2997 = vunpack.c.0.s8 %v2996
  %v2998 = vlaneseq
  %v2999 = vshrl.u32 %v2998, 7
  %v3000 = vsub.s32 %v2997, %v2999
  %v3001 = vrot.slane %v2991, %v3000
  %v3003 = vunpack.c.l.s4 1983009808
  %v3004 = vunpack.c.0.s8 %v3003
  %v3005 = vlaneseq
  %v3006 = vshrl.u32 %v3005, 7
  %v3007 = vsub.s32 %v3004, %v3006
  %v3008 = vrot.slane %v2992, %v3007
  %v3010 = vunpack.c.l.s4 1983009808
  %v3011 = vunpack.c.0.s8 %v3010
  %v3012 = vlaneseq
  %v3013 = vshrl.u32 %v3012, 7
  %v3014 = vsub.s32 %v3011, %v3013
  %v3015 = vrot.slane %v2993, %v3014
  %v3017 = vunpack.c.l.s4 1983009808
  %v3018 = vunpack.c.0.s8 %v3017
  %v3019 = vlaneseq
  %v3020 = vshrl.u32 %v3019, 7
  %v3021 = vsub.s32 %v3018, %v3020
  %v3022 = vrot.slane %v2994, %v3021
  %v3023 = vcombine.low %v3001, %v3015
  %v3024 = vcombine.high %v3001, %v3015
  %v3025 = vcombine.low %v3008, %v3022
  %v3026 = vcombine.high %v3008, %v3022
  %v3027 = vcombine.low %v2524, %v2541
  %v3028 = vcombine.high %v2524, %v2541
  %v3029 = vcombine.low %v2558, %v2575
  %v3030 = vcombine.high %v2558, %v2575
  %v3032 = vunpack.c.l.s4 1983009808
  %v3033 = vunpack.c.0.s8 %v3032
  %v3034 = vlaneseq
  %v3035 = vshrl.u32 %v3034, 7
  %v3036 = vsub.s32 %v3033, %v3035
  %v3037 = vrot.slane %v3027, %v3036
  %v3039 = vunpack.c.l.s4 1983009808
  %v3040 = vunpack.c.0.s8 %v3039
  %v3041 = vlaneseq
  %v3042 = vshrl.u32 %v3041, 7
  %v3043 = vsub.s32 %v3040, %v3042
  %v3044 = vrot.slane %v3028, %v3043
  %v3046 = vunpack.c.l.s4 1983009808
  %v3047 = vunpack.c.0.s8 %v3046
  %v3048 = vlaneseq
  %v3049 = vshrl.u32 %v3048, 7
  %v3050 = vsub.s32 %v3047, %v3049
  %v3051 = vrot.slane %v3029, %v3050
  %v3053 = vunpack.c.l.s4 1983009808
  %v3054 = vunpack.c.0.s8 %v3053
  %v3055 = vlaneseq
  %v3056 = vshrl.u32 %v3055, 7
  %v3057 = vsub.s32 %v3054, %v3056
  %v3058 = vrot.slane %v3030, %v3057
  %v3059 = vcombine.low %v3037, %v3051
  %v3060 = vcombine.high %v3037, %v3051
  %v3061 = vcombine.low %v3044, %v3058
  %v3062 = vcombine.high %v3044, %v3058
  %v3063 = vcombine.low %v2592, %v2609
  %v3064 = vcombine.high %v2592, %v2609
  %v3065 = vcombine.low %v2626, %v2643
  %v3066 = vcombine.high %v2626, %v2643
  %v3068 = vunpack.c.l.s4 1983009808
  %v3069 = vunpack.c.0.s8 %v3068
  %v3070 = vlaneseq
  %v3071 = vshrl.u32 %v3070, 7
  %v3072 = vsub.s32 %v3069, %v3071
  %v3073 = vrot.slane %v3063, %v3072
  %v3075 = vunpack.c.l.s4 1983009808
  %v3076 = vunpack.c.0.s8 %v3075
  %v3077 = vlaneseq
  %v3078 = vshrl.u32 %v3077, 7
  %v3079 = vsub.s32 %v3076, %v3078
  %v3080 = vrot.slane %v3064, %v3079
  %v3082 = vunpack.c.l.s4 1983009808
  %v3083 = vunpack.c.0.s8 %v3082
  %v3084 = vlaneseq
  %v3085 = vshrl.u32 %v3084, 7
  %v3086 = vsub.s32 %v3083, %v3085
  %v3087 = vrot.slane %v3065, %v3086
  %v3089 = vunpack.c.l.s4 1983009808
  %v3090 = vunpack.c.0.s8 %v3089
  %v3091 = vlaneseq
  %v3092 = vshrl.u32 %v3091, 7
  %v3093 = vsub.s32 %v3090, %v3092
  %v3094 = vrot.slane %v3066, %v3093
  %v3095 = vcombine.low %v3073, %v3087
  %v3096 = vcombine.high %v3073, %v3087
  %v3097 = vcombine.low %v3080, %v3094
  %v3098 = vcombine.high %v3080, %v3094
  %v3099 = vcombine.low %v2660, %v2677
  %v3100 = vcombine.high %v2660, %v2677
  %v3101 = vcombine.low %v2694, %v2711
  %v3102 = vcombine.high %v2694, %v2711
  %v3104 = vunpack.c.l.s4 1983009808
  %v3105 = vunpack.c.0.s8 %v3104
  %v3106 = vlaneseq
  %v3107 = vshrl.u32 %v3106, 7
  %v3108 = vsub.s32 %v3105, %v3107
  %v3109 = vrot.slane %v3099, %v3108
  %v3111 = vunpack.c.l.s4 1983009808
  %v3112 = vunpack.c.0.s8 %v3111
  %v3113 = vlaneseq
  %v3114 = vshrl.u32 %v3113, 7
  %v3115 = vsub.s32 %v3112, %v3114
  %v3116 = vrot.slane %v3100, %v3115
  %v3118 = vunpack.c.l.s4 1983009808
  %v3119 = vunpack.c.0.s8 %v3118
  %v3120 = vlaneseq
  %v3121 = vshrl.u32 %v3120, 7
  %v3122 = vsub.s32 %v3119, %v3121
  %v3123 = vrot.slane %v3101, %v3122
  %v3125 = vunpack.c.l.s4 1983009808
  %v3126 = vunpack.c.0.s8 %v3125
  %v3127 = vlaneseq
  %v3128 = vshrl.u32 %v3127, 7
  %v3129 = vsub.s32 %v3126, %v3128
  %v3130 = vrot.slane %v3102, %v3129
  %v3131 = vcombine.low %v3109, %v3123
  %v3132 = vcombine.high %v3109, %v3123
  %v3133 = vcombine.low %v3116, %v3130
  %v3134 = vcombine.high %v3116, %v3130
  %v3135 = vcombine.low %v2728, %v2745
  %v3136 = vcombine.high %v2728, %v2745
  %v3137 = vcombine.low %v2762, %v2779
  %v3138 = vcombine.high %v2762, %v2779
  %v3140 = vunpack.c.l.s4 1983009808
  %v3141 = vunpack.c.0.s8 %v3140
  %v3142 = vlaneseq
  %v3143 = vshrl.u32 %v3142, 7
  %v3144 = vsub.s32 %v3141, %v3143
  %v3145 = vrot.slane %v3135, %v3144
  %v3147 = vunpack.c.l.s4 1983009808
  %v3148 = vunpack.c.0.s8 %v3147
  %v3149 = vlaneseq
  %v3150 = vshrl.u32 %v3149, 7
  %v3151 = vsub.s32 %v3148, %v3150
  %v3152 = vrot.slane %v3136, %v3151
  %v3154 = vunpack.c.l.s4 1983009808
  %v3155 = vunpack.c.0.s8 %v3154
  %v3156 = vlaneseq
  %v3157 = vshrl.u32 %v3156, 7
  %v3158 = vsub.s32 %v3155, %v3157
  %v3159 = vrot.slane %v3137, %v3158
  %v3161 = vunpack.c.l.s4 1983009808
  %v3162 = vunpack.c.0.s8 %v3161
  %v3163 = vlaneseq
  %v3164 = vshrl.u32 %v3163, 7
  %v3165 = vsub.s32 %v3162, %v3164
  %v3166 = vrot.slane %v3138, %v3165
  %v3167 = vcombine.low %v3145, %v3159
  %v3168 = vcombine.high %v3145, %v3159
  %v3169 = vcombine.low %v3152, %v3166
  %v3170 = vcombine.high %v3152, %v3166
  %v3171 = vcombine.low %v2796, %v2813
  %v3172 = vcombine.high %v2796, %v2813
  %v3173 = vcombine.low %v2830, %v2847
  %v3174 = vcombine.high %v2830, %v2847
  %v3176 = vunpack.c.l.s4 1983009808
  %v3177 = vunpack.c.0.s8 %v3176
  %v3178 = vlaneseq
  %v3179 = vshrl.u32 %v3178, 7
  %v3180 = vsub.s32 %v3177, %v3179
  %v3181 = vrot.slane %v3171, %v3180
  %v3183 = vunpack.c.l.s4 1983009808
  %v3184 = vunpack.c.0.s8 %v3183
  %v3185 = vlaneseq
  %v3186 = vshrl.u32 %v3185, 7
  %v3187 = vsub.s32 %v3184, %v3186
  %v3188 = vrot.slane %v3172, %v3187
  %v3190 = vunpack.c.l.s4 1983009808
  %v3191 = vunpack.c.0.s8 %v3190
  %v3192 = vlaneseq
  %v3193 = vshrl.u32 %v3192, 7
  %v3194 = vsub.s32 %v3191, %v3193
  %v3195 = vrot.slane %v3173, %v3194
  %v3197 = vunpack.c.l.s4 1983009808
  %v3198 = vunpack.c.0.s8 %v3197
  %v3199 = vlaneseq
  %v3200 = vshrl.u32 %v3199, 7
  %v3201 = vsub.s32 %v3198, %v3200
  %v3202 = vrot.slane %v3174, %v3201
  %v3203 = vcombine.low %v3181, %v3195
  %v3204 = vcombine.high %v3181, %v3195
  %v3205 = vcombine.low %v3188, %v3202
  %v3206 = vcombine.high %v3188, %v3202
  %v3303 = vunpack.c.l.b16 %v2848
  %v3304 = vunpack.c.l.b16 %v2849
  %v3305 = vunpack.c.l.b16 %v2850
  %v3306 = vunpack.c.l.b16 %v2851
  %v3307 = vunpack.c.l.b16 %v2852
  %v3308 = vunpack.c.l.b16 %v2853
  %v3309 = vunpack.c.l.b16 %v2854
  %v3310 = vunpack.c.l.b16 %v2855
  %v3311 = vunpack.c.l.b16 %v2856
  %v3312 = vunpack.c.l.b16 %v2857
  %v3313 = vunpack.c.l.b16 %v2858
  %v3314 = vunpack.c.l.b16 %v2859
  %v3315 = vunpack.c.l.b16 %v2860
  %v3316 = vunpack.c.l.b16 %v2861
  %v3317 = vunpack.c.l.b16 %v2862
  %v3318 = vunpack.c.l.b16 %v2863
  %v3319 = vunpack.c.l.b16 %v2864
  %v3320 = vunpack.c.l.b16 %v2865
  %v3321 = vunpack.c.l.b16 %v2866
  %v3322 = vunpack.c.l.b16 %v2867
  %v3323 = vunpack.c.l.b16 %v2868
  %v3324 = vunpack.c.l.b16 %v2869
  %v3325 = vunpack.c.l.b16 %v2870
  %v3326 = vunpack.c.l.b16 %v2871
  %v3327 = vunpack.c.l.b16 %v2872
  %v3328 = vunpack.c.l.b16 %v2873
  %v3329 = vunpack.c.l.b16 %v2874
  %v3330 = vunpack.c.l.b16 %v2875
  %v3331 = vunpack.c.l.b16 %v2876
  %v3332 = vunpack.c.l.b16 %v2877
  %v3333 = vunpack.c.l.b16 %v2878
  %v3334 = vunpack.c.l.b16 %v2879
  %v3335 = vunpack.c.l.b16 %v2880
  %v3336 = vunpack.c.l.b16 %v2881
  %v3337 = vunpack.c.l.b16 %v2882
  %v3338 = vunpack.c.l.b16 %v2883
  %v3339 = vunpack.c.l.b16 %v2884
  %v3340 = vunpack.c.l.b16 %v2885
  %v3341 = vunpack.c.l.b16 %v2886
  %v3342 = vunpack.c.l.b16 %v2887
  %v3343 = vunpack.c.l.b16 %v2888
  %v3344 = vunpack.c.l.b16 %v2889
  %v3345 = vunpack.c.l.b16 %v2890
  %v3346 = vunpack.c.l.b16 %v2891
  %v3347 = vunpack.c.l.b16 %v2892
  %v3348 = vunpack.c.l.b16 %v2893
  %v3349 = vunpack.c.l.b16 %v2894
  %v3350 = vunpack.c.l.b16 %v2895
  %v3351 = vunpack.c.l.b16 %v2896
  %v3352 = vunpack.c.l.b16 %v2897
  %v3353 = vunpack.c.l.b16 %v2898
  %v3354 = vunpack.c.l.b16 %v2899
  %v3355 = vunpack.c.l.b16 %v2900
  %v3356 = vunpack.c.l.b16 %v2901
  %v3357 = vunpack.c.l.b16 %v2902
  %v3358 = vunpack.c.l.b16 %v2903
  %v3359 = vunpack.c.l.b16 %v2904
  %v3360 = vunpack.c.l.b16 %v2905
  %v3361 = vunpack.c.l.b16 %v2906
  %v3362 = vunpack.c.l.b16 %v2907
  %v3363 = vunpack.c.l.b16 %v2908
  %v3364 = vunpack.c.l.b16 %v2909
  %v3365 = vunpack.c.l.b16 %v2910
  %v3366 = vunpack.c.l.b16 %v2911
  %v3367 = vpack.c.b16 %v3304, %v3303
  %v3368 = vpack.c.b16 %v3306, %v3305
  %v3369 = vpack.c.b16 %v3308, %v3307
  %v3370 = vpack.c.b16 %v3310, %v3309
  %v3371 = vpack.c.b16 %v3312, %v3311
  %v3372 = vpack.c.b16 %v3314, %v3313
  %v3373 = vpack.c.b16 %v3316, %v3315
  %v3374 = vpack.c.b16 %v3318, %v3317
  %v3375 = vpack.c.b16 %v3320, %v3319
  %v3376 = vpack.c.b16 %v3322, %v3321
  %v3377 = vpack.c.b16 %v3324, %v3323
  %v3378 = vpack.c.b16 %v3326, %v3325
  %v3379 = vpack.c.b16 %v3328, %v3327
  %v3380 = vpack.c.b16 %v3330, %v3329
  %v3381 = vpack.c.b16 %v3332, %v3331
  %v3382 = vpack.c.b16 %v3334, %v3333
  %v3383 = vpack.c.b16 %v3336, %v3335
  %v3384 = vpack.c.b16 %v3338, %v3337
  %v3385 = vpack.c.b16 %v3340, %v3339
  %v3386 = vpack.c.b16 %v3342, %v3341
  %v3387 = vpack.c.b16 %v3344, %v3343
  %v3388 = vpack.c.b16 %v3346, %v3345
  %v3389 = vpack.c.b16 %v3348, %v3347
  %v3390 = vpack.c.b16 %v3350, %v3349
  %v3391 = vpack.c.b16 %v3352, %v3351
  %v3392 = vpack.c.b16 %v3354, %v3353
  %v3393 = vpack.c.b16 %v3356, %v3355
  %v3394 = vpack.c.b16 %v3358, %v3357
  %v3395 = vpack.c.b16 %v3360, %v3359
  %v3396 = vpack.c.b16 %v3362, %v3361
  %v3397 = vpack.c.b16 %v3364, %v3363
  %v3398 = vpack.c.b16 %v3366, %v3365
  %3431 = vmatprep.subr.bf16.mxu0 0
  %3432 = vmatpush1.bf16.msra.mxu0 %v3367
  %3433 = vmatprep.subr.bf16.mxu0 0
  %3434 = vmatpush1.bf16.msra.mxu0 %v3368
  %3435 = vmatprep.subr.bf16.mxu0 0
  %3436 = vmatpush1.bf16.msra.mxu0 %v3369
  %3437 = vmatprep.subr.bf16.mxu0 0
  %3438 = vmatpush1.bf16.msra.mxu0 %v3370
  %3439 = vmatprep.subr.bf16.mxu0 0
  %3440 = vmatpush1.bf16.msra.mxu0 %v3371
  %3441 = vmatprep.subr.bf16.mxu0 0
  %3442 = vmatpush1.bf16.msra.mxu0 %v3372
  %3443 = vmatprep.subr.bf16.mxu0 0
  %3444 = vmatpush1.bf16.msra.mxu0 %v3373
  %3445 = vmatprep.subr.bf16.mxu0 0
  %3446 = vmatpush1.bf16.msra.mxu0 %v3374
  %3447 = vmatprep.subr.bf16.mxu0 0
  %3448 = vmatpush1.bf16.msra.mxu0 %v3375
  %3449 = vmatprep.subr.bf16.mxu0 0
  %3450 = vmatpush1.bf16.msra.mxu0 %v3376
  %3451 = vmatprep.subr.bf16.mxu0 0
  %3452 = vmatpush1.bf16.msra.mxu0 %v3377
  %3453 = vmatprep.subr.bf16.mxu0 0
  %3454 = vmatpush1.bf16.msra.mxu0 %v3378
  %3455 = vmatprep.subr.bf16.mxu0 0
  %3456 = vmatpush1.bf16.msra.mxu0 %v3379
  %3457 = vmatprep.subr.bf16.mxu0 0
  %3458 = vmatpush1.bf16.msra.mxu0 %v3380
  %3459 = vmatprep.subr.bf16.mxu0 0
  %3460 = vmatpush1.bf16.msra.mxu0 %v3381
  %3461 = vmatprep.subr.bf16.mxu0 0
  %3462 = vmatpush1.bf16.msra.mxu0 %v3382
  %3463 = vmatprep.mubr.bf16.mxu0 %v2952
  %3464 = vmatmul.mubr.bf16.gmra.mrb[0].mxu0 %v2951
  %v3465 = vpop.f32.mrb[0].mxu0
  %v3466 = vadd.f32 %v2917, %v3465
  %v3467 = vpop.f32.mrb[0].mxu0
  %v3468 = vpop.f32.mrb[0].mxu0
  %v3469 = vadd.f32 %v2917, %v3468
  %v3470 = vpop.f32.mrb[0].mxu0
  %3471 = vmatprep.mubr.bf16.mxu0 %v2988
  %3472 = vmatmul.mubr.bf16.gmra.mrb[0].mxu0 %v2987
  %v3473 = vpop.f32.mrb[0].mxu0
  %v3474 = vadd.f32 %v2917, %v3473
  %v3475 = vpop.f32.mrb[0].mxu0
  %v3476 = vpop.f32.mrb[0].mxu0
  %v3477 = vadd.f32 %v2917, %v3476
  %v3478 = vpop.f32.mrb[0].mxu0
  %3479 = vmatprep.mubr.bf16.mxu0 %v3024
  %3480 = vmatmul.mubr.bf16.gmra.mrb[0].mxu0 %v3023
  %v3481 = vpop.f32.mrb[0].mxu0
  %v3482 = vadd.f32 %v2917, %v3481
  %v3483 = vpop.f32.mrb[0].mxu0
  %v3484 = vpop.f32.mrb[0].mxu0
  %v3485 = vadd.f32 %v2917, %v3484
  %v3486 = vpop.f32.mrb[0].mxu0
  %3487 = vmatprep.mubr.bf16.mxu0 %v3060
  %3488 = vmatmul.mubr.bf16.gmra.mrb[0].mxu0 %v3059
  %v3489 = vpop.f32.mrb[0].mxu0
  %v3490 = vadd.f32 %v2917, %v3489
  %v3491 = vpop.f32.mrb[0].mxu0
  %v3492 = vpop.f32.mrb[0].mxu0
  %v3493 = vadd.f32 %v2917, %v3492
  %v3494 = vpop.f32.mrb[0].mxu0
  %3495 = vmatprep.mubr.bf16.mxu0 %v3096
  %3496 = vmatmul.mubr.bf16.gmra.mrb[0].mxu0 %v3095
  %v3497 = vpop.f32.mrb[0].mxu0
  %v3498 = vadd.f32 %v2917, %v3497
  %v3499 = vpop.f32.mrb[0].mxu0
  %v3500 = vpop.f32.mrb[0].mxu0
  %v3501 = vadd.f32 %v2917, %v3500
  %v3502 = vpop.f32.mrb[0].mxu0
  %3503 = vmatprep.mubr.bf16.mxu0 %v3132
  %3504 = vmatmul.mubr.bf16.gmra.mrb[0].mxu0 %v3131
  %v3505 = vpop.f32.mrb[0].mxu0
  %v3506 = vadd.f32 %v2917, %v3505
  %v3507 = vpop.f32.mrb[0].mxu0
  %v3508 = vpop.f32.mrb[0].mxu0
  %v3509 = vadd.f32 %v2917, %v3508
  %v3510 = vpop.f32.mrb[0].mxu0
  %3511 = vmatprep.mubr.bf16.mxu0 %v3168
  %3512 = vmatmul.mubr.bf16.gmra.mrb[0].mxu0 %v3167
  %v3513 = vpop.f32.mrb[0].mxu0
  %v3514 = vadd.f32 %v2917, %v3513
  %v3515 = vpop.f32.mrb[0].mxu0
  %v3516 = vpop.f32.mrb[0].mxu0
  %v3517 = vadd.f32 %v2917, %v3516
  %v3518 = vpop.f32.mrb[0].mxu0
  %3519 = vmatprep.mubr.bf16.mxu0 %v3204
  %3520 = vmatmul.mubr.bf16.gmra.mrb[0].mxu0 %v3203
  %v3521 = vpop.f32.mrb[0].mxu0
  %v3522 = vadd.f32 %v2917, %v3521
  %v3523 = vpop.f32.mrb[0].mxu0
  %v3524 = vpop.f32.mrb[0].mxu0
  %v3525 = vadd.f32 %v2917, %v3524
  %v3526 = vpop.f32.mrb[0].mxu0
  %3527 = vdwg.mxu0
  %3528 = vmatprep.subr.bf16.mxu0 0
  %3529 = vmatpush1.bf16.msra.mxu0 %v3383
  %3530 = vmatprep.subr.bf16.mxu0 0
  %3531 = vmatpush1.bf16.msra.mxu0 %v3384
  %3532 = vmatprep.subr.bf16.mxu0 0
  %3533 = vmatpush1.bf16.msra.mxu0 %v3385
  %3534 = vmatprep.subr.bf16.mxu0 0
  %3535 = vmatpush1.bf16.msra.mxu0 %v3386
  %3536 = vmatprep.subr.bf16.mxu0 0
  %3537 = vmatpush1.bf16.msra.mxu0 %v3387
  %3538 = vmatprep.subr.bf16.mxu0 0
  %3539 = vmatpush1.bf16.msra.mxu0 %v3388
  %3540 = vmatprep.subr.bf16.mxu0 0
  %3541 = vmatpush1.bf16.msra.mxu0 %v3389
  %3542 = vmatprep.subr.bf16.mxu0 0
  %3543 = vmatpush1.bf16.msra.mxu0 %v3390
  %3544 = vmatprep.subr.bf16.mxu0 0
  %3545 = vmatpush1.bf16.msra.mxu0 %v3391
  %3546 = vmatprep.subr.bf16.mxu0 0
  %3547 = vmatpush1.bf16.msra.mxu0 %v3392
  %3548 = vmatprep.subr.bf16.mxu0 0
  %3549 = vmatpush1.bf16.msra.mxu0 %v3393
  %3550 = vmatprep.subr.bf16.mxu0 0
  %3551 = vmatpush1.bf16.msra.mxu0 %v3394
  %3552 = vmatprep.subr.bf16.mxu0 0
  %3553 = vmatpush1.bf16.msra.mxu0 %v3395
  %3554 = vmatprep.subr.bf16.mxu0 0
  %3555 = vmatpush1.bf16.msra.mxu0 %v3396
  %3556 = vmatprep.subr.bf16.mxu0 0
  %3557 = vmatpush1.bf16.msra.mxu0 %v3397
  %3558 = vmatprep.subr.bf16.mxu0 0
  %3559 = vmatpush1.bf16.msra.mxu0 %v3398
  %3560 = vmatprep.mubr.bf16.mxu0 %v2954
  %3561 = vmatmul.mubr.bf16.gmra.mrb[0].mxu0 %v2953
  %v3562 = vpop.f32.mrb[0].mxu0
  %v3563 = vadd.f32 %v3466, %v3562
  %v3564 = vpop.f32.mrb[0].mxu0
  %v3565 = vpop.f32.mrb[0].mxu0
  %v3566 = vadd.f32 %v3469, %v3565
  %v3567 = vpop.f32.mrb[0].mxu0
  %3568 = vmatprep.mubr.bf16.mxu0 %v2990
  %3569 = vmatmul.mubr.bf16.gmra.mrb[0].mxu0 %v2989
  %v3570 = vpop.f32.mrb[0].mxu0
  %v3571 = vadd.f32 %v3474, %v3570
  %v3572 = vpop.f32.mrb[0].mxu0
  %v3573 = vpop.f32.mrb[0].mxu0
  %v3574 = vadd.f32 %v3477, %v3573
  %v3575 = vpop.f32.mrb[0].mxu0
  %3576 = vmatprep.mubr.bf16.mxu0 %v3026
  %3577 = vmatmul.mubr.bf16.gmra.mrb[0].mxu0 %v3025
  %v3578 = vpop.f32.mrb[0].mxu0
  %v3579 = vadd.f32 %v3482, %v3578
  %v3580 = vpop.f32.mrb[0].mxu0
  %v3581 = vpop.f32.mrb[0].mxu0
  %v3582 = vadd.f32 %v3485, %v3581
  %v3583 = vpop.f32.mrb[0].mxu0
  %3584 = vmatprep.mubr.bf16.mxu0 %v3062
  %3585 = vmatmul.mubr.bf16.gmra.mrb[0].mxu0 %v3061
  %v3586 = vpop.f32.mrb[0].mxu0
  %v3587 = vadd.f32 %v3490, %v3586
  %v3588 = vpop.f32.mrb[0].mxu0
  %v3589 = vpop.f32.mrb[0].mxu0
  %v3590 = vadd.f32 %v3493, %v3589
  %v3591 = vpop.f32.mrb[0].mxu0
  %3592 = vmatprep.mubr.bf16.mxu0 %v3098
  %3593 = vmatmul.mubr.bf16.gmra.mrb[0].mxu0 %v3097
  %v3594 = vpop.f32.mrb[0].mxu0
  %v3595 = vadd.f32 %v3498, %v3594
  %v3596 = vpop.f32.mrb[0].mxu0
  %v3597 = vpop.f32.mrb[0].mxu0
  %v3598 = vadd.f32 %v3501, %v3597
  %v3599 = vpop.f32.mrb[0].mxu0
  %3600 = vmatprep.mubr.bf16.mxu0 %v3134
  %3601 = vmatmul.mubr.bf16.gmra.mrb[0].mxu0 %v3133
  %v3602 = vpop.f32.mrb[0].mxu0
  %v3603 = vadd.f32 %v3506, %v3602
  %v3604 = vpop.f32.mrb[0].mxu0
  %v3605 = vpop.f32.mrb[0].mxu0
  %v3606 = vadd.f32 %v3509, %v3605
  %v3607 = vpop.f32.mrb[0].mxu0
  %3608 = vmatprep.mubr.bf16.mxu0 %v3170
  %3609 = vmatmul.mubr.bf16.gmra.mrb[0].mxu0 %v3169
  %v3610 = vpop.f32.mrb[0].mxu0
  %v3611 = vadd.f32 %v3514, %v3610
  %v3612 = vpop.f32.mrb[0].mxu0
  %v3613 = vpop.f32.mrb[0].mxu0
  %v3614 = vadd.f32 %v3517, %v3613
  %v3615 = vpop.f32.mrb[0].mxu0
  %3616 = vmatprep.mubr.bf16.mxu0 %v3206
  %3617 = vmatmul.mubr.bf16.gmra.mrb[0].mxu0 %v3205
  %v3618 = vpop.f32.mrb[0].mxu0
  %v3619 = vadd.f32 %v3522, %v3618
  %v3620 = vpop.f32.mrb[0].mxu0
  %v3621 = vpop.f32.mrb[0].mxu0
  %v3622 = vadd.f32 %v3525, %v3621
  %v3623 = vpop.f32.mrb[0].mxu0
  %3624 = vdwg.mxu0
  %v3625 = vmax.f32 %v3563, 0.0
  %v3626 = vmax.f32 %v3566, 0.0
  %v3627 = vmax.f32 %v3571, 0.0
  %v3628 = vmax.f32 %v3574, 0.0
  %v3629 = vmax.f32 %v3579, 0.0
  %v3630 = vmax.f32 %v3582, 0.0
  %v3631 = vmax.f32 %v3587, 0.0
  %v3632 = vmax.f32 %v3590, 0.0
  %v3633 = vmax.f32 %v3595, 0.0
  %v3634 = vmax.f32 %v3598, 0.0
  %v3635 = vmax.f32 %v3603, 0.0
  %v3636 = vmax.f32 %v3606, 0.0
  %v3637 = vmax.f32 %v3611, 0.0
  %v3638 = vmax.f32 %v3614, 0.0
  %v3639 = vmax.f32 %v3619, 0.0
  %v3640 = vmax.f32 %v3622, 0.0
  %v3641 = vpack.c.bf16 %v3626, %v3625
  %v3642 = vpack.c.bf16 %v3628, %v3627
  %v3643 = vpack.c.bf16 %v3630, %v3629
  %v3644 = vpack.c.bf16 %v3632, %v3631
  %v3645 = vpack.c.bf16 %v3634, %v3633
  %v3646 = vpack.c.bf16 %v3636, %v3635
  %v3647 = vpack.c.bf16 %v3638, %v3637
  %v3648 = vpack.c.bf16 %v3640, %v3639
  %v3657 = vcombine.high %v3641, %v3641
  %v3659 = vunpack.c.l.s4 1983009808
  %v3660 = vunpack.c.0.s8 %v3659
  %v3661 = vlaneseq
  %v3662 = vshrl.u32 %v3661, 7
  %v3663 = vsub.s32 %v3660, %v3662
  %v3664 = vrot.slane %v3641, %v3663
  %v3666 = vunpack.c.l.s4 1983009808
  %v3667 = vunpack.c.0.s8 %v3666
  %v3668 = vlaneseq
  %v3669 = vshrl.u32 %v3668, 7
  %v3670 = vsub.s32 %v3667, %v3669
  %v3671 = vrot.slane %v3657, %v3670
  %v3672 = vcombine.high %v3664, %v3664
  %v3673 = vcombine.high %v3671, %v3671
  %v3674 = vcombine.high %v3642, %v3642
  %v3676 = vunpack.c.l.s4 1983009808
  %v3677 = vunpack.c.0.s8 %v3676
  %v3678 = vlaneseq
  %v3679 = vshrl.u32 %v3678, 7
  %v3680 = vsub.s32 %v3677, %v3679
  %v3681 = vrot.slane %v3642, %v3680
  %v3683 = vunpack.c.l.s4 1983009808
  %v3684 = vunpack.c.0.s8 %v3683
  %v3685 = vlaneseq
  %v3686 = vshrl.u32 %v3685, 7
  %v3687 = vsub.s32 %v3684, %v3686
  %v3688 = vrot.slane %v3674, %v3687
  %v3689 = vcombine.high %v3681, %v3681
  %v3690 = vcombine.high %v3688, %v3688
  %v3691 = vcombine.high %v3643, %v3643
  %v3693 = vunpack.c.l.s4 1983009808
  %v3694 = vunpack.c.0.s8 %v3693
  %v3695 = vlaneseq
  %v3696 = vshrl.u32 %v3695, 7
  %v3697 = vsub.s32 %v3694, %v3696
  %v3698 = vrot.slane %v3643, %v3697
  %v3700 = vunpack.c.l.s4 1983009808
  %v3701 = vunpack.c.0.s8 %v3700
  %v3702 = vlaneseq
  %v3703 = vshrl.u32 %v3702, 7
  %v3704 = vsub.s32 %v3701, %v3703
  %v3705 = vrot.slane %v3691, %v3704
  %v3706 = vcombine.high %v3698, %v3698
  %v3707 = vcombine.high %v3705, %v3705
  %v3708 = vcombine.high %v3644, %v3644
  %v3710 = vunpack.c.l.s4 1983009808
  %v3711 = vunpack.c.0.s8 %v3710
  %v3712 = vlaneseq
  %v3713 = vshrl.u32 %v3712, 7
  %v3714 = vsub.s32 %v3711, %v3713
  %v3715 = vrot.slane %v3644, %v3714
  %v3717 = vunpack.c.l.s4 1983009808
  %v3718 = vunpack.c.0.s8 %v3717
  %v3719 = vlaneseq
  %v3720 = vshrl.u32 %v3719, 7
  %v3721 = vsub.s32 %v3718, %v3720
  %v3722 = vrot.slane %v3708, %v3721
  %v3723 = vcombine.high %v3715, %v3715
  %v3724 = vcombine.high %v3722, %v3722
  %v3725 = vcombine.high %v3645, %v3645
  %v3727 = vunpack.c.l.s4 1983009808
  %v3728 = vunpack.c.0.s8 %v3727
  %v3729 = vlaneseq
  %v3730 = vshrl.u32 %v3729, 7
  %v3731 = vsub.s32 %v3728, %v3730
  %v3732 = vrot.slane %v3645, %v3731
  %v3734 = vunpack.c.l.s4 1983009808
  %v3735 = vunpack.c.0.s8 %v3734
  %v3736 = vlaneseq
  %v3737 = vshrl.u32 %v3736, 7
  %v3738 = vsub.s32 %v3735, %v3737
  %v3739 = vrot.slane %v3725, %v3738
  %v3740 = vcombine.high %v3732, %v3732
  %v3741 = vcombine.high %v3739, %v3739
  %v3742 = vcombine.high %v3646, %v3646
  %v3744 = vunpack.c.l.s4 1983009808
  %v3745 = vunpack.c.0.s8 %v3744
  %v3746 = vlaneseq
  %v3747 = vshrl.u32 %v3746, 7
  %v3748 = vsub.s32 %v3745, %v3747
  %v3749 = vrot.slane %v3646, %v3748
  %v3751 = vunpack.c.l.s4 1983009808
  %v3752 = vunpack.c.0.s8 %v3751
  %v3753 = vlaneseq
  %v3754 = vshrl.u32 %v3753, 7
  %v3755 = vsub.s32 %v3752, %v3754
  %v3756 = vrot.slane %v3742, %v3755
  %v3757 = vcombine.high %v3749, %v3749
  %v3758 = vcombine.high %v3756, %v3756
  %v3759 = vcombine.high %v3647, %v3647
  %v3761 = vunpack.c.l.s4 1983009808
  %v3762 = vunpack.c.0.s8 %v3761
  %v3763 = vlaneseq
  %v3764 = vshrl.u32 %v3763, 7
  %v3765 = vsub.s32 %v3762, %v3764
  %v3766 = vrot.slane %v3647, %v3765
  %v3768 = vunpack.c.l.s4 1983009808
  %v3769 = vunpack.c.0.s8 %v3768
  %v3770 = vlaneseq
  %v3771 = vshrl.u32 %v3770, 7
  %v3772 = vsub.s32 %v3769, %v3771
  %v3773 = vrot.slane %v3759, %v3772
  %v3774 = vcombine.high %v3766, %v3766
  %v3775 = vcombine.high %v3773, %v3773
  %v3776 = vcombine.high %v3648, %v3648
  %v3778 = vunpack.c.l.s4 1983009808
  %v3779 = vunpack.c.0.s8 %v3778
  %v3780 = vlaneseq
  %v3781 = vshrl.u32 %v3780, 7
  %v3782 = vsub.s32 %v3779, %v3781
  %v3783 = vrot.slane %v3648, %v3782
  %v3785 = vunpack.c.l.s4 1983009808
  %v3786 = vunpack.c.0.s8 %v3785
  %v3787 = vlaneseq
  %v3788 = vshrl.u32 %v3787, 7
  %v3789 = vsub.s32 %v3786, %v3788
  %v3790 = vrot.slane %v3776, %v3789
  %v3791 = vcombine.high %v3783, %v3783
  %v3792 = vcombine.high %v3790, %v3790
  %v3794 = vunpack.c.l.s4 1983009808
  %v3795 = vunpack.c.0.s8 %v3794
  %v3796 = vlaneseq
  %v3797 = vshrl.u32 %v3796, 7
  %v3798 = vsub.s32 %v3795, %v3797
  %v3799 = vrot.slane %v3664, %v3798
  %v3801 = vunpack.c.l.s4 1983009808
  %v3802 = vunpack.c.0.s8 %v3801
  %v3803 = vlaneseq
  %v3804 = vshrl.u32 %v3803, 7
  %v3805 = vsub.s32 %v3802, %v3804
  %v3806 = vrot.slane %v3672, %v3805
  %v3808 = vunpack.c.l.s4 1983009808
  %v3809 = vunpack.c.0.s8 %v3808
  %v3810 = vlaneseq
  %v3811 = vshrl.u32 %v3810, 7
  %v3812 = vsub.s32 %v3809, %v3811
  %v3813 = vrot.slane %v3671, %v3812
  %v3815 = vunpack.c.l.s4 1983009808
  %v3816 = vunpack.c.0.s8 %v3815
  %v3817 = vlaneseq
  %v3818 = vshrl.u32 %v3817, 7
  %v3819 = vsub.s32 %v3816, %v3818
  %v3820 = vrot.slane %v3681, %v3819
  %v3822 = vunpack.c.l.s4 1983009808
  %v3823 = vunpack.c.0.s8 %v3822
  %v3824 = vlaneseq
  %v3825 = vshrl.u32 %v3824, 7
  %v3826 = vsub.s32 %v3823, %v3825
  %v3827 = vrot.slane %v3689, %v3826
  %v3829 = vunpack.c.l.s4 1983009808
  %v3830 = vunpack.c.0.s8 %v3829
  %v3831 = vlaneseq
  %v3832 = vshrl.u32 %v3831, 7
  %v3833 = vsub.s32 %v3830, %v3832
  %v3834 = vrot.slane %v3688, %v3833
  %v3836 = vunpack.c.l.s4 1983009808
  %v3837 = vunpack.c.0.s8 %v3836
  %v3838 = vlaneseq
  %v3839 = vshrl.u32 %v3838, 7
  %v3840 = vsub.s32 %v3837, %v3839
  %v3841 = vrot.slane %v3698, %v3840
  %v3843 = vunpack.c.l.s4 1983009808
  %v3844 = vunpack.c.0.s8 %v3843
  %v3845 = vlaneseq
  %v3846 = vshrl.u32 %v3845, 7
  %v3847 = vsub.s32 %v3844, %v3846
  %v3848 = vrot.slane %v3706, %v3847
  %v3850 = vunpack.c.l.s4 1983009808
  %v3851 = vunpack.c.0.s8 %v3850
  %v3852 = vlaneseq
  %v3853 = vshrl.u32 %v3852, 7
  %v3854 = vsub.s32 %v3851, %v3853
  %v3855 = vrot.slane %v3705, %v3854
  %v3857 = vunpack.c.l.s4 1983009808
  %v3858 = vunpack.c.0.s8 %v3857
  %v3859 = vlaneseq
  %v3860 = vshrl.u32 %v3859, 7
  %v3861 = vsub.s32 %v3858, %v3860
  %v3862 = vrot.slane %v3715, %v3861
  %v3864 = vunpack.c.l.s4 1983009808
  %v3865 = vunpack.c.0.s8 %v3864
  %v3866 = vlaneseq
  %v3867 = vshrl.u32 %v3866, 7
  %v3868 = vsub.s32 %v3865, %v3867
  %v3869 = vrot.slane %v3723, %v3868
  %v3871 = vunpack.c.l.s4 1983009808
  %v3872 = vunpack.c.0.s8 %v3871
  %v3873 = vlaneseq
  %v3874 = vshrl.u32 %v3873, 7
  %v3875 = vsub.s32 %v3872, %v3874
  %v3876 = vrot.slane %v3722, %v3875
  %v3878 = vunpack.c.l.s4 1983009808
  %v3879 = vunpack.c.0.s8 %v3878
  %v3880 = vlaneseq
  %v3881 = vshrl.u32 %v3880, 7
  %v3882 = vsub.s32 %v3879, %v3881
  %v3883 = vrot.slane %v3732, %v3882
  %v3885 = vunpack.c.l.s4 1983009808
  %v3886 = vunpack.c.0.s8 %v3885
  %v3887 = vlaneseq
  %v3888 = vshrl.u32 %v3887, 7
  %v3889 = vsub.s32 %v3886, %v3888
  %v3890 = vrot.slane %v3740, %v3889
  %v3892 = vunpack.c.l.s4 1983009808
  %v3893 = vunpack.c.0.s8 %v3892
  %v3894 = vlaneseq
  %v3895 = vshrl.u32 %v3894, 7
  %v3896 = vsub.s32 %v3893, %v3895
  %v3897 = vrot.slane %v3739, %v3896
  %v3899 = vunpack.c.l.s4 1983009808
  %v3900 = vunpack.c.0.s8 %v3899
  %v3901 = vlaneseq
  %v3902 = vshrl.u32 %v3901, 7
  %v3903 = vsub.s32 %v3900, %v3902
  %v3904 = vrot.slane %v3749, %v3903
  %v3906 = vunpack.c.l.s4 1983009808
  %v3907 = vunpack.c.0.s8 %v3906
  %v3908 = vlaneseq
  %v3909 = vshrl.u32 %v3908, 7
  %v3910 = vsub.s32 %v3907, %v3909
  %v3911 = vrot.slane %v3757, %v3910
  %v3913 = vunpack.c.l.s4 1983009808
  %v3914 = vunpack.c.0.s8 %v3913
  %v3915 = vlaneseq
  %v3916 = vshrl.u32 %v3915, 7
  %v3917 = vsub.s32 %v3914, %v3916
  %v3918 = vrot.slane %v3756, %v3917
  %v3920 = vunpack.c.l.s4 1983009808
  %v3921 = vunpack.c.0.s8 %v3920
  %v3922 = vlaneseq
  %v3923 = vshrl.u32 %v3922, 7
  %v3924 = vsub.s32 %v3921, %v3923
  %v3925 = vrot.slane %v3766, %v3924
  %v3927 = vunpack.c.l.s4 1983009808
  %v3928 = vunpack.c.0.s8 %v3927
  %v3929 = vlaneseq
  %v3930 = vshrl.u32 %v3929, 7
  %v3931 = vsub.s32 %v3928, %v3930
  %v3932 = vrot.slane %v3774, %v3931
  %v3934 = vunpack.c.l.s4 1983009808
  %v3935 = vunpack.c.0.s8 %v3934
  %v3936 = vlaneseq
  %v3937 = vshrl.u32 %v3936, 7
  %v3938 = vsub.s32 %v3935, %v3937
  %v3939 = vrot.slane %v3773, %v3938
  %v3941 = vunpack.c.l.s4 1983009808
  %v3942 = vunpack.c.0.s8 %v3941
  %v3943 = vlaneseq
  %v3944 = vshrl.u32 %v3943, 7
  %v3945 = vsub.s32 %v3942, %v3944
  %v3946 = vrot.slane %v3783, %v3945
  %v3948 = vunpack.c.l.s4 1983009808
  %v3949 = vunpack.c.0.s8 %v3948
  %v3950 = vlaneseq
  %v3951 = vshrl.u32 %v3950, 7
  %v3952 = vsub.s32 %v3949, %v3951
  %v3953 = vrot.slane %v3791, %v3952
  %v3955 = vunpack.c.l.s4 1983009808
  %v3956 = vunpack.c.0.s8 %v3955
  %v3957 = vlaneseq
  %v3958 = vshrl.u32 %v3957, 7
  %v3959 = vsub.s32 %v3956, %v3958
  %v3960 = vrot.slane %v3790, %v3959
  %v3962 = vshrl.u32 %v3799, 16
  %v3964 = vshll.u32 %v3799, 16
  %v3966 = vrot.slane %v3964, 1
  %v3967 = vor.u32 %v3962, %v3966
  %v3969 = vshrl.u32 %v3806, 16
  %v3971 = vshll.u32 %v3806, 16
  %v3973 = vrot.slane %v3971, 1
  %v3974 = vor.u32 %v3969, %v3973
  %v3976 = vshrl.u32 %v3813, 16
  %v3978 = vshll.u32 %v3813, 16
  %v3980 = vrot.slane %v3978, 1
  %v3981 = vor.u32 %v3976, %v3980
  %v3983 = vshrl.u32 %v3820, 16
  %v3985 = vshll.u32 %v3820, 16
  %v3987 = vrot.slane %v3985, 1
  %v3988 = vor.u32 %v3983, %v3987
  %v3990 = vshrl.u32 %v3827, 16
  %v3992 = vshll.u32 %v3827, 16
  %v3994 = vrot.slane %v3992, 1
  %v3995 = vor.u32 %v3990, %v3994
  %v3997 = vshrl.u32 %v3834, 16
  %v3999 = vshll.u32 %v3834, 16
  %v4001 = vrot.slane %v3999, 1
  %v4002 = vor.u32 %v3997, %v4001
  %v4004 = vshrl.u32 %v3841, 16
  %v4006 = vshll.u32 %v3841, 16
  %v4008 = vrot.slane %v4006, 1
  %v4009 = vor.u32 %v4004, %v4008
  %v4011 = vshrl.u32 %v3848, 16
  %v4013 = vshll.u32 %v3848, 16
  %v4015 = vrot.slane %v4013, 1
  %v4016 = vor.u32 %v4011, %v4015
  %v4018 = vshrl.u32 %v3855, 16
  %v4020 = vshll.u32 %v3855, 16
  %v4022 = vrot.slane %v4020, 1
  %v4023 = vor.u32 %v4018, %v4022
  %v4025 = vshrl.u32 %v3862, 16
  %v4027 = vshll.u32 %v3862, 16
  %v4029 = vrot.slane %v4027, 1
  %v4030 = vor.u32 %v4025, %v4029
  %v4032 = vshrl.u32 %v3869, 16
  %v4034 = vshll.u32 %v3869, 16
  %v4036 = vrot.slane %v4034, 1
  %v4037 = vor.u32 %v4032, %v4036
  %v4039 = vshrl.u32 %v3876, 16
  %v4041 = vshll.u32 %v3876, 16
  %v4043 = vrot.slane %v4041, 1
  %v4044 = vor.u32 %v4039, %v4043
  %v4046 = vshrl.u32 %v3883, 16
  %v4048 = vshll.u32 %v3883, 16
  %v4050 = vrot.slane %v4048, 1
  %v4051 = vor.u32 %v4046, %v4050
  %v4053 = vshrl.u32 %v3890, 16
  %v4055 = vshll.u32 %v3890, 16
  %v4057 = vrot.slane %v4055, 1
  %v4058 = vor.u32 %v4053, %v4057
  %v4060 = vshrl.u32 %v3897, 16
  %v4062 = vshll.u32 %v3897, 16
  %v4064 = vrot.slane %v4062, 1
  %v4065 = vor.u32 %v4060, %v4064
  %v4067 = vshrl.u32 %v3904, 16
  %v4069 = vshll.u32 %v3904, 16
  %v4071 = vrot.slane %v4069, 1
  %v4072 = vor.u32 %v4067, %v4071
  %v4074 = vshrl.u32 %v3911, 16
  %v4076 = vshll.u32 %v3911, 16
  %v4078 = vrot.slane %v4076, 1
  %v4079 = vor.u32 %v4074, %v4078
  %v4081 = vshrl.u32 %v3918, 16
  %v4083 = vshll.u32 %v3918, 16
  %v4085 = vrot.slane %v4083, 1
  %v4086 = vor.u32 %v4081, %v4085
  %v4088 = vshrl.u32 %v3925, 16
  %v4090 = vshll.u32 %v3925, 16
  %v4092 = vrot.slane %v4090, 1
  %v4093 = vor.u32 %v4088, %v4092
  %v4095 = vshrl.u32 %v3932, 16
  %v4097 = vshll.u32 %v3932, 16
  %v4099 = vrot.slane %v4097, 1
  %v4100 = vor.u32 %v4095, %v4099
  %v4102 = vshrl.u32 %v3939, 16
  %v4104 = vshll.u32 %v3939, 16
  %v4106 = vrot.slane %v4104, 1
  %v4107 = vor.u32 %v4102, %v4106
  %v4109 = vshrl.u32 %v3946, 16
  %v4111 = vshll.u32 %v3946, 16
  %v4113 = vrot.slane %v4111, 1
  %v4114 = vor.u32 %v4109, %v4113
  %v4116 = vshrl.u32 %v3953, 16
  %v4118 = vshll.u32 %v3953, 16
  %v4120 = vrot.slane %v4118, 1
  %v4121 = vor.u32 %v4116, %v4120
  %v4123 = vshrl.u32 %v3960, 16
  %v4125 = vshll.u32 %v3960, 16
  %v4127 = vrot.slane %v4125, 1
  %v4128 = vor.u32 %v4123, %v4127
  %v4130 = vunpack.c.l.s4 1983009808
  %v4131 = vunpack.c.0.s8 %v4130
  %v4132 = vlaneseq
  %v4133 = vshrl.u32 %v4132, 7
  %v4134 = vsub.s32 %v4131, %v4133
  %v4135 = vrot.slane %v3673, %v4134
  %v4137 = vunpack.c.l.s4 1983009808
  %v4138 = vunpack.c.0.s8 %v4137
  %v4139 = vlaneseq
  %v4140 = vshrl.u32 %v4139, 7
  %v4141 = vsub.s32 %v4138, %v4140
  %v4142 = vrot.slane %v3690, %v4141
  %v4144 = vunpack.c.l.s4 1983009808
  %v4145 = vunpack.c.0.s8 %v4144
  %v4146 = vlaneseq
  %v4147 = vshrl.u32 %v4146, 7
  %v4148 = vsub.s32 %v4145, %v4147
  %v4149 = vrot.slane %v3707, %v4148
  %v4151 = vunpack.c.l.s4 1983009808
  %v4152 = vunpack.c.0.s8 %v4151
  %v4153 = vlaneseq
  %v4154 = vshrl.u32 %v4153, 7
  %v4155 = vsub.s32 %v4152, %v4154
  %v4156 = vrot.slane %v3724, %v4155
  %v4158 = vunpack.c.l.s4 1983009808
  %v4159 = vunpack.c.0.s8 %v4158
  %v4160 = vlaneseq
  %v4161 = vshrl.u32 %v4160, 7
  %v4162 = vsub.s32 %v4159, %v4161
  %v4163 = vrot.slane %v3741, %v4162
  %v4165 = vunpack.c.l.s4 1983009808
  %v4166 = vunpack.c.0.s8 %v4165
  %v4167 = vlaneseq
  %v4168 = vshrl.u32 %v4167, 7
  %v4169 = vsub.s32 %v4166, %v4168
  %v4170 = vrot.slane %v3758, %v4169
  %v4172 = vunpack.c.l.s4 1983009808
  %v4173 = vunpack.c.0.s8 %v4172
  %v4174 = vlaneseq
  %v4175 = vshrl.u32 %v4174, 7
  %v4176 = vsub.s32 %v4173, %v4175
  %v4177 = vrot.slane %v3775, %v4176
  %v4179 = vunpack.c.l.s4 1983009808
  %v4180 = vunpack.c.0.s8 %v4179
  %v4181 = vlaneseq
  %v4182 = vshrl.u32 %v4181, 7
  %v4183 = vsub.s32 %v4180, %v4182
  %v4184 = vrot.slane %v3792, %v4183
  %v4186 = vshrl.u32 %v4135, 16
  %v4188 = vshll.u32 %v4135, 16
  %v4190 = vrot.slane %v4188, 1
  %v4191 = vor.u32 %v4186, %v4190
  %v4193 = vshrl.u32 %v4142, 16
  %v4195 = vshll.u32 %v4142, 16
  %v4197 = vrot.slane %v4195, 1
  %v4198 = vor.u32 %v4193, %v4197
  %v4200 = vshrl.u32 %v4149, 16
  %v4202 = vshll.u32 %v4149, 16
  %v4204 = vrot.slane %v4202, 1
  %v4205 = vor.u32 %v4200, %v4204
  %v4207 = vshrl.u32 %v4156, 16
  %v4209 = vshll.u32 %v4156, 16
  %v4211 = vrot.slane %v4209, 1
  %v4212 = vor.u32 %v4207, %v4211
  %v4214 = vshrl.u32 %v4163, 16
  %v4216 = vshll.u32 %v4163, 16
  %v4218 = vrot.slane %v4216, 1
  %v4219 = vor.u32 %v4214, %v4218
  %v4221 = vshrl.u32 %v4170, 16
  %v4223 = vshll.u32 %v4170, 16
  %v4225 = vrot.slane %v4223, 1
  %v4226 = vor.u32 %v4221, %v4225
  %v4228 = vshrl.u32 %v4177, 16
  %v4230 = vshll.u32 %v4177, 16
  %v4232 = vrot.slane %v4230, 1
  %v4233 = vor.u32 %v4228, %v4232
  %v4235 = vshrl.u32 %v4184, 16
  %v4237 = vshll.u32 %v4184, 16
  %v4239 = vrot.slane %v4237, 1
  %v4240 = vor.u32 %v4235, %v4239
  %v4241 = vcombine.low %v3664, %v3967
  %v4242 = vcombine.low %v3672, %v3974
  %v4244 = vunpack.c.l.s4 1966171168
  %v4245 = vunpack.c.0.s8 %v4244
  %v4246 = vlaneseq
  %v4247 = vshrl.u32 %v4246, 7
  %v4248 = vsub.s32 %v4245, %v4247
  %v4249 = vrot.slane %v4241, %v4248
  %v4251 = vunpack.c.l.s4 1966171168
  %v4252 = vunpack.c.0.s8 %v4251
  %v4253 = vlaneseq
  %v4254 = vshrl.u32 %v4253, 7
  %v4255 = vsub.s32 %v4252, %v4254
  %v4256 = vrot.slane %v4242, %v4255
  %v4257 = vcombine.low %v4249, %v4256
  %v4258 = vcombine.high %v4249, %v4256
  %v4260 = vunpack.c.l.s4 1966171168
  %v4261 = vunpack.c.0.s8 %v4260
  %v4262 = vlaneseq
  %v4263 = vshrl.u32 %v4262, 7
  %v4264 = vsub.s32 %v4261, %v4263
  %v4265 = vrot.slane %v4257, %v4264
  %v4267 = vunpack.c.l.s4 1966171168
  %v4268 = vunpack.c.0.s8 %v4267
  %v4269 = vlaneseq
  %v4270 = vshrl.u32 %v4269, 7
  %v4271 = vsub.s32 %v4268, %v4270
  %v4272 = vrot.slane %v4258, %v4271
  %v4273 = vcombine.low %v3671, %v3981
  %v4275 = vunpack.c.l.s4 1966171168
  %v4276 = vunpack.c.0.s8 %v4275
  %v4277 = vlaneseq
  %v4278 = vshrl.u32 %v4277, 7
  %v4279 = vsub.s32 %v4276, %v4278
  %v4280 = vrot.slane %v4273, %v4279
  %v4281 = vcombine.low %v4256, %v4280
  %v4282 = vcombine.high %v4256, %v4280
  %v4284 = vunpack.c.l.s4 1966171168
  %v4285 = vunpack.c.0.s8 %v4284
  %v4286 = vlaneseq
  %v4287 = vshrl.u32 %v4286, 7
  %v4288 = vsub.s32 %v4285, %v4287
  %v4289 = vrot.slane %v4281, %v4288
  %v4291 = vunpack.c.l.s4 1966171168
  %v4292 = vunpack.c.0.s8 %v4291
  %v4293 = vlaneseq
  %v4294 = vshrl.u32 %v4293, 7
  %v4295 = vsub.s32 %v4292, %v4294
  %v4296 = vrot.slane %v4282, %v4295
  %v4297 = vcombine.low %v3673, %v4191
  %v4299 = vunpack.c.l.s4 1966171168
  %v4300 = vunpack.c.0.s8 %v4299
  %v4301 = vlaneseq
  %v4302 = vshrl.u32 %v4301, 7
  %v4303 = vsub.s32 %v4300, %v4302
  %v4304 = vrot.slane %v4297, %v4303
  %v4305 = vcombine.low %v4280, %v4304
  %v4306 = vcombine.high %v4280, %v4304
  %v4308 = vunpack.c.l.s4 1966171168
  %v4309 = vunpack.c.0.s8 %v4308
  %v4310 = vlaneseq
  %v4311 = vshrl.u32 %v4310, 7
  %v4312 = vsub.s32 %v4309, %v4311
  %v4313 = vrot.slane %v4305, %v4312
  %v4315 = vunpack.c.l.s4 1966171168
  %v4316 = vunpack.c.0.s8 %v4315
  %v4317 = vlaneseq
  %v4318 = vshrl.u32 %v4317, 7
  %v4319 = vsub.s32 %v4316, %v4318
  %v4320 = vrot.slane %v4306, %v4319
  %v4321 = vcombine.low %v3681, %v3988
  %v4322 = vcombine.low %v3689, %v3995
  %v4324 = vunpack.c.l.s4 1966171168
  %v4325 = vunpack.c.0.s8 %v4324
  %v4326 = vlaneseq
  %v4327 = vshrl.u32 %v4326, 7
  %v4328 = vsub.s32 %v4325, %v4327
  %v4329 = vrot.slane %v4321, %v4328
  %v4331 = vunpack.c.l.s4 1966171168
  %v4332 = vunpack.c.0.s8 %v4331
  %v4333 = vlaneseq
  %v4334 = vshrl.u32 %v4333, 7
  %v4335 = vsub.s32 %v4332, %v4334
  %v4336 = vrot.slane %v4322, %v4335
  %v4337 = vcombine.low %v4329, %v4336
  %v4338 = vcombine.high %v4329, %v4336
  %v4340 = vunpack.c.l.s4 1966171168
  %v4341 = vunpack.c.0.s8 %v4340
  %v4342 = vlaneseq
  %v4343 = vshrl.u32 %v4342, 7
  %v4344 = vsub.s32 %v4341, %v4343
  %v4345 = vrot.slane %v4337, %v4344
  %v4347 = vunpack.c.l.s4 1966171168
  %v4348 = vunpack.c.0.s8 %v4347
  %v4349 = vlaneseq
  %v4350 = vshrl.u32 %v4349, 7
  %v4351 = vsub.s32 %v4348, %v4350
  %v4352 = vrot.slane %v4338, %v4351
  %v4353 = vcombine.low %v3688, %v4002
  %v4355 = vunpack.c.l.s4 1966171168
  %v4356 = vunpack.c.0.s8 %v4355
  %v4357 = vlaneseq
  %v4358 = vshrl.u32 %v4357, 7
  %v4359 = vsub.s32 %v4356, %v4358
  %v4360 = vrot.slane %v4353, %v4359
  %v4361 = vcombine.low %v4336, %v4360
  %v4362 = vcombine.high %v4336, %v4360
  %v4364 = vunpack.c.l.s4 1966171168
  %v4365 = vunpack.c.0.s8 %v4364
  %v4366 = vlaneseq
  %v4367 = vshrl.u32 %v4366, 7
  %v4368 = vsub.s32 %v4365, %v4367
  %v4369 = vrot.slane %v4361, %v4368
  %v4371 = vunpack.c.l.s4 1966171168
  %v4372 = vunpack.c.0.s8 %v4371
  %v4373 = vlaneseq
  %v4374 = vshrl.u32 %v4373, 7
  %v4375 = vsub.s32 %v4372, %v4374
  %v4376 = vrot.slane %v4362, %v4375
  %v4377 = vcombine.low %v3690, %v4198
  %v4379 = vunpack.c.l.s4 1966171168
  %v4380 = vunpack.c.0.s8 %v4379
  %v4381 = vlaneseq
  %v4382 = vshrl.u32 %v4381, 7
  %v4383 = vsub.s32 %v4380, %v4382
  %v4384 = vrot.slane %v4377, %v4383
  %v4385 = vcombine.low %v4360, %v4384
  %v4386 = vcombine.high %v4360, %v4384
  %v4388 = vunpack.c.l.s4 1966171168
  %v4389 = vunpack.c.0.s8 %v4388
  %v4390 = vlaneseq
  %v4391 = vshrl.u32 %v4390, 7
  %v4392 = vsub.s32 %v4389, %v4391
  %v4393 = vrot.slane %v4385, %v4392
  %v4395 = vunpack.c.l.s4 1966171168
  %v4396 = vunpack.c.0.s8 %v4395
  %v4397 = vlaneseq
  %v4398 = vshrl.u32 %v4397, 7
  %v4399 = vsub.s32 %v4396, %v4398
  %v4400 = vrot.slane %v4386, %v4399
  %v4401 = vcombine.low %v3698, %v4009
  %v4402 = vcombine.low %v3706, %v4016
  %v4404 = vunpack.c.l.s4 1966171168
  %v4405 = vunpack.c.0.s8 %v4404
  %v4406 = vlaneseq
  %v4407 = vshrl.u32 %v4406, 7
  %v4408 = vsub.s32 %v4405, %v4407
  %v4409 = vrot.slane %v4401, %v4408
  %v4411 = vunpack.c.l.s4 1966171168
  %v4412 = vunpack.c.0.s8 %v4411
  %v4413 = vlaneseq
  %v4414 = vshrl.u32 %v4413, 7
  %v4415 = vsub.s32 %v4412, %v4414
  %v4416 = vrot.slane %v4402, %v4415
  %v4417 = vcombine.low %v4409, %v4416
  %v4418 = vcombine.high %v4409, %v4416
  %v4420 = vunpack.c.l.s4 1966171168
  %v4421 = vunpack.c.0.s8 %v4420
  %v4422 = vlaneseq
  %v4423 = vshrl.u32 %v4422, 7
  %v4424 = vsub.s32 %v4421, %v4423
  %v4425 = vrot.slane %v4417, %v4424
  %v4427 = vunpack.c.l.s4 1966171168
  %v4428 = vunpack.c.0.s8 %v4427
  %v4429 = vlaneseq
  %v4430 = vshrl.u32 %v4429, 7
  %v4431 = vsub.s32 %v4428, %v4430
  %v4432 = vrot.slane %v4418, %v4431
  %v4433 = vcombine.low %v3705, %v4023
  %v4435 = vunpack.c.l.s4 1966171168
  %v4436 = vunpack.c.0.s8 %v4435
  %v4437 = vlaneseq
  %v4438 = vshrl.u32 %v4437, 7
  %v4439 = vsub.s32 %v4436, %v4438
  %v4440 = vrot.slane %v4433, %v4439
  %v4441 = vcombine.low %v4416, %v4440
  %v4442 = vcombine.high %v4416, %v4440
  %v4444 = vunpack.c.l.s4 1966171168
  %v4445 = vunpack.c.0.s8 %v4444
  %v4446 = vlaneseq
  %v4447 = vshrl.u32 %v4446, 7
  %v4448 = vsub.s32 %v4445, %v4447
  %v4449 = vrot.slane %v4441, %v4448
  %v4451 = vunpack.c.l.s4 1966171168
  %v4452 = vunpack.c.0.s8 %v4451
  %v4453 = vlaneseq
  %v4454 = vshrl.u32 %v4453, 7
  %v4455 = vsub.s32 %v4452, %v4454
  %v4456 = vrot.slane %v4442, %v4455
  %v4457 = vcombine.low %v3707, %v4205
  %v4459 = vunpack.c.l.s4 1966171168
  %v4460 = vunpack.c.0.s8 %v4459
  %v4461 = vlaneseq
  %v4462 = vshrl.u32 %v4461, 7
  %v4463 = vsub.s32 %v4460, %v4462
  %v4464 = vrot.slane %v4457, %v4463
  %v4465 = vcombine.low %v4440, %v4464
  %v4466 = vcombine.high %v4440, %v4464
  %v4468 = vunpack.c.l.s4 1966171168
  %v4469 = vunpack.c.0.s8 %v4468
  %v4470 = vlaneseq
  %v4471 = vshrl.u32 %v4470, 7
  %v4472 = vsub.s32 %v4469, %v4471
  %v4473 = vrot.slane %v4465, %v4472
  %v4475 = vunpack.c.l.s4 1966171168
  %v4476 = vunpack.c.0.s8 %v4475
  %v4477 = vlaneseq
  %v4478 = vshrl.u32 %v4477, 7
  %v4479 = vsub.s32 %v4476, %v4478
  %v4480 = vrot.slane %v4466, %v4479
  %v4481 = vcombine.low %v3715, %v4030
  %v4482 = vcombine.low %v3723, %v4037
  %v4484 = vunpack.c.l.s4 1966171168
  %v4485 = vunpack.c.0.s8 %v4484
  %v4486 = vlaneseq
  %v4487 = vshrl.u32 %v4486, 7
  %v4488 = vsub.s32 %v4485, %v4487
  %v4489 = vrot.slane %v4481, %v4488
  %v4491 = vunpack.c.l.s4 1966171168
  %v4492 = vunpack.c.0.s8 %v4491
  %v4493 = vlaneseq
  %v4494 = vshrl.u32 %v4493, 7
  %v4495 = vsub.s32 %v4492, %v4494
  %v4496 = vrot.slane %v4482, %v4495
  %v4497 = vcombine.low %v4489, %v4496
  %v4498 = vcombine.high %v4489, %v4496
  %v4500 = vunpack.c.l.s4 1966171168
  %v4501 = vunpack.c.0.s8 %v4500
  %v4502 = vlaneseq
  %v4503 = vshrl.u32 %v4502, 7
  %v4504 = vsub.s32 %v4501, %v4503
  %v4505 = vrot.slane %v4497, %v4504
  %v4507 = vunpack.c.l.s4 1966171168
  %v4508 = vunpack.c.0.s8 %v4507
  %v4509 = vlaneseq
  %v4510 = vshrl.u32 %v4509, 7
  %v4511 = vsub.s32 %v4508, %v4510
  %v4512 = vrot.slane %v4498, %v4511
  %v4513 = vcombine.low %v3722, %v4044
  %v4515 = vunpack.c.l.s4 1966171168
  %v4516 = vunpack.c.0.s8 %v4515
  %v4517 = vlaneseq
  %v4518 = vshrl.u32 %v4517, 7
  %v4519 = vsub.s32 %v4516, %v4518
  %v4520 = vrot.slane %v4513, %v4519
  %v4521 = vcombine.low %v4496, %v4520
  %v4522 = vcombine.high %v4496, %v4520
  %v4524 = vunpack.c.l.s4 1966171168
  %v4525 = vunpack.c.0.s8 %v4524
  %v4526 = vlaneseq
  %v4527 = vshrl.u32 %v4526, 7
  %v4528 = vsub.s32 %v4525, %v4527
  %v4529 = vrot.slane %v4521, %v4528
  %v4531 = vunpack.c.l.s4 1966171168
  %v4532 = vunpack.c.0.s8 %v4531
  %v4533 = vlaneseq
  %v4534 = vshrl.u32 %v4533, 7
  %v4535 = vsub.s32 %v4532, %v4534
  %v4536 = vrot.slane %v4522, %v4535
  %v4537 = vcombine.low %v3724, %v4212
  %v4539 = vunpack.c.l.s4 1966171168
  %v4540 = vunpack.c.0.s8 %v4539
  %v4541 = vlaneseq
  %v4542 = vshrl.u32 %v4541, 7
  %v4543 = vsub.s32 %v4540, %v4542
  %v4544 = vrot.slane %v4537, %v4543
  %v4545 = vcombine.low %v4520, %v4544
  %v4546 = vcombine.high %v4520, %v4544
  %v4548 = vunpack.c.l.s4 1966171168
  %v4549 = vunpack.c.0.s8 %v4548
  %v4550 = vlaneseq
  %v4551 = vshrl.u32 %v4550, 7
  %v4552 = vsub.s32 %v4549, %v4551
  %v4553 = vrot.slane %v4545, %v4552
  %v4555 = vunpack.c.l.s4 1966171168
  %v4556 = vunpack.c.0.s8 %v4555
  %v4557 = vlaneseq
  %v4558 = vshrl.u32 %v4557, 7
  %v4559 = vsub.s32 %v4556, %v4558
  %v4560 = vrot.slane %v4546, %v4559
  %v4561 = vcombine.low %v3732, %v4051
  %v4562 = vcombine.low %v3740, %v4058
  %v4564 = vunpack.c.l.s4 1966171168
  %v4565 = vunpack.c.0.s8 %v4564
  %v4566 = vlaneseq
  %v4567 = vshrl.u32 %v4566, 7
  %v4568 = vsub.s32 %v4565, %v4567
  %v4569 = vrot.slane %v4561, %v4568
  %v4571 = vunpack.c.l.s4 1966171168
  %v4572 = vunpack.c.0.s8 %v4571
  %v4573 = vlaneseq
  %v4574 = vshrl.u32 %v4573, 7
  %v4575 = vsub.s32 %v4572, %v4574
  %v4576 = vrot.slane %v4562, %v4575
  %v4577 = vcombine.low %v4569, %v4576
  %v4578 = vcombine.high %v4569, %v4576
  %v4580 = vunpack.c.l.s4 1966171168
  %v4581 = vunpack.c.0.s8 %v4580
  %v4582 = vlaneseq
  %v4583 = vshrl.u32 %v4582, 7
  %v4584 = vsub.s32 %v4581, %v4583
  %v4585 = vrot.slane %v4577, %v4584
  %v4587 = vunpack.c.l.s4 1966171168
  %v4588 = vunpack.c.0.s8 %v4587
  %v4589 = vlaneseq
  %v4590 = vshrl.u32 %v4589, 7
  %v4591 = vsub.s32 %v4588, %v4590
  %v4592 = vrot.slane %v4578, %v4591
  %v4593 = vcombine.low %v3739, %v4065
  %v4595 = vunpack.c.l.s4 1966171168
  %v4596 = vunpack.c.0.s8 %v4595
  %v4597 = vlaneseq
  %v4598 = vshrl.u32 %v4597, 7
  %v4599 = vsub.s32 %v4596, %v4598
  %v4600 = vrot.slane %v4593, %v4599
  %v4601 = vcombine.low %v4576, %v4600
  %v4602 = vcombine.high %v4576, %v4600
  %v4604 = vunpack.c.l.s4 1966171168
  %v4605 = vunpack.c.0.s8 %v4604
  %v4606 = vlaneseq
  %v4607 = vshrl.u32 %v4606, 7
  %v4608 = vsub.s32 %v4605, %v4607
  %v4609 = vrot.slane %v4601, %v4608
  %v4611 = vunpack.c.l.s4 1966171168
  %v4612 = vunpack.c.0.s8 %v4611
  %v4613 = vlaneseq
  %v4614 = vshrl.u32 %v4613, 7
  %v4615 = vsub.s32 %v4612, %v4614
  %v4616 = vrot.slane %v4602, %v4615
  %v4617 = vcombine.low %v3741, %v4219
  %v4619 = vunpack.c.l.s4 1966171168
  %v4620 = vunpack.c.0.s8 %v4619
  %v4621 = vlaneseq
  %v4622 = vshrl.u32 %v4621, 7
  %v4623 = vsub.s32 %v4620, %v4622
  %v4624 = vrot.slane %v4617, %v4623
  %v4625 = vcombine.low %v4600, %v4624
  %v4626 = vcombine.high %v4600, %v4624
  %v4628 = vunpack.c.l.s4 1966171168
  %v4629 = vunpack.c.0.s8 %v4628
  %v4630 = vlaneseq
  %v4631 = vshrl.u32 %v4630, 7
  %v4632 = vsub.s32 %v4629, %v4631
  %v4633 = vrot.slane %v4625, %v4632
  %v4635 = vunpack.c.l.s4 1966171168
  %v4636 = vunpack.c.0.s8 %v4635
  %v4637 = vlaneseq
  %v4638 = vshrl.u32 %v4637, 7
  %v4639 = vsub.s32 %v4636, %v4638
  %v4640 = vrot.slane %v4626, %v4639
  %v4641 = vcombine.low %v3749, %v4072
  %v4642 = vcombine.low %v3757, %v4079
  %v4644 = vunpack.c.l.s4 1966171168
  %v4645 = vunpack.c.0.s8 %v4644
  %v4646 = vlaneseq
  %v4647 = vshrl.u32 %v4646, 7
  %v4648 = vsub.s32 %v4645, %v4647
  %v4649 = vrot.slane %v4641, %v4648
  %v4651 = vunpack.c.l.s4 1966171168
  %v4652 = vunpack.c.0.s8 %v4651
  %v4653 = vlaneseq
  %v4654 = vshrl.u32 %v4653, 7
  %v4655 = vsub.s32 %v4652, %v4654
  %v4656 = vrot.slane %v4642, %v4655
  %v4657 = vcombine.low %v4649, %v4656
  %v4658 = vcombine.high %v4649, %v4656
  %v4660 = vunpack.c.l.s4 1966171168
  %v4661 = vunpack.c.0.s8 %v4660
  %v4662 = vlaneseq
  %v4663 = vshrl.u32 %v4662, 7
  %v4664 = vsub.s32 %v4661, %v4663
  %v4665 = vrot.slane %v4657, %v4664
  %v4667 = vunpack.c.l.s4 1966171168
  %v4668 = vunpack.c.0.s8 %v4667
  %v4669 = vlaneseq
  %v4670 = vshrl.u32 %v4669, 7
  %v4671 = vsub.s32 %v4668, %v4670
  %v4672 = vrot.slane %v4658, %v4671
  %v4673 = vcombine.low %v3756, %v4086
  %v4675 = vunpack.c.l.s4 1966171168
  %v4676 = vunpack.c.0.s8 %v4675
  %v4677 = vlaneseq
  %v4678 = vshrl.u32 %v4677, 7
  %v4679 = vsub.s32 %v4676, %v4678
  %v4680 = vrot.slane %v4673, %v4679
  %v4681 = vcombine.low %v4656, %v4680
  %v4682 = vcombine.high %v4656, %v4680
  %v4684 = vunpack.c.l.s4 1966171168
  %v4685 = vunpack.c.0.s8 %v4684
  %v4686 = vlaneseq
  %v4687 = vshrl.u32 %v4686, 7
  %v4688 = vsub.s32 %v4685, %v4687
  %v4689 = vrot.slane %v4681, %v4688
  %v4691 = vunpack.c.l.s4 1966171168
  %v4692 = vunpack.c.0.s8 %v4691
  %v4693 = vlaneseq
  %v4694 = vshrl.u32 %v4693, 7
  %v4695 = vsub.s32 %v4692, %v4694
  %v4696 = vrot.slane %v4682, %v4695
  %v4697 = vcombine.low %v3758, %v4226
  %v4699 = vunpack.c.l.s4 1966171168
  %v4700 = vunpack.c.0.s8 %v4699
  %v4701 = vlaneseq
  %v4702 = vshrl.u32 %v4701, 7
  %v4703 = vsub.s32 %v4700, %v4702
  %v4704 = vrot.slane %v4697, %v4703
  %v4705 = vcombine.low %v4680, %v4704
  %v4706 = vcombine.high %v4680, %v4704
  %v4708 = vunpack.c.l.s4 1966171168
  %v4709 = vunpack.c.0.s8 %v4708
  %v4710 = vlaneseq
  %v4711 = vshrl.u32 %v4710, 7
  %v4712 = vsub.s32 %v4709, %v4711
  %v4713 = vrot.slane %v4705, %v4712
  %v4715 = vunpack.c.l.s4 1966171168
  %v4716 = vunpack.c.0.s8 %v4715
  %v4717 = vlaneseq
  %v4718 = vshrl.u32 %v4717, 7
  %v4719 = vsub.s32 %v4716, %v4718
  %v4720 = vrot.slane %v4706, %v4719
  %v4721 = vcombine.low %v3766, %v4093
  %v4722 = vcombine.low %v3774, %v4100
  %v4724 = vunpack.c.l.s4 1966171168
  %v4725 = vunpack.c.0.s8 %v4724
  %v4726 = vlaneseq
  %v4727 = vshrl.u32 %v4726, 7
  %v4728 = vsub.s32 %v4725, %v4727
  %v4729 = vrot.slane %v4721, %v4728
  %v4731 = vunpack.c.l.s4 1966171168
  %v4732 = vunpack.c.0.s8 %v4731
  %v4733 = vlaneseq
  %v4734 = vshrl.u32 %v4733, 7
  %v4735 = vsub.s32 %v4732, %v4734
  %v4736 = vrot.slane %v4722, %v4735
  %v4737 = vcombine.low %v4729, %v4736
  %v4738 = vcombine.high %v4729, %v4736
  %v4740 = vunpack.c.l.s4 1966171168
  %v4741 = vunpack.c.0.s8 %v4740
  %v4742 = vlaneseq
  %v4743 = vshrl.u32 %v4742, 7
  %v4744 = vsub.s32 %v4741, %v4743
  %v4745 = vrot.slane %v4737, %v4744
  %v4747 = vunpack.c.l.s4 1966171168
  %v4748 = vunpack.c.0.s8 %v4747
  %v4749 = vlaneseq
  %v4750 = vshrl.u32 %v4749, 7
  %v4751 = vsub.s32 %v4748, %v4750
  %v4752 = vrot.slane %v4738, %v4751
  %v4753 = vcombine.low %v3773, %v4107
  %v4755 = vunpack.c.l.s4 1966171168
  %v4756 = vunpack.c.0.s8 %v4755
  %v4757 = vlaneseq
  %v4758 = vshrl.u32 %v4757, 7
  %v4759 = vsub.s32 %v4756, %v4758
  %v4760 = vrot.slane %v4753, %v4759
  %v4761 = vcombine.low %v4736, %v4760
  %v4762 = vcombine.high %v4736, %v4760
  %v4764 = vunpack.c.l.s4 1966171168
  %v4765 = vunpack.c.0.s8 %v4764
  %v4766 = vlaneseq
  %v4767 = vshrl.u32 %v4766, 7
  %v4768 = vsub.s32 %v4765, %v4767
  %v4769 = vrot.slane %v4761, %v4768
  %v4771 = vunpack.c.l.s4 1966171168
  %v4772 = vunpack.c.0.s8 %v4771
  %v4773 = vlaneseq
  %v4774 = vshrl.u32 %v4773, 7
  %v4775 = vsub.s32 %v4772, %v4774
  %v4776 = vrot.slane %v4762, %v4775
  %v4777 = vcombine.low %v3775, %v4233
  %v4779 = vunpack.c.l.s4 1966171168
  %v4780 = vunpack.c.0.s8 %v4779
  %v4781 = vlaneseq
  %v4782 = vshrl.u32 %v4781, 7
  %v4783 = vsub.s32 %v4780, %v4782
  %v4784 = vrot.slane %v4777, %v4783
  %v4785 = vcombine.low %v4760, %v4784
  %v4786 = vcombine.high %v4760, %v4784
  %v4788 = vunpack.c.l.s4 1966171168
  %v4789 = vunpack.c.0.s8 %v4788
  %v4790 = vlaneseq
  %v4791 = vshrl.u32 %v4790, 7
  %v4792 = vsub.s32 %v4789, %v4791
  %v4793 = vrot.slane %v4785, %v4792
  %v4795 = vunpack.c.l.s4 1966171168
  %v4796 = vunpack.c.0.s8 %v4795
  %v4797 = vlaneseq
  %v4798 = vshrl.u32 %v4797, 7
  %v4799 = vsub.s32 %v4796, %v4798
  %v4800 = vrot.slane %v4786, %v4799
  %v4801 = vcombine.low %v3783, %v4114
  %v4802 = vcombine.low %v3791, %v4121
  %v4804 = vunpack.c.l.s4 1966171168
  %v4805 = vunpack.c.0.s8 %v4804
  %v4806 = vlaneseq
  %v4807 = vshrl.u32 %v4806, 7
  %v4808 = vsub.s32 %v4805, %v4807
  %v4809 = vrot.slane %v4801, %v4808
  %v4811 = vunpack.c.l.s4 1966171168
  %v4812 = vunpack.c.0.s8 %v4811
  %v4813 = vlaneseq
  %v4814 = vshrl.u32 %v4813, 7
  %v4815 = vsub.s32 %v4812, %v4814
  %v4816 = vrot.slane %v4802, %v4815
  %v4817 = vcombine.low %v4809, %v4816
  %v4818 = vcombine.high %v4809, %v4816
  %v4820 = vunpack.c.l.s4 1966171168
  %v4821 = vunpack.c.0.s8 %v4820
  %v4822 = vlaneseq
  %v4823 = vshrl.u32 %v4822, 7
  %v4824 = vsub.s32 %v4821, %v4823
  %v4825 = vrot.slane %v4817, %v4824
  %v4827 = vunpack.c.l.s4 1966171168
  %v4828 = vunpack.c.0.s8 %v4827
  %v4829 = vlaneseq
  %v4830 = vshrl.u32 %v4829, 7
  %v4831 = vsub.s32 %v4828, %v4830
  %v4832 = vrot.slane %v4818, %v4831
  %v4833 = vcombine.low %v3790, %v4128
  %v4835 = vunpack.c.l.s4 1966171168
  %v4836 = vunpack.c.0.s8 %v4835
  %v4837 = vlaneseq
  %v4838 = vshrl.u32 %v4837, 7
  %v4839 = vsub.s32 %v4836, %v4838
  %v4840 = vrot.slane %v4833, %v4839
  %v4841 = vcombine.low %v4816, %v4840
  %v4842 = vcombine.high %v4816, %v4840
  %v4844 = vunpack.c.l.s4 1966171168
  %v4845 = vunpack.c.0.s8 %v4844
  %v4846 = vlaneseq
  %v4847 = vshrl.u32 %v4846, 7
  %v4848 = vsub.s32 %v4845, %v4847
  %v4849 = vrot.slane %v4841, %v4848
  %v4851 = vunpack.c.l.s4 1966171168
  %v4852 = vunpack.c.0.s8 %v4851
  %v4853 = vlaneseq
  %v4854 = vshrl.u32 %v4853, 7
  %v4855 = vsub.s32 %v4852, %v4854
  %v4856 = vrot.slane %v4842, %v4855
  %v4857 = vcombine.low %v3792, %v4240
  %v4859 = vunpack.c.l.s4 1966171168
  %v4860 = vunpack.c.0.s8 %v4859
  %v4861 = vlaneseq
  %v4862 = vshrl.u32 %v4861, 7
  %v4863 = vsub.s32 %v4860, %v4862
  %v4864 = vrot.slane %v4857, %v4863
  %v4865 = vcombine.low %v4840, %v4864
  %v4866 = vcombine.high %v4840, %v4864
  %v4868 = vunpack.c.l.s4 1966171168
  %v4869 = vunpack.c.0.s8 %v4868
  %v4870 = vlaneseq
  %v4871 = vshrl.u32 %v4870, 7
  %v4872 = vsub.s32 %v4869, %v4871
  %v4873 = vrot.slane %v4865, %v4872
  %v4875 = vunpack.c.l.s4 1966171168
  %v4876 = vunpack.c.0.s8 %v4875
  %v4877 = vlaneseq
  %v4878 = vshrl.u32 %v4877, 7
  %v4879 = vsub.s32 %v4876, %v4878
  %v4880 = vrot.slane %v4866, %v4879
  %v4881 = vunpack.i.l.s16 %v4265
  %v4882 = vunpack.i.h.s16 %v4265
  %v4883 = vunpack.i.l.s16 %v4272
  %v4884 = vunpack.i.l.s16 %v4289
  %v4885 = vunpack.i.h.s16 %v4289
  %v4886 = vunpack.i.l.s16 %v4296
  %v4887 = vunpack.i.l.s16 %v4313
  %v4888 = vunpack.i.h.s16 %v4313
  %v4889 = vunpack.i.l.s16 %v4320
  %v4890 = vunpack.i.l.s16 %v4345
  %v4891 = vunpack.i.h.s16 %v4345
  %v4892 = vunpack.i.l.s16 %v4352
  %v4893 = vunpack.i.l.s16 %v4369
  %v4894 = vunpack.i.h.s16 %v4369
  %v4895 = vunpack.i.l.s16 %v4376
  %v4896 = vunpack.i.l.s16 %v4393
  %v4897 = vunpack.i.h.s16 %v4393
  %v4898 = vunpack.i.l.s16 %v4400
  %v4899 = vunpack.i.l.s16 %v4425
  %v4900 = vunpack.i.h.s16 %v4425
  %v4901 = vunpack.i.l.s16 %v4432
  %v4902 = vunpack.i.l.s16 %v4449
  %v4903 = vunpack.i.h.s16 %v4449
  %v4904 = vunpack.i.l.s16 %v4456
  %v4905 = vunpack.i.l.s16 %v4473
  %v4906 = vunpack.i.h.s16 %v4473
  %v4907 = vunpack.i.l.s16 %v4480
  %v4908 = vunpack.i.l.s16 %v4505
  %v4909 = vunpack.i.h.s16 %v4505
  %v4910 = vunpack.i.l.s16 %v4512
  %v4911 = vunpack.i.l.s16 %v4529
  %v4912 = vunpack.i.h.s16 %v4529
  %v4913 = vunpack.i.l.s16 %v4536
  %v4914 = vunpack.i.l.s16 %v4553
  %v4915 = vunpack.i.h.s16 %v4553
  %v4916 = vunpack.i.l.s16 %v4560
  %v4917 = vunpack.i.l.s16 %v4585
  %v4918 = vunpack.i.h.s16 %v4585
  %v4919 = vunpack.i.l.s16 %v4592
  %v4920 = vunpack.i.l.s16 %v4609
  %v4921 = vunpack.i.h.s16 %v4609
  %v4922 = vunpack.i.l.s16 %v4616
  %v4923 = vunpack.i.l.s16 %v4633
  %v4924 = vunpack.i.h.s16 %v4633
  %v4925 = vunpack.i.l.s16 %v4640
  %v4926 = vunpack.i.l.s16 %v4665
  %v4927 = vunpack.i.h.s16 %v4665
  %v4928 = vunpack.i.l.s16 %v4672
  %v4929 = vunpack.i.l.s16 %v4689
  %v4930 = vunpack.i.h.s16 %v4689
  %v4931 = vunpack.i.l.s16 %v4696
  %v4932 = vunpack.i.l.s16 %v4713
  %v4933 = vunpack.i.h.s16 %v4713
  %v4934 = vunpack.i.l.s16 %v4720
  %v4935 = vunpack.i.l.s16 %v4745
  %v4936 = vunpack.i.h.s16 %v4745
  %v4937 = vunpack.i.l.s16 %v4752
  %v4938 = vunpack.i.l.s16 %v4769
  %v4939 = vunpack.i.h.s16 %v4769
  %v4940 = vunpack.i.l.s16 %v4776
  %v4941 = vunpack.i.l.s16 %v4793
  %v4942 = vunpack.i.h.s16 %v4793
  %v4943 = vunpack.i.l.s16 %v4800
  %v4944 = vunpack.i.l.s16 %v4825
  %v4945 = vunpack.i.h.s16 %v4825
  %v4946 = vunpack.i.l.s16 %v4832
  %v4947 = vunpack.i.l.s16 %v4849
  %v4948 = vunpack.i.h.s16 %v4849
  %v4949 = vunpack.i.l.s16 %v4856
  %v4950 = vunpack.i.l.s16 %v4873
  %v4951 = vunpack.i.h.s16 %v4873
  %v4952 = vunpack.i.l.s16 %v4880
  %v4953 = vld [vmem:[%s5] sm:$0xff]
  %v4954 = vld [vmem:[%s5 + $0x8] sm:$0xff]
  %v4955 = vld [vmem:[%s5 + $0x10] sm:$0xff]
  %v4956 = vld [vmem:[%s5 + $0x18] sm:$0xff]
  %v4957 = vld [vmem:[%s5 + $0x20] sm:$0xff]
  %v4958 = vld [vmem:[%s5 + $0x28] sm:$0xff]
  %v4959 = vld [vmem:[%s5 + $0x30] sm:$0xff]
  %v4960 = vld [vmem:[%s5 + $0x38] sm:$0xff]
  %v4961 = vld [vmem:[%s5 + $0x40] sm:$0xff]
  %v4962 = vld [vmem:[%s5 + $0x48] sm:$0xff]
  %v4963 = vld [vmem:[%s5 + $0x50] sm:$0xff]
  %v4964 = vld [vmem:[%s5 + $0x58] sm:$0xff]
  %v4965 = vld [vmem:[%s5 + $0x60] sm:$0xff]
  %v4966 = vld [vmem:[%s5 + $0x68] sm:$0xff]
  %v4967 = vld [vmem:[%s5 + $0x70] sm:$0xff]
  %v4968 = vld [vmem:[%s5 + $0x78] sm:$0xff]
  %v4969 = vld [vmem:[%s5 + $0x80] sm:$0xff]
  %v4970 = vld [vmem:[%s5 + $0x88] sm:$0xff]
  %v4971 = vld [vmem:[%s5 + $0x90] sm:$0xff]
  %v4972 = vld [vmem:[%s5 + $0x98] sm:$0xff]
  %v4973 = vld [vmem:[%s5 + $0xa0] sm:$0xff]
  %v4974 = vld [vmem:[%s5 + $0xa8] sm:$0xff]
  %v4975 = vld [vmem:[%s5 + $0xb0] sm:$0xff]
  %v4976 = vld [vmem:[%s5 + $0xb8] sm:$0xff]
  %v4977 = vld [vmem:[%s5 + $0xc0] sm:$0xff]
  %v4978 = vld [vmem:[%s5 + $0xc8] sm:$0xff]
  %v4979 = vld [vmem:[%s5 + $0xd0] sm:$0xff]
  %v4980 = vld [vmem:[%s5 + $0xd8] sm:$0xff]
  %v4981 = vld [vmem:[%s5 + $0xe0] sm:$0xff]
  %v4982 = vld [vmem:[%s5 + $0xe8] sm:$0xff]
  %v4983 = vld [vmem:[%s5 + $0xf0] sm:$0xff]
  %v4984 = vld [vmem:[%s5 + $0xf8] sm:$0xff]
  %v4985 = vld [vmem:[%s5 + $0x100] sm:$0xff]
  %v4986 = vld [vmem:[%s5 + $0x108] sm:$0xff]
  %v4987 = vld [vmem:[%s5 + $0x110] sm:$0xff]
  %v4988 = vld [vmem:[%s5 + $0x118] sm:$0xff]
  %v4989 = vld [vmem:[%s5 + $0x120] sm:$0xff]
  %v4990 = vld [vmem:[%s5 + $0x128] sm:$0xff]
  %v4991 = vld [vmem:[%s5 + $0x130] sm:$0xff]
  %v4992 = vld [vmem:[%s5 + $0x138] sm:$0xff]
  %v4993 = vld [vmem:[%s5 + $0x140] sm:$0xff]
  %v4994 = vld [vmem:[%s5 + $0x148] sm:$0xff]
  %v4995 = vld [vmem:[%s5 + $0x150] sm:$0xff]
  %v4996 = vld [vmem:[%s5 + $0x158] sm:$0xff]
  %v4997 = vld [vmem:[%s5 + $0x160] sm:$0xff]
  %v4998 = vld [vmem:[%s5 + $0x168] sm:$0xff]
  %v4999 = vld [vmem:[%s5 + $0x170] sm:$0xff]
  %v5000 = vld [vmem:[%s5 + $0x178] sm:$0xff]
  %v5001 = vld [vmem:[%s5 + $0x180] sm:$0xff]
  %v5002 = vld [vmem:[%s5 + $0x188] sm:$0xff]
  %v5003 = vld [vmem:[%s5 + $0x190] sm:$0xff]
  %v5004 = vld [vmem:[%s5 + $0x198] sm:$0xff]
  %v5005 = vld [vmem:[%s5 + $0x1a0] sm:$0xff]
  %v5006 = vld [vmem:[%s5 + $0x1a8] sm:$0xff]
  %v5007 = vld [vmem:[%s5 + $0x1b0] sm:$0xff]
  %v5008 = vld [vmem:[%s5 + $0x1b8] sm:$0xff]
  %v5009 = vld [vmem:[%s5 + $0x1c0] sm:$0xff]
  %v5010 = vld [vmem:[%s5 + $0x1c8] sm:$0xff]
  %v5011 = vld [vmem:[%s5 + $0x1d0] sm:$0xff]
  %v5012 = vld [vmem:[%s5 + $0x1d8] sm:$0xff]
  %v5013 = vld [vmem:[%s5 + $0x1e0] sm:$0xff]
  %v5014 = vld [vmem:[%s5 + $0x1e8] sm:$0xff]
  %v5015 = vld [vmem:[%s5 + $0x1f0] sm:$0xff]
  %v5016 = vld [vmem:[%s5 + $0x1f8] sm:$0xff]
  %v5017 = vld [vmem:[%s6] sm:$0x3]
  %v5019 = vlaneseq
  %v5020 = vshrl.u32 %v5019, 7
  %v5021 = vsub.s32 0, %v5020
  %v5022 = vrot.slane %v5017, %v5021
  %v5023 = vlaneseq
  %v5024 = vshrl.u32 %v5023, 7
  %v5025 = vsub.s32 1, %v5024
  %v5026 = vrot.slane %v5017, %v5025
  %v5029 = vpack.i.b16 %v4882, %v4881
  %v5030 = vpack.i.b16 %v4884, %v4883
  %v5031 = vpack.i.b16 %v4886, %v4885
  %v5032 = vpack.i.b16 %v4888, %v4887
  %v5033 = vpack.i.b16 %v4890, %v4889
  %v5034 = vpack.i.b16 %v4892, %v4891
  %v5035 = vpack.i.b16 %v4894, %v4893
  %v5036 = vpack.i.b16 %v4896, %v4895
  %v5037 = vpack.i.b16 %v4898, %v4897
  %v5038 = vpack.i.b16 %v4900, %v4899
  %v5039 = vpack.i.b16 %v4902, %v4901
  %v5040 = vpack.i.b16 %v4904, %v4903
  %v5041 = vpack.i.b16 %v4906, %v4905
  %v5042 = vpack.i.b16 %v4908, %v4907
  %v5043 = vpack.i.b16 %v4910, %v4909
  %v5044 = vpack.i.b16 %v4912, %v4911
  %v5045 = vpack.i.b16 %v4914, %v4913
  %v5046 = vpack.i.b16 %v4916, %v4915
  %v5047 = vpack.i.b16 %v4918, %v4917
  %v5048 = vpack.i.b16 %v4920, %v4919
  %v5049 = vpack.i.b16 %v4922, %v4921
  %v5050 = vpack.i.b16 %v4924, %v4923
  %v5051 = vpack.i.b16 %v4926, %v4925
  %v5052 = vpack.i.b16 %v4928, %v4927
  %v5053 = vpack.i.b16 %v4930, %v4929
  %v5054 = vpack.i.b16 %v4932, %v4931
  %v5055 = vpack.i.b16 %v4934, %v4933
  %v5056 = vpack.i.b16 %v4936, %v4935
  %v5057 = vpack.i.b16 %v4938, %v4937
  %v5058 = vpack.i.b16 %v4940, %v4939
  %v5059 = vpack.i.b16 %v4942, %v4941
  %v5060 = vpack.i.b16 %v4944, %v4943
  %v5061 = vpack.i.b16 %v4946, %v4945
  %v5062 = vpack.i.b16 %v4948, %v4947
  %v5063 = vpack.i.b16 %v4950, %v4949
  %v5064 = vpack.i.b16 %v4952, %v4951
  %v5065 = vcombine.low %v5029, %v5030
  %v5066 = vcombine.low %v5031, %v5032
  %v5067 = vcombine.low %v5033, %v5034
  %v5068 = vcombine.low %v5035, %v5036
  %v5070 = vunpack.c.l.s4 1966171168
  %v5071 = vunpack.c.0.s8 %v5070
  %v5072 = vlaneseq
  %v5073 = vshrl.u32 %v5072, 7
  %v5074 = vsub.s32 %v5071, %v5073
  %v5075 = vrot.slane %v5065, %v5074
  %v5077 = vunpack.c.l.s4 1966171168
  %v5078 = vunpack.c.0.s8 %v5077
  %v5079 = vlaneseq
  %v5080 = vshrl.u32 %v5079, 7
  %v5081 = vsub.s32 %v5078, %v5080
  %v5082 = vrot.slane %v5066, %v5081
  %v5084 = vunpack.c.l.s4 1966171168
  %v5085 = vunpack.c.0.s8 %v5084
  %v5086 = vlaneseq
  %v5087 = vshrl.u32 %v5086, 7
  %v5088 = vsub.s32 %v5085, %v5087
  %v5089 = vrot.slane %v5067, %v5088
  %v5091 = vunpack.c.l.s4 1966171168
  %v5092 = vunpack.c.0.s8 %v5091
  %v5093 = vlaneseq
  %v5094 = vshrl.u32 %v5093, 7
  %v5095 = vsub.s32 %v5092, %v5094
  %v5096 = vrot.slane %v5068, %v5095
  %v5097 = vcombine.low %v5075, %v5082
  %v5098 = vcombine.high %v5075, %v5082
  %v5099 = vcombine.low %v5089, %v5096
  %v5100 = vcombine.high %v5089, %v5096
  %v5102 = vunpack.c.l.s4 1966171168
  %v5103 = vunpack.c.0.s8 %v5102
  %v5104 = vlaneseq
  %v5105 = vshrl.u32 %v5104, 7
  %v5106 = vsub.s32 %v5103, %v5105
  %v5107 = vrot.slane %v5097, %v5106
  %v5109 = vunpack.c.l.s4 1966171168
  %v5110 = vunpack.c.0.s8 %v5109
  %v5111 = vlaneseq
  %v5112 = vshrl.u32 %v5111, 7
  %v5113 = vsub.s32 %v5110, %v5112
  %v5114 = vrot.slane %v5098, %v5113
  %v5116 = vunpack.c.l.s4 1966171168
  %v5117 = vunpack.c.0.s8 %v5116
  %v5118 = vlaneseq
  %v5119 = vshrl.u32 %v5118, 7
  %v5120 = vsub.s32 %v5117, %v5119
  %v5121 = vrot.slane %v5099, %v5120
  %v5123 = vunpack.c.l.s4 1966171168
  %v5124 = vunpack.c.0.s8 %v5123
  %v5125 = vlaneseq
  %v5126 = vshrl.u32 %v5125, 7
  %v5127 = vsub.s32 %v5124, %v5126
  %v5128 = vrot.slane %v5100, %v5127
  %v5129 = vcombine.low %v5107, %v5121
  %v5130 = vcombine.high %v5107, %v5121
  %v5131 = vcombine.low %v5114, %v5128
  %v5132 = vcombine.high %v5114, %v5128
  %v5133 = vcombine.low %v5037, %v5038
  %v5134 = vcombine.low %v5039, %v5040
  %v5135 = vcombine.low %v5041, %v5042
  %v5136 = vcombine.low %v5043, %v5044
  %v5138 = vunpack.c.l.s4 1966171168
  %v5139 = vunpack.c.0.s8 %v5138
  %v5140 = vlaneseq
  %v5141 = vshrl.u32 %v5140, 7
  %v5142 = vsub.s32 %v5139, %v5141
  %v5143 = vrot.slane %v5133, %v5142
  %v5145 = vunpack.c.l.s4 1966171168
  %v5146 = vunpack.c.0.s8 %v5145
  %v5147 = vlaneseq
  %v5148 = vshrl.u32 %v5147, 7
  %v5149 = vsub.s32 %v5146, %v5148
  %v5150 = vrot.slane %v5134, %v5149
  %v5152 = vunpack.c.l.s4 1966171168
  %v5153 = vunpack.c.0.s8 %v5152
  %v5154 = vlaneseq
  %v5155 = vshrl.u32 %v5154, 7
  %v5156 = vsub.s32 %v5153, %v5155
  %v5157 = vrot.slane %v5135, %v5156
  %v5159 = vunpack.c.l.s4 1966171168
  %v5160 = vunpack.c.0.s8 %v5159
  %v5161 = vlaneseq
  %v5162 = vshrl.u32 %v5161, 7
  %v5163 = vsub.s32 %v5160, %v5162
  %v5164 = vrot.slane %v5136, %v5163
  %v5165 = vcombine.low %v5143, %v5150
  %v5166 = vcombine.high %v5143, %v5150
  %v5167 = vcombine.low %v5157, %v5164
  %v5168 = vcombine.high %v5157, %v5164
  %v5170 = vunpack.c.l.s4 1966171168
  %v5171 = vunpack.c.0.s8 %v5170
  %v5172 = vlaneseq
  %v5173 = vshrl.u32 %v5172, 7
  %v5174 = vsub.s32 %v5171, %v5173
  %v5175 = vrot.slane %v5165, %v5174
  %v5177 = vunpack.c.l.s4 1966171168
  %v5178 = vunpack.c.0.s8 %v5177
  %v5179 = vlaneseq
  %v5180 = vshrl.u32 %v5179, 7
  %v5181 = vsub.s32 %v5178, %v5180
  %v5182 = vrot.slane %v5166, %v5181
  %v5184 = vunpack.c.l.s4 1966171168
  %v5185 = vunpack.c.0.s8 %v5184
  %v5186 = vlaneseq
  %v5187 = vshrl.u32 %v5186, 7
  %v5188 = vsub.s32 %v5185, %v5187
  %v5189 = vrot.slane %v5167, %v5188
  %v5191 = vunpack.c.l.s4 1966171168
  %v5192 = vunpack.c.0.s8 %v5191
  %v5193 = vlaneseq
  %v5194 = vshrl.u32 %v5193, 7
  %v5195 = vsub.s32 %v5192, %v5194
  %v5196 = vrot.slane %v5168, %v5195
  %v5197 = vcombine.low %v5175, %v5189
  %v5198 = vcombine.high %v5175, %v5189
  %v5199 = vcombine.low %v5182, %v5196
  %v5200 = vcombine.high %v5182, %v5196
  %v5201 = vcombine.low %v5045, %v5046
  %v5202 = vcombine.low %v5047, %v5048
  %v5203 = vcombine.low %v5049, %v5050
  %v5204 = vcombine.low %v5051, %v5052
  %v5206 = vunpack.c.l.s4 1966171168
  %v5207 = vunpack.c.0.s8 %v5206
  %v5208 = vlaneseq
  %v5209 = vshrl.u32 %v5208, 7
  %v5210 = vsub.s32 %v5207, %v5209
  %v5211 = vrot.slane %v5201, %v5210
  %v5213 = vunpack.c.l.s4 1966171168
  %v5214 = vunpack.c.0.s8 %v5213
  %v5215 = vlaneseq
  %v5216 = vshrl.u32 %v5215, 7
  %v5217 = vsub.s32 %v5214, %v5216
  %v5218 = vrot.slane %v5202, %v5217
  %v5220 = vunpack.c.l.s4 1966171168
  %v5221 = vunpack.c.0.s8 %v5220
  %v5222 = vlaneseq
  %v5223 = vshrl.u32 %v5222, 7
  %v5224 = vsub.s32 %v5221, %v5223
  %v5225 = vrot.slane %v5203, %v5224
  %v5227 = vunpack.c.l.s4 1966171168
  %v5228 = vunpack.c.0.s8 %v5227
  %v5229 = vlaneseq
  %v5230 = vshrl.u32 %v5229, 7
  %v5231 = vsub.s32 %v5228, %v5230
  %v5232 = vrot.slane %v5204, %v5231
  %v5233 = vcombine.low %v5211, %v5218
  %v5234 = vcombine.high %v5211, %v5218
  %v5235 = vcombine.low %v5225, %v5232
  %v5236 = vcombine.high %v5225, %v5232
  %v5238 = vunpack.c.l.s4 1966171168
  %v5239 = vunpack.c.0.s8 %v5238
  %v5240 = vlaneseq
  %v5241 = vshrl.u32 %v5240, 7
  %v5242 = vsub.s32 %v5239, %v5241
  %v5243 = vrot.slane %v5233, %v5242
  %v5245 = vunpack.c.l.s4 1966171168
  %v5246 = vunpack.c.0.s8 %v5245
  %v5247 = vlaneseq
  %v5248 = vshrl.u32 %v5247, 7
  %v5249 = vsub.s32 %v5246, %v5248
  %v5250 = vrot.slane %v5234, %v5249
  %v5252 = vunpack.c.l.s4 1966171168
  %v5253 = vunpack.c.0.s8 %v5252
  %v5254 = vlaneseq
  %v5255 = vshrl.u32 %v5254, 7
  %v5256 = vsub.s32 %v5253, %v5255
  %v5257 = vrot.slane %v5235, %v5256
  %v5259 = vunpack.c.l.s4 1966171168
  %v5260 = vunpack.c.0.s8 %v5259
  %v5261 = vlaneseq
  %v5262 = vshrl.u32 %v5261, 7
  %v5263 = vsub.s32 %v5260, %v5262
  %v5264 = vrot.slane %v5236, %v5263
  %v5265 = vcombine.low %v5243, %v5257
  %v5266 = vcombine.high %v5243, %v5257
  %v5267 = vcombine.low %v5250, %v5264
  %v5268 = vcombine.high %v5250, %v5264
  %v5269 = vcombine.low %v5053, %v5054
  %v5270 = vcombine.low %v5055, %v5056
  %v5271 = vcombine.low %v5057, %v5058
  %v5272 = vcombine.low %v5059, %v5060
  %v5274 = vunpack.c.l.s4 1966171168
  %v5275 = vunpack.c.0.s8 %v5274
  %v5276 = vlaneseq
  %v5277 = vshrl.u32 %v5276, 7
  %v5278 = vsub.s32 %v5275, %v5277
  %v5279 = vrot.slane %v5269, %v5278
  %v5281 = vunpack.c.l.s4 1966171168
  %v5282 = vunpack.c.0.s8 %v5281
  %v5283 = vlaneseq
  %v5284 = vshrl.u32 %v5283, 7
  %v5285 = vsub.s32 %v5282, %v5284
  %v5286 = vrot.slane %v5270, %v5285
  %v5288 = vunpack.c.l.s4 1966171168
  %v5289 = vunpack.c.0.s8 %v5288
  %v5290 = vlaneseq
  %v5291 = vshrl.u32 %v5290, 7
  %v5292 = vsub.s32 %v5289, %v5291
  %v5293 = vrot.slane %v5271, %v5292
  %v5295 = vunpack.c.l.s4 1966171168
  %v5296 = vunpack.c.0.s8 %v5295
  %v5297 = vlaneseq
  %v5298 = vshrl.u32 %v5297, 7
  %v5299 = vsub.s32 %v5296, %v5298
  %v5300 = vrot.slane %v5272, %v5299
  %v5301 = vcombine.low %v5279, %v5286
  %v5302 = vcombine.high %v5279, %v5286
  %v5303 = vcombine.low %v5293, %v5300
  %v5304 = vcombine.high %v5293, %v5300
  %v5306 = vunpack.c.l.s4 1966171168
  %v5307 = vunpack.c.0.s8 %v5306
  %v5308 = vlaneseq
  %v5309 = vshrl.u32 %v5308, 7
  %v5310 = vsub.s32 %v5307, %v5309
  %v5311 = vrot.slane %v5301, %v5310
  %v5313 = vunpack.c.l.s4 1966171168
  %v5314 = vunpack.c.0.s8 %v5313
  %v5315 = vlaneseq
  %v5316 = vshrl.u32 %v5315, 7
  %v5317 = vsub.s32 %v5314, %v5316
  %v5318 = vrot.slane %v5302, %v5317
  %v5320 = vunpack.c.l.s4 1966171168
  %v5321 = vunpack.c.0.s8 %v5320
  %v5322 = vlaneseq
  %v5323 = vshrl.u32 %v5322, 7
  %v5324 = vsub.s32 %v5321, %v5323
  %v5325 = vrot.slane %v5303, %v5324
  %v5327 = vunpack.c.l.s4 1966171168
  %v5328 = vunpack.c.0.s8 %v5327
  %v5329 = vlaneseq
  %v5330 = vshrl.u32 %v5329, 7
  %v5331 = vsub.s32 %v5328, %v5330
  %v5332 = vrot.slane %v5304, %v5331
  %v5333 = vcombine.low %v5311, %v5325
  %v5334 = vcombine.high %v5311, %v5325
  %v5335 = vcombine.low %v5318, %v5332
  %v5336 = vcombine.high %v5318, %v5332
  %v5337 = vcombine.low %v5061, %v5062
  %v5338 = vcombine.low %v5063, %v5064
  %v5340 = vunpack.c.l.s4 1966171168
  %v5341 = vunpack.c.0.s8 %v5340
  %v5342 = vlaneseq
  %v5343 = vshrl.u32 %v5342, 7
  %v5344 = vsub.s32 %v5341, %v5343
  %v5345 = vrot.slane %v5337, %v5344
  %v5347 = vunpack.c.l.s4 1966171168
  %v5348 = vunpack.c.0.s8 %v5347
  %v5349 = vlaneseq
  %v5350 = vshrl.u32 %v5349, 7
  %v5351 = vsub.s32 %v5348, %v5350
  %v5352 = vrot.slane %v5338, %v5351
  %v5353 = vcombine.low %v5345, %v5352
  %v5354 = vcombine.high %v5345, %v5352
  %v5356 = vunpack.c.l.s4 1966171168
  %v5357 = vunpack.c.0.s8 %v5356
  %v5358 = vlaneseq
  %v5359 = vshrl.u32 %v5358, 7
  %v5360 = vsub.s32 %v5357, %v5359
  %v5361 = vrot.slane %v5353, %v5360
  %v5363 = vunpack.c.l.s4 1966171168
  %v5364 = vunpack.c.0.s8 %v5363
  %v5365 = vlaneseq
  %v5366 = vshrl.u32 %v5365, 7
  %v5367 = vsub.s32 %v5364, %v5366
  %v5368 = vrot.slane %v5354, %v5367
  %v5369 = vcombine.high %v5361, %v5361
  %v5370 = vcombine.high %v5368, %v5368
  %v5455 = vunpack.c.l.b16 %v4953
  %v5456 = vunpack.c.h.b16 %v4953
  %v5457 = vunpack.c.l.b16 %v4954
  %v5458 = vunpack.c.h.b16 %v4954
  %v5459 = vunpack.c.l.b16 %v4955
  %v5460 = vunpack.c.h.b16 %v4955
  %v5461 = vunpack.c.l.b16 %v4956
  %v5462 = vunpack.c.h.b16 %v4956
  %v5463 = vunpack.c.l.b16 %v4957
  %v5464 = vunpack.c.h.b16 %v4957
  %v5465 = vunpack.c.l.b16 %v4958
  %v5466 = vunpack.c.h.b16 %v4958
  %v5467 = vunpack.c.l.b16 %v4959
  %v5468 = vunpack.c.h.b16 %v4959
  %v5469 = vunpack.c.l.b16 %v4960
  %v5470 = vunpack.c.h.b16 %v4960
  %v5471 = vunpack.c.l.b16 %v4961
  %v5472 = vunpack.c.h.b16 %v4961
  %v5473 = vunpack.c.l.b16 %v4962
  %v5474 = vunpack.c.h.b16 %v4962
  %v5475 = vunpack.c.l.b16 %v4963
  %v5476 = vunpack.c.h.b16 %v4963
  %v5477 = vunpack.c.l.b16 %v4964
  %v5478 = vunpack.c.h.b16 %v4964
  %v5479 = vunpack.c.l.b16 %v4965
  %v5480 = vunpack.c.h.b16 %v4965
  %v5481 = vunpack.c.l.b16 %v4966
  %v5482 = vunpack.c.h.b16 %v4966
  %v5483 = vunpack.c.l.b16 %v4967
  %v5484 = vunpack.c.h.b16 %v4967
  %v5485 = vunpack.c.l.b16 %v4968
  %v5486 = vunpack.c.h.b16 %v4968
  %v5487 = vunpack.c.l.b16 %v4969
  %v5488 = vunpack.c.h.b16 %v4969
  %v5489 = vunpack.c.l.b16 %v4970
  %v5490 = vunpack.c.h.b16 %v4970
  %v5491 = vunpack.c.l.b16 %v4971
  %v5492 = vunpack.c.h.b16 %v4971
  %v5493 = vunpack.c.l.b16 %v4972
  %v5494 = vunpack.c.h.b16 %v4972
  %v5495 = vunpack.c.l.b16 %v4973
  %v5496 = vunpack.c.h.b16 %v4973
  %v5497 = vunpack.c.l.b16 %v4974
  %v5498 = vunpack.c.h.b16 %v4974
  %v5499 = vunpack.c.l.b16 %v4975
  %v5500 = vunpack.c.h.b16 %v4975
  %v5501 = vunpack.c.l.b16 %v4976
  %v5502 = vunpack.c.h.b16 %v4976
  %v5503 = vunpack.c.l.b16 %v4977
  %v5504 = vunpack.c.h.b16 %v4977
  %v5505 = vunpack.c.l.b16 %v4978
  %v5506 = vunpack.c.h.b16 %v4978
  %v5507 = vunpack.c.l.b16 %v4979
  %v5508 = vunpack.c.h.b16 %v4979
  %v5509 = vunpack.c.l.b16 %v4980
  %v5510 = vunpack.c.h.b16 %v4980
  %v5511 = vunpack.c.l.b16 %v4981
  %v5512 = vunpack.c.h.b16 %v4981
  %v5513 = vunpack.c.l.b16 %v4982
  %v5514 = vunpack.c.h.b16 %v4982
  %v5515 = vunpack.c.l.b16 %v4983
  %v5516 = vunpack.c.h.b16 %v4983
  %v5517 = vunpack.c.l.b16 %v4984
  %v5518 = vunpack.c.h.b16 %v4984
  %v5519 = vunpack.c.l.b16 %v4985
  %v5520 = vunpack.c.h.b16 %v4985
  %v5521 = vunpack.c.l.b16 %v4986
  %v5522 = vunpack.c.h.b16 %v4986
  %v5523 = vunpack.c.l.b16 %v4987
  %v5524 = vunpack.c.h.b16 %v4987
  %v5525 = vunpack.c.l.b16 %v4988
  %v5526 = vunpack.c.h.b16 %v4988
  %v5527 = vunpack.c.l.b16 %v4989
  %v5528 = vunpack.c.h.b16 %v4989
  %v5529 = vunpack.c.l.b16 %v4990
  %v5530 = vunpack.c.h.b16 %v4990
  %v5531 = vunpack.c.l.b16 %v4991
  %v5532 = vunpack.c.h.b16 %v4991
  %v5533 = vunpack.c.l.b16 %v4992
  %v5534 = vunpack.c.h.b16 %v4992
  %v5535 = vunpack.c.l.b16 %v4993
  %v5536 = vunpack.c.h.b16 %v4993
  %v5537 = vunpack.c.l.b16 %v4994
  %v5538 = vunpack.c.h.b16 %v4994
  %v5539 = vunpack.c.l.b16 %v4995
  %v5540 = vunpack.c.h.b16 %v4995
  %v5541 = vunpack.c.l.b16 %v4996
  %v5542 = vunpack.c.h.b16 %v4996
  %v5543 = vunpack.c.l.b16 %v4997
  %v5544 = vunpack.c.h.b16 %v4997
  %v5545 = vunpack.c.l.b16 %v4998
  %v5546 = vunpack.c.h.b16 %v4998
  %v5547 = vunpack.c.l.b16 %v4999
  %v5548 = vunpack.c.h.b16 %v4999
  %v5549 = vunpack.c.l.b16 %v5000
  %v5550 = vunpack.c.h.b16 %v5000
  %v5551 = vunpack.c.l.b16 %v5001
  %v5552 = vunpack.c.h.b16 %v5001
  %v5553 = vunpack.c.l.b16 %v5002
  %v5554 = vunpack.c.h.b16 %v5002
  %v5555 = vunpack.c.l.b16 %v5003
  %v5556 = vunpack.c.h.b16 %v5003
  %v5557 = vunpack.c.l.b16 %v5004
  %v5558 = vunpack.c.h.b16 %v5004
  %v5559 = vunpack.c.l.b16 %v5005
  %v5560 = vunpack.c.h.b16 %v5005
  %v5561 = vunpack.c.l.b16 %v5006
  %v5562 = vunpack.c.h.b16 %v5006
  %v5563 = vunpack.c.l.b16 %v5007
  %v5564 = vunpack.c.h.b16 %v5007
  %v5565 = vunpack.c.l.b16 %v5008
  %v5566 = vunpack.c.h.b16 %v5008
  %v5567 = vunpack.c.l.b16 %v5009
  %v5568 = vunpack.c.h.b16 %v5009
  %v5569 = vunpack.c.l.b16 %v5010
  %v5570 = vunpack.c.h.b16 %v5010
  %v5571 = vunpack.c.l.b16 %v5011
  %v5572 = vunpack.c.h.b16 %v5011
  %v5573 = vunpack.c.l.b16 %v5012
  %v5574 = vunpack.c.h.b16 %v5012
  %v5575 = vunpack.c.l.b16 %v5013
  %v5576 = vunpack.c.h.b16 %v5013
  %v5577 = vunpack.c.l.b16 %v5014
  %v5578 = vunpack.c.h.b16 %v5014
  %v5579 = vunpack.c.l.b16 %v5015
  %v5580 = vunpack.c.h.b16 %v5015
  %v5581 = vunpack.c.l.b16 %v5016
  %v5582 = vunpack.c.h.b16 %v5016
  %v5583 = vpack.c.b16 %v5457, %v5455
  %v5584 = vpack.c.b16 %v5458, %v5456
  %v5585 = vpack.c.b16 %v5461, %v5459
  %v5586 = vpack.c.b16 %v5462, %v5460
  %v5587 = vpack.c.b16 %v5465, %v5463
  %v5588 = vpack.c.b16 %v5466, %v5464
  %v5589 = vpack.c.b16 %v5469, %v5467
  %v5590 = vpack.c.b16 %v5470, %v5468
  %v5591 = vpack.c.b16 %v5473, %v5471
  %v5592 = vpack.c.b16 %v5474, %v5472
  %v5593 = vpack.c.b16 %v5477, %v5475
  %v5594 = vpack.c.b16 %v5478, %v5476
  %v5595 = vpack.c.b16 %v5481, %v5479
  %v5596 = vpack.c.b16 %v5482, %v5480
  %v5597 = vpack.c.b16 %v5485, %v5483
  %v5598 = vpack.c.b16 %v5486, %v5484
  %v5599 = vpack.c.b16 %v5489, %v5487
  %v5600 = vpack.c.b16 %v5490, %v5488
  %v5601 = vpack.c.b16 %v5493, %v5491
  %v5602 = vpack.c.b16 %v5494, %v5492
  %v5603 = vpack.c.b16 %v5497, %v5495
  %v5604 = vpack.c.b16 %v5498, %v5496
  %v5605 = vpack.c.b16 %v5501, %v5499
  %v5606 = vpack.c.b16 %v5502, %v5500
  %v5607 = vpack.c.b16 %v5505, %v5503
  %v5608 = vpack.c.b16 %v5506, %v5504
  %v5609 = vpack.c.b16 %v5509, %v5507
  %v5610 = vpack.c.b16 %v5510, %v5508
  %v5611 = vpack.c.b16 %v5513, %v5511
  %v5612 = vpack.c.b16 %v5514, %v5512
  %v5613 = vpack.c.b16 %v5517, %v5515
  %v5614 = vpack.c.b16 %v5518, %v5516
  %v5615 = vpack.c.b16 %v5521, %v5519
  %v5616 = vpack.c.b16 %v5522, %v5520
  %v5617 = vpack.c.b16 %v5525, %v5523
  %v5618 = vpack.c.b16 %v5526, %v5524
  %v5619 = vpack.c.b16 %v5529, %v5527
  %v5620 = vpack.c.b16 %v5530, %v5528
  %v5621 = vpack.c.b16 %v5533, %v5531
  %v5622 = vpack.c.b16 %v5534, %v5532
  %v5623 = vpack.c.b16 %v5537, %v5535
  %v5624 = vpack.c.b16 %v5538, %v5536
  %v5625 = vpack.c.b16 %v5541, %v5539
  %v5626 = vpack.c.b16 %v5542, %v5540
  %v5627 = vpack.c.b16 %v5545, %v5543
  %v5628 = vpack.c.b16 %v5546, %v5544
  %v5629 = vpack.c.b16 %v5549, %v5547
  %v5630 = vpack.c.b16 %v5550, %v5548
  %v5631 = vpack.c.b16 %v5553, %v5551
  %v5632 = vpack.c.b16 %v5554, %v5552
  %v5633 = vpack.c.b16 %v5557, %v5555
  %v5634 = vpack.c.b16 %v5558, %v5556
  %v5635 = vpack.c.b16 %v5561, %v5559
  %v5636 = vpack.c.b16 %v5562, %v5560
  %v5637 = vpack.c.b16 %v5565, %v5563
  %v5638 = vpack.c.b16 %v5566, %v5564
  %v5639 = vpack.c.b16 %v5569, %v5567
  %v5640 = vpack.c.b16 %v5570, %v5568
  %v5641 = vpack.c.b16 %v5573, %v5571
  %v5642 = vpack.c.b16 %v5574, %v5572
  %v5643 = vpack.c.b16 %v5577, %v5575
  %v5644 = vpack.c.b16 %v5578, %v5576
  %v5645 = vpack.c.b16 %v5581, %v5579
  %v5646 = vpack.c.b16 %v5582, %v5580
  %5711 = vmatprep.subr.bf16.mxu0 %v5584
  %5712 = vmatpush1.bf16.msra.mxu0 %v5583
  %5713 = vmatprep.subr.bf16.mxu0 %v5586
  %5714 = vmatpush1.bf16.msra.mxu0 %v5585
  %5715 = vmatprep.subr.bf16.mxu0 %v5588
  %5716 = vmatpush1.bf16.msra.mxu0 %v5587
  %5717 = vmatprep.subr.bf16.mxu0 %v5590
  %5718 = vmatpush1.bf16.msra.mxu0 %v5589
  %5719 = vmatprep.subr.bf16.mxu0 %v5592
  %5720 = vmatpush1.bf16.msra.mxu0 %v5591
  %5721 = vmatprep.subr.bf16.mxu0 %v5594
  %5722 = vmatpush1.bf16.msra.mxu0 %v5593
  %5723 = vmatprep.subr.bf16.mxu0 %v5596
  %5724 = vmatpush1.bf16.msra.mxu0 %v5595
  %5725 = vmatprep.subr.bf16.mxu0 %v5598
  %5726 = vmatpush1.bf16.msra.mxu0 %v5597
  %5727 = vmatprep.subr.bf16.mxu0 %v5600
  %5728 = vmatpush1.bf16.msra.mxu0 %v5599
  %5729 = vmatprep.subr.bf16.mxu0 %v5602
  %5730 = vmatpush1.bf16.msra.mxu0 %v5601
  %5731 = vmatprep.subr.bf16.mxu0 %v5604
  %5732 = vmatpush1.bf16.msra.mxu0 %v5603
  %5733 = vmatprep.subr.bf16.mxu0 %v5606
  %5734 = vmatpush1.bf16.msra.mxu0 %v5605
  %5735 = vmatprep.subr.bf16.mxu0 %v5608
  %5736 = vmatpush1.bf16.msra.mxu0 %v5607
  %5737 = vmatprep.subr.bf16.mxu0 %v5610
  %5738 = vmatpush1.bf16.msra.mxu0 %v5609
  %5739 = vmatprep.subr.bf16.mxu0 %v5612
  %5740 = vmatpush1.bf16.msra.mxu0 %v5611
  %5741 = vmatprep.subr.bf16.mxu0 %v5614
  %5742 = vmatpush1.bf16.msra.mxu0 %v5613
  %5743 = vmatprep.mubr.bf16.mxu0 %v5131
  %5744 = vmatmul.mubr.bf16.gmra.mrb[0].mxu0 %v5129
  %v5745 = vpop.f32.mrb[0].mxu0
  %v5746 = vadd.f32 %v5022, %v5745
  %v5747 = vpop.f32.mrb[0].mxu0
  %v5748 = vadd.f32 %v5026, %v5747
  %v5749 = vpop.f32.mrb[0].mxu0
  %v5750 = vadd.f32 %v5022, %v5749
  %v5751 = vpop.f32.mrb[0].mxu0
  %v5752 = vadd.f32 %v5026, %v5751
  %5753 = vmatprep.mubr.bf16.mxu0 %v5199
  %5754 = vmatmul.mubr.bf16.gmra.mrb[0].mxu0 %v5197
  %v5755 = vpop.f32.mrb[0].mxu0
  %v5756 = vadd.f32 %v5022, %v5755
  %v5757 = vpop.f32.mrb[0].mxu0
  %v5758 = vadd.f32 %v5026, %v5757
  %v5759 = vpop.f32.mrb[0].mxu0
  %v5760 = vadd.f32 %v5022, %v5759
  %v5761 = vpop.f32.mrb[0].mxu0
  %v5762 = vadd.f32 %v5026, %v5761
  %5763 = vmatprep.mubr.bf16.mxu0 %v5267
  %5764 = vmatmul.mubr.bf16.gmra.mrb[0].mxu0 %v5265
  %v5765 = vpop.f32.mrb[0].mxu0
  %v5766 = vadd.f32 %v5022, %v5765
  %v5767 = vpop.f32.mrb[0].mxu0
  %v5768 = vadd.f32 %v5026, %v5767
  %v5769 = vpop.f32.mrb[0].mxu0
  %v5770 = vadd.f32 %v5022, %v5769
  %v5771 = vpop.f32.mrb[0].mxu0
  %v5772 = vadd.f32 %v5026, %v5771
  %5773 = vmatprep.mubr.bf16.mxu0 %v5335
  %5774 = vmatmul.mubr.bf16.gmra.mrb[0].mxu0 %v5333
  %v5775 = vpop.f32.mrb[0].mxu0
  %v5776 = vadd.f32 %v5022, %v5775
  %v5777 = vpop.f32.mrb[0].mxu0
  %v5778 = vadd.f32 %v5026, %v5777
  %v5779 = vpop.f32.mrb[0].mxu0
  %v5780 = vadd.f32 %v5022, %v5779
  %v5781 = vpop.f32.mrb[0].mxu0
  %v5782 = vadd.f32 %v5026, %v5781
  %5783 = vmatprep.mubr.bf16.mxu0 %v5368
  %5784 = vmatmul.mubr.bf16.gmra.mrb[0].mxu0 %v5361
  %v5785 = vpop.f32.mrb[0].mxu0
  %v5786 = vadd.f32 %v5022, %v5785
  %v5787 = vpop.f32.mrb[0].mxu0
  %v5788 = vadd.f32 %v5026, %v5787
  %v5789 = vpop.f32.mrb[0].mxu0
  %v5790 = vpop.f32.mrb[0].mxu0
  %5791 = vdwg.mxu0
  %5792 = vmatprep.subr.bf16.mxu0 %v5616
  %5793 = vmatpush1.bf16.msra.mxu0 %v5615
  %5794 = vmatprep.subr.bf16.mxu0 %v5618
  %5795 = vmatpush1.bf16.msra.mxu0 %v5617
  %5796 = vmatprep.subr.bf16.mxu0 %v5620
  %5797 = vmatpush1.bf16.msra.mxu0 %v5619
  %5798 = vmatprep.subr.bf16.mxu0 %v5622
  %5799 = vmatpush1.bf16.msra.mxu0 %v5621
  %5800 = vmatprep.subr.bf16.mxu0 %v5624
  %5801 = vmatpush1.bf16.msra.mxu0 %v5623
  %5802 = vmatprep.subr.bf16.mxu0 %v5626
  %5803 = vmatpush1.bf16.msra.mxu0 %v5625
  %5804 = vmatprep.subr.bf16.mxu0 %v5628
  %5805 = vmatpush1.bf16.msra.mxu0 %v5627
  %5806 = vmatprep.subr.bf16.mxu0 %v5630
  %5807 = vmatpush1.bf16.msra.mxu0 %v5629
  %5808 = vmatprep.subr.bf16.mxu0 %v5632
  %5809 = vmatpush1.bf16.msra.mxu0 %v5631
  %5810 = vmatprep.subr.bf16.mxu0 %v5634
  %5811 = vmatpush1.bf16.msra.mxu0 %v5633
  %5812 = vmatprep.subr.bf16.mxu0 %v5636
  %5813 = vmatpush1.bf16.msra.mxu0 %v5635
  %5814 = vmatprep.subr.bf16.mxu0 %v5638
  %5815 = vmatpush1.bf16.msra.mxu0 %v5637
  %5816 = vmatprep.subr.bf16.mxu0 %v5640
  %5817 = vmatpush1.bf16.msra.mxu0 %v5639
  %5818 = vmatprep.subr.bf16.mxu0 %v5642
  %5819 = vmatpush1.bf16.msra.mxu0 %v5641
  %5820 = vmatprep.subr.bf16.mxu0 %v5644
  %5821 = vmatpush1.bf16.msra.mxu0 %v5643
  %5822 = vmatprep.subr.bf16.mxu0 %v5646
  %5823 = vmatpush1.bf16.msra.mxu0 %v5645
  %5824 = vmatprep.mubr.bf16.mxu0 %v5132
  %5825 = vmatmul.mubr.bf16.gmra.mrb[0].mxu0 %v5130
  %v5826 = vpop.f32.mrb[0].mxu0
  %v5827 = vadd.f32 %v5746, %v5826
  %v5828 = vpop.f32.mrb[0].mxu0
  %v5829 = vadd.f32 %v5748, %v5828
  %v5830 = vpop.f32.mrb[0].mxu0
  %v5831 = vadd.f32 %v5750, %v5830
  %v5832 = vpop.f32.mrb[0].mxu0
  %v5833 = vadd.f32 %v5752, %v5832
  %5834 = vmatprep.mubr.bf16.mxu0 %v5200
  %5835 = vmatmul.mubr.bf16.gmra.mrb[0].mxu0 %v5198
  %v5836 = vpop.f32.mrb[0].mxu0
  %v5837 = vadd.f32 %v5756, %v5836
  %v5838 = vpop.f32.mrb[0].mxu0
  %v5839 = vadd.f32 %v5758, %v5838
  %v5840 = vpop.f32.mrb[0].mxu0
  %v5841 = vadd.f32 %v5760, %v5840
  %v5842 = vpop.f32.mrb[0].mxu0
  %v5843 = vadd.f32 %v5762, %v5842
  %5844 = vmatprep.mubr.bf16.mxu0 %v5268
  %5845 = vmatmul.mubr.bf16.gmra.mrb[0].mxu0 %v5266
  %v5846 = vpop.f32.mrb[0].mxu0
  %v5847 = vadd.f32 %v5766, %v5846
  %v5848 = vpop.f32.mrb[0].mxu0
  %v5849 = vadd.f32 %v5768, %v5848
  %v5850 = vpop.f32.mrb[0].mxu0
  %v5851 = vadd.f32 %v5770, %v5850
  %v5852 = vpop.f32.mrb[0].mxu0
  %v5853 = vadd.f32 %v5772, %v5852
  %5854 = vmatprep.mubr.bf16.mxu0 %v5336
  %5855 = vmatmul.mubr.bf16.gmra.mrb[0].mxu0 %v5334
  %v5856 = vpop.f32.mrb[0].mxu0
  %v5857 = vadd.f32 %v5776, %v5856
  %v5858 = vpop.f32.mrb[0].mxu0
  %v5859 = vadd.f32 %v5778, %v5858
  %v5860 = vpop.f32.mrb[0].mxu0
  %v5861 = vadd.f32 %v5780, %v5860
  %v5862 = vpop.f32.mrb[0].mxu0
  %v5863 = vadd.f32 %v5782, %v5862
  %5864 = vmatprep.mubr.bf16.mxu0 %v5370
  %5865 = vmatmul.mubr.bf16.gmra.mrb[0].mxu0 %v5369
  %v5866 = vpop.f32.mrb[0].mxu0
  %v5867 = vadd.f32 %v5786, %v5866
  %v5868 = vpop.f32.mrb[0].mxu0
  %v5869 = vadd.f32 %v5788, %v5868
  %v5870 = vpop.f32.mrb[0].mxu0
  %v5871 = vpop.f32.mrb[0].mxu0
  %5872 = vdwg.mxu0
  %v5873 = vmax.f32 %v5827, 0.0
  %v5874 = vmax.f32 %v5829, 0.0
  %v5875 = vmax.f32 %v5831, 0.0
  %v5876 = vmax.f32 %v5833, 0.0
  %v5877 = vmax.f32 %v5837, 0.0
  %v5878 = vmax.f32 %v5839, 0.0
  %v5879 = vmax.f32 %v5841, 0.0
  %v5880 = vmax.f32 %v5843, 0.0
  %v5881 = vmax.f32 %v5847, 0.0
  %v5882 = vmax.f32 %v5849, 0.0
  %v5883 = vmax.f32 %v5851, 0.0
  %v5884 = vmax.f32 %v5853, 0.0
  %v5885 = vmax.f32 %v5857, 0.0
  %v5886 = vmax.f32 %v5859, 0.0
  %v5887 = vmax.f32 %v5861, 0.0
  %v5888 = vmax.f32 %v5863, 0.0
  %v5889 = vmax.f32 %v5867, 0.0
  %v5890 = vmax.f32 %v5869, 0.0
  %v5891 = vpack.c.bf16 %v5875, %v5873
  %v5892 = vpack.c.bf16 %v5876, %v5874
  %v5893 = vpack.c.bf16 %v5879, %v5877
  %v5894 = vpack.c.bf16 %v5880, %v5878
  %v5895 = vpack.c.bf16 %v5883, %v5881
  %v5896 = vpack.c.bf16 %v5884, %v5882
  %v5897 = vpack.c.bf16 %v5887, %v5885
  %v5898 = vpack.c.bf16 %v5888, %v5886
  %v5899 = vpack.c.bf16 %v5889, %v5889
  %v5900 = vpack.c.bf16 %v5890, %v5890
  %v5911 = vcombine.low %v5891, %v5892
  %v5912 = vcombine.high %v5891, %v5892
  %v5914 = vunpack.c.l.s4 1966171168
  %v5915 = vunpack.c.0.s8 %v5914
  %v5916 = vlaneseq
  %v5917 = vshrl.u32 %v5916, 7
  %v5918 = vsub.s32 %v5915, %v5917
  %v5919 = vrot.slane %v5911, %v5918
  %v5921 = vunpack.c.l.s4 1966171168
  %v5922 = vunpack.c.0.s8 %v5921
  %v5923 = vlaneseq
  %v5924 = vshrl.u32 %v5923, 7
  %v5925 = vsub.s32 %v5922, %v5924
  %v5926 = vrot.slane %v5912, %v5925
  %v5927 = vcombine.high %v5919, %v5919
  %v5928 = vcombine.high %v5926, %v5926
  %v5930 = vunpack.c.l.s4 1966171168
  %v5931 = vunpack.c.0.s8 %v5930
  %v5932 = vlaneseq
  %v5933 = vshrl.u32 %v5932, 7
  %v5934 = vsub.s32 %v5931, %v5933
  %v5935 = vrot.slane %v5919, %v5934
  %v5937 = vunpack.c.l.s4 1966171168
  %v5938 = vunpack.c.0.s8 %v5937
  %v5939 = vlaneseq
  %v5940 = vshrl.u32 %v5939, 7
  %v5941 = vsub.s32 %v5938, %v5940
  %v5942 = vrot.slane %v5926, %v5941
  %v5944 = vunpack.c.l.s4 1966171168
  %v5945 = vunpack.c.0.s8 %v5944
  %v5946 = vlaneseq
  %v5947 = vshrl.u32 %v5946, 7
  %v5948 = vsub.s32 %v5945, %v5947
  %v5949 = vrot.slane %v5927, %v5948
  %v5951 = vunpack.c.l.s4 1966171168
  %v5952 = vunpack.c.0.s8 %v5951
  %v5953 = vlaneseq
  %v5954 = vshrl.u32 %v5953, 7
  %v5955 = vsub.s32 %v5952, %v5954
  %v5956 = vrot.slane %v5928, %v5955
  %v5957 = vcombine.high %v5935, %v5935
  %v5958 = vcombine.high %v5942, %v5942
  %v5959 = vcombine.high %v5949, %v5949
  %v5960 = vcombine.high %v5956, %v5956
  %v5961 = vcombine.low %v5893, %v5894
  %v5962 = vcombine.high %v5893, %v5894
  %v5964 = vunpack.c.l.s4 1966171168
  %v5965 = vunpack.c.0.s8 %v5964
  %v5966 = vlaneseq
  %v5967 = vshrl.u32 %v5966, 7
  %v5968 = vsub.s32 %v5965, %v5967
  %v5969 = vrot.slane %v5961, %v5968
  %v5971 = vunpack.c.l.s4 1966171168
  %v5972 = vunpack.c.0.s8 %v5971
  %v5973 = vlaneseq
  %v5974 = vshrl.u32 %v5973, 7
  %v5975 = vsub.s32 %v5972, %v5974
  %v5976 = vrot.slane %v5962, %v5975
  %v5977 = vcombine.high %v5969, %v5969
  %v5978 = vcombine.high %v5976, %v5976
  %v5980 = vunpack.c.l.s4 1966171168
  %v5981 = vunpack.c.0.s8 %v5980
  %v5982 = vlaneseq
  %v5983 = vshrl.u32 %v5982, 7
  %v5984 = vsub.s32 %v5981, %v5983
  %v5985 = vrot.slane %v5969, %v5984
  %v5987 = vunpack.c.l.s4 1966171168
  %v5988 = vunpack.c.0.s8 %v5987
  %v5989 = vlaneseq
  %v5990 = vshrl.u32 %v5989, 7
  %v5991 = vsub.s32 %v5988, %v5990
  %v5992 = vrot.slane %v5976, %v5991
  %v5994 = vunpack.c.l.s4 1966171168
  %v5995 = vunpack.c.0.s8 %v5994
  %v5996 = vlaneseq
  %v5997 = vshrl.u32 %v5996, 7
  %v5998 = vsub.s32 %v5995, %v5997
  %v5999 = vrot.slane %v5977, %v5998
  %v6001 = vunpack.c.l.s4 1966171168
  %v6002 = vunpack.c.0.s8 %v6001
  %v6003 = vlaneseq
  %v6004 = vshrl.u32 %v6003, 7
  %v6005 = vsub.s32 %v6002, %v6004
  %v6006 = vrot.slane %v5978, %v6005
  %v6007 = vcombine.high %v5985, %v5985
  %v6008 = vcombine.high %v5992, %v5992
  %v6009 = vcombine.high %v5999, %v5999
  %v6010 = vcombine.high %v6006, %v6006
  %v6011 = vcombine.low %v5895, %v5896
  %v6012 = vcombine.high %v5895, %v5896
  %v6014 = vunpack.c.l.s4 1966171168
  %v6015 = vunpack.c.0.s8 %v6014
  %v6016 = vlaneseq
  %v6017 = vshrl.u32 %v6016, 7
  %v6018 = vsub.s32 %v6015, %v6017
  %v6019 = vrot.slane %v6011, %v6018
  %v6021 = vunpack.c.l.s4 1966171168
  %v6022 = vunpack.c.0.s8 %v6021
  %v6023 = vlaneseq
  %v6024 = vshrl.u32 %v6023, 7
  %v6025 = vsub.s32 %v6022, %v6024
  %v6026 = vrot.slane %v6012, %v6025
  %v6027 = vcombine.high %v6019, %v6019
  %v6028 = vcombine.high %v6026, %v6026
  %v6030 = vunpack.c.l.s4 1966171168
  %v6031 = vunpack.c.0.s8 %v6030
  %v6032 = vlaneseq
  %v6033 = vshrl.u32 %v6032, 7
  %v6034 = vsub.s32 %v6031, %v6033
  %v6035 = vrot.slane %v6019, %v6034
  %v6037 = vunpack.c.l.s4 1966171168
  %v6038 = vunpack.c.0.s8 %v6037
  %v6039 = vlaneseq
  %v6040 = vshrl.u32 %v6039, 7
  %v6041 = vsub.s32 %v6038, %v6040
  %v6042 = vrot.slane %v6026, %v6041
  %v6044 = vunpack.c.l.s4 1966171168
  %v6045 = vunpack.c.0.s8 %v6044
  %v6046 = vlaneseq
  %v6047 = vshrl.u32 %v6046, 7
  %v6048 = vsub.s32 %v6045, %v6047
  %v6049 = vrot.slane %v6027, %v6048
  %v6051 = vunpack.c.l.s4 1966171168
  %v6052 = vunpack.c.0.s8 %v6051
  %v6053 = vlaneseq
  %v6054 = vshrl.u32 %v6053, 7
  %v6055 = vsub.s32 %v6052, %v6054
  %v6056 = vrot.slane %v6028, %v6055
  %v6057 = vcombine.high %v6035, %v6035
  %v6058 = vcombine.high %v6042, %v6042
  %v6059 = vcombine.high %v6049, %v6049
  %v6060 = vcombine.high %v6056, %v6056
  %v6061 = vcombine.low %v5897, %v5898
  %v6062 = vcombine.high %v5897, %v5898
  %v6064 = vunpack.c.l.s4 1966171168
  %v6065 = vunpack.c.0.s8 %v6064
  %v6066 = vlaneseq
  %v6067 = vshrl.u32 %v6066, 7
  %v6068 = vsub.s32 %v6065, %v6067
  %v6069 = vrot.slane %v6061, %v6068
  %v6071 = vunpack.c.l.s4 1966171168
  %v6072 = vunpack.c.0.s8 %v6071
  %v6073 = vlaneseq
  %v6074 = vshrl.u32 %v6073, 7
  %v6075 = vsub.s32 %v6072, %v6074
  %v6076 = vrot.slane %v6062, %v6075
  %v6077 = vcombine.high %v6069, %v6069
  %v6078 = vcombine.high %v6076, %v6076
  %v6080 = vunpack.c.l.s4 1966171168
  %v6081 = vunpack.c.0.s8 %v6080
  %v6082 = vlaneseq
  %v6083 = vshrl.u32 %v6082, 7
  %v6084 = vsub.s32 %v6081, %v6083
  %v6085 = vrot.slane %v6069, %v6084
  %v6087 = vunpack.c.l.s4 1966171168
  %v6088 = vunpack.c.0.s8 %v6087
  %v6089 = vlaneseq
  %v6090 = vshrl.u32 %v6089, 7
  %v6091 = vsub.s32 %v6088, %v6090
  %v6092 = vrot.slane %v6076, %v6091
  %v6094 = vunpack.c.l.s4 1966171168
  %v6095 = vunpack.c.0.s8 %v6094
  %v6096 = vlaneseq
  %v6097 = vshrl.u32 %v6096, 7
  %v6098 = vsub.s32 %v6095, %v6097
  %v6099 = vrot.slane %v6077, %v6098
  %v6101 = vunpack.c.l.s4 1966171168
  %v6102 = vunpack.c.0.s8 %v6101
  %v6103 = vlaneseq
  %v6104 = vshrl.u32 %v6103, 7
  %v6105 = vsub.s32 %v6102, %v6104
  %v6106 = vrot.slane %v6078, %v6105
  %v6107 = vcombine.high %v6085, %v6085
  %v6108 = vcombine.high %v6092, %v6092
  %v6109 = vcombine.high %v6099, %v6099
  %v6110 = vcombine.high %v6106, %v6106
  %v6111 = vcombine.low %v5899, %v5900
  %v6113 = vunpack.c.l.s4 1966171168
  %v6114 = vunpack.c.0.s8 %v6113
  %v6115 = vlaneseq
  %v6116 = vshrl.u32 %v6115, 7
  %v6117 = vsub.s32 %v6114, %v6116
  %v6118 = vrot.slane %v6111, %v6117
  %v6119 = vcombine.high %v6118, %v6118
  %v6121 = vunpack.c.l.s4 1966171168
  %v6122 = vunpack.c.0.s8 %v6121
  %v6123 = vlaneseq
  %v6124 = vshrl.u32 %v6123, 7
  %v6125 = vsub.s32 %v6122, %v6124
  %v6126 = vrot.slane %v6118, %v6125
  %v6128 = vunpack.c.l.s4 1966171168
  %v6129 = vunpack.c.0.s8 %v6128
  %v6130 = vlaneseq
  %v6131 = vshrl.u32 %v6130, 7
  %v6132 = vsub.s32 %v6129, %v6131
  %v6133 = vrot.slane %v6119, %v6132
  %v6134 = vcombine.high %v6126, %v6126
  %v6135 = vcombine.high %v6133, %v6133
  %v6136 = vunpack.i.l.s16 %v5935
  %v6137 = vunpack.i.h.s16 %v5935
  %v6138 = vunpack.i.l.s16 %v5949
  %v6139 = vunpack.i.h.s16 %v5949
  %v6140 = vunpack.i.l.s16 %v5957
  %v6141 = vunpack.i.h.s16 %v5957
  %v6142 = vunpack.i.l.s16 %v5959
  %v6143 = vunpack.i.h.s16 %v5959
  %v6144 = vunpack.i.l.s16 %v5942
  %v6145 = vunpack.i.h.s16 %v5942
  %v6146 = vunpack.i.l.s16 %v5956
  %v6147 = vunpack.i.h.s16 %v5956
  %v6148 = vunpack.i.l.s16 %v5958
  %v6149 = vunpack.i.h.s16 %v5958
  %v6150 = vunpack.i.l.s16 %v5960
  %v6151 = vunpack.i.h.s16 %v5960
  %v6152 = vunpack.i.l.s16 %v5985
  %v6153 = vunpack.i.h.s16 %v5985
  %v6154 = vunpack.i.l.s16 %v5999
  %v6155 = vunpack.i.h.s16 %v5999
  %v6156 = vunpack.i.l.s16 %v6007
  %v6157 = vunpack.i.h.s16 %v6007
  %v6158 = vunpack.i.l.s16 %v6009
  %v6159 = vunpack.i.h.s16 %v6009
  %v6160 = vunpack.i.l.s16 %v5992
  %v6161 = vunpack.i.h.s16 %v5992
  %v6162 = vunpack.i.l.s16 %v6006
  %v6163 = vunpack.i.h.s16 %v6006
  %v6164 = vunpack.i.l.s16 %v6008
  %v6165 = vunpack.i.h.s16 %v6008
  %v6166 = vunpack.i.l.s16 %v6010
  %v6167 = vunpack.i.h.s16 %v6010
  %v6168 = vunpack.i.l.s16 %v6035
  %v6169 = vunpack.i.h.s16 %v6035
  %v6170 = vunpack.i.l.s16 %v6049
  %v6171 = vunpack.i.h.s16 %v6049
  %v6172 = vunpack.i.l.s16 %v6057
  %v6173 = vunpack.i.h.s16 %v6057
  %v6174 = vunpack.i.l.s16 %v6059
  %v6175 = vunpack.i.h.s16 %v6059
  %v6176 = vunpack.i.l.s16 %v6042
  %v6177 = vunpack.i.h.s16 %v6042
  %v6178 = vunpack.i.l.s16 %v6056
  %v6179 = vunpack.i.h.s16 %v6056
  %v6180 = vunpack.i.l.s16 %v6058
  %v6181 = vunpack.i.h.s16 %v6058
  %v6182 = vunpack.i.l.s16 %v6060
  %v6183 = vunpack.i.h.s16 %v6060
  %v6184 = vunpack.i.l.s16 %v6085
  %v6185 = vunpack.i.h.s16 %v6085
  %v6186 = vunpack.i.l.s16 %v6099
  %v6187 = vunpack.i.h.s16 %v6099
  %v6188 = vunpack.i.l.s16 %v6107
  %v6189 = vunpack.i.h.s16 %v6107
  %v6190 = vunpack.i.l.s16 %v6109
  %v6191 = vunpack.i.h.s16 %v6109
  %v6192 = vunpack.i.l.s16 %v6092
  %v6193 = vunpack.i.h.s16 %v6092
  %v6194 = vunpack.i.l.s16 %v6106
  %v6195 = vunpack.i.h.s16 %v6106
  %v6196 = vunpack.i.l.s16 %v6108
  %v6197 = vunpack.i.h.s16 %v6108
  %v6198 = vunpack.i.l.s16 %v6110
  %v6199 = vunpack.i.h.s16 %v6110
  %v6200 = vunpack.i.l.s16 %v6126
  %v6201 = vunpack.i.h.s16 %v6126
  %v6202 = vunpack.i.l.s16 %v6133
  %v6203 = vunpack.i.h.s16 %v6133
  %v6204 = vunpack.i.l.s16 %v6134
  %v6205 = vunpack.i.h.s16 %v6134
  %v6206 = vunpack.i.l.s16 %v6135
  %v6207 = vunpack.i.h.s16 %v6135
  %v6208 = vpack.i.b16 %v6137, %v6136
  %v6209 = vpack.i.b16 %v6140, %v6139
  %v6210 = vpack.i.b16 %v6146, %v6145
  %v6211 = vpack.i.b16 %v6149, %v6148
  %v6212 = vpack.i.b16 %v6155, %v6154
  %v6213 = vpack.i.b16 %v6158, %v6157
  %v6214 = vpack.i.b16 %v6164, %v6163
  %v6215 = vpack.i.b16 %v6167, %v6166
  %v6216 = vpack.i.b16 %v6173, %v6172
  %v6217 = vpack.i.b16 %v6176, %v6175
  %v6218 = vpack.i.b16 %v6182, %v6181
  %v6219 = vpack.i.b16 %v6185, %v6184
  %v6220 = vpack.i.b16 %v6191, %v6190
  %v6221 = vpack.i.b16 %v6194, %v6193
  %v6222 = vpack.i.b16 %v6200, %v6199
  %v6223 = vpack.i.b16 %v6203, %v6202
  %v6225 = vunpack.c.l.s4 1966171168
  %v6226 = vunpack.c.0.s8 %v6225
  %v6227 = vlaneseq
  %v6228 = vshrl.u32 %v6227, 7
  %v6229 = vsub.s32 %v6226, %v6228
  %v6230 = vrot.slane %v6208, %v6229
  %v6231 = vcombine.high %v6230, %v6230
  %v6233 = vunpack.c.l.s4 1966171168
  %v6234 = vunpack.c.0.s8 %v6233
  %v6235 = vlaneseq
  %v6236 = vshrl.u32 %v6235, 7
  %v6237 = vsub.s32 %v6234, %v6236
  %v6238 = vrot.slane %v6230, %v6237
  %v6240 = vunpack.c.l.s4 1966171168
  %v6241 = vunpack.c.0.s8 %v6240
  %v6242 = vlaneseq
  %v6243 = vshrl.u32 %v6242, 7
  %v6244 = vsub.s32 %v6241, %v6243
  %v6245 = vrot.slane %v6231, %v6244
  %v6247 = vunpack.c.l.s4 1966171168
  %v6248 = vunpack.c.0.s8 %v6247
  %v6249 = vlaneseq
  %v6250 = vshrl.u32 %v6249, 7
  %v6251 = vsub.s32 %v6248, %v6250
  %v6252 = vrot.slane %v6209, %v6251
  %v6253 = vcombine.high %v6252, %v6252
  %v6255 = vunpack.c.l.s4 1966171168
  %v6256 = vunpack.c.0.s8 %v6255
  %v6257 = vlaneseq
  %v6258 = vshrl.u32 %v6257, 7
  %v6259 = vsub.s32 %v6256, %v6258
  %v6260 = vrot.slane %v6252, %v6259
  %v6262 = vunpack.c.l.s4 1966171168
  %v6263 = vunpack.c.0.s8 %v6262
  %v6264 = vlaneseq
  %v6265 = vshrl.u32 %v6264, 7
  %v6266 = vsub.s32 %v6263, %v6265
  %v6267 = vrot.slane %v6253, %v6266
  %v6269 = vunpack.c.l.s4 1966171168
  %v6270 = vunpack.c.0.s8 %v6269
  %v6271 = vlaneseq
  %v6272 = vshrl.u32 %v6271, 7
  %v6273 = vsub.s32 %v6270, %v6272
  %v6274 = vrot.slane %v6210, %v6273
  %v6275 = vcombine.high %v6274, %v6274
  %v6277 = vunpack.c.l.s4 1966171168
  %v6278 = vunpack.c.0.s8 %v6277
  %v6279 = vlaneseq
  %v6280 = vshrl.u32 %v6279, 7
  %v6281 = vsub.s32 %v6278, %v6280
  %v6282 = vrot.slane %v6274, %v6281
  %v6284 = vunpack.c.l.s4 1966171168
  %v6285 = vunpack.c.0.s8 %v6284
  %v6286 = vlaneseq
  %v6287 = vshrl.u32 %v6286, 7
  %v6288 = vsub.s32 %v6285, %v6287
  %v6289 = vrot.slane %v6275, %v6288
  %v6291 = vunpack.c.l.s4 1966171168
  %v6292 = vunpack.c.0.s8 %v6291
  %v6293 = vlaneseq
  %v6294 = vshrl.u32 %v6293, 7
  %v6295 = vsub.s32 %v6292, %v6294
  %v6296 = vrot.slane %v6211, %v6295
  %v6297 = vcombine.high %v6296, %v6296
  %v6299 = vunpack.c.l.s4 1966171168
  %v6300 = vunpack.c.0.s8 %v6299
  %v6301 = vlaneseq
  %v6302 = vshrl.u32 %v6301, 7
  %v6303 = vsub.s32 %v6300, %v6302
  %v6304 = vrot.slane %v6296, %v6303
  %v6306 = vunpack.c.l.s4 1966171168
  %v6307 = vunpack.c.0.s8 %v6306
  %v6308 = vlaneseq
  %v6309 = vshrl.u32 %v6308, 7
  %v6310 = vsub.s32 %v6307, %v6309
  %v6311 = vrot.slane %v6297, %v6310
  %v6313 = vunpack.c.l.s4 1966171168
  %v6314 = vunpack.c.0.s8 %v6313
  %v6315 = vlaneseq
  %v6316 = vshrl.u32 %v6315, 7
  %v6317 = vsub.s32 %v6314, %v6316
  %v6318 = vrot.slane %v6212, %v6317
  %v6319 = vcombine.high %v6318, %v6318
  %v6321 = vunpack.c.l.s4 1966171168
  %v6322 = vunpack.c.0.s8 %v6321
  %v6323 = vlaneseq
  %v6324 = vshrl.u32 %v6323, 7
  %v6325 = vsub.s32 %v6322, %v6324
  %v6326 = vrot.slane %v6318, %v6325
  %v6328 = vunpack.c.l.s4 1966171168
  %v6329 = vunpack.c.0.s8 %v6328
  %v6330 = vlaneseq
  %v6331 = vshrl.u32 %v6330, 7
  %v6332 = vsub.s32 %v6329, %v6331
  %v6333 = vrot.slane %v6319, %v6332
  %v6335 = vunpack.c.l.s4 1966171168
  %v6336 = vunpack.c.0.s8 %v6335
  %v6337 = vlaneseq
  %v6338 = vshrl.u32 %v6337, 7
  %v6339 = vsub.s32 %v6336, %v6338
  %v6340 = vrot.slane %v6213, %v6339
  %v6341 = vcombine.high %v6340, %v6340
  %v6343 = vunpack.c.l.s4 1966171168
  %v6344 = vunpack.c.0.s8 %v6343
  %v6345 = vlaneseq
  %v6346 = vshrl.u32 %v6345, 7
  %v6347 = vsub.s32 %v6344, %v6346
  %v6348 = vrot.slane %v6340, %v6347
  %v6350 = vunpack.c.l.s4 1966171168
  %v6351 = vunpack.c.0.s8 %v6350
  %v6352 = vlaneseq
  %v6353 = vshrl.u32 %v6352, 7
  %v6354 = vsub.s32 %v6351, %v6353
  %v6355 = vrot.slane %v6341, %v6354
  %v6357 = vunpack.c.l.s4 1966171168
  %v6358 = vunpack.c.0.s8 %v6357
  %v6359 = vlaneseq
  %v6360 = vshrl.u32 %v6359, 7
  %v6361 = vsub.s32 %v6358, %v6360
  %v6362 = vrot.slane %v6214, %v6361
  %v6363 = vcombine.high %v6362, %v6362
  %v6365 = vunpack.c.l.s4 1966171168
  %v6366 = vunpack.c.0.s8 %v6365
  %v6367 = vlaneseq
  %v6368 = vshrl.u32 %v6367, 7
  %v6369 = vsub.s32 %v6366, %v6368
  %v6370 = vrot.slane %v6362, %v6369
  %v6372 = vunpack.c.l.s4 1966171168
  %v6373 = vunpack.c.0.s8 %v6372
  %v6374 = vlaneseq
  %v6375 = vshrl.u32 %v6374, 7
  %v6376 = vsub.s32 %v6373, %v6375
  %v6377 = vrot.slane %v6363, %v6376
  %v6379 = vunpack.c.l.s4 1966171168
  %v6380 = vunpack.c.0.s8 %v6379
  %v6381 = vlaneseq
  %v6382 = vshrl.u32 %v6381, 7
  %v6383 = vsub.s32 %v6380, %v6382
  %v6384 = vrot.slane %v6215, %v6383
  %v6385 = vcombine.high %v6384, %v6384
  %v6387 = vunpack.c.l.s4 1966171168
  %v6388 = vunpack.c.0.s8 %v6387
  %v6389 = vlaneseq
  %v6390 = vshrl.u32 %v6389, 7
  %v6391 = vsub.s32 %v6388, %v6390
  %v6392 = vrot.slane %v6384, %v6391
  %v6394 = vunpack.c.l.s4 1966171168
  %v6395 = vunpack.c.0.s8 %v6394
  %v6396 = vlaneseq
  %v6397 = vshrl.u32 %v6396, 7
  %v6398 = vsub.s32 %v6395, %v6397
  %v6399 = vrot.slane %v6385, %v6398
  %v6401 = vunpack.c.l.s4 1966171168
  %v6402 = vunpack.c.0.s8 %v6401
  %v6403 = vlaneseq
  %v6404 = vshrl.u32 %v6403, 7
  %v6405 = vsub.s32 %v6402, %v6404
  %v6406 = vrot.slane %v6216, %v6405
  %v6407 = vcombine.high %v6406, %v6406
  %v6409 = vunpack.c.l.s4 1966171168
  %v6410 = vunpack.c.0.s8 %v6409
  %v6411 = vlaneseq
  %v6412 = vshrl.u32 %v6411, 7
  %v6413 = vsub.s32 %v6410, %v6412
  %v6414 = vrot.slane %v6406, %v6413
  %v6416 = vunpack.c.l.s4 1966171168
  %v6417 = vunpack.c.0.s8 %v6416
  %v6418 = vlaneseq
  %v6419 = vshrl.u32 %v6418, 7
  %v6420 = vsub.s32 %v6417, %v6419
  %v6421 = vrot.slane %v6407, %v6420
  %v6423 = vunpack.c.l.s4 1966171168
  %v6424 = vunpack.c.0.s8 %v6423
  %v6425 = vlaneseq
  %v6426 = vshrl.u32 %v6425, 7
  %v6427 = vsub.s32 %v6424, %v6426
  %v6428 = vrot.slane %v6217, %v6427
  %v6429 = vcombine.high %v6428, %v6428
  %v6431 = vunpack.c.l.s4 1966171168
  %v6432 = vunpack.c.0.s8 %v6431
  %v6433 = vlaneseq
  %v6434 = vshrl.u32 %v6433, 7
  %v6435 = vsub.s32 %v6432, %v6434
  %v6436 = vrot.slane %v6428, %v6435
  %v6438 = vunpack.c.l.s4 1966171168
  %v6439 = vunpack.c.0.s8 %v6438
  %v6440 = vlaneseq
  %v6441 = vshrl.u32 %v6440, 7
  %v6442 = vsub.s32 %v6439, %v6441
  %v6443 = vrot.slane %v6429, %v6442
  %v6445 = vunpack.c.l.s4 1966171168
  %v6446 = vunpack.c.0.s8 %v6445
  %v6447 = vlaneseq
  %v6448 = vshrl.u32 %v6447, 7
  %v6449 = vsub.s32 %v6446, %v6448
  %v6450 = vrot.slane %v6218, %v6449
  %v6451 = vcombine.high %v6450, %v6450
  %v6453 = vunpack.c.l.s4 1966171168
  %v6454 = vunpack.c.0.s8 %v6453
  %v6455 = vlaneseq
  %v6456 = vshrl.u32 %v6455, 7
  %v6457 = vsub.s32 %v6454, %v6456
  %v6458 = vrot.slane %v6450, %v6457
  %v6460 = vunpack.c.l.s4 1966171168
  %v6461 = vunpack.c.0.s8 %v6460
  %v6462 = vlaneseq
  %v6463 = vshrl.u32 %v6462, 7
  %v6464 = vsub.s32 %v6461, %v6463
  %v6465 = vrot.slane %v6451, %v6464
  %v6467 = vunpack.c.l.s4 1966171168
  %v6468 = vunpack.c.0.s8 %v6467
  %v6469 = vlaneseq
  %v6470 = vshrl.u32 %v6469, 7
  %v6471 = vsub.s32 %v6468, %v6470
  %v6472 = vrot.slane %v6219, %v6471
  %v6473 = vcombine.high %v6472, %v6472
  %v6475 = vunpack.c.l.s4 1966171168
  %v6476 = vunpack.c.0.s8 %v6475
  %v6477 = vlaneseq
  %v6478 = vshrl.u32 %v6477, 7
  %v6479 = vsub.s32 %v6476, %v6478
  %v6480 = vrot.slane %v6472, %v6479
  %v6482 = vunpack.c.l.s4 1966171168
  %v6483 = vunpack.c.0.s8 %v6482
  %v6484 = vlaneseq
  %v6485 = vshrl.u32 %v6484, 7
  %v6486 = vsub.s32 %v6483, %v6485
  %v6487 = vrot.slane %v6473, %v6486
  %v6489 = vunpack.c.l.s4 1966171168
  %v6490 = vunpack.c.0.s8 %v6489
  %v6491 = vlaneseq
  %v6492 = vshrl.u32 %v6491, 7
  %v6493 = vsub.s32 %v6490, %v6492
  %v6494 = vrot.slane %v6220, %v6493
  %v6495 = vcombine.high %v6494, %v6494
  %v6497 = vunpack.c.l.s4 1966171168
  %v6498 = vunpack.c.0.s8 %v6497
  %v6499 = vlaneseq
  %v6500 = vshrl.u32 %v6499, 7
  %v6501 = vsub.s32 %v6498, %v6500
  %v6502 = vrot.slane %v6494, %v6501
  %v6504 = vunpack.c.l.s4 1966171168
  %v6505 = vunpack.c.0.s8 %v6504
  %v6506 = vlaneseq
  %v6507 = vshrl.u32 %v6506, 7
  %v6508 = vsub.s32 %v6505, %v6507
  %v6509 = vrot.slane %v6495, %v6508
  %v6511 = vunpack.c.l.s4 1966171168
  %v6512 = vunpack.c.0.s8 %v6511
  %v6513 = vlaneseq
  %v6514 = vshrl.u32 %v6513, 7
  %v6515 = vsub.s32 %v6512, %v6514
  %v6516 = vrot.slane %v6221, %v6515
  %v6517 = vcombine.high %v6516, %v6516
  %v6519 = vunpack.c.l.s4 1966171168
  %v6520 = vunpack.c.0.s8 %v6519
  %v6521 = vlaneseq
  %v6522 = vshrl.u32 %v6521, 7
  %v6523 = vsub.s32 %v6520, %v6522
  %v6524 = vrot.slane %v6516, %v6523
  %v6526 = vunpack.c.l.s4 1966171168
  %v6527 = vunpack.c.0.s8 %v6526
  %v6528 = vlaneseq
  %v6529 = vshrl.u32 %v6528, 7
  %v6530 = vsub.s32 %v6527, %v6529
  %v6531 = vrot.slane %v6517, %v6530
  %v6533 = vunpack.c.l.s4 1966171168
  %v6534 = vunpack.c.0.s8 %v6533
  %v6535 = vlaneseq
  %v6536 = vshrl.u32 %v6535, 7
  %v6537 = vsub.s32 %v6534, %v6536
  %v6538 = vrot.slane %v6222, %v6537
  %v6539 = vcombine.high %v6538, %v6538
  %v6541 = vunpack.c.l.s4 1966171168
  %v6542 = vunpack.c.0.s8 %v6541
  %v6543 = vlaneseq
  %v6544 = vshrl.u32 %v6543, 7
  %v6545 = vsub.s32 %v6542, %v6544
  %v6546 = vrot.slane %v6538, %v6545
  %v6548 = vunpack.c.l.s4 1966171168
  %v6549 = vunpack.c.0.s8 %v6548
  %v6550 = vlaneseq
  %v6551 = vshrl.u32 %v6550, 7
  %v6552 = vsub.s32 %v6549, %v6551
  %v6553 = vrot.slane %v6539, %v6552
  %v6555 = vunpack.c.l.s4 1966171168
  %v6556 = vunpack.c.0.s8 %v6555
  %v6557 = vlaneseq
  %v6558 = vshrl.u32 %v6557, 7
  %v6559 = vsub.s32 %v6556, %v6558
  %v6560 = vrot.slane %v6223, %v6559
  %v6561 = vcombine.high %v6560, %v6560
  %v6563 = vunpack.c.l.s4 1966171168
  %v6564 = vunpack.c.0.s8 %v6563
  %v6565 = vlaneseq
  %v6566 = vshrl.u32 %v6565, 7
  %v6567 = vsub.s32 %v6564, %v6566
  %v6568 = vrot.slane %v6560, %v6567
  %v6570 = vunpack.c.l.s4 1966171168
  %v6571 = vunpack.c.0.s8 %v6570
  %v6572 = vlaneseq
  %v6573 = vshrl.u32 %v6572, 7
  %v6574 = vsub.s32 %v6571, %v6573
  %v6575 = vrot.slane %v6561, %v6574
  %v6576 = vpack.i.b16 %v6138, %v6137
  %v6577 = vpack.i.b16 %v6141, %v6140
  %v6578 = vpack.i.b16 %v6147, %v6146
  %v6579 = vpack.i.b16 %v6150, %v6149
  %v6580 = vpack.i.b16 %v6156, %v6155
  %v6581 = vpack.i.b16 %v6159, %v6158
  %v6582 = vpack.i.b16 %v6165, %v6164
  %v6583 = vpack.i.b16 %v6168, %v6167
  %v6584 = vpack.i.b16 %v6174, %v6173
  %v6585 = vpack.i.b16 %v6177, %v6176
  %v6586 = vpack.i.b16 %v6183, %v6182
  %v6587 = vpack.i.b16 %v6186, %v6185
  %v6588 = vpack.i.b16 %v6192, %v6191
  %v6589 = vpack.i.b16 %v6195, %v6194
  %v6590 = vpack.i.b16 %v6201, %v6200
  %v6591 = vpack.i.b16 %v6204, %v6203
  %v6593 = vunpack.c.l.s4 1966171168
  %v6594 = vunpack.c.0.s8 %v6593
  %v6595 = vlaneseq
  %v6596 = vshrl.u32 %v6595, 7
  %v6597 = vsub.s32 %v6594, %v6596
  %v6598 = vrot.slane %v6576, %v6597
  %v6599 = vcombine.high %v6598, %v6598
  %v6601 = vunpack.c.l.s4 1966171168
  %v6602 = vunpack.c.0.s8 %v6601
  %v6603 = vlaneseq
  %v6604 = vshrl.u32 %v6603, 7
  %v6605 = vsub.s32 %v6602, %v6604
  %v6606 = vrot.slane %v6598, %v6605
  %v6608 = vunpack.c.l.s4 1966171168
  %v6609 = vunpack.c.0.s8 %v6608
  %v6610 = vlaneseq
  %v6611 = vshrl.u32 %v6610, 7
  %v6612 = vsub.s32 %v6609, %v6611
  %v6613 = vrot.slane %v6599, %v6612
  %v6615 = vunpack.c.l.s4 1966171168
  %v6616 = vunpack.c.0.s8 %v6615
  %v6617 = vlaneseq
  %v6618 = vshrl.u32 %v6617, 7
  %v6619 = vsub.s32 %v6616, %v6618
  %v6620 = vrot.slane %v6577, %v6619
  %v6621 = vcombine.high %v6620, %v6620
  %v6623 = vunpack.c.l.s4 1966171168
  %v6624 = vunpack.c.0.s8 %v6623
  %v6625 = vlaneseq
  %v6626 = vshrl.u32 %v6625, 7
  %v6627 = vsub.s32 %v6624, %v6626
  %v6628 = vrot.slane %v6620, %v6627
  %v6630 = vunpack.c.l.s4 1966171168
  %v6631 = vunpack.c.0.s8 %v6630
  %v6632 = vlaneseq
  %v6633 = vshrl.u32 %v6632, 7
  %v6634 = vsub.s32 %v6631, %v6633
  %v6635 = vrot.slane %v6621, %v6634
  %v6637 = vunpack.c.l.s4 1966171168
  %v6638 = vunpack.c.0.s8 %v6637
  %v6639 = vlaneseq
  %v6640 = vshrl.u32 %v6639, 7
  %v6641 = vsub.s32 %v6638, %v6640
  %v6642 = vrot.slane %v6578, %v6641
  %v6643 = vcombine.high %v6642, %v6642
  %v6645 = vunpack.c.l.s4 1966171168
  %v6646 = vunpack.c.0.s8 %v6645
  %v6647 = vlaneseq
  %v6648 = vshrl.u32 %v6647, 7
  %v6649 = vsub.s32 %v6646, %v6648
  %v6650 = vrot.slane %v6642, %v6649
  %v6652 = vunpack.c.l.s4 1966171168
  %v6653 = vunpack.c.0.s8 %v6652
  %v6654 = vlaneseq
  %v6655 = vshrl.u32 %v6654, 7
  %v6656 = vsub.s32 %v6653, %v6655
  %v6657 = vrot.slane %v6643, %v6656
  %v6659 = vunpack.c.l.s4 1966171168
  %v6660 = vunpack.c.0.s8 %v6659
  %v6661 = vlaneseq
  %v6662 = vshrl.u32 %v6661, 7
  %v6663 = vsub.s32 %v6660, %v6662
  %v6664 = vrot.slane %v6579, %v6663
  %v6665 = vcombine.high %v6664, %v6664
  %v6667 = vunpack.c.l.s4 1966171168
  %v6668 = vunpack.c.0.s8 %v6667
  %v6669 = vlaneseq
  %v6670 = vshrl.u32 %v6669, 7
  %v6671 = vsub.s32 %v6668, %v6670
  %v6672 = vrot.slane %v6664, %v6671
  %v6674 = vunpack.c.l.s4 1966171168
  %v6675 = vunpack.c.0.s8 %v6674
  %v6676 = vlaneseq
  %v6677 = vshrl.u32 %v6676, 7
  %v6678 = vsub.s32 %v6675, %v6677
  %v6679 = vrot.slane %v6665, %v6678
  %v6681 = vunpack.c.l.s4 1966171168
  %v6682 = vunpack.c.0.s8 %v6681
  %v6683 = vlaneseq
  %v6684 = vshrl.u32 %v6683, 7
  %v6685 = vsub.s32 %v6682, %v6684
  %v6686 = vrot.slane %v6580, %v6685
  %v6687 = vcombine.high %v6686, %v6686
  %v6689 = vunpack.c.l.s4 1966171168
  %v6690 = vunpack.c.0.s8 %v6689
  %v6691 = vlaneseq
  %v6692 = vshrl.u32 %v6691, 7
  %v6693 = vsub.s32 %v6690, %v6692
  %v6694 = vrot.slane %v6686, %v6693
  %v6696 = vunpack.c.l.s4 1966171168
  %v6697 = vunpack.c.0.s8 %v6696
  %v6698 = vlaneseq
  %v6699 = vshrl.u32 %v6698, 7
  %v6700 = vsub.s32 %v6697, %v6699
  %v6701 = vrot.slane %v6687, %v6700
  %v6703 = vunpack.c.l.s4 1966171168
  %v6704 = vunpack.c.0.s8 %v6703
  %v6705 = vlaneseq
  %v6706 = vshrl.u32 %v6705, 7
  %v6707 = vsub.s32 %v6704, %v6706
  %v6708 = vrot.slane %v6581, %v6707
  %v6709 = vcombine.high %v6708, %v6708
  %v6711 = vunpack.c.l.s4 1966171168
  %v6712 = vunpack.c.0.s8 %v6711
  %v6713 = vlaneseq
  %v6714 = vshrl.u32 %v6713, 7
  %v6715 = vsub.s32 %v6712, %v6714
  %v6716 = vrot.slane %v6708, %v6715
  %v6718 = vunpack.c.l.s4 1966171168
  %v6719 = vunpack.c.0.s8 %v6718
  %v6720 = vlaneseq
  %v6721 = vshrl.u32 %v6720, 7
  %v6722 = vsub.s32 %v6719, %v6721
  %v6723 = vrot.slane %v6709, %v6722
  %v6725 = vunpack.c.l.s4 1966171168
  %v6726 = vunpack.c.0.s8 %v6725
  %v6727 = vlaneseq
  %v6728 = vshrl.u32 %v6727, 7
  %v6729 = vsub.s32 %v6726, %v6728
  %v6730 = vrot.slane %v6582, %v6729
  %v6731 = vcombine.high %v6730, %v6730
  %v6733 = vunpack.c.l.s4 1966171168
  %v6734 = vunpack.c.0.s8 %v6733
  %v6735 = vlaneseq
  %v6736 = vshrl.u32 %v6735, 7
  %v6737 = vsub.s32 %v6734, %v6736
  %v6738 = vrot.slane %v6730, %v6737
  %v6740 = vunpack.c.l.s4 1966171168
  %v6741 = vunpack.c.0.s8 %v6740
  %v6742 = vlaneseq
  %v6743 = vshrl.u32 %v6742, 7
  %v6744 = vsub.s32 %v6741, %v6743
  %v6745 = vrot.slane %v6731, %v6744
  %v6747 = vunpack.c.l.s4 1966171168
  %v6748 = vunpack.c.0.s8 %v6747
  %v6749 = vlaneseq
  %v6750 = vshrl.u32 %v6749, 7
  %v6751 = vsub.s32 %v6748, %v6750
  %v6752 = vrot.slane %v6583, %v6751
  %v6753 = vcombine.high %v6752, %v6752
  %v6755 = vunpack.c.l.s4 1966171168
  %v6756 = vunpack.c.0.s8 %v6755
  %v6757 = vlaneseq
  %v6758 = vshrl.u32 %v6757, 7
  %v6759 = vsub.s32 %v6756, %v6758
  %v6760 = vrot.slane %v6752, %v6759
  %v6762 = vunpack.c.l.s4 1966171168
  %v6763 = vunpack.c.0.s8 %v6762
  %v6764 = vlaneseq
  %v6765 = vshrl.u32 %v6764, 7
  %v6766 = vsub.s32 %v6763, %v6765
  %v6767 = vrot.slane %v6753, %v6766
  %v6769 = vunpack.c.l.s4 1966171168
  %v6770 = vunpack.c.0.s8 %v6769
  %v6771 = vlaneseq
  %v6772 = vshrl.u32 %v6771, 7
  %v6773 = vsub.s32 %v6770, %v6772
  %v6774 = vrot.slane %v6584, %v6773
  %v6775 = vcombine.high %v6774, %v6774
  %v6777 = vunpack.c.l.s4 1966171168
  %v6778 = vunpack.c.0.s8 %v6777
  %v6779 = vlaneseq
  %v6780 = vshrl.u32 %v6779, 7
  %v6781 = vsub.s32 %v6778, %v6780
  %v6782 = vrot.slane %v6774, %v6781
  %v6784 = vunpack.c.l.s4 1966171168
  %v6785 = vunpack.c.0.s8 %v6784
  %v6786 = vlaneseq
  %v6787 = vshrl.u32 %v6786, 7
  %v6788 = vsub.s32 %v6785, %v6787
  %v6789 = vrot.slane %v6775, %v6788
  %v6791 = vunpack.c.l.s4 1966171168
  %v6792 = vunpack.c.0.s8 %v6791
  %v6793 = vlaneseq
  %v6794 = vshrl.u32 %v6793, 7
  %v6795 = vsub.s32 %v6792, %v6794
  %v6796 = vrot.slane %v6585, %v6795
  %v6797 = vcombine.high %v6796, %v6796
  %v6799 = vunpack.c.l.s4 1966171168
  %v6800 = vunpack.c.0.s8 %v6799
  %v6801 = vlaneseq
  %v6802 = vshrl.u32 %v6801, 7
  %v6803 = vsub.s32 %v6800, %v6802
  %v6804 = vrot.slane %v6796, %v6803
  %v6806 = vunpack.c.l.s4 1966171168
  %v6807 = vunpack.c.0.s8 %v6806
  %v6808 = vlaneseq
  %v6809 = vshrl.u32 %v6808, 7
  %v6810 = vsub.s32 %v6807, %v6809
  %v6811 = vrot.slane %v6797, %v6810
  %v6813 = vunpack.c.l.s4 1966171168
  %v6814 = vunpack.c.0.s8 %v6813
  %v6815 = vlaneseq
  %v6816 = vshrl.u32 %v6815, 7
  %v6817 = vsub.s32 %v6814, %v6816
  %v6818 = vrot.slane %v6586, %v6817
  %v6819 = vcombine.high %v6818, %v6818
  %v6821 = vunpack.c.l.s4 1966171168
  %v6822 = vunpack.c.0.s8 %v6821
  %v6823 = vlaneseq
  %v6824 = vshrl.u32 %v6823, 7
  %v6825 = vsub.s32 %v6822, %v6824
  %v6826 = vrot.slane %v6818, %v6825
  %v6828 = vunpack.c.l.s4 1966171168
  %v6829 = vunpack.c.0.s8 %v6828
  %v6830 = vlaneseq
  %v6831 = vshrl.u32 %v6830, 7
  %v6832 = vsub.s32 %v6829, %v6831
  %v6833 = vrot.slane %v6819, %v6832
  %v6835 = vunpack.c.l.s4 1966171168
  %v6836 = vunpack.c.0.s8 %v6835
  %v6837 = vlaneseq
  %v6838 = vshrl.u32 %v6837, 7
  %v6839 = vsub.s32 %v6836, %v6838
  %v6840 = vrot.slane %v6587, %v6839
  %v6841 = vcombine.high %v6840, %v6840
  %v6843 = vunpack.c.l.s4 1966171168
  %v6844 = vunpack.c.0.s8 %v6843
  %v6845 = vlaneseq
  %v6846 = vshrl.u32 %v6845, 7
  %v6847 = vsub.s32 %v6844, %v6846
  %v6848 = vrot.slane %v6840, %v6847
  %v6850 = vunpack.c.l.s4 1966171168
  %v6851 = vunpack.c.0.s8 %v6850
  %v6852 = vlaneseq
  %v6853 = vshrl.u32 %v6852, 7
  %v6854 = vsub.s32 %v6851, %v6853
  %v6855 = vrot.slane %v6841, %v6854
  %v6857 = vunpack.c.l.s4 1966171168
  %v6858 = vunpack.c.0.s8 %v6857
  %v6859 = vlaneseq
  %v6860 = vshrl.u32 %v6859, 7
  %v6861 = vsub.s32 %v6858, %v6860
  %v6862 = vrot.slane %v6588, %v6861
  %v6863 = vcombine.high %v6862, %v6862
  %v6865 = vunpack.c.l.s4 1966171168
  %v6866 = vunpack.c.0.s8 %v6865
  %v6867 = vlaneseq
  %v6868 = vshrl.u32 %v6867, 7
  %v6869 = vsub.s32 %v6866, %v6868
  %v6870 = vrot.slane %v6862, %v6869
  %v6872 = vunpack.c.l.s4 1966171168
  %v6873 = vunpack.c.0.s8 %v6872
  %v6874 = vlaneseq
  %v6875 = vshrl.u32 %v6874, 7
  %v6876 = vsub.s32 %v6873, %v6875
  %v6877 = vrot.slane %v6863, %v6876
  %v6879 = vunpack.c.l.s4 1966171168
  %v6880 = vunpack.c.0.s8 %v6879
  %v6881 = vlaneseq
  %v6882 = vshrl.u32 %v6881, 7
  %v6883 = vsub.s32 %v6880, %v6882
  %v6884 = vrot.slane %v6589, %v6883
  %v6885 = vcombine.high %v6884, %v6884
  %v6887 = vunpack.c.l.s4 1966171168
  %v6888 = vunpack.c.0.s8 %v6887
  %v6889 = vlaneseq
  %v6890 = vshrl.u32 %v6889, 7
  %v6891 = vsub.s32 %v6888, %v6890
  %v6892 = vrot.slane %v6884, %v6891
  %v6894 = vunpack.c.l.s4 1966171168
  %v6895 = vunpack.c.0.s8 %v6894
  %v6896 = vlaneseq
  %v6897 = vshrl.u32 %v6896, 7
  %v6898 = vsub.s32 %v6895, %v6897
  %v6899 = vrot.slane %v6885, %v6898
  %v6901 = vunpack.c.l.s4 1966171168
  %v6902 = vunpack.c.0.s8 %v6901
  %v6903 = vlaneseq
  %v6904 = vshrl.u32 %v6903, 7
  %v6905 = vsub.s32 %v6902, %v6904
  %v6906 = vrot.slane %v6590, %v6905
  %v6907 = vcombine.high %v6906, %v6906
  %v6909 = vunpack.c.l.s4 1966171168
  %v6910 = vunpack.c.0.s8 %v6909
  %v6911 = vlaneseq
  %v6912 = vshrl.u32 %v6911, 7
  %v6913 = vsub.s32 %v6910, %v6912
  %v6914 = vrot.slane %v6906, %v6913
  %v6916 = vunpack.c.l.s4 1966171168
  %v6917 = vunpack.c.0.s8 %v6916
  %v6918 = vlaneseq
  %v6919 = vshrl.u32 %v6918, 7
  %v6920 = vsub.s32 %v6917, %v6919
  %v6921 = vrot.slane %v6907, %v6920
  %v6923 = vunpack.c.l.s4 1966171168
  %v6924 = vunpack.c.0.s8 %v6923
  %v6925 = vlaneseq
  %v6926 = vshrl.u32 %v6925, 7
  %v6927 = vsub.s32 %v6924, %v6926
  %v6928 = vrot.slane %v6591, %v6927
  %v6929 = vcombine.high %v6928, %v6928
  %v6931 = vunpack.c.l.s4 1966171168
  %v6932 = vunpack.c.0.s8 %v6931
  %v6933 = vlaneseq
  %v6934 = vshrl.u32 %v6933, 7
  %v6935 = vsub.s32 %v6932, %v6934
  %v6936 = vrot.slane %v6928, %v6935
  %v6938 = vunpack.c.l.s4 1966171168
  %v6939 = vunpack.c.0.s8 %v6938
  %v6940 = vlaneseq
  %v6941 = vshrl.u32 %v6940, 7
  %v6942 = vsub.s32 %v6939, %v6941
  %v6943 = vrot.slane %v6929, %v6942
  %v6944 = vpack.i.b16 %v6143, %v6142
  %v6945 = vpack.i.b16 %v6152, %v6151
  %v6946 = vpack.i.b16 %v6161, %v6160
  %v6947 = vpack.i.b16 %v6170, %v6169
  %v6948 = vpack.i.b16 %v6179, %v6178
  %v6949 = vpack.i.b16 %v6188, %v6187
  %v6950 = vpack.i.b16 %v6197, %v6196
  %v6951 = vpack.i.b16 %v6206, %v6205
  %v6953 = vunpack.c.l.s4 1966171168
  %v6954 = vunpack.c.0.s8 %v6953
  %v6955 = vlaneseq
  %v6956 = vshrl.u32 %v6955, 7
  %v6957 = vsub.s32 %v6954, %v6956
  %v6958 = vrot.slane %v6944, %v6957
  %v6959 = vcombine.high %v6958, %v6958
  %v6961 = vunpack.c.l.s4 1966171168
  %v6962 = vunpack.c.0.s8 %v6961
  %v6963 = vlaneseq
  %v6964 = vshrl.u32 %v6963, 7
  %v6965 = vsub.s32 %v6962, %v6964
  %v6966 = vrot.slane %v6958, %v6965
  %v6968 = vunpack.c.l.s4 1966171168
  %v6969 = vunpack.c.0.s8 %v6968
  %v6970 = vlaneseq
  %v6971 = vshrl.u32 %v6970, 7
  %v6972 = vsub.s32 %v6969, %v6971
  %v6973 = vrot.slane %v6959, %v6972
  %v6975 = vunpack.c.l.s4 1966171168
  %v6976 = vunpack.c.0.s8 %v6975
  %v6977 = vlaneseq
  %v6978 = vshrl.u32 %v6977, 7
  %v6979 = vsub.s32 %v6976, %v6978
  %v6980 = vrot.slane %v6945, %v6979
  %v6981 = vcombine.high %v6980, %v6980
  %v6983 = vunpack.c.l.s4 1966171168
  %v6984 = vunpack.c.0.s8 %v6983
  %v6985 = vlaneseq
  %v6986 = vshrl.u32 %v6985, 7
  %v6987 = vsub.s32 %v6984, %v6986
  %v6988 = vrot.slane %v6980, %v6987
  %v6990 = vunpack.c.l.s4 1966171168
  %v6991 = vunpack.c.0.s8 %v6990
  %v6992 = vlaneseq
  %v6993 = vshrl.u32 %v6992, 7
  %v6994 = vsub.s32 %v6991, %v6993
  %v6995 = vrot.slane %v6981, %v6994
  %v6997 = vunpack.c.l.s4 1966171168
  %v6998 = vunpack.c.0.s8 %v6997
  %v6999 = vlaneseq
  %v7000 = vshrl.u32 %v6999, 7
  %v7001 = vsub.s32 %v6998, %v7000
  %v7002 = vrot.slane %v6946, %v7001
  %v7003 = vcombine.high %v7002, %v7002
  %v7005 = vunpack.c.l.s4 1966171168
  %v7006 = vunpack.c.0.s8 %v7005
  %v7007 = vlaneseq
  %v7008 = vshrl.u32 %v7007, 7
  %v7009 = vsub.s32 %v7006, %v7008
  %v7010 = vrot.slane %v7002, %v7009
  %v7012 = vunpack.c.l.s4 1966171168
  %v7013 = vunpack.c.0.s8 %v7012
  %v7014 = vlaneseq
  %v7015 = vshrl.u32 %v7014, 7
  %v7016 = vsub.s32 %v7013, %v7015
  %v7017 = vrot.slane %v7003, %v7016
  %v7019 = vunpack.c.l.s4 1966171168
  %v7020 = vunpack.c.0.s8 %v7019
  %v7021 = vlaneseq
  %v7022 = vshrl.u32 %v7021, 7
  %v7023 = vsub.s32 %v7020, %v7022
  %v7024 = vrot.slane %v6947, %v7023
  %v7025 = vcombine.high %v7024, %v7024
  %v7027 = vunpack.c.l.s4 1966171168
  %v7028 = vunpack.c.0.s8 %v7027
  %v7029 = vlaneseq
  %v7030 = vshrl.u32 %v7029, 7
  %v7031 = vsub.s32 %v7028, %v7030
  %v7032 = vrot.slane %v7024, %v7031
  %v7034 = vunpack.c.l.s4 1966171168
  %v7035 = vunpack.c.0.s8 %v7034
  %v7036 = vlaneseq
  %v7037 = vshrl.u32 %v7036, 7
  %v7038 = vsub.s32 %v7035, %v7037
  %v7039 = vrot.slane %v7025, %v7038
  %v7041 = vunpack.c.l.s4 1966171168
  %v7042 = vunpack.c.0.s8 %v7041
  %v7043 = vlaneseq
  %v7044 = vshrl.u32 %v7043, 7
  %v7045 = vsub.s32 %v7042, %v7044
  %v7046 = vrot.slane %v6948, %v7045
  %v7047 = vcombine.high %v7046, %v7046
  %v7049 = vunpack.c.l.s4 1966171168
  %v7050 = vunpack.c.0.s8 %v7049
  %v7051 = vlaneseq
  %v7052 = vshrl.u32 %v7051, 7
  %v7053 = vsub.s32 %v7050, %v7052
  %v7054 = vrot.slane %v7046, %v7053
  %v7056 = vunpack.c.l.s4 1966171168
  %v7057 = vunpack.c.0.s8 %v7056
  %v7058 = vlaneseq
  %v7059 = vshrl.u32 %v7058, 7
  %v7060 = vsub.s32 %v7057, %v7059
  %v7061 = vrot.slane %v7047, %v7060
  %v7063 = vunpack.c.l.s4 1966171168
  %v7064 = vunpack.c.0.s8 %v7063
  %v7065 = vlaneseq
  %v7066 = vshrl.u32 %v7065, 7
  %v7067 = vsub.s32 %v7064, %v7066
  %v7068 = vrot.slane %v6949, %v7067
  %v7069 = vcombine.high %v7068, %v7068
  %v7071 = vunpack.c.l.s4 1966171168
  %v7072 = vunpack.c.0.s8 %v7071
  %v7073 = vlaneseq
  %v7074 = vshrl.u32 %v7073, 7
  %v7075 = vsub.s32 %v7072, %v7074
  %v7076 = vrot.slane %v7068, %v7075
  %v7078 = vunpack.c.l.s4 1966171168
  %v7079 = vunpack.c.0.s8 %v7078
  %v7080 = vlaneseq
  %v7081 = vshrl.u32 %v7080, 7
  %v7082 = vsub.s32 %v7079, %v7081
  %v7083 = vrot.slane %v7069, %v7082
  %v7085 = vunpack.c.l.s4 1966171168
  %v7086 = vunpack.c.0.s8 %v7085
  %v7087 = vlaneseq
  %v7088 = vshrl.u32 %v7087, 7
  %v7089 = vsub.s32 %v7086, %v7088
  %v7090 = vrot.slane %v6950, %v7089
  %v7091 = vcombine.high %v7090, %v7090
  %v7093 = vunpack.c.l.s4 1966171168
  %v7094 = vunpack.c.0.s8 %v7093
  %v7095 = vlaneseq
  %v7096 = vshrl.u32 %v7095, 7
  %v7097 = vsub.s32 %v7094, %v7096
  %v7098 = vrot.slane %v7090, %v7097
  %v7100 = vunpack.c.l.s4 1966171168
  %v7101 = vunpack.c.0.s8 %v7100
  %v7102 = vlaneseq
  %v7103 = vshrl.u32 %v7102, 7
  %v7104 = vsub.s32 %v7101, %v7103
  %v7105 = vrot.slane %v7091, %v7104
  %v7107 = vunpack.c.l.s4 1966171168
  %v7108 = vunpack.c.0.s8 %v7107
  %v7109 = vlaneseq
  %v7110 = vshrl.u32 %v7109, 7
  %v7111 = vsub.s32 %v7108, %v7110
  %v7112 = vrot.slane %v6951, %v7111
  %v7113 = vcombine.high %v7112, %v7112
  %v7115 = vunpack.c.l.s4 1966171168
  %v7116 = vunpack.c.0.s8 %v7115
  %v7117 = vlaneseq
  %v7118 = vshrl.u32 %v7117, 7
  %v7119 = vsub.s32 %v7116, %v7118
  %v7120 = vrot.slane %v7112, %v7119
  %v7122 = vunpack.c.l.s4 1966171168
  %v7123 = vunpack.c.0.s8 %v7122
  %v7124 = vlaneseq
  %v7125 = vshrl.u32 %v7124, 7
  %v7126 = vsub.s32 %v7123, %v7125
  %v7127 = vrot.slane %v7113, %v7126
  %v7128 = vpack.i.b16 %v6144, %v6143
  %v7129 = vpack.i.b16 %v6153, %v6152
  %v7130 = vpack.i.b16 %v6162, %v6161
  %v7131 = vpack.i.b16 %v6171, %v6170
  %v7132 = vpack.i.b16 %v6180, %v6179
  %v7133 = vpack.i.b16 %v6189, %v6188
  %v7134 = vpack.i.b16 %v6198, %v6197
  %v7135 = vpack.i.b16 %v6207, %v6206
  %v7137 = vunpack.c.l.s4 1966171168
  %v7138 = vunpack.c.0.s8 %v7137
  %v7139 = vlaneseq
  %v7140 = vshrl.u32 %v7139, 7
  %v7141 = vsub.s32 %v7138, %v7140
  %v7142 = vrot.slane %v7128, %v7141
  %v7143 = vcombine.high %v7142, %v7142
  %v7145 = vunpack.c.l.s4 1966171168
  %v7146 = vunpack.c.0.s8 %v7145
  %v7147 = vlaneseq
  %v7148 = vshrl.u32 %v7147, 7
  %v7149 = vsub.s32 %v7146, %v7148
  %v7150 = vrot.slane %v7142, %v7149
  %v7152 = vunpack.c.l.s4 1966171168
  %v7153 = vunpack.c.0.s8 %v7152
  %v7154 = vlaneseq
  %v7155 = vshrl.u32 %v7154, 7
  %v7156 = vsub.s32 %v7153, %v7155
  %v7157 = vrot.slane %v7143, %v7156
  %v7159 = vunpack.c.l.s4 1966171168
  %v7160 = vunpack.c.0.s8 %v7159
  %v7161 = vlaneseq
  %v7162 = vshrl.u32 %v7161, 7
  %v7163 = vsub.s32 %v7160, %v7162
  %v7164 = vrot.slane %v7129, %v7163
  %v7165 = vcombine.high %v7164, %v7164
  %v7167 = vunpack.c.l.s4 1966171168
  %v7168 = vunpack.c.0.s8 %v7167
  %v7169 = vlaneseq
  %v7170 = vshrl.u32 %v7169, 7
  %v7171 = vsub.s32 %v7168, %v7170
  %v7172 = vrot.slane %v7164, %v7171
  %v7174 = vunpack.c.l.s4 1966171168
  %v7175 = vunpack.c.0.s8 %v7174
  %v7176 = vlaneseq
  %v7177 = vshrl.u32 %v7176, 7
  %v7178 = vsub.s32 %v7175, %v7177
  %v7179 = vrot.slane %v7165, %v7178
  %v7181 = vunpack.c.l.s4 1966171168
  %v7182 = vunpack.c.0.s8 %v7181
  %v7183 = vlaneseq
  %v7184 = vshrl.u32 %v7183, 7
  %v7185 = vsub.s32 %v7182, %v7184
  %v7186 = vrot.slane %v7130, %v7185
  %v7187 = vcombine.high %v7186, %v7186
  %v7189 = vunpack.c.l.s4 1966171168
  %v7190 = vunpack.c.0.s8 %v7189
  %v7191 = vlaneseq
  %v7192 = vshrl.u32 %v7191, 7
  %v7193 = vsub.s32 %v7190, %v7192
  %v7194 = vrot.slane %v7186, %v7193
  %v7196 = vunpack.c.l.s4 1966171168
  %v7197 = vunpack.c.0.s8 %v7196
  %v7198 = vlaneseq
  %v7199 = vshrl.u32 %v7198, 7
  %v7200 = vsub.s32 %v7197, %v7199
  %v7201 = vrot.slane %v7187, %v7200
  %v7203 = vunpack.c.l.s4 1966171168
  %v7204 = vunpack.c.0.s8 %v7203
  %v7205 = vlaneseq
  %v7206 = vshrl.u32 %v7205, 7
  %v7207 = vsub.s32 %v7204, %v7206
  %v7208 = vrot.slane %v7131, %v7207
  %v7209 = vcombine.high %v7208, %v7208
  %v7211 = vunpack.c.l.s4 1966171168
  %v7212 = vunpack.c.0.s8 %v7211
  %v7213 = vlaneseq
  %v7214 = vshrl.u32 %v7213, 7
  %v7215 = vsub.s32 %v7212, %v7214
  %v7216 = vrot.slane %v7208, %v7215
  %v7218 = vunpack.c.l.s4 1966171168
  %v7219 = vunpack.c.0.s8 %v7218
  %v7220 = vlaneseq
  %v7221 = vshrl.u32 %v7220, 7
  %v7222 = vsub.s32 %v7219, %v7221
  %v7223 = vrot.slane %v7209, %v7222
  %v7225 = vunpack.c.l.s4 1966171168
  %v7226 = vunpack.c.0.s8 %v7225
  %v7227 = vlaneseq
  %v7228 = vshrl.u32 %v7227, 7
  %v7229 = vsub.s32 %v7226, %v7228
  %v7230 = vrot.slane %v7132, %v7229
  %v7231 = vcombine.high %v7230, %v7230
  %v7233 = vunpack.c.l.s4 1966171168
  %v7234 = vunpack.c.0.s8 %v7233
  %v7235 = vlaneseq
  %v7236 = vshrl.u32 %v7235, 7
  %v7237 = vsub.s32 %v7234, %v7236
  %v7238 = vrot.slane %v7230, %v7237
  %v7240 = vunpack.c.l.s4 1966171168
  %v7241 = vunpack.c.0.s8 %v7240
  %v7242 = vlaneseq
  %v7243 = vshrl.u32 %v7242, 7
  %v7244 = vsub.s32 %v7241, %v7243
  %v7245 = vrot.slane %v7231, %v7244
  %v7247 = vunpack.c.l.s4 1966171168
  %v7248 = vunpack.c.0.s8 %v7247
  %v7249 = vlaneseq
  %v7250 = vshrl.u32 %v7249, 7
  %v7251 = vsub.s32 %v7248, %v7250
  %v7252 = vrot.slane %v7133, %v7251
  %v7253 = vcombine.high %v7252, %v7252
  %v7255 = vunpack.c.l.s4 1966171168
  %v7256 = vunpack.c.0.s8 %v7255
  %v7257 = vlaneseq
  %v7258 = vshrl.u32 %v7257, 7
  %v7259 = vsub.s32 %v7256, %v7258
  %v7260 = vrot.slane %v7252, %v7259
  %v7262 = vunpack.c.l.s4 1966171168
  %v7263 = vunpack.c.0.s8 %v7262
  %v7264 = vlaneseq
  %v7265 = vshrl.u32 %v7264, 7
  %v7266 = vsub.s32 %v7263, %v7265
  %v7267 = vrot.slane %v7253, %v7266
  %v7269 = vunpack.c.l.s4 1966171168
  %v7270 = vunpack.c.0.s8 %v7269
  %v7271 = vlaneseq
  %v7272 = vshrl.u32 %v7271, 7
  %v7273 = vsub.s32 %v7270, %v7272
  %v7274 = vrot.slane %v7134, %v7273
  %v7275 = vcombine.high %v7274, %v7274
  %v7277 = vunpack.c.l.s4 1966171168
  %v7278 = vunpack.c.0.s8 %v7277
  %v7279 = vlaneseq
  %v7280 = vshrl.u32 %v7279, 7
  %v7281 = vsub.s32 %v7278, %v7280
  %v7282 = vrot.slane %v7274, %v7281
  %v7284 = vunpack.c.l.s4 1966171168
  %v7285 = vunpack.c.0.s8 %v7284
  %v7286 = vlaneseq
  %v7287 = vshrl.u32 %v7286, 7
  %v7288 = vsub.s32 %v7285, %v7287
  %v7289 = vrot.slane %v7275, %v7288
  %v7291 = vunpack.c.l.s4 1966171168
  %v7292 = vunpack.c.0.s8 %v7291
  %v7293 = vlaneseq
  %v7294 = vshrl.u32 %v7293, 7
  %v7295 = vsub.s32 %v7292, %v7294
  %v7296 = vrot.slane %v7135, %v7295
  %v7297 = vcombine.high %v7296, %v7296
  %v7299 = vunpack.c.l.s4 1966171168
  %v7300 = vunpack.c.0.s8 %v7299
  %v7301 = vlaneseq
  %v7302 = vshrl.u32 %v7301, 7
  %v7303 = vsub.s32 %v7300, %v7302
  %v7304 = vrot.slane %v7296, %v7303
  %v7306 = vunpack.c.l.s4 1966171168
  %v7307 = vunpack.c.0.s8 %v7306
  %v7308 = vlaneseq
  %v7309 = vshrl.u32 %v7308, 7
  %v7310 = vsub.s32 %v7307, %v7309
  %v7311 = vrot.slane %v7297, %v7310
  %v7312 = vcombine.low %v6238, %v6245
  %v7313 = vcombine.low %v6606, %v6613
  %v7314 = vcombine.low %v6260, %v6267
  %v7315 = vcombine.low %v6628, %v6635
  %v7317 = vunpack.c.l.s4 1966171168
  %v7318 = vunpack.c.0.s8 %v7317
  %v7319 = vlaneseq
  %v7320 = vshrl.u32 %v7319, 7
  %v7321 = vsub.s32 %v7318, %v7320
  %v7322 = vrot.slane %v7312, %v7321
  %v7324 = vunpack.c.l.s4 1966171168
  %v7325 = vunpack.c.0.s8 %v7324
  %v7326 = vlaneseq
  %v7327 = vshrl.u32 %v7326, 7
  %v7328 = vsub.s32 %v7325, %v7327
  %v7329 = vrot.slane %v7313, %v7328
  %v7331 = vunpack.c.l.s4 1966171168
  %v7332 = vunpack.c.0.s8 %v7331
  %v7333 = vlaneseq
  %v7334 = vshrl.u32 %v7333, 7
  %v7335 = vsub.s32 %v7332, %v7334
  %v7336 = vrot.slane %v7314, %v7335
  %v7338 = vunpack.c.l.s4 1966171168
  %v7339 = vunpack.c.0.s8 %v7338
  %v7340 = vlaneseq
  %v7341 = vshrl.u32 %v7340, 7
  %v7342 = vsub.s32 %v7339, %v7341
  %v7343 = vrot.slane %v7315, %v7342
  %v7344 = vcombine.low %v7322, %v7329
  %v7345 = vcombine.low %v7336, %v7343
  %v7347 = vunpack.c.l.s4 1966171168
  %v7348 = vunpack.c.0.s8 %v7347
  %v7349 = vlaneseq
  %v7350 = vshrl.u32 %v7349, 7
  %v7351 = vsub.s32 %v7348, %v7350
  %v7352 = vrot.slane %v7344, %v7351
  %v7354 = vunpack.c.l.s4 1966171168
  %v7355 = vunpack.c.0.s8 %v7354
  %v7356 = vlaneseq
  %v7357 = vshrl.u32 %v7356, 7
  %v7358 = vsub.s32 %v7355, %v7357
  %v7359 = vrot.slane %v7345, %v7358
  %v7360 = vcombine.low %v7352, %v7359
  %v7361 = vcombine.low %v6966, %v6973
  %v7362 = vcombine.low %v7150, %v7157
  %v7364 = vunpack.c.l.s4 1966171168
  %v7365 = vunpack.c.0.s8 %v7364
  %v7366 = vlaneseq
  %v7367 = vshrl.u32 %v7366, 7
  %v7368 = vsub.s32 %v7365, %v7367
  %v7369 = vrot.slane %v7361, %v7368
  %v7371 = vunpack.c.l.s4 1966171168
  %v7372 = vunpack.c.0.s8 %v7371
  %v7373 = vlaneseq
  %v7374 = vshrl.u32 %v7373, 7
  %v7375 = vsub.s32 %v7372, %v7374
  %v7376 = vrot.slane %v7362, %v7375
  %v7377 = vcombine.low %v7369, %v7376
  %v7379 = vunpack.c.l.s4 1966171168
  %v7380 = vunpack.c.0.s8 %v7379
  %v7381 = vlaneseq
  %v7382 = vshrl.u32 %v7381, 7
  %v7383 = vsub.s32 %v7380, %v7382
  %v7384 = vrot.slane %v7377, %v7383
  %v7385 = vcombine.low %v7359, %v7384
  %v7386 = vcombine.low %v6282, %v6289
  %v7387 = vcombine.low %v6650, %v6657
  %v7388 = vcombine.low %v6304, %v6311
  %v7389 = vcombine.low %v6672, %v6679
  %v7391 = vunpack.c.l.s4 1966171168
  %v7392 = vunpack.c.0.s8 %v7391
  %v7393 = vlaneseq
  %v7394 = vshrl.u32 %v7393, 7
  %v7395 = vsub.s32 %v7392, %v7394
  %v7396 = vrot.slane %v7386, %v7395
  %v7398 = vunpack.c.l.s4 1966171168
  %v7399 = vunpack.c.0.s8 %v7398
  %v7400 = vlaneseq
  %v7401 = vshrl.u32 %v7400, 7
  %v7402 = vsub.s32 %v7399, %v7401
  %v7403 = vrot.slane %v7387, %v7402
  %v7405 = vunpack.c.l.s4 1966171168
  %v7406 = vunpack.c.0.s8 %v7405
  %v7407 = vlaneseq
  %v7408 = vshrl.u32 %v7407, 7
  %v7409 = vsub.s32 %v7406, %v7408
  %v7410 = vrot.slane %v7388, %v7409
  %v7412 = vunpack.c.l.s4 1966171168
  %v7413 = vunpack.c.0.s8 %v7412
  %v7414 = vlaneseq
  %v7415 = vshrl.u32 %v7414, 7
  %v7416 = vsub.s32 %v7413, %v7415
  %v7417 = vrot.slane %v7389, %v7416
  %v7418 = vcombine.low %v7396, %v7403
  %v7419 = vcombine.low %v7410, %v7417
  %v7421 = vunpack.c.l.s4 1966171168
  %v7422 = vunpack.c.0.s8 %v7421
  %v7423 = vlaneseq
  %v7424 = vshrl.u32 %v7423, 7
  %v7425 = vsub.s32 %v7422, %v7424
  %v7426 = vrot.slane %v7418, %v7425
  %v7428 = vunpack.c.l.s4 1966171168
  %v7429 = vunpack.c.0.s8 %v7428
  %v7430 = vlaneseq
  %v7431 = vshrl.u32 %v7430, 7
  %v7432 = vsub.s32 %v7429, %v7431
  %v7433 = vrot.slane %v7419, %v7432
  %v7434 = vcombine.low %v7426, %v7433
  %v7435 = vcombine.low %v6988, %v6995
  %v7436 = vcombine.low %v7172, %v7179
  %v7438 = vunpack.c.l.s4 1966171168
  %v7439 = vunpack.c.0.s8 %v7438
  %v7440 = vlaneseq
  %v7441 = vshrl.u32 %v7440, 7
  %v7442 = vsub.s32 %v7439, %v7441
  %v7443 = vrot.slane %v7435, %v7442
  %v7445 = vunpack.c.l.s4 1966171168
  %v7446 = vunpack.c.0.s8 %v7445
  %v7447 = vlaneseq
  %v7448 = vshrl.u32 %v7447, 7
  %v7449 = vsub.s32 %v7446, %v7448
  %v7450 = vrot.slane %v7436, %v7449
  %v7451 = vcombine.low %v7443, %v7450
  %v7453 = vunpack.c.l.s4 1966171168
  %v7454 = vunpack.c.0.s8 %v7453
  %v7455 = vlaneseq
  %v7456 = vshrl.u32 %v7455, 7
  %v7457 = vsub.s32 %v7454, %v7456
  %v7458 = vrot.slane %v7451, %v7457
  %v7459 = vcombine.low %v7433, %v7458
  %v7460 = vcombine.low %v6326, %v6333
  %v7461 = vcombine.low %v6694, %v6701
  %v7462 = vcombine.low %v6348, %v6355
  %v7463 = vcombine.low %v6716, %v6723
  %v7465 = vunpack.c.l.s4 1966171168
  %v7466 = vunpack.c.0.s8 %v7465
  %v7467 = vlaneseq
  %v7468 = vshrl.u32 %v7467, 7
  %v7469 = vsub.s32 %v7466, %v7468
  %v7470 = vrot.slane %v7460, %v7469
  %v7472 = vunpack.c.l.s4 1966171168
  %v7473 = vunpack.c.0.s8 %v7472
  %v7474 = vlaneseq
  %v7475 = vshrl.u32 %v7474, 7
  %v7476 = vsub.s32 %v7473, %v7475
  %v7477 = vrot.slane %v7461, %v7476
  %v7479 = vunpack.c.l.s4 1966171168
  %v7480 = vunpack.c.0.s8 %v7479
  %v7481 = vlaneseq
  %v7482 = vshrl.u32 %v7481, 7
  %v7483 = vsub.s32 %v7480, %v7482
  %v7484 = vrot.slane %v7462, %v7483
  %v7486 = vunpack.c.l.s4 1966171168
  %v7487 = vunpack.c.0.s8 %v7486
  %v7488 = vlaneseq
  %v7489 = vshrl.u32 %v7488, 7
  %v7490 = vsub.s32 %v7487, %v7489
  %v7491 = vrot.slane %v7463, %v7490
  %v7492 = vcombine.low %v7470, %v7477
  %v7493 = vcombine.low %v7484, %v7491
  %v7495 = vunpack.c.l.s4 1966171168
  %v7496 = vunpack.c.0.s8 %v7495
  %v7497 = vlaneseq
  %v7498 = vshrl.u32 %v7497, 7
  %v7499 = vsub.s32 %v7496, %v7498
  %v7500 = vrot.slane %v7492, %v7499
  %v7502 = vunpack.c.l.s4 1966171168
  %v7503 = vunpack.c.0.s8 %v7502
  %v7504 = vlaneseq
  %v7505 = vshrl.u32 %v7504, 7
  %v7506 = vsub.s32 %v7503, %v7505
  %v7507 = vrot.slane %v7493, %v7506
  %v7508 = vcombine.low %v7500, %v7507
  %v7509 = vcombine.low %v7010, %v7017
  %v7510 = vcombine.low %v7194, %v7201
  %v7512 = vunpack.c.l.s4 1966171168
  %v7513 = vunpack.c.0.s8 %v7512
  %v7514 = vlaneseq
  %v7515 = vshrl.u32 %v7514, 7
  %v7516 = vsub.s32 %v7513, %v7515
  %v7517 = vrot.slane %v7509, %v7516
  %v7519 = vunpack.c.l.s4 1966171168
  %v7520 = vunpack.c.0.s8 %v7519
  %v7521 = vlaneseq
  %v7522 = vshrl.u32 %v7521, 7
  %v7523 = vsub.s32 %v7520, %v7522
  %v7524 = vrot.slane %v7510, %v7523
  %v7525 = vcombine.low %v7517, %v7524
  %v7527 = vunpack.c.l.s4 1966171168
  %v7528 = vunpack.c.0.s8 %v7527
  %v7529 = vlaneseq
  %v7530 = vshrl.u32 %v7529, 7
  %v7531 = vsub.s32 %v7528, %v7530
  %v7532 = vrot.slane %v7525, %v7531
  %v7533 = vcombine.low %v7507, %v7532
  %v7534 = vcombine.low %v6370, %v6377
  %v7535 = vcombine.low %v6738, %v6745
  %v7536 = vcombine.low %v6392, %v6399
  %v7537 = vcombine.low %v6760, %v6767
  %v7539 = vunpack.c.l.s4 1966171168
  %v7540 = vunpack.c.0.s8 %v7539
  %v7541 = vlaneseq
  %v7542 = vshrl.u32 %v7541, 7
  %v7543 = vsub.s32 %v7540, %v7542
  %v7544 = vrot.slane %v7534, %v7543
  %v7546 = vunpack.c.l.s4 1966171168
  %v7547 = vunpack.c.0.s8 %v7546
  %v7548 = vlaneseq
  %v7549 = vshrl.u32 %v7548, 7
  %v7550 = vsub.s32 %v7547, %v7549
  %v7551 = vrot.slane %v7535, %v7550
  %v7553 = vunpack.c.l.s4 1966171168
  %v7554 = vunpack.c.0.s8 %v7553
  %v7555 = vlaneseq
  %v7556 = vshrl.u32 %v7555, 7
  %v7557 = vsub.s32 %v7554, %v7556
  %v7558 = vrot.slane %v7536, %v7557
  %v7560 = vunpack.c.l.s4 1966171168
  %v7561 = vunpack.c.0.s8 %v7560
  %v7562 = vlaneseq
  %v7563 = vshrl.u32 %v7562, 7
  %v7564 = vsub.s32 %v7561, %v7563
  %v7565 = vrot.slane %v7537, %v7564
  %v7566 = vcombine.low %v7544, %v7551
  %v7567 = vcombine.low %v7558, %v7565
  %v7569 = vunpack.c.l.s4 1966171168
  %v7570 = vunpack.c.0.s8 %v7569
  %v7571 = vlaneseq
  %v7572 = vshrl.u32 %v7571, 7
  %v7573 = vsub.s32 %v7570, %v7572
  %v7574 = vrot.slane %v7566, %v7573
  %v7576 = vunpack.c.l.s4 1966171168
  %v7577 = vunpack.c.0.s8 %v7576
  %v7578 = vlaneseq
  %v7579 = vshrl.u32 %v7578, 7
  %v7580 = vsub.s32 %v7577, %v7579
  %v7581 = vrot.slane %v7567, %v7580
  %v7582 = vcombine.low %v7574, %v7581
  %v7583 = vcombine.low %v7032, %v7039
  %v7584 = vcombine.low %v7216, %v7223
  %v7586 = vunpack.c.l.s4 1966171168
  %v7587 = vunpack.c.0.s8 %v7586
  %v7588 = vlaneseq
  %v7589 = vshrl.u32 %v7588, 7
  %v7590 = vsub.s32 %v7587, %v7589
  %v7591 = vrot.slane %v7583, %v7590
  %v7593 = vunpack.c.l.s4 1966171168
  %v7594 = vunpack.c.0.s8 %v7593
  %v7595 = vlaneseq
  %v7596 = vshrl.u32 %v7595, 7
  %v7597 = vsub.s32 %v7594, %v7596
  %v7598 = vrot.slane %v7584, %v7597
  %v7599 = vcombine.low %v7591, %v7598
  %v7601 = vunpack.c.l.s4 1966171168
  %v7602 = vunpack.c.0.s8 %v7601
  %v7603 = vlaneseq
  %v7604 = vshrl.u32 %v7603, 7
  %v7605 = vsub.s32 %v7602, %v7604
  %v7606 = vrot.slane %v7599, %v7605
  %v7607 = vcombine.low %v7581, %v7606
  %v7608 = vcombine.low %v6414, %v6421
  %v7609 = vcombine.low %v6782, %v6789
  %v7610 = vcombine.low %v6436, %v6443
  %v7611 = vcombine.low %v6804, %v6811
  %v7613 = vunpack.c.l.s4 1966171168
  %v7614 = vunpack.c.0.s8 %v7613
  %v7615 = vlaneseq
  %v7616 = vshrl.u32 %v7615, 7
  %v7617 = vsub.s32 %v7614, %v7616
  %v7618 = vrot.slane %v7608, %v7617
  %v7620 = vunpack.c.l.s4 1966171168
  %v7621 = vunpack.c.0.s8 %v7620
  %v7622 = vlaneseq
  %v7623 = vshrl.u32 %v7622, 7
  %v7624 = vsub.s32 %v7621, %v7623
  %v7625 = vrot.slane %v7609, %v7624
  %v7627 = vunpack.c.l.s4 1966171168
  %v7628 = vunpack.c.0.s8 %v7627
  %v7629 = vlaneseq
  %v7630 = vshrl.u32 %v7629, 7
  %v7631 = vsub.s32 %v7628, %v7630
  %v7632 = vrot.slane %v7610, %v7631
  %v7634 = vunpack.c.l.s4 1966171168
  %v7635 = vunpack.c.0.s8 %v7634
  %v7636 = vlaneseq
  %v7637 = vshrl.u32 %v7636, 7
  %v7638 = vsub.s32 %v7635, %v7637
  %v7639 = vrot.slane %v7611, %v7638
  %v7640 = vcombine.low %v7618, %v7625
  %v7641 = vcombine.low %v7632, %v7639
  %v7643 = vunpack.c.l.s4 1966171168
  %v7644 = vunpack.c.0.s8 %v7643
  %v7645 = vlaneseq
  %v7646 = vshrl.u32 %v7645, 7
  %v7647 = vsub.s32 %v7644, %v7646
  %v7648 = vrot.slane %v7640, %v7647
  %v7650 = vunpack.c.l.s4 1966171168
  %v7651 = vunpack.c.0.s8 %v7650
  %v7652 = vlaneseq
  %v7653 = vshrl.u32 %v7652, 7
  %v7654 = vsub.s32 %v7651, %v7653
  %v7655 = vrot.slane %v7641, %v7654
  %v7656 = vcombine.low %v7648, %v7655
  %v7657 = vcombine.low %v7054, %v7061
  %v7658 = vcombine.low %v7238, %v7245
  %v7660 = vunpack.c.l.s4 1966171168
  %v7661 = vunpack.c.0.s8 %v7660
  %v7662 = vlaneseq
  %v7663 = vshrl.u32 %v7662, 7
  %v7664 = vsub.s32 %v7661, %v7663
  %v7665 = vrot.slane %v7657, %v7664
  %v7667 = vunpack.c.l.s4 1966171168
  %v7668 = vunpack.c.0.s8 %v7667
  %v7669 = vlaneseq
  %v7670 = vshrl.u32 %v7669, 7
  %v7671 = vsub.s32 %v7668, %v7670
  %v7672 = vrot.slane %v7658, %v7671
  %v7673 = vcombine.low %v7665, %v7672
  %v7675 = vunpack.c.l.s4 1966171168
  %v7676 = vunpack.c.0.s8 %v7675
  %v7677 = vlaneseq
  %v7678 = vshrl.u32 %v7677, 7
  %v7679 = vsub.s32 %v7676, %v7678
  %v7680 = vrot.slane %v7673, %v7679
  %v7681 = vcombine.low %v7655, %v7680
  %v7682 = vcombine.low %v6458, %v6465
  %v7683 = vcombine.low %v6826, %v6833
  %v7684 = vcombine.low %v6480, %v6487
  %v7685 = vcombine.low %v6848, %v6855
  %v7687 = vunpack.c.l.s4 1966171168
  %v7688 = vunpack.c.0.s8 %v7687
  %v7689 = vlaneseq
  %v7690 = vshrl.u32 %v7689, 7
  %v7691 = vsub.s32 %v7688, %v7690
  %v7692 = vrot.slane %v7682, %v7691
  %v7694 = vunpack.c.l.s4 1966171168
  %v7695 = vunpack.c.0.s8 %v7694
  %v7696 = vlaneseq
  %v7697 = vshrl.u32 %v7696, 7
  %v7698 = vsub.s32 %v7695, %v7697
  %v7699 = vrot.slane %v7683, %v7698
  %v7701 = vunpack.c.l.s4 1966171168
  %v7702 = vunpack.c.0.s8 %v7701
  %v7703 = vlaneseq
  %v7704 = vshrl.u32 %v7703, 7
  %v7705 = vsub.s32 %v7702, %v7704
  %v7706 = vrot.slane %v7684, %v7705
  %v7708 = vunpack.c.l.s4 1966171168
  %v7709 = vunpack.c.0.s8 %v7708
  %v7710 = vlaneseq
  %v7711 = vshrl.u32 %v7710, 7
  %v7712 = vsub.s32 %v7709, %v7711
  %v7713 = vrot.slane %v7685, %v7712
  %v7714 = vcombine.low %v7692, %v7699
  %v7715 = vcombine.low %v7706, %v7713
  %v7717 = vunpack.c.l.s4 1966171168
  %v7718 = vunpack.c.0.s8 %v7717
  %v7719 = vlaneseq
  %v7720 = vshrl.u32 %v7719, 7
  %v7721 = vsub.s32 %v7718, %v7720
  %v7722 = vrot.slane %v7714, %v7721
  %v7724 = vunpack.c.l.s4 1966171168
  %v7725 = vunpack.c.0.s8 %v7724
  %v7726 = vlaneseq
  %v7727 = vshrl.u32 %v7726, 7
  %v7728 = vsub.s32 %v7725, %v7727
  %v7729 = vrot.slane %v7715, %v7728
  %v7730 = vcombine.low %v7722, %v7729
  %v7731 = vcombine.low %v7076, %v7083
  %v7732 = vcombine.low %v7260, %v7267
  %v7734 = vunpack.c.l.s4 1966171168
  %v7735 = vunpack.c.0.s8 %v7734
  %v7736 = vlaneseq
  %v7737 = vshrl.u32 %v7736, 7
  %v7738 = vsub.s32 %v7735, %v7737
  %v7739 = vrot.slane %v7731, %v7738
  %v7741 = vunpack.c.l.s4 1966171168
  %v7742 = vunpack.c.0.s8 %v7741
  %v7743 = vlaneseq
  %v7744 = vshrl.u32 %v7743, 7
  %v7745 = vsub.s32 %v7742, %v7744
  %v7746 = vrot.slane %v7732, %v7745
  %v7747 = vcombine.low %v7739, %v7746
  %v7749 = vunpack.c.l.s4 1966171168
  %v7750 = vunpack.c.0.s8 %v7749
  %v7751 = vlaneseq
  %v7752 = vshrl.u32 %v7751, 7
  %v7753 = vsub.s32 %v7750, %v7752
  %v7754 = vrot.slane %v7747, %v7753
  %v7755 = vcombine.low %v7729, %v7754
  %v7756 = vcombine.low %v6502, %v6509
  %v7757 = vcombine.low %v6870, %v6877
  %v7758 = vcombine.low %v6524, %v6531
  %v7759 = vcombine.low %v6892, %v6899
  %v7761 = vunpack.c.l.s4 1966171168
  %v7762 = vunpack.c.0.s8 %v7761
  %v7763 = vlaneseq
  %v7764 = vshrl.u32 %v7763, 7
  %v7765 = vsub.s32 %v7762, %v7764
  %v7766 = vrot.slane %v7756, %v7765
  %v7768 = vunpack.c.l.s4 1966171168
  %v7769 = vunpack.c.0.s8 %v7768
  %v7770 = vlaneseq
  %v7771 = vshrl.u32 %v7770, 7
  %v7772 = vsub.s32 %v7769, %v7771
  %v7773 = vrot.slane %v7757, %v7772
  %v7775 = vunpack.c.l.s4 1966171168
  %v7776 = vunpack.c.0.s8 %v7775
  %v7777 = vlaneseq
  %v7778 = vshrl.u32 %v7777, 7
  %v7779 = vsub.s32 %v7776, %v7778
  %v7780 = vrot.slane %v7758, %v7779
  %v7782 = vunpack.c.l.s4 1966171168
  %v7783 = vunpack.c.0.s8 %v7782
  %v7784 = vlaneseq
  %v7785 = vshrl.u32 %v7784, 7
  %v7786 = vsub.s32 %v7783, %v7785
  %v7787 = vrot.slane %v7759, %v7786
  %v7788 = vcombine.low %v7766, %v7773
  %v7789 = vcombine.low %v7780, %v7787
  %v7791 = vunpack.c.l.s4 1966171168
  %v7792 = vunpack.c.0.s8 %v7791
  %v7793 = vlaneseq
  %v7794 = vshrl.u32 %v7793, 7
  %v7795 = vsub.s32 %v7792, %v7794
  %v7796 = vrot.slane %v7788, %v7795
  %v7798 = vunpack.c.l.s4 1966171168
  %v7799 = vunpack.c.0.s8 %v7798
  %v7800 = vlaneseq
  %v7801 = vshrl.u32 %v7800, 7
  %v7802 = vsub.s32 %v7799, %v7801
  %v7803 = vrot.slane %v7789, %v7802
  %v7804 = vcombine.low %v7796, %v7803
  %v7805 = vcombine.low %v7098, %v7105
  %v7806 = vcombine.low %v7282, %v7289
  %v7808 = vunpack.c.l.s4 1966171168
  %v7809 = vunpack.c.0.s8 %v7808
  %v7810 = vlaneseq
  %v7811 = vshrl.u32 %v7810, 7
  %v7812 = vsub.s32 %v7809, %v7811
  %v7813 = vrot.slane %v7805, %v7812
  %v7815 = vunpack.c.l.s4 1966171168
  %v7816 = vunpack.c.0.s8 %v7815
  %v7817 = vlaneseq
  %v7818 = vshrl.u32 %v7817, 7
  %v7819 = vsub.s32 %v7816, %v7818
  %v7820 = vrot.slane %v7806, %v7819
  %v7821 = vcombine.low %v7813, %v7820
  %v7823 = vunpack.c.l.s4 1966171168
  %v7824 = vunpack.c.0.s8 %v7823
  %v7825 = vlaneseq
  %v7826 = vshrl.u32 %v7825, 7
  %v7827 = vsub.s32 %v7824, %v7826
  %v7828 = vrot.slane %v7821, %v7827
  %v7829 = vcombine.low %v7803, %v7828
  %v7830 = vcombine.low %v6546, %v6553
  %v7831 = vcombine.low %v6914, %v6921
  %v7832 = vcombine.low %v6568, %v6575
  %v7833 = vcombine.low %v6936, %v6943
  %v7835 = vunpack.c.l.s4 1966171168
  %v7836 = vunpack.c.0.s8 %v7835
  %v7837 = vlaneseq
  %v7838 = vshrl.u32 %v7837, 7
  %v7839 = vsub.s32 %v7836, %v7838
  %v7840 = vrot.slane %v7830, %v7839
  %v7842 = vunpack.c.l.s4 1966171168
  %v7843 = vunpack.c.0.s8 %v7842
  %v7844 = vlaneseq
  %v7845 = vshrl.u32 %v7844, 7
  %v7846 = vsub.s32 %v7843, %v7845
  %v7847 = vrot.slane %v7831, %v7846
  %v7849 = vunpack.c.l.s4 1966171168
  %v7850 = vunpack.c.0.s8 %v7849
  %v7851 = vlaneseq
  %v7852 = vshrl.u32 %v7851, 7
  %v7853 = vsub.s32 %v7850, %v7852
  %v7854 = vrot.slane %v7832, %v7853
  %v7856 = vunpack.c.l.s4 1966171168
  %v7857 = vunpack.c.0.s8 %v7856
  %v7858 = vlaneseq
  %v7859 = vshrl.u32 %v7858, 7
  %v7860 = vsub.s32 %v7857, %v7859
  %v7861 = vrot.slane %v7833, %v7860
  %v7862 = vcombine.low %v7840, %v7847
  %v7863 = vcombine.low %v7854, %v7861
  %v7865 = vunpack.c.l.s4 1966171168
  %v7866 = vunpack.c.0.s8 %v7865
  %v7867 = vlaneseq
  %v7868 = vshrl.u32 %v7867, 7
  %v7869 = vsub.s32 %v7866, %v7868
  %v7870 = vrot.slane %v7862, %v7869
  %v7872 = vunpack.c.l.s4 1966171168
  %v7873 = vunpack.c.0.s8 %v7872
  %v7874 = vlaneseq
  %v7875 = vshrl.u32 %v7874, 7
  %v7876 = vsub.s32 %v7873, %v7875
  %v7877 = vrot.slane %v7863, %v7876
  %v7878 = vcombine.low %v7870, %v7877
  %v7879 = vcombine.low %v7120, %v7127
  %v7880 = vcombine.low %v7304, %v7311
  %v7882 = vunpack.c.l.s4 1966171168
  %v7883 = vunpack.c.0.s8 %v7882
  %v7884 = vlaneseq
  %v7885 = vshrl.u32 %v7884, 7
  %v7886 = vsub.s32 %v7883, %v7885
  %v7887 = vrot.slane %v7879, %v7886
  %v7889 = vunpack.c.l.s4 1966171168
  %v7890 = vunpack.c.0.s8 %v7889
  %v7891 = vlaneseq
  %v7892 = vshrl.u32 %v7891, 7
  %v7893 = vsub.s32 %v7890, %v7892
  %v7894 = vrot.slane %v7880, %v7893
  %v7895 = vcombine.low %v7887, %v7894
  %v7897 = vunpack.c.l.s4 1966171168
  %v7898 = vunpack.c.0.s8 %v7897
  %v7899 = vlaneseq
  %v7900 = vshrl.u32 %v7899, 7
  %v7901 = vsub.s32 %v7898, %v7900
  %v7902 = vrot.slane %v7895, %v7901
  %v7903 = vcombine.low %v7877, %v7902
  %v7904 = vld [vmem:[%s7] sm:$0xff]
  %v7905 = vld [vmem:[%s7 + $0x8] sm:$0xff]
  %v7906 = vld [vmem:[%s7 + $0x10] sm:$0xff]
  %v7907 = vld [vmem:[%s7 + $0x18] sm:$0xff]
  %v7908 = vld [vmem:[%s7 + $0x20] sm:$0xff]
  %v7909 = vld [vmem:[%s7 + $0x28] sm:$0xff]
  %v7910 = vld [vmem:[%s7 + $0x30] sm:$0xff]
  %v7911 = vld [vmem:[%s7 + $0x38] sm:$0xff]
  %v7912 = vld [vmem:[%s7 + $0x40] sm:$0xff]
  %v7913 = vld [vmem:[%s7 + $0x48] sm:$0xff]
  %v7914 = vld [vmem:[%s7 + $0x50] sm:$0xff]
  %v7915 = vld [vmem:[%s7 + $0x58] sm:$0xff]
  %v7916 = vld [vmem:[%s7 + $0x60] sm:$0xff]
  %v7917 = vld [vmem:[%s7 + $0x68] sm:$0xff]
  %v7918 = vld [vmem:[%s7 + $0x70] sm:$0xff]
  %v7919 = vld [vmem:[%s7 + $0x78] sm:$0xff]
  %v7920 = vld [vmem:[%s7 + $0x80] sm:$0xff]
  %v7921 = vld [vmem:[%s7 + $0x88] sm:$0xff]
  %v7922 = vld [vmem:[%s7 + $0x90] sm:$0xff]
  %v7923 = vld [vmem:[%s7 + $0x98] sm:$0xff]
  %v7924 = vld [vmem:[%s7 + $0xa0] sm:$0xff]
  %v7925 = vld [vmem:[%s7 + $0xa8] sm:$0xff]
  %v7926 = vld [vmem:[%s7 + $0xb0] sm:$0xff]
  %v7927 = vld [vmem:[%s7 + $0xb8] sm:$0xff]
  %v7928 = vld [vmem:[%s7 + $0xc0] sm:$0xff]
  %v7929 = vld [vmem:[%s7 + $0xc8] sm:$0xff]
  %v7930 = vld [vmem:[%s7 + $0xd0] sm:$0xff]
  %v7931 = vld [vmem:[%s7 + $0xd8] sm:$0xff]
  %v7932 = vld [vmem:[%s7 + $0xe0] sm:$0xff]
  %v7933 = vld [vmem:[%s7 + $0xe8] sm:$0xff]
  %v7934 = vld [vmem:[%s7 + $0xf0] sm:$0xff]
  %v7935 = vld [vmem:[%s7 + $0xf8] sm:$0xff]
  %v7936 = vld [vmem:[%s7 + $0x100] sm:$0xff]
  %v7937 = vld [vmem:[%s7 + $0x108] sm:$0xff]
  %v7938 = vld [vmem:[%s7 + $0x110] sm:$0xff]
  %v7939 = vld [vmem:[%s7 + $0x118] sm:$0xff]
  %v7940 = vld [vmem:[%s7 + $0x120] sm:$0xff]
  %v7941 = vld [vmem:[%s7 + $0x128] sm:$0xff]
  %v7942 = vld [vmem:[%s7 + $0x130] sm:$0xff]
  %v7943 = vld [vmem:[%s7 + $0x138] sm:$0xff]
  %v7944 = vld [vmem:[%s7 + $0x140] sm:$0xff]
  %v7945 = vld [vmem:[%s7 + $0x148] sm:$0xff]
  %v7946 = vld [vmem:[%s7 + $0x150] sm:$0xff]
  %v7947 = vld [vmem:[%s7 + $0x158] sm:$0xff]
  %v7948 = vld [vmem:[%s7 + $0x160] sm:$0xff]
  %v7949 = vld [vmem:[%s7 + $0x168] sm:$0xff]
  %v7950 = vld [vmem:[%s7 + $0x170] sm:$0xff]
  %v7951 = vld [vmem:[%s7 + $0x178] sm:$0xff]
  %v7952 = vld [vmem:[%s7 + $0x180] sm:$0xff]
  %v7953 = vld [vmem:[%s7 + $0x188] sm:$0xff]
  %v7954 = vld [vmem:[%s7 + $0x190] sm:$0xff]
  %v7955 = vld [vmem:[%s7 + $0x198] sm:$0xff]
  %v7956 = vld [vmem:[%s7 + $0x1a0] sm:$0xff]
  %v7957 = vld [vmem:[%s7 + $0x1a8] sm:$0xff]
  %v7958 = vld [vmem:[%s7 + $0x1b0] sm:$0xff]
  %v7959 = vld [vmem:[%s7 + $0x1b8] sm:$0xff]
  %v7960 = vld [vmem:[%s7 + $0x1c0] sm:$0xff]
  %v7961 = vld [vmem:[%s7 + $0x1c8] sm:$0xff]
  %v7962 = vld [vmem:[%s7 + $0x1d0] sm:$0xff]
  %v7963 = vld [vmem:[%s7 + $0x1d8] sm:$0xff]
  %v7964 = vld [vmem:[%s7 + $0x1e0] sm:$0xff]
  %v7965 = vld [vmem:[%s7 + $0x1e8] sm:$0xff]
  %v7966 = vld [vmem:[%s7 + $0x1f0] sm:$0xff]
  %v7967 = vld [vmem:[%s7 + $0x1f8] sm:$0xff]
  %v7968 = vld [vmem:[%s7 + $0x200] sm:$0xff]
  %v7969 = vld [vmem:[%s7 + $0x208] sm:$0xff]
  %v7970 = vld [vmem:[%s7 + $0x210] sm:$0xff]
  %v7971 = vld [vmem:[%s7 + $0x218] sm:$0xff]
  %v7972 = vld [vmem:[%s7 + $0x220] sm:$0xff]
  %v7973 = vld [vmem:[%s7 + $0x228] sm:$0xff]
  %v7974 = vld [vmem:[%s7 + $0x230] sm:$0xff]
  %v7975 = vld [vmem:[%s7 + $0x238] sm:$0xff]
  %v7976 = vld [vmem:[%s7 + $0x240] sm:$0xff]
  %v7977 = vld [vmem:[%s7 + $0x248] sm:$0xff]
  %v7978 = vld [vmem:[%s7 + $0x250] sm:$0xff]
  %v7979 = vld [vmem:[%s7 + $0x258] sm:$0xff]
  %v7980 = vld [vmem:[%s7 + $0x260] sm:$0xff]
  %v7981 = vld [vmem:[%s7 + $0x268] sm:$0xff]
  %v7982 = vld [vmem:[%s7 + $0x270] sm:$0xff]
  %v7983 = vld [vmem:[%s7 + $0x278] sm:$0xff]
  %v7984 = vld [vmem:[%s7 + $0x280] sm:$0xff]
  %v7985 = vld [vmem:[%s7 + $0x288] sm:$0xff]
  %v7986 = vld [vmem:[%s7 + $0x290] sm:$0xff]
  %v7987 = vld [vmem:[%s7 + $0x298] sm:$0xff]
  %v7988 = vld [vmem:[%s7 + $0x2a0] sm:$0xff]
  %v7989 = vld [vmem:[%s7 + $0x2a8] sm:$0xff]
  %v7990 = vld [vmem:[%s7 + $0x2b0] sm:$0xff]
  %v7991 = vld [vmem:[%s7 + $0x2b8] sm:$0xff]
  %v7992 = vld [vmem:[%s7 + $0x2c0] sm:$0xff]
  %v7993 = vld [vmem:[%s7 + $0x2c8] sm:$0xff]
  %v7994 = vld [vmem:[%s7 + $0x2d0] sm:$0xff]
  %v7995 = vld [vmem:[%s7 + $0x2d8] sm:$0xff]
  %v7996 = vld [vmem:[%s7 + $0x2e0] sm:$0xff]
  %v7997 = vld [vmem:[%s7 + $0x2e8] sm:$0xff]
  %v7998 = vld [vmem:[%s7 + $0x2f0] sm:$0xff]
  %v7999 = vld [vmem:[%s7 + $0x2f8] sm:$0xff]
  %v8000 = vld [vmem:[%s7 + $0x300] sm:$0xff]
  %v8001 = vld [vmem:[%s7 + $0x308] sm:$0xff]
  %v8002 = vld [vmem:[%s7 + $0x310] sm:$0xff]
  %v8003 = vld [vmem:[%s7 + $0x318] sm:$0xff]
  %v8004 = vld [vmem:[%s7 + $0x320] sm:$0xff]
  %v8005 = vld [vmem:[%s7 + $0x328] sm:$0xff]
  %v8006 = vld [vmem:[%s7 + $0x330] sm:$0xff]
  %v8007 = vld [vmem:[%s7 + $0x338] sm:$0xff]
  %v8008 = vld [vmem:[%s7 + $0x340] sm:$0xff]
  %v8009 = vld [vmem:[%s7 + $0x348] sm:$0xff]
  %v8010 = vld [vmem:[%s7 + $0x350] sm:$0xff]
  %v8011 = vld [vmem:[%s7 + $0x358] sm:$0xff]
  %v8012 = vld [vmem:[%s7 + $0x360] sm:$0xff]
  %v8013 = vld [vmem:[%s7 + $0x368] sm:$0xff]
  %v8014 = vld [vmem:[%s7 + $0x370] sm:$0xff]
  %v8015 = vld [vmem:[%s7 + $0x378] sm:$0xff]
  %v8016 = vld [vmem:[%s7 + $0x380] sm:$0xff]
  %v8017 = vld [vmem:[%s7 + $0x388] sm:$0xff]
  %v8018 = vld [vmem:[%s7 + $0x390] sm:$0xff]
  %v8019 = vld [vmem:[%s7 + $0x398] sm:$0xff]
  %v8020 = vld [vmem:[%s7 + $0x3a0] sm:$0xff]
  %v8021 = vld [vmem:[%s7 + $0x3a8] sm:$0xff]
  %v8022 = vld [vmem:[%s7 + $0x3b0] sm:$0xff]
  %v8023 = vld [vmem:[%s7 + $0x3b8] sm:$0xff]
  %v8024 = vld [vmem:[%s7 + $0x3c0] sm:$0xff]
  %v8025 = vld [vmem:[%s7 + $0x3c8] sm:$0xff]
  %v8026 = vld [vmem:[%s7 + $0x3d0] sm:$0xff]
  %v8027 = vld [vmem:[%s7 + $0x3d8] sm:$0xff]
  %v8028 = vld [vmem:[%s7 + $0x3e0] sm:$0xff]
  %v8029 = vld [vmem:[%s7 + $0x3e8] sm:$0xff]
  %v8030 = vld [vmem:[%s7 + $0x3f0] sm:$0xff]
  %v8031 = vld [vmem:[%s7 + $0x3f8] sm:$0xff]
  %v8032 = vld [vmem:[%s8] sm:$0x3]
  %v8034 = vlaneseq
  %v8035 = vshrl.u32 %v8034, 7
  %v8036 = vsub.s32 0, %v8035
  %v8037 = vrot.slane %v8032, %v8036
  %v8038 = vlaneseq
  %v8039 = vshrl.u32 %v8038, 7
  %v8040 = vsub.s32 1, %v8039
  %v8041 = vrot.slane %v8032, %v8040
  %v8044 = vcombine.low %v7360, %v7385
  %v8045 = vcombine.high %v7360, %v7385
  %v8046 = vcombine.low %v7434, %v7459
  %v8047 = vcombine.high %v7434, %v7459
  %v8048 = vcombine.low %v7508, %v7533
  %v8049 = vcombine.high %v7508, %v7533
  %v8050 = vcombine.low %v7582, %v7607
  %v8051 = vcombine.high %v7582, %v7607
  %v8053 = vunpack.c.l.s4 1966171168
  %v8054 = vunpack.c.0.s8 %v8053
  %v8055 = vlaneseq
  %v8056 = vshrl.u32 %v8055, 7
  %v8057 = vsub.s32 %v8054, %v8056
  %v8058 = vrot.slane %v8044, %v8057
  %v8060 = vunpack.c.l.s4 1966171168
  %v8061 = vunpack.c.0.s8 %v8060
  %v8062 = vlaneseq
  %v8063 = vshrl.u32 %v8062, 7
  %v8064 = vsub.s32 %v8061, %v8063
  %v8065 = vrot.slane %v8045, %v8064
  %v8067 = vunpack.c.l.s4 1966171168
  %v8068 = vunpack.c.0.s8 %v8067
  %v8069 = vlaneseq
  %v8070 = vshrl.u32 %v8069, 7
  %v8071 = vsub.s32 %v8068, %v8070
  %v8072 = vrot.slane %v8046, %v8071
  %v8074 = vunpack.c.l.s4 1966171168
  %v8075 = vunpack.c.0.s8 %v8074
  %v8076 = vlaneseq
  %v8077 = vshrl.u32 %v8076, 7
  %v8078 = vsub.s32 %v8075, %v8077
  %v8079 = vrot.slane %v8047, %v8078
  %v8081 = vunpack.c.l.s4 1966171168
  %v8082 = vunpack.c.0.s8 %v8081
  %v8083 = vlaneseq
  %v8084 = vshrl.u32 %v8083, 7
  %v8085 = vsub.s32 %v8082, %v8084
  %v8086 = vrot.slane %v8048, %v8085
  %v8088 = vunpack.c.l.s4 1966171168
  %v8089 = vunpack.c.0.s8 %v8088
  %v8090 = vlaneseq
  %v8091 = vshrl.u32 %v8090, 7
  %v8092 = vsub.s32 %v8089, %v8091
  %v8093 = vrot.slane %v8049, %v8092
  %v8095 = vunpack.c.l.s4 1966171168
  %v8096 = vunpack.c.0.s8 %v8095
  %v8097 = vlaneseq
  %v8098 = vshrl.u32 %v8097, 7
  %v8099 = vsub.s32 %v8096, %v8098
  %v8100 = vrot.slane %v8050, %v8099
  %v8102 = vunpack.c.l.s4 1966171168
  %v8103 = vunpack.c.0.s8 %v8102
  %v8104 = vlaneseq
  %v8105 = vshrl.u32 %v8104, 7
  %v8106 = vsub.s32 %v8103, %v8105
  %v8107 = vrot.slane %v8051, %v8106
  %v8108 = vcombine.low %v8058, %v8072
  %v8109 = vcombine.high %v8058, %v8072
  %v8110 = vcombine.low %v8065, %v8079
  %v8111 = vcombine.high %v8065, %v8079
  %v8112 = vcombine.low %v8086, %v8100
  %v8113 = vcombine.high %v8086, %v8100
  %v8114 = vcombine.low %v8093, %v8107
  %v8115 = vcombine.high %v8093, %v8107
  %v8117 = vunpack.c.l.s4 1966171168
  %v8118 = vunpack.c.0.s8 %v8117
  %v8119 = vlaneseq
  %v8120 = vshrl.u32 %v8119, 7
  %v8121 = vsub.s32 %v8118, %v8120
  %v8122 = vrot.slane %v8108, %v8121
  %v8124 = vunpack.c.l.s4 1966171168
  %v8125 = vunpack.c.0.s8 %v8124
  %v8126 = vlaneseq
  %v8127 = vshrl.u32 %v8126, 7
  %v8128 = vsub.s32 %v8125, %v8127
  %v8129 = vrot.slane %v8110, %v8128
  %v8131 = vunpack.c.l.s4 1966171168
  %v8132 = vunpack.c.0.s8 %v8131
  %v8133 = vlaneseq
  %v8134 = vshrl.u32 %v8133, 7
  %v8135 = vsub.s32 %v8132, %v8134
  %v8136 = vrot.slane %v8109, %v8135
  %v8138 = vunpack.c.l.s4 1966171168
  %v8139 = vunpack.c.0.s8 %v8138
  %v8140 = vlaneseq
  %v8141 = vshrl.u32 %v8140, 7
  %v8142 = vsub.s32 %v8139, %v8141
  %v8143 = vrot.slane %v8111, %v8142
  %v8145 = vunpack.c.l.s4 1966171168
  %v8146 = vunpack.c.0.s8 %v8145
  %v8147 = vlaneseq
  %v8148 = vshrl.u32 %v8147, 7
  %v8149 = vsub.s32 %v8146, %v8148
  %v8150 = vrot.slane %v8112, %v8149
  %v8152 = vunpack.c.l.s4 1966171168
  %v8153 = vunpack.c.0.s8 %v8152
  %v8154 = vlaneseq
  %v8155 = vshrl.u32 %v8154, 7
  %v8156 = vsub.s32 %v8153, %v8155
  %v8157 = vrot.slane %v8114, %v8156
  %v8159 = vunpack.c.l.s4 1966171168
  %v8160 = vunpack.c.0.s8 %v8159
  %v8161 = vlaneseq
  %v8162 = vshrl.u32 %v8161, 7
  %v8163 = vsub.s32 %v8160, %v8162
  %v8164 = vrot.slane %v8113, %v8163
  %v8166 = vunpack.c.l.s4 1966171168
  %v8167 = vunpack.c.0.s8 %v8166
  %v8168 = vlaneseq
  %v8169 = vshrl.u32 %v8168, 7
  %v8170 = vsub.s32 %v8167, %v8169
  %v8171 = vrot.slane %v8115, %v8170
  %v8172 = vcombine.low %v8122, %v8150
  %v8173 = vcombine.high %v8122, %v8150
  %v8174 = vcombine.low %v8129, %v8157
  %v8175 = vcombine.high %v8129, %v8157
  %v8176 = vcombine.low %v8136, %v8164
  %v8177 = vcombine.high %v8136, %v8164
  %v8178 = vcombine.low %v8143, %v8171
  %v8179 = vcombine.high %v8143, %v8171
  %v8180 = vcombine.low %v7656, %v7681
  %v8181 = vcombine.high %v7656, %v7681
  %v8182 = vcombine.low %v7730, %v7755
  %v8183 = vcombine.high %v7730, %v7755
  %v8184 = vcombine.low %v7804, %v7829
  %v8185 = vcombine.high %v7804, %v7829
  %v8186 = vcombine.low %v7878, %v7903
  %v8187 = vcombine.high %v7878, %v7903
  %v8189 = vunpack.c.l.s4 1966171168
  %v8190 = vunpack.c.0.s8 %v8189
  %v8191 = vlaneseq
  %v8192 = vshrl.u32 %v8191, 7
  %v8193 = vsub.s32 %v8190, %v8192
  %v8194 = vrot.slane %v8180, %v8193
  %v8196 = vunpack.c.l.s4 1966171168
  %v8197 = vunpack.c.0.s8 %v8196
  %v8198 = vlaneseq
  %v8199 = vshrl.u32 %v8198, 7
  %v8200 = vsub.s32 %v8197, %v8199
  %v8201 = vrot.slane %v8181, %v8200
  %v8203 = vunpack.c.l.s4 1966171168
  %v8204 = vunpack.c.0.s8 %v8203
  %v8205 = vlaneseq
  %v8206 = vshrl.u32 %v8205, 7
  %v8207 = vsub.s32 %v8204, %v8206
  %v8208 = vrot.slane %v8182, %v8207
  %v8210 = vunpack.c.l.s4 1966171168
  %v8211 = vunpack.c.0.s8 %v8210
  %v8212 = vlaneseq
  %v8213 = vshrl.u32 %v8212, 7
  %v8214 = vsub.s32 %v8211, %v8213
  %v8215 = vrot.slane %v8183, %v8214
  %v8217 = vunpack.c.l.s4 1966171168
  %v8218 = vunpack.c.0.s8 %v8217
  %v8219 = vlaneseq
  %v8220 = vshrl.u32 %v8219, 7
  %v8221 = vsub.s32 %v8218, %v8220
  %v8222 = vrot.slane %v8184, %v8221
  %v8224 = vunpack.c.l.s4 1966171168
  %v8225 = vunpack.c.0.s8 %v8224
  %v8226 = vlaneseq
  %v8227 = vshrl.u32 %v8226, 7
  %v8228 = vsub.s32 %v8225, %v8227
  %v8229 = vrot.slane %v8185, %v8228
  %v8231 = vunpack.c.l.s4 1966171168
  %v8232 = vunpack.c.0.s8 %v8231
  %v8233 = vlaneseq
  %v8234 = vshrl.u32 %v8233, 7
  %v8235 = vsub.s32 %v8232, %v8234
  %v8236 = vrot.slane %v8186, %v8235
  %v8238 = vunpack.c.l.s4 1966171168
  %v8239 = vunpack.c.0.s8 %v8238
  %v8240 = vlaneseq
  %v8241 = vshrl.u32 %v8240, 7
  %v8242 = vsub.s32 %v8239, %v8241
  %v8243 = vrot.slane %v8187, %v8242
  %v8244 = vcombine.low %v8194, %v8208
  %v8245 = vcombine.high %v8194, %v8208
  %v8246 = vcombine.low %v8201, %v8215
  %v8247 = vcombine.high %v8201, %v8215
  %v8248 = vcombine.low %v8222, %v8236
  %v8249 = vcombine.high %v8222, %v8236
  %v8250 = vcombine.low %v8229, %v8243
  %v8251 = vcombine.high %v8229, %v8243
  %v8253 = vunpack.c.l.s4 1966171168
  %v8254 = vunpack.c.0.s8 %v8253
  %v8255 = vlaneseq
  %v8256 = vshrl.u32 %v8255, 7
  %v8257 = vsub.s32 %v8254, %v8256
  %v8258 = vrot.slane %v8244, %v8257
  %v8260 = vunpack.c.l.s4 1966171168
  %v8261 = vunpack.c.0.s8 %v8260
  %v8262 = vlaneseq
  %v8263 = vshrl.u32 %v8262, 7
  %v8264 = vsub.s32 %v8261, %v8263
  %v8265 = vrot.slane %v8246, %v8264
  %v8267 = vunpack.c.l.s4 1966171168
  %v8268 = vunpack.c.0.s8 %v8267
  %v8269 = vlaneseq
  %v8270 = vshrl.u32 %v8269, 7
  %v8271 = vsub.s32 %v8268, %v8270
  %v8272 = vrot.slane %v8245, %v8271
  %v8274 = vunpack.c.l.s4 1966171168
  %v8275 = vunpack.c.0.s8 %v8274
  %v8276 = vlaneseq
  %v8277 = vshrl.u32 %v8276, 7
  %v8278 = vsub.s32 %v8275, %v8277
  %v8279 = vrot.slane %v8247, %v8278
  %v8281 = vunpack.c.l.s4 1966171168
  %v8282 = vunpack.c.0.s8 %v8281
  %v8283 = vlaneseq
  %v8284 = vshrl.u32 %v8283, 7
  %v8285 = vsub.s32 %v8282, %v8284
  %v8286 = vrot.slane %v8248, %v8285
  %v8288 = vunpack.c.l.s4 1966171168
  %v8289 = vunpack.c.0.s8 %v8288
  %v8290 = vlaneseq
  %v8291 = vshrl.u32 %v8290, 7
  %v8292 = vsub.s32 %v8289, %v8291
  %v8293 = vrot.slane %v8250, %v8292
  %v8295 = vunpack.c.l.s4 1966171168
  %v8296 = vunpack.c.0.s8 %v8295
  %v8297 = vlaneseq
  %v8298 = vshrl.u32 %v8297, 7
  %v8299 = vsub.s32 %v8296, %v8298
  %v8300 = vrot.slane %v8249, %v8299
  %v8302 = vunpack.c.l.s4 1966171168
  %v8303 = vunpack.c.0.s8 %v8302
  %v8304 = vlaneseq
  %v8305 = vshrl.u32 %v8304, 7
  %v8306 = vsub.s32 %v8303, %v8305
  %v8307 = vrot.slane %v8251, %v8306
  %v8308 = vcombine.low %v8258, %v8286
  %v8309 = vcombine.high %v8258, %v8286
  %v8310 = vcombine.low %v8265, %v8293
  %v8311 = vcombine.high %v8265, %v8293
  %v8312 = vcombine.low %v8272, %v8300
  %v8313 = vcombine.high %v8272, %v8300
  %v8314 = vcombine.low %v8279, %v8307
  %v8315 = vcombine.high %v8279, %v8307
  %v8460 = vunpack.c.l.b16 %v7904
  %v8461 = vunpack.c.h.b16 %v7904
  %v8462 = vunpack.c.l.b16 %v7905
  %v8463 = vunpack.c.h.b16 %v7905
  %v8464 = vunpack.c.l.b16 %v7906
  %v8465 = vunpack.c.h.b16 %v7906
  %v8466 = vunpack.c.l.b16 %v7907
  %v8467 = vunpack.c.h.b16 %v7907
  %v8468 = vunpack.c.l.b16 %v7908
  %v8469 = vunpack.c.h.b16 %v7908
  %v8470 = vunpack.c.l.b16 %v7909
  %v8471 = vunpack.c.h.b16 %v7909
  %v8472 = vunpack.c.l.b16 %v7910
  %v8473 = vunpack.c.h.b16 %v7910
  %v8474 = vunpack.c.l.b16 %v7911
  %v8475 = vunpack.c.h.b16 %v7911
  %v8476 = vunpack.c.l.b16 %v7912
  %v8477 = vunpack.c.h.b16 %v7912
  %v8478 = vunpack.c.l.b16 %v7913
  %v8479 = vunpack.c.h.b16 %v7913
  %v8480 = vunpack.c.l.b16 %v7914
  %v8481 = vunpack.c.h.b16 %v7914
  %v8482 = vunpack.c.l.b16 %v7915
  %v8483 = vunpack.c.h.b16 %v7915
  %v8484 = vunpack.c.l.b16 %v7916
  %v8485 = vunpack.c.h.b16 %v7916
  %v8486 = vunpack.c.l.b16 %v7917
  %v8487 = vunpack.c.h.b16 %v7917
  %v8488 = vunpack.c.l.b16 %v7918
  %v8489 = vunpack.c.h.b16 %v7918
  %v8490 = vunpack.c.l.b16 %v7919
  %v8491 = vunpack.c.h.b16 %v7919
  %v8492 = vunpack.c.l.b16 %v7920
  %v8493 = vunpack.c.h.b16 %v7920
  %v8494 = vunpack.c.l.b16 %v7921
  %v8495 = vunpack.c.h.b16 %v7921
  %v8496 = vunpack.c.l.b16 %v7922
  %v8497 = vunpack.c.h.b16 %v7922
  %v8498 = vunpack.c.l.b16 %v7923
  %v8499 = vunpack.c.h.b16 %v7923
  %v8500 = vunpack.c.l.b16 %v7924
  %v8501 = vunpack.c.h.b16 %v7924
  %v8502 = vunpack.c.l.b16 %v7925
  %v8503 = vunpack.c.h.b16 %v7925
  %v8504 = vunpack.c.l.b16 %v7926
  %v8505 = vunpack.c.h.b16 %v7926
  %v8506 = vunpack.c.l.b16 %v7927
  %v8507 = vunpack.c.h.b16 %v7927
  %v8508 = vunpack.c.l.b16 %v7928
  %v8509 = vunpack.c.h.b16 %v7928
  %v8510 = vunpack.c.l.b16 %v7929
  %v8511 = vunpack.c.h.b16 %v7929
  %v8512 = vunpack.c.l.b16 %v7930
  %v8513 = vunpack.c.h.b16 %v7930
  %v8514 = vunpack.c.l.b16 %v7931
  %v8515 = vunpack.c.h.b16 %v7931
  %v8516 = vunpack.c.l.b16 %v7932
  %v8517 = vunpack.c.h.b16 %v7932
  %v8518 = vunpack.c.l.b16 %v7933
  %v8519 = vunpack.c.h.b16 %v7933
  %v8520 = vunpack.c.l.b16 %v7934
  %v8521 = vunpack.c.h.b16 %v7934
  %v8522 = vunpack.c.l.b16 %v7935
  %v8523 = vunpack.c.h.b16 %v7935
  %v8524 = vunpack.c.l.b16 %v7936
  %v8525 = vunpack.c.h.b16 %v7936
  %v8526 = vunpack.c.l.b16 %v7937
  %v8527 = vunpack.c.h.b16 %v7937
  %v8528 = vunpack.c.l.b16 %v7938
  %v8529 = vunpack.c.h.b16 %v7938
  %v8530 = vunpack.c.l.b16 %v7939
  %v8531 = vunpack.c.h.b16 %v7939
  %v8532 = vunpack.c.l.b16 %v7940
  %v8533 = vunpack.c.h.b16 %v7940
  %v8534 = vunpack.c.l.b16 %v7941
  %v8535 = vunpack.c.h.b16 %v7941
  %v8536 = vunpack.c.l.b16 %v7942
  %v8537 = vunpack.c.h.b16 %v7942
  %v8538 = vunpack.c.l.b16 %v7943
  %v8539 = vunpack.c.h.b16 %v7943
  %v8540 = vunpack.c.l.b16 %v7944
  %v8541 = vunpack.c.h.b16 %v7944
  %v8542 = vunpack.c.l.b16 %v7945
  %v8543 = vunpack.c.h.b16 %v7945
  %v8544 = vunpack.c.l.b16 %v7946
  %v8545 = vunpack.c.h.b16 %v7946
  %v8546 = vunpack.c.l.b16 %v7947
  %v8547 = vunpack.c.h.b16 %v7947
  %v8548 = vunpack.c.l.b16 %v7948
  %v8549 = vunpack.c.h.b16 %v7948
  %v8550 = vunpack.c.l.b16 %v7949
  %v8551 = vunpack.c.h.b16 %v7949
  %v8552 = vunpack.c.l.b16 %v7950
  %v8553 = vunpack.c.h.b16 %v7950
  %v8554 = vunpack.c.l.b16 %v7951
  %v8555 = vunpack.c.h.b16 %v7951
  %v8556 = vunpack.c.l.b16 %v7952
  %v8557 = vunpack.c.h.b16 %v7952
  %v8558 = vunpack.c.l.b16 %v7953
  %v8559 = vunpack.c.h.b16 %v7953
  %v8560 = vunpack.c.l.b16 %v7954
  %v8561 = vunpack.c.h.b16 %v7954
  %v8562 = vunpack.c.l.b16 %v7955
  %v8563 = vunpack.c.h.b16 %v7955
  %v8564 = vunpack.c.l.b16 %v7956
  %v8565 = vunpack.c.h.b16 %v7956
  %v8566 = vunpack.c.l.b16 %v7957
  %v8567 = vunpack.c.h.b16 %v7957
  %v8568 = vunpack.c.l.b16 %v7958
  %v8569 = vunpack.c.h.b16 %v7958
  %v8570 = vunpack.c.l.b16 %v7959
  %v8571 = vunpack.c.h.b16 %v7959
  %v8572 = vunpack.c.l.b16 %v7960
  %v8573 = vunpack.c.h.b16 %v7960
  %v8574 = vunpack.c.l.b16 %v7961
  %v8575 = vunpack.c.h.b16 %v7961
  %v8576 = vunpack.c.l.b16 %v7962
  %v8577 = vunpack.c.h.b16 %v7962
  %v8578 = vunpack.c.l.b16 %v7963
  %v8579 = vunpack.c.h.b16 %v7963
  %v8580 = vunpack.c.l.b16 %v7964
  %v8581 = vunpack.c.h.b16 %v7964
  %v8582 = vunpack.c.l.b16 %v7965
  %v8583 = vunpack.c.h.b16 %v7965
  %v8584 = vunpack.c.l.b16 %v7966
  %v8585 = vunpack.c.h.b16 %v7966
  %v8586 = vunpack.c.l.b16 %v7967
  %v8587 = vunpack.c.h.b16 %v7967
  %v8588 = vunpack.c.l.b16 %v7968
  %v8589 = vunpack.c.h.b16 %v7968
  %v8590 = vunpack.c.l.b16 %v7969
  %v8591 = vunpack.c.h.b16 %v7969
  %v8592 = vunpack.c.l.b16 %v7970
  %v8593 = vunpack.c.h.b16 %v7970
  %v8594 = vunpack.c.l.b16 %v7971
  %v8595 = vunpack.c.h.b16 %v7971
  %v8596 = vunpack.c.l.b16 %v7972
  %v8597 = vunpack.c.h.b16 %v7972
  %v8598 = vunpack.c.l.b16 %v7973
  %v8599 = vunpack.c.h.b16 %v7973
  %v8600 = vunpack.c.l.b16 %v7974
  %v8601 = vunpack.c.h.b16 %v7974
  %v8602 = vunpack.c.l.b16 %v7975
  %v8603 = vunpack.c.h.b16 %v7975
  %v8604 = vunpack.c.l.b16 %v7976
  %v8605 = vunpack.c.h.b16 %v7976
  %v8606 = vunpack.c.l.b16 %v7977
  %v8607 = vunpack.c.h.b16 %v7977
  %v8608 = vunpack.c.l.b16 %v7978
  %v8609 = vunpack.c.h.b16 %v7978
  %v8610 = vunpack.c.l.b16 %v7979
  %v8611 = vunpack.c.h.b16 %v7979
  %v8612 = vunpack.c.l.b16 %v7980
  %v8613 = vunpack.c.h.b16 %v7980
  %v8614 = vunpack.c.l.b16 %v7981
  %v8615 = vunpack.c.h.b16 %v7981
  %v8616 = vunpack.c.l.b16 %v7982
  %v8617 = vunpack.c.h.b16 %v7982
  %v8618 = vunpack.c.l.b16 %v7983
  %v8619 = vunpack.c.h.b16 %v7983
  %v8620 = vunpack.c.l.b16 %v7984
  %v8621 = vunpack.c.h.b16 %v7984
  %v8622 = vunpack.c.l.b16 %v7985
  %v8623 = vunpack.c.h.b16 %v7985
  %v8624 = vunpack.c.l.b16 %v7986
  %v8625 = vunpack.c.h.b16 %v7986
  %v8626 = vunpack.c.l.b16 %v7987
  %v8627 = vunpack.c.h.b16 %v7987
  %v8628 = vunpack.c.l.b16 %v7988
  %v8629 = vunpack.c.h.b16 %v7988
  %v8630 = vunpack.c.l.b16 %v7989
  %v8631 = vunpack.c.h.b16 %v7989
  %v8632 = vunpack.c.l.b16 %v7990
  %v8633 = vunpack.c.h.b16 %v7990
  %v8634 = vunpack.c.l.b16 %v7991
  %v8635 = vunpack.c.h.b16 %v7991
  %v8636 = vunpack.c.l.b16 %v7992
  %v8637 = vunpack.c.h.b16 %v7992
  %v8638 = vunpack.c.l.b16 %v7993
  %v8639 = vunpack.c.h.b16 %v7993
  %v8640 = vunpack.c.l.b16 %v7994
  %v8641 = vunpack.c.h.b16 %v7994
  %v8642 = vunpack.c.l.b16 %v7995
  %v8643 = vunpack.c.h.b16 %v7995
  %v8644 = vunpack.c.l.b16 %v7996
  %v8645 = vunpack.c.h.b16 %v7996
  %v8646 = vunpack.c.l.b16 %v7997
  %v8647 = vunpack.c.h.b16 %v7997
  %v8648 = vunpack.c.l.b16 %v7998
  %v8649 = vunpack.c.h.b16 %v7998
  %v8650 = vunpack.c.l.b16 %v7999
  %v8651 = vunpack.c.h.b16 %v7999
  %v8652 = vunpack.c.l.b16 %v8000
  %v8653 = vunpack.c.h.b16 %v8000
  %v8654 = vunpack.c.l.b16 %v8001
  %v8655 = vunpack.c.h.b16 %v8001
  %v8656 = vunpack.c.l.b16 %v8002
  %v8657 = vunpack.c.h.b16 %v8002
  %v8658 = vunpack.c.l.b16 %v8003
  %v8659 = vunpack.c.h.b16 %v8003
  %v8660 = vunpack.c.l.b16 %v8004
  %v8661 = vunpack.c.h.b16 %v8004
  %v8662 = vunpack.c.l.b16 %v8005
  %v8663 = vunpack.c.h.b16 %v8005
  %v8664 = vunpack.c.l.b16 %v8006
  %v8665 = vunpack.c.h.b16 %v8006
  %v8666 = vunpack.c.l.b16 %v8007
  %v8667 = vunpack.c.h.b16 %v8007
  %v8668 = vunpack.c.l.b16 %v8008
  %v8669 = vunpack.c.h.b16 %v8008
  %v8670 = vunpack.c.l.b16 %v8009
  %v8671 = vunpack.c.h.b16 %v8009
  %v8672 = vunpack.c.l.b16 %v8010
  %v8673 = vunpack.c.h.b16 %v8010
  %v8674 = vunpack.c.l.b16 %v8011
  %v8675 = vunpack.c.h.b16 %v8011
  %v8676 = vunpack.c.l.b16 %v8012
  %v8677 = vunpack.c.h.b16 %v8012
  %v8678 = vunpack.c.l.b16 %v8013
  %v8679 = vunpack.c.h.b16 %v8013
  %v8680 = vunpack.c.l.b16 %v8014
  %v8681 = vunpack.c.h.b16 %v8014
  %v8682 = vunpack.c.l.b16 %v8015
  %v8683 = vunpack.c.h.b16 %v8015
  %v8684 = vunpack.c.l.b16 %v8016
  %v8685 = vunpack.c.h.b16 %v8016
  %v8686 = vunpack.c.l.b16 %v8017
  %v8687 = vunpack.c.h.b16 %v8017
  %v8688 = vunpack.c.l.b16 %v8018
  %v8689 = vunpack.c.h.b16 %v8018
  %v8690 = vunpack.c.l.b16 %v8019
  %v8691 = vunpack.c.h.b16 %v8019
  %v8692 = vunpack.c.l.b16 %v8020
  %v8693 = vunpack.c.h.b16 %v8020
  %v8694 = vunpack.c.l.b16 %v8021
  %v8695 = vunpack.c.h.b16 %v8021
  %v8696 = vunpack.c.l.b16 %v8022
  %v8697 = vunpack.c.h.b16 %v8022
  %v8698 = vunpack.c.l.b16 %v8023
  %v8699 = vunpack.c.h.b16 %v8023
  %v8700 = vunpack.c.l.b16 %v8024
  %v8701 = vunpack.c.h.b16 %v8024
  %v8702 = vunpack.c.l.b16 %v8025
  %v8703 = vunpack.c.h.b16 %v8025
  %v8704 = vunpack.c.l.b16 %v8026
  %v8705 = vunpack.c.h.b16 %v8026
  %v8706 = vunpack.c.l.b16 %v8027
  %v8707 = vunpack.c.h.b16 %v8027
  %v8708 = vunpack.c.l.b16 %v8028
  %v8709 = vunpack.c.h.b16 %v8028
  %v8710 = vunpack.c.l.b16 %v8029
  %v8711 = vunpack.c.h.b16 %v8029
  %v8712 = vunpack.c.l.b16 %v8030
  %v8713 = vunpack.c.h.b16 %v8030
  %v8714 = vunpack.c.l.b16 %v8031
  %v8715 = vunpack.c.h.b16 %v8031
  %v8716 = vpack.c.b16 %v8462, %v8460
  %v8717 = vpack.c.b16 %v8463, %v8461
  %v8718 = vpack.c.b16 %v8466, %v8464
  %v8719 = vpack.c.b16 %v8467, %v8465
  %v8720 = vpack.c.b16 %v8470, %v8468
  %v8721 = vpack.c.b16 %v8471, %v8469
  %v8722 = vpack.c.b16 %v8474, %v8472
  %v8723 = vpack.c.b16 %v8475, %v8473
  %v8724 = vpack.c.b16 %v8478, %v8476
  %v8725 = vpack.c.b16 %v8479, %v8477
  %v8726 = vpack.c.b16 %v8482, %v8480
  %v8727 = vpack.c.b16 %v8483, %v8481
  %v8728 = vpack.c.b16 %v8486, %v8484
  %v8729 = vpack.c.b16 %v8487, %v8485
  %v8730 = vpack.c.b16 %v8490, %v8488
  %v8731 = vpack.c.b16 %v8491, %v8489
  %v8732 = vpack.c.b16 %v8494, %v8492
  %v8733 = vpack.c.b16 %v8495, %v8493
  %v8734 = vpack.c.b16 %v8498, %v8496
  %v8735 = vpack.c.b16 %v8499, %v8497
  %v8736 = vpack.c.b16 %v8502, %v8500
  %v8737 = vpack.c.b16 %v8503, %v8501
  %v8738 = vpack.c.b16 %v8506, %v8504
  %v8739 = vpack.c.b16 %v8507, %v8505
  %v8740 = vpack.c.b16 %v8510, %v8508
  %v8741 = vpack.c.b16 %v8511, %v8509
  %v8742 = vpack.c.b16 %v8514, %v8512
  %v8743 = vpack.c.b16 %v8515, %v8513
  %v8744 = vpack.c.b16 %v8518, %v8516
  %v8745 = vpack.c.b16 %v8519, %v8517
  %v8746 = vpack.c.b16 %v8522, %v8520
  %v8747 = vpack.c.b16 %v8523, %v8521
  %v8748 = vpack.c.b16 %v8526, %v8524
  %v8749 = vpack.c.b16 %v8527, %v8525
  %v8750 = vpack.c.b16 %v8530, %v8528
  %v8751 = vpack.c.b16 %v8531, %v8529
  %v8752 = vpack.c.b16 %v8534, %v8532
  %v8753 = vpack.c.b16 %v8535, %v8533
  %v8754 = vpack.c.b16 %v8538, %v8536
  %v8755 = vpack.c.b16 %v8539, %v8537
  %v8756 = vpack.c.b16 %v8542, %v8540
  %v8757 = vpack.c.b16 %v8543, %v8541
  %v8758 = vpack.c.b16 %v8546, %v8544
  %v8759 = vpack.c.b16 %v8547, %v8545
  %v8760 = vpack.c.b16 %v8550, %v8548
  %v8761 = vpack.c.b16 %v8551, %v8549
  %v8762 = vpack.c.b16 %v8554, %v8552
  %v8763 = vpack.c.b16 %v8555, %v8553
  %v8764 = vpack.c.b16 %v8558, %v8556
  %v8765 = vpack.c.b16 %v8559, %v8557
  %v8766 = vpack.c.b16 %v8562, %v8560
  %v8767 = vpack.c.b16 %v8563, %v8561
  %v8768 = vpack.c.b16 %v8566, %v8564
  %v8769 = vpack.c.b16 %v8567, %v8565
  %v8770 = vpack.c.b16 %v8570, %v8568
  %v8771 = vpack.c.b16 %v8571, %v8569
  %v8772 = vpack.c.b16 %v8574, %v8572
  %v8773 = vpack.c.b16 %v8575, %v8573
  %v8774 = vpack.c.b16 %v8578, %v8576
  %v8775 = vpack.c.b16 %v8579, %v8577
  %v8776 = vpack.c.b16 %v8582, %v8580
  %v8777 = vpack.c.b16 %v8583, %v8581
  %v8778 = vpack.c.b16 %v8586, %v8584
  %v8779 = vpack.c.b16 %v8587, %v8585
  %v8780 = vpack.c.b16 %v8590, %v8588
  %v8781 = vpack.c.b16 %v8591, %v8589
  %v8782 = vpack.c.b16 %v8594, %v8592
  %v8783 = vpack.c.b16 %v8595, %v8593
  %v8784 = vpack.c.b16 %v8598, %v8596
  %v8785 = vpack.c.b16 %v8599, %v8597
  %v8786 = vpack.c.b16 %v8602, %v8600
  %v8787 = vpack.c.b16 %v8603, %v8601
  %v8788 = vpack.c.b16 %v8606, %v8604
  %v8789 = vpack.c.b16 %v8607, %v8605
  %v8790 = vpack.c.b16 %v8610, %v8608
  %v8791 = vpack.c.b16 %v8611, %v8609
  %v8792 = vpack.c.b16 %v8614, %v8612
  %v8793 = vpack.c.b16 %v8615, %v8613
  %v8794 = vpack.c.b16 %v8618, %v8616
  %v8795 = vpack.c.b16 %v8619, %v8617
  %v8796 = vpack.c.b16 %v8622, %v8620
  %v8797 = vpack.c.b16 %v8623, %v8621
  %v8798 = vpack.c.b16 %v8626, %v8624
  %v8799 = vpack.c.b16 %v8627, %v8625
  %v8800 = vpack.c.b16 %v8630, %v8628
  %v8801 = vpack.c.b16 %v8631, %v8629
  %v8802 = vpack.c.b16 %v8634, %v8632
  %v8803 = vpack.c.b16 %v8635, %v8633
  %v8804 = vpack.c.b16 %v8638, %v8636
  %v8805 = vpack.c.b16 %v8639, %v8637
  %v8806 = vpack.c.b16 %v8642, %v8640
  %v8807 = vpack.c.b16 %v8643, %v8641
  %v8808 = vpack.c.b16 %v8646, %v8644
  %v8809 = vpack.c.b16 %v8647, %v8645
  %v8810 = vpack.c.b16 %v8650, %v8648
  %v8811 = vpack.c.b16 %v8651, %v8649
  %v8812 = vpack.c.b16 %v8654, %v8652
  %v8813 = vpack.c.b16 %v8655, %v8653
  %v8814 = vpack.c.b16 %v8658, %v8656
  %v8815 = vpack.c.b16 %v8659, %v8657
  %v8816 = vpack.c.b16 %v8662, %v8660
  %v8817 = vpack.c.b16 %v8663, %v8661
  %v8818 = vpack.c.b16 %v8666, %v8664
  %v8819 = vpack.c.b16 %v8667, %v8665
  %v8820 = vpack.c.b16 %v8670, %v8668
  %v8821 = vpack.c.b16 %v8671, %v8669
  %v8822 = vpack.c.b16 %v8674, %v8672
  %v8823 = vpack.c.b16 %v8675, %v8673
  %v8824 = vpack.c.b16 %v8678, %v8676
  %v8825 = vpack.c.b16 %v8679, %v8677
  %v8826 = vpack.c.b16 %v8682, %v8680
  %v8827 = vpack.c.b16 %v8683, %v8681
  %v8828 = vpack.c.b16 %v8686, %v8684
  %v8829 = vpack.c.b16 %v8687, %v8685
  %v8830 = vpack.c.b16 %v8690, %v8688
  %v8831 = vpack.c.b16 %v8691, %v8689
  %v8832 = vpack.c.b16 %v8694, %v8692
  %v8833 = vpack.c.b16 %v8695, %v8693
  %v8834 = vpack.c.b16 %v8698, %v8696
  %v8835 = vpack.c.b16 %v8699, %v8697
  %v8836 = vpack.c.b16 %v8702, %v8700
  %v8837 = vpack.c.b16 %v8703, %v8701
  %v8838 = vpack.c.b16 %v8706, %v8704
  %v8839 = vpack.c.b16 %v8707, %v8705
  %v8840 = vpack.c.b16 %v8710, %v8708
  %v8841 = vpack.c.b16 %v8711, %v8709
  %v8842 = vpack.c.b16 %v8714, %v8712
  %v8843 = vpack.c.b16 %v8715, %v8713
  %8972 = vmatprep.subr.bf16.mxu0 %v8717
  %8973 = vmatpush1.bf16.msra.mxu0 %v8716
  %8974 = vmatprep.subr.bf16.mxu0 %v8719
  %8975 = vmatpush1.bf16.msra.mxu0 %v8718
  %8976 = vmatprep.subr.bf16.mxu0 %v8721
  %8977 = vmatpush1.bf16.msra.mxu0 %v8720
  %8978 = vmatprep.subr.bf16.mxu0 %v8723
  %8979 = vmatpush1.bf16.msra.mxu0 %v8722
  %8980 = vmatprep.subr.bf16.mxu0 %v8725
  %8981 = vmatpush1.bf16.msra.mxu0 %v8724
  %8982 = vmatprep.subr.bf16.mxu0 %v8727
  %8983 = vmatpush1.bf16.msra.mxu0 %v8726
  %8984 = vmatprep.subr.bf16.mxu0 %v8729
  %8985 = vmatpush1.bf16.msra.mxu0 %v8728
  %8986 = vmatprep.subr.bf16.mxu0 %v8731
  %8987 = vmatpush1.bf16.msra.mxu0 %v8730
  %8988 = vmatprep.subr.bf16.mxu0 %v8733
  %8989 = vmatpush1.bf16.msra.mxu0 %v8732
  %8990 = vmatprep.subr.bf16.mxu0 %v8735
  %8991 = vmatpush1.bf16.msra.mxu0 %v8734
  %8992 = vmatprep.subr.bf16.mxu0 %v8737
  %8993 = vmatpush1.bf16.msra.mxu0 %v8736
  %8994 = vmatprep.subr.bf16.mxu0 %v8739
  %8995 = vmatpush1.bf16.msra.mxu0 %v8738
  %8996 = vmatprep.subr.bf16.mxu0 %v8741
  %8997 = vmatpush1.bf16.msra.mxu0 %v8740
  %8998 = vmatprep.subr.bf16.mxu0 %v8743
  %8999 = vmatpush1.bf16.msra.mxu0 %v8742
  %9000 = vmatprep.subr.bf16.mxu0 %v8745
  %9001 = vmatpush1.bf16.msra.mxu0 %v8744
  %9002 = vmatprep.subr.bf16.mxu0 %v8747
  %9003 = vmatpush1.bf16.msra.mxu0 %v8746
  %9004 = vmatprep.mubr.bf16.mxu0 %v8176
  %9005 = vmatmul.mubr.bf16.gmra.mrb[0].mxu0 %v8172
  %v9006 = vpop.f32.mrb[0].mxu0
  %v9007 = vadd.f32 %v8037, %v9006
  %v9008 = vpop.f32.mrb[0].mxu0
  %v9009 = vadd.f32 %v8041, %v9008
  %v9010 = vpop.f32.mrb[0].mxu0
  %v9011 = vadd.f32 %v8037, %v9010
  %v9012 = vpop.f32.mrb[0].mxu0
  %v9013 = vadd.f32 %v8041, %v9012
  %9014 = vmatprep.mubr.bf16.mxu0 %v8312
  %9015 = vmatmul.mubr.bf16.gmra.mrb[0].mxu0 %v8308
  %v9016 = vpop.f32.mrb[0].mxu0
  %v9017 = vadd.f32 %v8037, %v9016
  %v9018 = vpop.f32.mrb[0].mxu0
  %v9019 = vadd.f32 %v8041, %v9018
  %v9020 = vpop.f32.mrb[0].mxu0
  %v9021 = vadd.f32 %v8037, %v9020
  %v9022 = vpop.f32.mrb[0].mxu0
  %v9023 = vadd.f32 %v8041, %v9022
  %9024 = vdwg.mxu0
  %9025 = vmatprep.subr.bf16.mxu0 %v8749
  %9026 = vmatpush1.bf16.msra.mxu0 %v8748
  %9027 = vmatprep.subr.bf16.mxu0 %v8751
  %9028 = vmatpush1.bf16.msra.mxu0 %v8750
  %9029 = vmatprep.subr.bf16.mxu0 %v8753
  %9030 = vmatpush1.bf16.msra.mxu0 %v8752
  %9031 = vmatprep.subr.bf16.mxu0 %v8755
  %9032 = vmatpush1.bf16.msra.mxu0 %v8754
  %9033 = vmatprep.subr.bf16.mxu0 %v8757
  %9034 = vmatpush1.bf16.msra.mxu0 %v8756
  %9035 = vmatprep.subr.bf16.mxu0 %v8759
  %9036 = vmatpush1.bf16.msra.mxu0 %v8758
  %9037 = vmatprep.subr.bf16.mxu0 %v8761
  %9038 = vmatpush1.bf16.msra.mxu0 %v8760
  %9039 = vmatprep.subr.bf16.mxu0 %v8763
  %9040 = vmatpush1.bf16.msra.mxu0 %v8762
  %9041 = vmatprep.subr.bf16.mxu0 %v8765
  %9042 = vmatpush1.bf16.msra.mxu0 %v8764
  %9043 = vmatprep.subr.bf16.mxu0 %v8767
  %9044 = vmatpush1.bf16.msra.mxu0 %v8766
  %9045 = vmatprep.subr.bf16.mxu0 %v8769
  %9046 = vmatpush1.bf16.msra.mxu0 %v8768
  %9047 = vmatprep.subr.bf16.mxu0 %v8771
  %9048 = vmatpush1.bf16.msra.mxu0 %v8770
  %9049 = vmatprep.subr.bf16.mxu0 %v8773
  %9050 = vmatpush1.bf16.msra.mxu0 %v8772
  %9051 = vmatprep.subr.bf16.mxu0 %v8775
  %9052 = vmatpush1.bf16.msra.mxu0 %v8774
  %9053 = vmatprep.subr.bf16.mxu0 %v8777
  %9054 = vmatpush1.bf16.msra.mxu0 %v8776
  %9055 = vmatprep.subr.bf16.mxu0 %v8779
  %9056 = vmatpush1.bf16.msra.mxu0 %v8778
  %9057 = vmatprep.mubr.bf16.mxu0 %v8177
  %9058 = vmatmul.mubr.bf16.gmra.mrb[0].mxu0 %v8173
  %v9059 = vpop.f32.mrb[0].mxu0
  %v9060 = vadd.f32 %v9007, %v9059
  %v9061 = vpop.f32.mrb[0].mxu0
  %v9062 = vadd.f32 %v9009, %v9061
  %v9063 = vpop.f32.mrb[0].mxu0
  %v9064 = vadd.f32 %v9011, %v9063
  %v9065 = vpop.f32.mrb[0].mxu0
  %v9066 = vadd.f32 %v9013, %v9065
  %9067 = vmatprep.mubr.bf16.mxu0 %v8313
  %9068 = vmatmul.mubr.bf16.gmra.mrb[0].mxu0 %v8309
  %v9069 = vpop.f32.mrb[0].mxu0
  %v9070 = vadd.f32 %v9017, %v9069
  %v9071 = vpop.f32.mrb[0].mxu0
  %v9072 = vadd.f32 %v9019, %v9071
  %v9073 = vpop.f32.mrb[0].mxu0
  %v9074 = vadd.f32 %v9021, %v9073
  %v9075 = vpop.f32.mrb[0].mxu0
  %v9076 = vadd.f32 %v9023, %v9075
  %9077 = vdwg.mxu0
  %9078 = vmatprep.subr.bf16.mxu0 %v8781
  %9079 = vmatpush1.bf16.msra.mxu0 %v8780
  %9080 = vmatprep.subr.bf16.mxu0 %v8783
  %9081 = vmatpush1.bf16.msra.mxu0 %v8782
  %9082 = vmatprep.subr.bf16.mxu0 %v8785
  %9083 = vmatpush1.bf16.msra.mxu0 %v8784
  %9084 = vmatprep.subr.bf16.mxu0 %v8787
  %9085 = vmatpush1.bf16.msra.mxu0 %v8786
  %9086 = vmatprep.subr.bf16.mxu0 %v8789
  %9087 = vmatpush1.bf16.msra.mxu0 %v8788
  %9088 = vmatprep.subr.bf16.mxu0 %v8791
  %9089 = vmatpush1.bf16.msra.mxu0 %v8790
  %9090 = vmatprep.subr.bf16.mxu0 %v8793
  %9091 = vmatpush1.bf16.msra.mxu0 %v8792
  %9092 = vmatprep.subr.bf16.mxu0 %v8795
  %9093 = vmatpush1.bf16.msra.mxu0 %v8794
  %9094 = vmatprep.subr.bf16.mxu0 %v8797
  %9095 = vmatpush1.bf16.msra.mxu0 %v8796
  %9096 = vmatprep.subr.bf16.mxu0 %v8799
  %9097 = vmatpush1.bf16.msra.mxu0 %v8798
  %9098 = vmatprep.subr.bf16.mxu0 %v8801
  %9099 = vmatpush1.bf16.msra.mxu0 %v8800
  %9100 = vmatprep.subr.bf16.mxu0 %v8803
  %9101 = vmatpush1.bf16.msra.mxu0 %v8802
  %9102 = vmatprep.subr.bf16.mxu0 %v8805
  %9103 = vmatpush1.bf16.msra.mxu0 %v8804
  %9104 = vmatprep.subr.bf16.mxu0 %v8807
  %9105 = vmatpush1.bf16.msra.mxu0 %v8806
  %9106 = vmatprep.subr.bf16.mxu0 %v8809
  %9107 = vmatpush1.bf16.msra.mxu0 %v8808
  %9108 = vmatprep.subr.bf16.mxu0 %v8811
  %9109 = vmatpush1.bf16.msra.mxu0 %v8810
  %9110 = vmatprep.mubr.bf16.mxu0 %v8178
  %9111 = vmatmul.mubr.bf16.gmra.mrb[0].mxu0 %v8174
  %v9112 = vpop.f32.mrb[0].mxu0
  %v9113 = vadd.f32 %v9060, %v9112
  %v9114 = vpop.f32.mrb[0].mxu0
  %v9115 = vadd.f32 %v9062, %v9114
  %v9116 = vpop.f32.mrb[0].mxu0
  %v9117 = vadd.f32 %v9064, %v9116
  %v9118 = vpop.f32.mrb[0].mxu0
  %v9119 = vadd.f32 %v9066, %v9118
  %9120 = vmatprep.mubr.bf16.mxu0 %v8314
  %9121 = vmatmul.mubr.bf16.gmra.mrb[0].mxu0 %v8310
  %v9122 = vpop.f32.mrb[0].mxu0
  %v9123 = vadd.f32 %v9070, %v9122
  %v9124 = vpop.f32.mrb[0].mxu0
  %v9125 = vadd.f32 %v9072, %v9124
  %v9126 = vpop.f32.mrb[0].mxu0
  %v9127 = vadd.f32 %v9074, %v9126
  %v9128 = vpop.f32.mrb[0].mxu0
  %v9129 = vadd.f32 %v9076, %v9128
  %9130 = vdwg.mxu0
  %9131 = vmatprep.subr.bf16.mxu0 %v8813
  %9132 = vmatpush1.bf16.msra.mxu0 %v8812
  %9133 = vmatprep.subr.bf16.mxu0 %v8815
  %9134 = vmatpush1.bf16.msra.mxu0 %v8814
  %9135 = vmatprep.subr.bf16.mxu0 %v8817
  %9136 = vmatpush1.bf16.msra.mxu0 %v8816
  %9137 = vmatprep.subr.bf16.mxu0 %v8819
  %9138 = vmatpush1.bf16.msra.mxu0 %v8818
  %9139 = vmatprep.subr.bf16.mxu0 %v8821
  %9140 = vmatpush1.bf16.msra.mxu0 %v8820
  %9141 = vmatprep.subr.bf16.mxu0 %v8823
  %9142 = vmatpush1.bf16.msra.mxu0 %v8822
  %9143 = vmatprep.subr.bf16.mxu0 %v8825
  %9144 = vmatpush1.bf16.msra.mxu0 %v8824
  %9145 = vmatprep.subr.bf16.mxu0 %v8827
  %9146 = vmatpush1.bf16.msra.mxu0 %v8826
  %9147 = vmatprep.subr.bf16.mxu0 %v8829
  %9148 = vmatpush1.bf16.msra.mxu0 %v8828
  %9149 = vmatprep.subr.bf16.mxu0 %v8831
  %9150 = vmatpush1.bf16.msra.mxu0 %v8830
  %9151 = vmatprep.subr.bf16.mxu0 %v8833
  %9152 = vmatpush1.bf16.msra.mxu0 %v8832
  %9153 = vmatprep.subr.bf16.mxu0 %v8835
  %9154 = vmatpush1.bf16.msra.mxu0 %v8834
  %9155 = vmatprep.subr.bf16.mxu0 %v8837
  %9156 = vmatpush1.bf16.msra.mxu0 %v8836
  %9157 = vmatprep.subr.bf16.mxu0 %v8839
  %9158 = vmatpush1.bf16.msra.mxu0 %v8838
  %9159 = vmatprep.subr.bf16.mxu0 %v8841
  %9160 = vmatpush1.bf16.msra.mxu0 %v8840
  %9161 = vmatprep.subr.bf16.mxu0 %v8843
  %9162 = vmatpush1.bf16.msra.mxu0 %v8842
  %9163 = vmatprep.mubr.bf16.mxu0 %v8179
  %9164 = vmatmul.mubr.bf16.gmra.mrb[0].mxu0 %v8175
  %v9165 = vpop.f32.mrb[0].mxu0
  %v9166 = vadd.f32 %v9113, %v9165
  %v9167 = vpop.f32.mrb[0].mxu0
  %v9168 = vadd.f32 %v9115, %v9167
  %v9169 = vpop.f32.mrb[0].mxu0
  %v9170 = vadd.f32 %v9117, %v9169
  %v9171 = vpop.f32.mrb[0].mxu0
  %v9172 = vadd.f32 %v9119, %v9171
  %9173 = vmatprep.mubr.bf16.mxu0 %v8315
  %9174 = vmatmul.mubr.bf16.gmra.mrb[0].mxu0 %v8311
  %v9175 = vpop.f32.mrb[0].mxu0
  %v9176 = vadd.f32 %v9123, %v9175
  %v9177 = vpop.f32.mrb[0].mxu0
  %v9178 = vadd.f32 %v9125, %v9177
  %v9179 = vpop.f32.mrb[0].mxu0
  %v9180 = vadd.f32 %v9127, %v9179
  %v9181 = vpop.f32.mrb[0].mxu0
  %v9182 = vadd.f32 %v9129, %v9181
  %9183 = vdwg.mxu0
  %v9184 = vmax.f32 %v9166, 0.0
  %v9185 = vmax.f32 %v9168, 0.0
  %v9186 = vmax.f32 %v9170, 0.0
  %v9187 = vmax.f32 %v9172, 0.0
  %v9188 = vmax.f32 %v9176, 0.0
  %v9189 = vmax.f32 %v9178, 0.0
  %v9190 = vmax.f32 %v9180, 0.0
  %v9191 = vmax.f32 %v9182, 0.0
  %v9192 = vpack.c.bf16 %v9186, %v9184
  %v9193 = vpack.c.bf16 %v9187, %v9185
  %v9194 = vpack.c.bf16 %v9190, %v9188
  %v9195 = vpack.c.bf16 %v9191, %v9189
  %v9200 = vcombine.low %v9192, %v9193
  %v9201 = vcombine.high %v9192, %v9193
  %v9203 = vunpack.c.l.s4 1966171168
  %v9204 = vunpack.c.0.s8 %v9203
  %v9205 = vlaneseq
  %v9206 = vshrl.u32 %v9205, 7
  %v9207 = vsub.s32 %v9204, %v9206
  %v9208 = vrot.slane %v9200, %v9207
  %v9210 = vunpack.c.l.s4 1966171168
  %v9211 = vunpack.c.0.s8 %v9210
  %v9212 = vlaneseq
  %v9213 = vshrl.u32 %v9212, 7
  %v9214 = vsub.s32 %v9211, %v9213
  %v9215 = vrot.slane %v9201, %v9214
  %v9216 = vcombine.high %v9208, %v9208
  %v9217 = vcombine.high %v9215, %v9215
  %v9219 = vunpack.c.l.s4 1966171168
  %v9220 = vunpack.c.0.s8 %v9219
  %v9221 = vlaneseq
  %v9222 = vshrl.u32 %v9221, 7
  %v9223 = vsub.s32 %v9220, %v9222
  %v9224 = vrot.slane %v9208, %v9223
  %v9226 = vunpack.c.l.s4 1966171168
  %v9227 = vunpack.c.0.s8 %v9226
  %v9228 = vlaneseq
  %v9229 = vshrl.u32 %v9228, 7
  %v9230 = vsub.s32 %v9227, %v9229
  %v9231 = vrot.slane %v9215, %v9230
  %v9233 = vunpack.c.l.s4 1966171168
  %v9234 = vunpack.c.0.s8 %v9233
  %v9235 = vlaneseq
  %v9236 = vshrl.u32 %v9235, 7
  %v9237 = vsub.s32 %v9234, %v9236
  %v9238 = vrot.slane %v9216, %v9237
  %v9240 = vunpack.c.l.s4 1966171168
  %v9241 = vunpack.c.0.s8 %v9240
  %v9242 = vlaneseq
  %v9243 = vshrl.u32 %v9242, 7
  %v9244 = vsub.s32 %v9241, %v9243
  %v9245 = vrot.slane %v9217, %v9244
  %v9246 = vcombine.high %v9224, %v9224
  %v9247 = vcombine.high %v9231, %v9231
  %v9248 = vcombine.high %v9238, %v9238
  %v9249 = vcombine.high %v9245, %v9245
  %v9250 = vcombine.low %v9194, %v9195
  %v9251 = vcombine.high %v9194, %v9195
  %v9253 = vunpack.c.l.s4 1966171168
  %v9254 = vunpack.c.0.s8 %v9253
  %v9255 = vlaneseq
  %v9256 = vshrl.u32 %v9255, 7
  %v9257 = vsub.s32 %v9254, %v9256
  %v9258 = vrot.slane %v9250, %v9257
  %v9260 = vunpack.c.l.s4 1966171168
  %v9261 = vunpack.c.0.s8 %v9260
  %v9262 = vlaneseq
  %v9263 = vshrl.u32 %v9262, 7
  %v9264 = vsub.s32 %v9261, %v9263
  %v9265 = vrot.slane %v9251, %v9264
  %v9266 = vcombine.high %v9258, %v9258
  %v9267 = vcombine.high %v9265, %v9265
  %v9269 = vunpack.c.l.s4 1966171168
  %v9270 = vunpack.c.0.s8 %v9269
  %v9271 = vlaneseq
  %v9272 = vshrl.u32 %v9271, 7
  %v9273 = vsub.s32 %v9270, %v9272
  %v9274 = vrot.slane %v9258, %v9273
  %v9276 = vunpack.c.l.s4 1966171168
  %v9277 = vunpack.c.0.s8 %v9276
  %v9278 = vlaneseq
  %v9279 = vshrl.u32 %v9278, 7
  %v9280 = vsub.s32 %v9277, %v9279
  %v9281 = vrot.slane %v9265, %v9280
  %v9283 = vunpack.c.l.s4 1966171168
  %v9284 = vunpack.c.0.s8 %v9283
  %v9285 = vlaneseq
  %v9286 = vshrl.u32 %v9285, 7
  %v9287 = vsub.s32 %v9284, %v9286
  %v9288 = vrot.slane %v9266, %v9287
  %v9290 = vunpack.c.l.s4 1966171168
  %v9291 = vunpack.c.0.s8 %v9290
  %v9292 = vlaneseq
  %v9293 = vshrl.u32 %v9292, 7
  %v9294 = vsub.s32 %v9291, %v9293
  %v9295 = vrot.slane %v9267, %v9294
  %v9296 = vcombine.high %v9274, %v9274
  %v9297 = vcombine.high %v9281, %v9281
  %v9298 = vcombine.high %v9288, %v9288
  %v9299 = vcombine.high %v9295, %v9295
  %v9301 = vunpack.c.l.s4 1966171168
  %v9302 = vunpack.c.0.s8 %v9301
  %v9303 = vlaneseq
  %v9304 = vshrl.u32 %v9303, 7
  %v9305 = vsub.s32 %v9302, %v9304
  %v9306 = vrot.slane %v9224, %v9305
  %v9307 = vcombine.high %v9306, %v9306
  %v9309 = vunpack.c.l.s4 1966171168
  %v9310 = vunpack.c.0.s8 %v9309
  %v9311 = vlaneseq
  %v9312 = vshrl.u32 %v9311, 7
  %v9313 = vsub.s32 %v9310, %v9312
  %v9314 = vrot.slane %v9306, %v9313
  %v9316 = vunpack.c.l.s4 1966171168
  %v9317 = vunpack.c.0.s8 %v9316
  %v9318 = vlaneseq
  %v9319 = vshrl.u32 %v9318, 7
  %v9320 = vsub.s32 %v9317, %v9319
  %v9321 = vrot.slane %v9307, %v9320
  %v9323 = vunpack.c.l.s4 1966171168
  %v9324 = vunpack.c.0.s8 %v9323
  %v9325 = vlaneseq
  %v9326 = vshrl.u32 %v9325, 7
  %v9327 = vsub.s32 %v9324, %v9326
  %v9328 = vrot.slane %v9246, %v9327
  %v9329 = vcombine.high %v9328, %v9328
  %v9331 = vunpack.c.l.s4 1966171168
  %v9332 = vunpack.c.0.s8 %v9331
  %v9333 = vlaneseq
  %v9334 = vshrl.u32 %v9333, 7
  %v9335 = vsub.s32 %v9332, %v9334
  %v9336 = vrot.slane %v9328, %v9335
  %v9338 = vunpack.c.l.s4 1966171168
  %v9339 = vunpack.c.0.s8 %v9338
  %v9340 = vlaneseq
  %v9341 = vshrl.u32 %v9340, 7
  %v9342 = vsub.s32 %v9339, %v9341
  %v9343 = vrot.slane %v9329, %v9342
  %v9345 = vunpack.c.l.s4 1966171168
  %v9346 = vunpack.c.0.s8 %v9345
  %v9347 = vlaneseq
  %v9348 = vshrl.u32 %v9347, 7
  %v9349 = vsub.s32 %v9346, %v9348
  %v9350 = vrot.slane %v9231, %v9349
  %v9351 = vcombine.high %v9350, %v9350
  %v9353 = vunpack.c.l.s4 1966171168
  %v9354 = vunpack.c.0.s8 %v9353
  %v9355 = vlaneseq
  %v9356 = vshrl.u32 %v9355, 7
  %v9357 = vsub.s32 %v9354, %v9356
  %v9358 = vrot.slane %v9350, %v9357
  %v9360 = vunpack.c.l.s4 1966171168
  %v9361 = vunpack.c.0.s8 %v9360
  %v9362 = vlaneseq
  %v9363 = vshrl.u32 %v9362, 7
  %v9364 = vsub.s32 %v9361, %v9363
  %v9365 = vrot.slane %v9351, %v9364
  %v9367 = vunpack.c.l.s4 1966171168
  %v9368 = vunpack.c.0.s8 %v9367
  %v9369 = vlaneseq
  %v9370 = vshrl.u32 %v9369, 7
  %v9371 = vsub.s32 %v9368, %v9370
  %v9372 = vrot.slane %v9247, %v9371
  %v9373 = vcombine.high %v9372, %v9372
  %v9375 = vunpack.c.l.s4 1966171168
  %v9376 = vunpack.c.0.s8 %v9375
  %v9377 = vlaneseq
  %v9378 = vshrl.u32 %v9377, 7
  %v9379 = vsub.s32 %v9376, %v9378
  %v9380 = vrot.slane %v9372, %v9379
  %v9382 = vunpack.c.l.s4 1966171168
  %v9383 = vunpack.c.0.s8 %v9382
  %v9384 = vlaneseq
  %v9385 = vshrl.u32 %v9384, 7
  %v9386 = vsub.s32 %v9383, %v9385
  %v9387 = vrot.slane %v9373, %v9386
  %v9389 = vunpack.c.l.s4 1966171168
  %v9390 = vunpack.c.0.s8 %v9389
  %v9391 = vlaneseq
  %v9392 = vshrl.u32 %v9391, 7
  %v9393 = vsub.s32 %v9390, %v9392
  %v9394 = vrot.slane %v9274, %v9393
  %v9395 = vcombine.high %v9394, %v9394
  %v9397 = vunpack.c.l.s4 1966171168
  %v9398 = vunpack.c.0.s8 %v9397
  %v9399 = vlaneseq
  %v9400 = vshrl.u32 %v9399, 7
  %v9401 = vsub.s32 %v9398, %v9400
  %v9402 = vrot.slane %v9394, %v9401
  %v9404 = vunpack.c.l.s4 1966171168
  %v9405 = vunpack.c.0.s8 %v9404
  %v9406 = vlaneseq
  %v9407 = vshrl.u32 %v9406, 7
  %v9408 = vsub.s32 %v9405, %v9407
  %v9409 = vrot.slane %v9395, %v9408
  %v9411 = vunpack.c.l.s4 1966171168
  %v9412 = vunpack.c.0.s8 %v9411
  %v9413 = vlaneseq
  %v9414 = vshrl.u32 %v9413, 7
  %v9415 = vsub.s32 %v9412, %v9414
  %v9416 = vrot.slane %v9296, %v9415
  %v9417 = vcombine.high %v9416, %v9416
  %v9419 = vunpack.c.l.s4 1966171168
  %v9420 = vunpack.c.0.s8 %v9419
  %v9421 = vlaneseq
  %v9422 = vshrl.u32 %v9421, 7
  %v9423 = vsub.s32 %v9420, %v9422
  %v9424 = vrot.slane %v9416, %v9423
  %v9426 = vunpack.c.l.s4 1966171168
  %v9427 = vunpack.c.0.s8 %v9426
  %v9428 = vlaneseq
  %v9429 = vshrl.u32 %v9428, 7
  %v9430 = vsub.s32 %v9427, %v9429
  %v9431 = vrot.slane %v9417, %v9430
  %v9433 = vunpack.c.l.s4 1966171168
  %v9434 = vunpack.c.0.s8 %v9433
  %v9435 = vlaneseq
  %v9436 = vshrl.u32 %v9435, 7
  %v9437 = vsub.s32 %v9434, %v9436
  %v9438 = vrot.slane %v9281, %v9437
  %v9439 = vcombine.high %v9438, %v9438
  %v9441 = vunpack.c.l.s4 1966171168
  %v9442 = vunpack.c.0.s8 %v9441
  %v9443 = vlaneseq
  %v9444 = vshrl.u32 %v9443, 7
  %v9445 = vsub.s32 %v9442, %v9444
  %v9446 = vrot.slane %v9438, %v9445
  %v9448 = vunpack.c.l.s4 1966171168
  %v9449 = vunpack.c.0.s8 %v9448
  %v9450 = vlaneseq
  %v9451 = vshrl.u32 %v9450, 7
  %v9452 = vsub.s32 %v9449, %v9451
  %v9453 = vrot.slane %v9439, %v9452
  %v9455 = vunpack.c.l.s4 1966171168
  %v9456 = vunpack.c.0.s8 %v9455
  %v9457 = vlaneseq
  %v9458 = vshrl.u32 %v9457, 7
  %v9459 = vsub.s32 %v9456, %v9458
  %v9460 = vrot.slane %v9297, %v9459
  %v9461 = vcombine.high %v9460, %v9460
  %v9463 = vunpack.c.l.s4 1966171168
  %v9464 = vunpack.c.0.s8 %v9463
  %v9465 = vlaneseq
  %v9466 = vshrl.u32 %v9465, 7
  %v9467 = vsub.s32 %v9464, %v9466
  %v9468 = vrot.slane %v9460, %v9467
  %v9470 = vunpack.c.l.s4 1966171168
  %v9471 = vunpack.c.0.s8 %v9470
  %v9472 = vlaneseq
  %v9473 = vshrl.u32 %v9472, 7
  %v9474 = vsub.s32 %v9471, %v9473
  %v9475 = vrot.slane %v9461, %v9474
  %v9477 = vshrl.u32 %v9314, 16
  %v9480 = vshrl.u32 %v9321, 16
  %v9483 = vshrl.u32 %v9336, 16
  %v9486 = vshrl.u32 %v9343, 16
  %v9489 = vshrl.u32 %v9358, 16
  %v9492 = vshrl.u32 %v9365, 16
  %v9495 = vshrl.u32 %v9380, 16
  %v9498 = vshrl.u32 %v9387, 16
  %v9501 = vshrl.u32 %v9402, 16
  %v9504 = vshrl.u32 %v9409, 16
  %v9507 = vshrl.u32 %v9424, 16
  %v9510 = vshrl.u32 %v9431, 16
  %v9513 = vshrl.u32 %v9446, 16
  %v9516 = vshrl.u32 %v9453, 16
  %v9519 = vshrl.u32 %v9468, 16
  %v9522 = vshrl.u32 %v9475, 16
  %v9525 = vunpack.c.l.s4 1966171168
  %v9526 = vunpack.c.0.s8 %v9525
  %v9527 = vlaneseq
  %v9528 = vshrl.u32 %v9527, 7
  %v9529 = vsub.s32 %v9526, %v9528
  %v9530 = vrot.slane %v9238, %v9529
  %v9531 = vcombine.high %v9530, %v9530
  %v9533 = vunpack.c.l.s4 1966171168
  %v9534 = vunpack.c.0.s8 %v9533
  %v9535 = vlaneseq
  %v9536 = vshrl.u32 %v9535, 7
  %v9537 = vsub.s32 %v9534, %v9536
  %v9538 = vrot.slane %v9530, %v9537
  %v9540 = vunpack.c.l.s4 1966171168
  %v9541 = vunpack.c.0.s8 %v9540
  %v9542 = vlaneseq
  %v9543 = vshrl.u32 %v9542, 7
  %v9544 = vsub.s32 %v9541, %v9543
  %v9545 = vrot.slane %v9531, %v9544
  %v9547 = vunpack.c.l.s4 1966171168
  %v9548 = vunpack.c.0.s8 %v9547
  %v9549 = vlaneseq
  %v9550 = vshrl.u32 %v9549, 7
  %v9551 = vsub.s32 %v9548, %v9550
  %v9552 = vrot.slane %v9248, %v9551
  %v9553 = vcombine.high %v9552, %v9552
  %v9555 = vunpack.c.l.s4 1966171168
  %v9556 = vunpack.c.0.s8 %v9555
  %v9557 = vlaneseq
  %v9558 = vshrl.u32 %v9557, 7
  %v9559 = vsub.s32 %v9556, %v9558
  %v9560 = vrot.slane %v9552, %v9559
  %v9562 = vunpack.c.l.s4 1966171168
  %v9563 = vunpack.c.0.s8 %v9562
  %v9564 = vlaneseq
  %v9565 = vshrl.u32 %v9564, 7
  %v9566 = vsub.s32 %v9563, %v9565
  %v9567 = vrot.slane %v9553, %v9566
  %v9569 = vunpack.c.l.s4 1966171168
  %v9570 = vunpack.c.0.s8 %v9569
  %v9571 = vlaneseq
  %v9572 = vshrl.u32 %v9571, 7
  %v9573 = vsub.s32 %v9570, %v9572
  %v9574 = vrot.slane %v9245, %v9573
  %v9575 = vcombine.high %v9574, %v9574
  %v9577 = vunpack.c.l.s4 1966171168
  %v9578 = vunpack.c.0.s8 %v9577
  %v9579 = vlaneseq
  %v9580 = vshrl.u32 %v9579, 7
  %v9581 = vsub.s32 %v9578, %v9580
  %v9582 = vrot.slane %v9574, %v9581
  %v9584 = vunpack.c.l.s4 1966171168
  %v9585 = vunpack.c.0.s8 %v9584
  %v9586 = vlaneseq
  %v9587 = vshrl.u32 %v9586, 7
  %v9588 = vsub.s32 %v9585, %v9587
  %v9589 = vrot.slane %v9575, %v9588
  %v9591 = vunpack.c.l.s4 1966171168
  %v9592 = vunpack.c.0.s8 %v9591
  %v9593 = vlaneseq
  %v9594 = vshrl.u32 %v9593, 7
  %v9595 = vsub.s32 %v9592, %v9594
  %v9596 = vrot.slane %v9249, %v9595
  %v9597 = vcombine.high %v9596, %v9596
  %v9599 = vunpack.c.l.s4 1966171168
  %v9600 = vunpack.c.0.s8 %v9599
  %v9601 = vlaneseq
  %v9602 = vshrl.u32 %v9601, 7
  %v9603 = vsub.s32 %v9600, %v9602
  %v9604 = vrot.slane %v9596, %v9603
  %v9606 = vunpack.c.l.s4 1966171168
  %v9607 = vunpack.c.0.s8 %v9606
  %v9608 = vlaneseq
  %v9609 = vshrl.u32 %v9608, 7
  %v9610 = vsub.s32 %v9607, %v9609
  %v9611 = vrot.slane %v9597, %v9610
  %v9613 = vunpack.c.l.s4 1966171168
  %v9614 = vunpack.c.0.s8 %v9613
  %v9615 = vlaneseq
  %v9616 = vshrl.u32 %v9615, 7
  %v9617 = vsub.s32 %v9614, %v9616
  %v9618 = vrot.slane %v9288, %v9617
  %v9619 = vcombine.high %v9618, %v9618
  %v9621 = vunpack.c.l.s4 1966171168
  %v9622 = vunpack.c.0.s8 %v9621
  %v9623 = vlaneseq
  %v9624 = vshrl.u32 %v9623, 7
  %v9625 = vsub.s32 %v9622, %v9624
  %v9626 = vrot.slane %v9618, %v9625
  %v9628 = vunpack.c.l.s4 1966171168
  %v9629 = vunpack.c.0.s8 %v9628
  %v9630 = vlaneseq
  %v9631 = vshrl.u32 %v9630, 7
  %v9632 = vsub.s32 %v9629, %v9631
  %v9633 = vrot.slane %v9619, %v9632
  %v9635 = vunpack.c.l.s4 1966171168
  %v9636 = vunpack.c.0.s8 %v9635
  %v9637 = vlaneseq
  %v9638 = vshrl.u32 %v9637, 7
  %v9639 = vsub.s32 %v9636, %v9638
  %v9640 = vrot.slane %v9298, %v9639
  %v9641 = vcombine.high %v9640, %v9640
  %v9643 = vunpack.c.l.s4 1966171168
  %v9644 = vunpack.c.0.s8 %v9643
  %v9645 = vlaneseq
  %v9646 = vshrl.u32 %v9645, 7
  %v9647 = vsub.s32 %v9644, %v9646
  %v9648 = vrot.slane %v9640, %v9647
  %v9650 = vunpack.c.l.s4 1966171168
  %v9651 = vunpack.c.0.s8 %v9650
  %v9652 = vlaneseq
  %v9653 = vshrl.u32 %v9652, 7
  %v9654 = vsub.s32 %v9651, %v9653
  %v9655 = vrot.slane %v9641, %v9654
  %v9657 = vunpack.c.l.s4 1966171168
  %v9658 = vunpack.c.0.s8 %v9657
  %v9659 = vlaneseq
  %v9660 = vshrl.u32 %v9659, 7
  %v9661 = vsub.s32 %v9658, %v9660
  %v9662 = vrot.slane %v9295, %v9661
  %v9663 = vcombine.high %v9662, %v9662
  %v9665 = vunpack.c.l.s4 1966171168
  %v9666 = vunpack.c.0.s8 %v9665
  %v9667 = vlaneseq
  %v9668 = vshrl.u32 %v9667, 7
  %v9669 = vsub.s32 %v9666, %v9668
  %v9670 = vrot.slane %v9662, %v9669
  %v9672 = vunpack.c.l.s4 1966171168
  %v9673 = vunpack.c.0.s8 %v9672
  %v9674 = vlaneseq
  %v9675 = vshrl.u32 %v9674, 7
  %v9676 = vsub.s32 %v9673, %v9675
  %v9677 = vrot.slane %v9663, %v9676
  %v9679 = vunpack.c.l.s4 1966171168
  %v9680 = vunpack.c.0.s8 %v9679
  %v9681 = vlaneseq
  %v9682 = vshrl.u32 %v9681, 7
  %v9683 = vsub.s32 %v9680, %v9682
  %v9684 = vrot.slane %v9299, %v9683
  %v9685 = vcombine.high %v9684, %v9684
  %v9687 = vunpack.c.l.s4 1966171168
  %v9688 = vunpack.c.0.s8 %v9687
  %v9689 = vlaneseq
  %v9690 = vshrl.u32 %v9689, 7
  %v9691 = vsub.s32 %v9688, %v9690
  %v9692 = vrot.slane %v9684, %v9691
  %v9694 = vunpack.c.l.s4 1966171168
  %v9695 = vunpack.c.0.s8 %v9694
  %v9696 = vlaneseq
  %v9697 = vshrl.u32 %v9696, 7
  %v9698 = vsub.s32 %v9695, %v9697
  %v9699 = vrot.slane %v9685, %v9698
  %v9701 = vshrl.u32 %v9538, 16
  %v9704 = vshrl.u32 %v9545, 16
  %v9707 = vshrl.u32 %v9560, 16
  %v9710 = vshrl.u32 %v9567, 16
  %v9713 = vshrl.u32 %v9582, 16
  %v9716 = vshrl.u32 %v9589, 16
  %v9719 = vshrl.u32 %v9604, 16
  %v9722 = vshrl.u32 %v9611, 16
  %v9725 = vshrl.u32 %v9626, 16
  %v9728 = vshrl.u32 %v9633, 16
  %v9731 = vshrl.u32 %v9648, 16
  %v9734 = vshrl.u32 %v9655, 16
  %v9737 = vshrl.u32 %v9670, 16
  %v9740 = vshrl.u32 %v9677, 16
  %v9743 = vshrl.u32 %v9692, 16
  %v9746 = vshrl.u32 %v9699, 16
  %v9748 = vld [vmem:[%s9] sm:$0xff]
  %v9749 = vld [vmem:[%s9 + $0x8] sm:$0xff]
  %v9750 = vld [vmem:[%s9 + $0x10] sm:$0xff]
  %v9751 = vld [vmem:[%s9 + $0x18] sm:$0xff]
  %v9752 = vld [vmem:[%s9 + $0x20] sm:$0xff]
  %v9753 = vld [vmem:[%s9 + $0x28] sm:$0xff]
  %v9754 = vld [vmem:[%s9 + $0x30] sm:$0xff]
  %v9755 = vld [vmem:[%s9 + $0x38] sm:$0xff]
  %v9756 = vld [vmem:[%s9 + $0x40] sm:$0xff]
  %v9757 = vld [vmem:[%s9 + $0x48] sm:$0xff]
  %v9758 = vld [vmem:[%s9 + $0x50] sm:$0xff]
  %v9759 = vld [vmem:[%s9 + $0x58] sm:$0xff]
  %v9760 = vld [vmem:[%s9 + $0x60] sm:$0xff]
  %v9761 = vld [vmem:[%s9 + $0x68] sm:$0xff]
  %v9762 = vld [vmem:[%s9 + $0x70] sm:$0xff]
  %v9763 = vld [vmem:[%s9 + $0x78] sm:$0xff]
  %v9764 = vld [vmem:[%s9 + $0x80] sm:$0xff]
  %v9765 = vld [vmem:[%s9 + $0x88] sm:$0xff]
  %v9766 = vld [vmem:[%s9 + $0x90] sm:$0xff]
  %v9767 = vld [vmem:[%s9 + $0x98] sm:$0xff]
  %v9768 = vld [vmem:[%s9 + $0xa0] sm:$0xff]
  %v9769 = vld [vmem:[%s9 + $0xa8] sm:$0xff]
  %v9770 = vld [vmem:[%s9 + $0xb0] sm:$0xff]
  %v9771 = vld [vmem:[%s9 + $0xb8] sm:$0xff]
  %v9772 = vld [vmem:[%s9 + $0xc0] sm:$0xff]
  %v9773 = vld [vmem:[%s9 + $0xc8] sm:$0xff]
  %v9774 = vld [vmem:[%s9 + $0xd0] sm:$0xff]
  %v9775 = vld [vmem:[%s9 + $0xd8] sm:$0xff]
  %v9776 = vld [vmem:[%s9 + $0xe0] sm:$0xff]
  %v9777 = vld [vmem:[%s9 + $0xe8] sm:$0xff]
  %v9778 = vld [vmem:[%s9 + $0xf0] sm:$0xff]
  %v9779 = vld [vmem:[%s9 + $0xf8] sm:$0xff]
  %v9780 = vld [vmem:[%s9 + $0x100] sm:$0xff]
  %v9781 = vld [vmem:[%s9 + $0x108] sm:$0xff]
  %v9782 = vld [vmem:[%s9 + $0x110] sm:$0xff]
  %v9783 = vld [vmem:[%s9 + $0x118] sm:$0xff]
  %v9784 = vld [vmem:[%s9 + $0x120] sm:$0xff]
  %v9785 = vld [vmem:[%s9 + $0x128] sm:$0xff]
  %v9786 = vld [vmem:[%s9 + $0x130] sm:$0xff]
  %v9787 = vld [vmem:[%s9 + $0x138] sm:$0xff]
  %v9788 = vld [vmem:[%s9 + $0x140] sm:$0xff]
  %v9789 = vld [vmem:[%s9 + $0x148] sm:$0xff]
  %v9790 = vld [vmem:[%s9 + $0x150] sm:$0xff]
  %v9791 = vld [vmem:[%s9 + $0x158] sm:$0xff]
  %v9792 = vld [vmem:[%s9 + $0x160] sm:$0xff]
  %v9793 = vld [vmem:[%s9 + $0x168] sm:$0xff]
  %v9794 = vld [vmem:[%s9 + $0x170] sm:$0xff]
  %v9795 = vld [vmem:[%s9 + $0x178] sm:$0xff]
  %v9796 = vld [vmem:[%s9 + $0x180] sm:$0xff]
  %v9797 = vld [vmem:[%s9 + $0x188] sm:$0xff]
  %v9798 = vld [vmem:[%s9 + $0x190] sm:$0xff]
  %v9799 = vld [vmem:[%s9 + $0x198] sm:$0xff]
  %v9800 = vld [vmem:[%s9 + $0x1a0] sm:$0xff]
  %v9801 = vld [vmem:[%s9 + $0x1a8] sm:$0xff]
  %v9802 = vld [vmem:[%s9 + $0x1b0] sm:$0xff]
  %v9803 = vld [vmem:[%s9 + $0x1b8] sm:$0xff]
  %v9804 = vld [vmem:[%s9 + $0x1c0] sm:$0xff]
  %v9805 = vld [vmem:[%s9 + $0x1c8] sm:$0xff]
  %v9806 = vld [vmem:[%s9 + $0x1d0] sm:$0xff]
  %v9807 = vld [vmem:[%s9 + $0x1d8] sm:$0xff]
  %v9808 = vld [vmem:[%s9 + $0x1e0] sm:$0xff]
  %v9809 = vld [vmem:[%s9 + $0x1e8] sm:$0xff]
  %v9810 = vld [vmem:[%s9 + $0x1f0] sm:$0xff]
  %v9811 = vld [vmem:[%s9 + $0x1f8] sm:$0xff]
  %v9812 = vld [vmem:[%s9 + $0x200] sm:$0xff]
  %v9813 = vld [vmem:[%s9 + $0x208] sm:$0xff]
  %v9814 = vld [vmem:[%s9 + $0x210] sm:$0xff]
  %v9815 = vld [vmem:[%s9 + $0x218] sm:$0xff]
  %v9816 = vld [vmem:[%s9 + $0x220] sm:$0xff]
  %v9817 = vld [vmem:[%s9 + $0x228] sm:$0xff]
  %v9818 = vld [vmem:[%s9 + $0x230] sm:$0xff]
  %v9819 = vld [vmem:[%s9 + $0x238] sm:$0xff]
  %v9820 = vld [vmem:[%s9 + $0x240] sm:$0xff]
  %v9821 = vld [vmem:[%s9 + $0x248] sm:$0xff]
  %v9822 = vld [vmem:[%s9 + $0x250] sm:$0xff]
  %v9823 = vld [vmem:[%s9 + $0x258] sm:$0xff]
  %v9824 = vld [vmem:[%s9 + $0x260] sm:$0xff]
  %v9825 = vld [vmem:[%s9 + $0x268] sm:$0xff]
  %v9826 = vld [vmem:[%s9 + $0x270] sm:$0xff]
  %v9827 = vld [vmem:[%s9 + $0x278] sm:$0xff]
  %v9828 = vld [vmem:[%s9 + $0x280] sm:$0xff]
  %v9829 = vld [vmem:[%s9 + $0x288] sm:$0xff]
  %v9830 = vld [vmem:[%s9 + $0x290] sm:$0xff]
  %v9831 = vld [vmem:[%s9 + $0x298] sm:$0xff]
  %v9832 = vld [vmem:[%s9 + $0x2a0] sm:$0xff]
  %v9833 = vld [vmem:[%s9 + $0x2a8] sm:$0xff]
  %v9834 = vld [vmem:[%s9 + $0x2b0] sm:$0xff]
  %v9835 = vld [vmem:[%s9 + $0x2b8] sm:$0xff]
  %v9836 = vld [vmem:[%s9 + $0x2c0] sm:$0xff]
  %v9837 = vld [vmem:[%s9 + $0x2c8] sm:$0xff]
  %v9838 = vld [vmem:[%s9 + $0x2d0] sm:$0xff]
  %v9839 = vld [vmem:[%s9 + $0x2d8] sm:$0xff]
  %v9840 = vld [vmem:[%s9 + $0x2e0] sm:$0xff]
  %v9841 = vld [vmem:[%s9 + $0x2e8] sm:$0xff]
  %v9842 = vld [vmem:[%s9 + $0x2f0] sm:$0xff]
  %v9843 = vld [vmem:[%s9 + $0x2f8] sm:$0xff]
  %v9844 = vld [vmem:[%s9 + $0x300] sm:$0xff]
  %v9845 = vld [vmem:[%s9 + $0x308] sm:$0xff]
  %v9846 = vld [vmem:[%s9 + $0x310] sm:$0xff]
  %v9847 = vld [vmem:[%s9 + $0x318] sm:$0xff]
  %v9848 = vld [vmem:[%s9 + $0x320] sm:$0xff]
  %v9849 = vld [vmem:[%s9 + $0x328] sm:$0xff]
  %v9850 = vld [vmem:[%s9 + $0x330] sm:$0xff]
  %v9851 = vld [vmem:[%s9 + $0x338] sm:$0xff]
  %v9852 = vld [vmem:[%s9 + $0x340] sm:$0xff]
  %v9853 = vld [vmem:[%s9 + $0x348] sm:$0xff]
  %v9854 = vld [vmem:[%s9 + $0x350] sm:$0xff]
  %v9855 = vld [vmem:[%s9 + $0x358] sm:$0xff]
  %v9856 = vld [vmem:[%s9 + $0x360] sm:$0xff]
  %v9857 = vld [vmem:[%s9 + $0x368] sm:$0xff]
  %v9858 = vld [vmem:[%s9 + $0x370] sm:$0xff]
  %v9859 = vld [vmem:[%s9 + $0x378] sm:$0xff]
  %v9860 = vld [vmem:[%s9 + $0x380] sm:$0xff]
  %v9861 = vld [vmem:[%s9 + $0x388] sm:$0xff]
  %v9862 = vld [vmem:[%s9 + $0x390] sm:$0xff]
  %v9863 = vld [vmem:[%s9 + $0x398] sm:$0xff]
  %v9864 = vld [vmem:[%s9 + $0x3a0] sm:$0xff]
  %v9865 = vld [vmem:[%s9 + $0x3a8] sm:$0xff]
  %v9866 = vld [vmem:[%s9 + $0x3b0] sm:$0xff]
  %v9867 = vld [vmem:[%s9 + $0x3b8] sm:$0xff]
  %v9868 = vld [vmem:[%s9 + $0x3c0] sm:$0xff]
  %v9869 = vld [vmem:[%s9 + $0x3c8] sm:$0xff]
  %v9870 = vld [vmem:[%s9 + $0x3d0] sm:$0xff]
  %v9871 = vld [vmem:[%s9 + $0x3d8] sm:$0xff]
  %v9872 = vld [vmem:[%s9 + $0x3e0] sm:$0xff]
  %v9873 = vld [vmem:[%s9 + $0x3e8] sm:$0xff]
  %v9874 = vld [vmem:[%s9 + $0x3f0] sm:$0xff]
  %v9875 = vld [vmem:[%s9 + $0x3f8] sm:$0xff]
  %v9876 = vld [vmem:[%s10] sm:$0x3]
  %v9878 = vlaneseq
  %v9879 = vshrl.u32 %v9878, 7
  %v9880 = vsub.s32 0, %v9879
  %v9881 = vrot.slane %v9876, %v9880
  %v9882 = vlaneseq
  %v9883 = vshrl.u32 %v9882, 7
  %v9884 = vsub.s32 1, %v9883
  %v9885 = vrot.slane %v9876, %v9884
  %v9888 = vunpack.c.l.b16 %v9314
  %v9889 = vunpack.c.l.b16 %v9321
  %v9890 = vunpack.c.l.b16 %v9477
  %v9891 = vunpack.c.l.b16 %v9480
  %v9892 = vunpack.c.l.b16 %v9538
  %v9893 = vunpack.c.l.b16 %v9545
  %v9894 = vunpack.c.l.b16 %v9701
  %v9895 = vunpack.c.l.b16 %v9704
  %v9896 = vunpack.c.l.b16 %v9336
  %v9897 = vunpack.c.l.b16 %v9343
  %v9898 = vunpack.c.l.b16 %v9483
  %v9899 = vunpack.c.l.b16 %v9486
  %v9900 = vunpack.c.l.b16 %v9560
  %v9901 = vunpack.c.l.b16 %v9567
  %v9902 = vunpack.c.l.b16 %v9707
  %v9903 = vunpack.c.l.b16 %v9710
  %v9904 = vunpack.c.l.b16 %v9358
  %v9905 = vunpack.c.l.b16 %v9365
  %v9906 = vunpack.c.l.b16 %v9489
  %v9907 = vunpack.c.l.b16 %v9492
  %v9908 = vunpack.c.l.b16 %v9582
  %v9909 = vunpack.c.l.b16 %v9589
  %v9910 = vunpack.c.l.b16 %v9713
  %v9911 = vunpack.c.l.b16 %v9716
  %v9912 = vunpack.c.l.b16 %v9380
  %v9913 = vunpack.c.l.b16 %v9387
  %v9914 = vunpack.c.l.b16 %v9495
  %v9915 = vunpack.c.l.b16 %v9498
  %v9916 = vunpack.c.l.b16 %v9604
  %v9917 = vunpack.c.l.b16 %v9611
  %v9918 = vunpack.c.l.b16 %v9719
  %v9919 = vunpack.c.l.b16 %v9722
  %v9920 = vunpack.c.l.b16 %v9402
  %v9921 = vunpack.c.l.b16 %v9409
  %v9922 = vunpack.c.l.b16 %v9501
  %v9923 = vunpack.c.l.b16 %v9504
  %v9924 = vunpack.c.l.b16 %v9626
  %v9925 = vunpack.c.l.b16 %v9633
  %v9926 = vunpack.c.l.b16 %v9725
  %v9927 = vunpack.c.l.b16 %v9728
  %v9928 = vunpack.c.l.b16 %v9424
  %v9929 = vunpack.c.l.b16 %v9431
  %v9930 = vunpack.c.l.b16 %v9507
  %v9931 = vunpack.c.l.b16 %v9510
  %v9932 = vunpack.c.l.b16 %v9648
  %v9933 = vunpack.c.l.b16 %v9655
  %v9934 = vunpack.c.l.b16 %v9731
  %v9935 = vunpack.c.l.b16 %v9734
  %v9936 = vunpack.c.l.b16 %v9446
  %v9937 = vunpack.c.l.b16 %v9453
  %v9938 = vunpack.c.l.b16 %v9513
  %v9939 = vunpack.c.l.b16 %v9516
  %v9940 = vunpack.c.l.b16 %v9670
  %v9941 = vunpack.c.l.b16 %v9677
  %v9942 = vunpack.c.l.b16 %v9737
  %v9943 = vunpack.c.l.b16 %v9740
  %v9944 = vunpack.c.l.b16 %v9468
  %v9945 = vunpack.c.l.b16 %v9475
  %v9946 = vunpack.c.l.b16 %v9519
  %v9947 = vunpack.c.l.b16 %v9522
  %v9948 = vunpack.c.l.b16 %v9692
  %v9949 = vunpack.c.l.b16 %v9699
  %v9950 = vunpack.c.l.b16 %v9743
  %v9951 = vunpack.c.l.b16 %v9746
  %v9952 = vrot.slane %v9896, 7
  %vm9953 = vcmask 1041409
  %v9954 = vsel %vm9953, %v9952, %v9888
  %v9955 = vrot.slane %v9904, 6
  %vm9956 = vcmask 1042434
  %v9957 = vsel %vm9956, %v9955, %v9954
  %v9958 = vrot.slane %v9912, 5
  %vm9959 = vcmask 1043459
  %v9960 = vsel %vm9959, %v9958, %v9957
  %v9961 = vrot.slane %v9920, 4
  %vm9962 = vcmask 1044484
  %v9963 = vsel %vm9962, %v9961, %v9960
  %v9964 = vrot.slane %v9928, 3
  %vm9965 = vcmask 1045509
  %v9966 = vsel %vm9965, %v9964, %v9963
  %v9967 = vrot.slane %v9936, 2
  %vm9968 = vcmask 1046534
  %v9969 = vsel %vm9968, %v9967, %v9966
  %v9970 = vrot.slane %v9944, 1
  %vm9971 = vcmask 1047559
  %v9972 = vsel %vm9971, %v9970, %v9969
  %v9973 = vrot.slane %v9897, 7
  %v9974 = vsel %vm9953, %v9973, %v9889
  %v9975 = vrot.slane %v9905, 6
  %v9976 = vsel %vm9956, %v9975, %v9974
  %v9977 = vrot.slane %v9913, 5
  %v9978 = vsel %vm9959, %v9977, %v9976
  %v9979 = vrot.slane %v9921, 4
  %v9980 = vsel %vm9962, %v9979, %v9978
  %v9981 = vrot.slane %v9929, 3
  %v9982 = vsel %vm9965, %v9981, %v9980
  %v9983 = vrot.slane %v9937, 2
  %v9984 = vsel %vm9968, %v9983, %v9982
  %v9985 = vrot.slane %v9945, 1
  %v9986 = vsel %vm9971, %v9985, %v9984
  %v9987 = vrot.slane %v9898, 7
  %v9988 = vsel %vm9953, %v9987, %v9890
  %v9989 = vrot.slane %v9906, 6
  %v9990 = vsel %vm9956, %v9989, %v9988
  %v9991 = vrot.slane %v9914, 5
  %v9992 = vsel %vm9959, %v9991, %v9990
  %v9993 = vrot.slane %v9922, 4
  %v9994 = vsel %vm9962, %v9993, %v9992
  %v9995 = vrot.slane %v9930, 3
  %v9996 = vsel %vm9965, %v9995, %v9994
  %v9997 = vrot.slane %v9938, 2
  %v9998 = vsel %vm9968, %v9997, %v9996
  %v9999 = vrot.slane %v9946, 1
  %v10000 = vsel %vm9971, %v9999, %v9998
  %v10001 = vrot.slane %v9899, 7
  %v10002 = vsel %vm9953, %v10001, %v9891
  %v10003 = vrot.slane %v9907, 6
  %v10004 = vsel %vm9956, %v10003, %v10002
  %v10005 = vrot.slane %v9915, 5
  %v10006 = vsel %vm9959, %v10005, %v10004
  %v10007 = vrot.slane %v9923, 4
  %v10008 = vsel %vm9962, %v10007, %v10006
  %v10009 = vrot.slane %v9931, 3
  %v10010 = vsel %vm9965, %v10009, %v10008
  %v10011 = vrot.slane %v9939, 2
  %v10012 = vsel %vm9968, %v10011, %v10010
  %v10013 = vrot.slane %v9947, 1
  %v10014 = vsel %vm9971, %v10013, %v10012
  %v10015 = vrot.slane %v9900, 7
  %v10016 = vsel %vm9953, %v10015, %v9892
  %v10017 = vrot.slane %v9908, 6
  %v10018 = vsel %vm9956, %v10017, %v10016
  %v10019 = vrot.slane %v9916, 5
  %v10020 = vsel %vm9959, %v10019, %v10018
  %v10021 = vrot.slane %v9924, 4
  %v10022 = vsel %vm9962, %v10021, %v10020
  %v10023 = vrot.slane %v9932, 3
  %v10024 = vsel %vm9965, %v10023, %v10022
  %v10025 = vrot.slane %v9940, 2
  %v10026 = vsel %vm9968, %v10025, %v10024
  %v10027 = vrot.slane %v9948, 1
  %v10028 = vsel %vm9971, %v10027, %v10026
  %v10029 = vrot.slane %v9901, 7
  %v10030 = vsel %vm9953, %v10029, %v9893
  %v10031 = vrot.slane %v9909, 6
  %v10032 = vsel %vm9956, %v10031, %v10030
  %v10033 = vrot.slane %v9917, 5
  %v10034 = vsel %vm9959, %v10033, %v10032
  %v10035 = vrot.slane %v9925, 4
  %v10036 = vsel %vm9962, %v10035, %v10034
  %v10037 = vrot.slane %v9933, 3
  %v10038 = vsel %vm9965, %v10037, %v10036
  %v10039 = vrot.slane %v9941, 2
  %v10040 = vsel %vm9968, %v10039, %v10038
  %v10041 = vrot.slane %v9949, 1
  %v10042 = vsel %vm9971, %v10041, %v10040
  %v10043 = vrot.slane %v9902, 7
  %v10044 = vsel %vm9953, %v10043, %v9894
  %v10045 = vrot.slane %v9910, 6
  %v10046 = vsel %vm9956, %v10045, %v10044
  %v10047 = vrot.slane %v9918, 5
  %v10048 = vsel %vm9959, %v10047, %v10046
  %v10049 = vrot.slane %v9926, 4
  %v10050 = vsel %vm9962, %v10049, %v10048
  %v10051 = vrot.slane %v9934, 3
  %v10052 = vsel %vm9965, %v10051, %v10050
  %v10053 = vrot.slane %v9942, 2
  %v10054 = vsel %vm9968, %v10053, %v10052
  %v10055 = vrot.slane %v9950, 1
  %v10056 = vsel %vm9971, %v10055, %v10054
  %v10057 = vrot.slane %v9903, 7
  %v10058 = vsel %vm9953, %v10057, %v9895
  %v10059 = vrot.slane %v9911, 6
  %v10060 = vsel %vm9956, %v10059, %v10058
  %v10061 = vrot.slane %v9919, 5
  %v10062 = vsel %vm9959, %v10061, %v10060
  %v10063 = vrot.slane %v9927, 4
  %v10064 = vsel %vm9962, %v10063, %v10062
  %v10065 = vrot.slane %v9935, 3
  %v10066 = vsel %vm9965, %v10065, %v10064
  %v10067 = vrot.slane %v9943, 2
  %v10068 = vsel %vm9968, %v10067, %v10066
  %v10069 = vrot.slane %v9951, 1
  %v10070 = vsel %vm9971, %v10069, %v10068
  %v10071 = vpack.c.b16 %v9972, %v9972
  %v10072 = vpack.c.b16 %v9986, %v9986
  %v10073 = vpack.c.b16 %v10000, %v10000
  %v10074 = vpack.c.b16 %v10014, %v10014
  %v10075 = vpack.c.b16 %v10028, %v10028
  %v10076 = vpack.c.b16 %v10042, %v10042
  %v10077 = vpack.c.b16 %v10056, %v10056
  %v10078 = vpack.c.b16 %v10070, %v10070
  %v10215 = vunpack.c.l.b16 %v9748
  %v10216 = vunpack.c.h.b16 %v9748
  %v10217 = vunpack.c.l.b16 %v9749
  %v10218 = vunpack.c.h.b16 %v9749
  %v10219 = vunpack.c.l.b16 %v9750
  %v10220 = vunpack.c.h.b16 %v9750
  %v10221 = vunpack.c.l.b16 %v9751
  %v10222 = vunpack.c.h.b16 %v9751
  %v10223 = vunpack.c.l.b16 %v9752
  %v10224 = vunpack.c.h.b16 %v9752
  %v10225 = vunpack.c.l.b16 %v9753
  %v10226 = vunpack.c.h.b16 %v9753
  %v10227 = vunpack.c.l.b16 %v9754
  %v10228 = vunpack.c.h.b16 %v9754
  %v10229 = vunpack.c.l.b16 %v9755
  %v10230 = vunpack.c.h.b16 %v9755
  %v10231 = vunpack.c.l.b16 %v9756
  %v10232 = vunpack.c.h.b16 %v9756
  %v10233 = vunpack.c.l.b16 %v9757
  %v10234 = vunpack.c.h.b16 %v9757
  %v10235 = vunpack.c.l.b16 %v9758
  %v10236 = vunpack.c.h.b16 %v9758
  %v10237 = vunpack.c.l.b16 %v9759
  %v10238 = vunpack.c.h.b16 %v9759
  %v10239 = vunpack.c.l.b16 %v9760
  %v10240 = vunpack.c.h.b16 %v9760
  %v10241 = vunpack.c.l.b16 %v9761
  %v10242 = vunpack.c.h.b16 %v9761
  %v10243 = vunpack.c.l.b16 %v9762
  %v10244 = vunpack.c.h.b16 %v9762
  %v10245 = vunpack.c.l.b16 %v9763
  %v10246 = vunpack.c.h.b16 %v9763
  %v10247 = vunpack.c.l.b16 %v9764
  %v10248 = vunpack.c.h.b16 %v9764
  %v10249 = vunpack.c.l.b16 %v9765
  %v10250 = vunpack.c.h.b16 %v9765
  %v10251 = vunpack.c.l.b16 %v9766
  %v10252 = vunpack.c.h.b16 %v9766
  %v10253 = vunpack.c.l.b16 %v9767
  %v10254 = vunpack.c.h.b16 %v9767
  %v10255 = vunpack.c.l.b16 %v9768
  %v10256 = vunpack.c.h.b16 %v9768
  %v10257 = vunpack.c.l.b16 %v9769
  %v10258 = vunpack.c.h.b16 %v9769
  %v10259 = vunpack.c.l.b16 %v9770
  %v10260 = vunpack.c.h.b16 %v9770
  %v10261 = vunpack.c.l.b16 %v9771
  %v10262 = vunpack.c.h.b16 %v9771
  %v10263 = vunpack.c.l.b16 %v9772
  %v10264 = vunpack.c.h.b16 %v9772
  %v10265 = vunpack.c.l.b16 %v9773
  %v10266 = vunpack.c.h.b16 %v9773
  %v10267 = vunpack.c.l.b16 %v9774
  %v10268 = vunpack.c.h.b16 %v9774
  %v10269 = vunpack.c.l.b16 %v9775
  %v10270 = vunpack.c.h.b16 %v9775
  %v10271 = vunpack.c.l.b16 %v9776
  %v10272 = vunpack.c.h.b16 %v9776
  %v10273 = vunpack.c.l.b16 %v9777
  %v10274 = vunpack.c.h.b16 %v9777
  %v10275 = vunpack.c.l.b16 %v9778
  %v10276 = vunpack.c.h.b16 %v9778
  %v10277 = vunpack.c.l.b16 %v9779
  %v10278 = vunpack.c.h.b16 %v9779
  %v10279 = vunpack.c.l.b16 %v9780
  %v10280 = vunpack.c.h.b16 %v9780
  %v10281 = vunpack.c.l.b16 %v9781
  %v10282 = vunpack.c.h.b16 %v9781
  %v10283 = vunpack.c.l.b16 %v9782
  %v10284 = vunpack.c.h.b16 %v9782
  %v10285 = vunpack.c.l.b16 %v9783
  %v10286 = vunpack.c.h.b16 %v9783
  %v10287 = vunpack.c.l.b16 %v9784
  %v10288 = vunpack.c.h.b16 %v9784
  %v10289 = vunpack.c.l.b16 %v9785
  %v10290 = vunpack.c.h.b16 %v9785
  %v10291 = vunpack.c.l.b16 %v9786
  %v10292 = vunpack.c.h.b16 %v9786
  %v10293 = vunpack.c.l.b16 %v9787
  %v10294 = vunpack.c.h.b16 %v9787
  %v10295 = vunpack.c.l.b16 %v9788
  %v10296 = vunpack.c.h.b16 %v9788
  %v10297 = vunpack.c.l.b16 %v9789
  %v10298 = vunpack.c.h.b16 %v9789
  %v10299 = vunpack.c.l.b16 %v9790
  %v10300 = vunpack.c.h.b16 %v9790
  %v10301 = vunpack.c.l.b16 %v9791
  %v10302 = vunpack.c.h.b16 %v9791
  %v10303 = vunpack.c.l.b16 %v9792
  %v10304 = vunpack.c.h.b16 %v9792
  %v10305 = vunpack.c.l.b16 %v9793
  %v10306 = vunpack.c.h.b16 %v9793
  %v10307 = vunpack.c.l.b16 %v9794
  %v10308 = vunpack.c.h.b16 %v9794
  %v10309 = vunpack.c.l.b16 %v9795
  %v10310 = vunpack.c.h.b16 %v9795
  %v10311 = vunpack.c.l.b16 %v9796
  %v10312 = vunpack.c.h.b16 %v9796
  %v10313 = vunpack.c.l.b16 %v9797
  %v10314 = vunpack.c.h.b16 %v9797
  %v10315 = vunpack.c.l.b16 %v9798
  %v10316 = vunpack.c.h.b16 %v9798
  %v10317 = vunpack.c.l.b16 %v9799
  %v10318 = vunpack.c.h.b16 %v9799
  %v10319 = vunpack.c.l.b16 %v9800
  %v10320 = vunpack.c.h.b16 %v9800
  %v10321 = vunpack.c.l.b16 %v9801
  %v10322 = vunpack.c.h.b16 %v9801
  %v10323 = vunpack.c.l.b16 %v9802
  %v10324 = vunpack.c.h.b16 %v9802
  %v10325 = vunpack.c.l.b16 %v9803
  %v10326 = vunpack.c.h.b16 %v9803
  %v10327 = vunpack.c.l.b16 %v9804
  %v10328 = vunpack.c.h.b16 %v9804
  %v10329 = vunpack.c.l.b16 %v9805
  %v10330 = vunpack.c.h.b16 %v9805
  %v10331 = vunpack.c.l.b16 %v9806
  %v10332 = vunpack.c.h.b16 %v9806
  %v10333 = vunpack.c.l.b16 %v9807
  %v10334 = vunpack.c.h.b16 %v9807
  %v10335 = vunpack.c.l.b16 %v9808
  %v10336 = vunpack.c.h.b16 %v9808
  %v10337 = vunpack.c.l.b16 %v9809
  %v10338 = vunpack.c.h.b16 %v9809
  %v10339 = vunpack.c.l.b16 %v9810
  %v10340 = vunpack.c.h.b16 %v9810
  %v10341 = vunpack.c.l.b16 %v9811
  %v10342 = vunpack.c.h.b16 %v9811
  %v10343 = vunpack.c.l.b16 %v9812
  %v10344 = vunpack.c.h.b16 %v9812
  %v10345 = vunpack.c.l.b16 %v9813
  %v10346 = vunpack.c.h.b16 %v9813
  %v10347 = vunpack.c.l.b16 %v9814
  %v10348 = vunpack.c.h.b16 %v9814
  %v10349 = vunpack.c.l.b16 %v9815
  %v10350 = vunpack.c.h.b16 %v9815
  %v10351 = vunpack.c.l.b16 %v9816
  %v10352 = vunpack.c.h.b16 %v9816
  %v10353 = vunpack.c.l.b16 %v9817
  %v10354 = vunpack.c.h.b16 %v9817
  %v10355 = vunpack.c.l.b16 %v9818
  %v10356 = vunpack.c.h.b16 %v9818
  %v10357 = vunpack.c.l.b16 %v9819
  %v10358 = vunpack.c.h.b16 %v9819
  %v10359 = vunpack.c.l.b16 %v9820
  %v10360 = vunpack.c.h.b16 %v9820
  %v10361 = vunpack.c.l.b16 %v9821
  %v10362 = vunpack.c.h.b16 %v9821
  %v10363 = vunpack.c.l.b16 %v9822
  %v10364 = vunpack.c.h.b16 %v9822
  %v10365 = vunpack.c.l.b16 %v9823
  %v10366 = vunpack.c.h.b16 %v9823
  %v10367 = vunpack.c.l.b16 %v9824
  %v10368 = vunpack.c.h.b16 %v9824
  %v10369 = vunpack.c.l.b16 %v9825
  %v10370 = vunpack.c.h.b16 %v9825
  %v10371 = vunpack.c.l.b16 %v9826
  %v10372 = vunpack.c.h.b16 %v9826
  %v10373 = vunpack.c.l.b16 %v9827
  %v10374 = vunpack.c.h.b16 %v9827
  %v10375 = vunpack.c.l.b16 %v9828
  %v10376 = vunpack.c.h.b16 %v9828
  %v10377 = vunpack.c.l.b16 %v9829
  %v10378 = vunpack.c.h.b16 %v9829
  %v10379 = vunpack.c.l.b16 %v9830
  %v10380 = vunpack.c.h.b16 %v9830
  %v10381 = vunpack.c.l.b16 %v9831
  %v10382 = vunpack.c.h.b16 %v9831
  %v10383 = vunpack.c.l.b16 %v9832
  %v10384 = vunpack.c.h.b16 %v9832
  %v10385 = vunpack.c.l.b16 %v9833
  %v10386 = vunpack.c.h.b16 %v9833
  %v10387 = vunpack.c.l.b16 %v9834
  %v10388 = vunpack.c.h.b16 %v9834
  %v10389 = vunpack.c.l.b16 %v9835
  %v10390 = vunpack.c.h.b16 %v9835
  %v10391 = vunpack.c.l.b16 %v9836
  %v10392 = vunpack.c.h.b16 %v9836
  %v10393 = vunpack.c.l.b16 %v9837
  %v10394 = vunpack.c.h.b16 %v9837
  %v10395 = vunpack.c.l.b16 %v9838
  %v10396 = vunpack.c.h.b16 %v9838
  %v10397 = vunpack.c.l.b16 %v9839
  %v10398 = vunpack.c.h.b16 %v9839
  %v10399 = vunpack.c.l.b16 %v9840
  %v10400 = vunpack.c.h.b16 %v9840
  %v10401 = vunpack.c.l.b16 %v9841
  %v10402 = vunpack.c.h.b16 %v9841
  %v10403 = vunpack.c.l.b16 %v9842
  %v10404 = vunpack.c.h.b16 %v9842
  %v10405 = vunpack.c.l.b16 %v9843
  %v10406 = vunpack.c.h.b16 %v9843
  %v10407 = vunpack.c.l.b16 %v9844
  %v10408 = vunpack.c.h.b16 %v9844
  %v10409 = vunpack.c.l.b16 %v9845
  %v10410 = vunpack.c.h.b16 %v9845
  %v10411 = vunpack.c.l.b16 %v9846
  %v10412 = vunpack.c.h.b16 %v9846
  %v10413 = vunpack.c.l.b16 %v9847
  %v10414 = vunpack.c.h.b16 %v9847
  %v10415 = vunpack.c.l.b16 %v9848
  %v10416 = vunpack.c.h.b16 %v9848
  %v10417 = vunpack.c.l.b16 %v9849
  %v10418 = vunpack.c.h.b16 %v9849
  %v10419 = vunpack.c.l.b16 %v9850
  %v10420 = vunpack.c.h.b16 %v9850
  %v10421 = vunpack.c.l.b16 %v9851
  %v10422 = vunpack.c.h.b16 %v9851
  %v10423 = vunpack.c.l.b16 %v9852
  %v10424 = vunpack.c.h.b16 %v9852
  %v10425 = vunpack.c.l.b16 %v9853
  %v10426 = vunpack.c.h.b16 %v9853
  %v10427 = vunpack.c.l.b16 %v9854
  %v10428 = vunpack.c.h.b16 %v9854
  %v10429 = vunpack.c.l.b16 %v9855
  %v10430 = vunpack.c.h.b16 %v9855
  %v10431 = vunpack.c.l.b16 %v9856
  %v10432 = vunpack.c.h.b16 %v9856
  %v10433 = vunpack.c.l.b16 %v9857
  %v10434 = vunpack.c.h.b16 %v9857
  %v10435 = vunpack.c.l.b16 %v9858
  %v10436 = vunpack.c.h.b16 %v9858
  %v10437 = vunpack.c.l.b16 %v9859
  %v10438 = vunpack.c.h.b16 %v9859
  %v10439 = vunpack.c.l.b16 %v9860
  %v10440 = vunpack.c.h.b16 %v9860
  %v10441 = vunpack.c.l.b16 %v9861
  %v10442 = vunpack.c.h.b16 %v9861
  %v10443 = vunpack.c.l.b16 %v9862
  %v10444 = vunpack.c.h.b16 %v9862
  %v10445 = vunpack.c.l.b16 %v9863
  %v10446 = vunpack.c.h.b16 %v9863
  %v10447 = vunpack.c.l.b16 %v9864
  %v10448 = vunpack.c.h.b16 %v9864
  %v10449 = vunpack.c.l.b16 %v9865
  %v10450 = vunpack.c.h.b16 %v9865
  %v10451 = vunpack.c.l.b16 %v9866
  %v10452 = vunpack.c.h.b16 %v9866
  %v10453 = vunpack.c.l.b16 %v9867
  %v10454 = vunpack.c.h.b16 %v9867
  %v10455 = vunpack.c.l.b16 %v9868
  %v10456 = vunpack.c.h.b16 %v9868
  %v10457 = vunpack.c.l.b16 %v9869
  %v10458 = vunpack.c.h.b16 %v9869
  %v10459 = vunpack.c.l.b16 %v9870
  %v10460 = vunpack.c.h.b16 %v9870
  %v10461 = vunpack.c.l.b16 %v9871
  %v10462 = vunpack.c.h.b16 %v9871
  %v10463 = vunpack.c.l.b16 %v9872
  %v10464 = vunpack.c.h.b16 %v9872
  %v10465 = vunpack.c.l.b16 %v9873
  %v10466 = vunpack.c.h.b16 %v9873
  %v10467 = vunpack.c.l.b16 %v9874
  %v10468 = vunpack.c.h.b16 %v9874
  %v10469 = vunpack.c.l.b16 %v9875
  %v10470 = vunpack.c.h.b16 %v9875
  %v10471 = vpack.c.b16 %v10217, %v10215
  %v10472 = vpack.c.b16 %v10218, %v10216
  %v10473 = vpack.c.b16 %v10221, %v10219
  %v10474 = vpack.c.b16 %v10222, %v10220
  %v10475 = vpack.c.b16 %v10225, %v10223
  %v10476 = vpack.c.b16 %v10226, %v10224
  %v10477 = vpack.c.b16 %v10229, %v10227
  %v10478 = vpack.c.b16 %v10230, %v10228
  %v10479 = vpack.c.b16 %v10233, %v10231
  %v10480 = vpack.c.b16 %v10234, %v10232
  %v10481 = vpack.c.b16 %v10237, %v10235
  %v10482 = vpack.c.b16 %v10238, %v10236
  %v10483 = vpack.c.b16 %v10241, %v10239
  %v10484 = vpack.c.b16 %v10242, %v10240
  %v10485 = vpack.c.b16 %v10245, %v10243
  %v10486 = vpack.c.b16 %v10246, %v10244
  %v10487 = vpack.c.b16 %v10249, %v10247
  %v10488 = vpack.c.b16 %v10250, %v10248
  %v10489 = vpack.c.b16 %v10253, %v10251
  %v10490 = vpack.c.b16 %v10254, %v10252
  %v10491 = vpack.c.b16 %v10257, %v10255
  %v10492 = vpack.c.b16 %v10258, %v10256
  %v10493 = vpack.c.b16 %v10261, %v10259
  %v10494 = vpack.c.b16 %v10262, %v10260
  %v10495 = vpack.c.b16 %v10265, %v10263
  %v10496 = vpack.c.b16 %v10266, %v10264
  %v10497 = vpack.c.b16 %v10269, %v10267
  %v10498 = vpack.c.b16 %v10270, %v10268
  %v10499 = vpack.c.b16 %v10273, %v10271
  %v10500 = vpack.c.b16 %v10274, %v10272
  %v10501 = vpack.c.b16 %v10277, %v10275
  %v10502 = vpack.c.b16 %v10278, %v10276
  %v10503 = vpack.c.b16 %v10281, %v10279
  %v10504 = vpack.c.b16 %v10282, %v10280
  %v10505 = vpack.c.b16 %v10285, %v10283
  %v10506 = vpack.c.b16 %v10286, %v10284
  %v10507 = vpack.c.b16 %v10289, %v10287
  %v10508 = vpack.c.b16 %v10290, %v10288
  %v10509 = vpack.c.b16 %v10293, %v10291
  %v10510 = vpack.c.b16 %v10294, %v10292
  %v10511 = vpack.c.b16 %v10297, %v10295
  %v10512 = vpack.c.b16 %v10298, %v10296
  %v10513 = vpack.c.b16 %v10301, %v10299
  %v10514 = vpack.c.b16 %v10302, %v10300
  %v10515 = vpack.c.b16 %v10305, %v10303
  %v10516 = vpack.c.b16 %v10306, %v10304
  %v10517 = vpack.c.b16 %v10309, %v10307
  %v10518 = vpack.c.b16 %v10310, %v10308
  %v10519 = vpack.c.b16 %v10313, %v10311
  %v10520 = vpack.c.b16 %v10314, %v10312
  %v10521 = vpack.c.b16 %v10317, %v10315
  %v10522 = vpack.c.b16 %v10318, %v10316
  %v10523 = vpack.c.b16 %v10321, %v10319
  %v10524 = vpack.c.b16 %v10322, %v10320
  %v10525 = vpack.c.b16 %v10325, %v10323
  %v10526 = vpack.c.b16 %v10326, %v10324
  %v10527 = vpack.c.b16 %v10329, %v10327
  %v10528 = vpack.c.b16 %v10330, %v10328
  %v10529 = vpack.c.b16 %v10333, %v10331
  %v10530 = vpack.c.b16 %v10334, %v10332
  %v10531 = vpack.c.b16 %v10337, %v10335
  %v10532 = vpack.c.b16 %v10338, %v10336
  %v10533 = vpack.c.b16 %v10341, %v10339
  %v10534 = vpack.c.b16 %v10342, %v10340
  %v10535 = vpack.c.b16 %v10345, %v10343
  %v10536 = vpack.c.b16 %v10346, %v10344
  %v10537 = vpack.c.b16 %v10349, %v10347
  %v10538 = vpack.c.b16 %v10350, %v10348
  %v10539 = vpack.c.b16 %v10353, %v10351
  %v10540 = vpack.c.b16 %v10354, %v10352
  %v10541 = vpack.c.b16 %v10357, %v10355
  %v10542 = vpack.c.b16 %v10358, %v10356
  %v10543 = vpack.c.b16 %v10361, %v10359
  %v10544 = vpack.c.b16 %v10362, %v10360
  %v10545 = vpack.c.b16 %v10365, %v10363
  %v10546 = vpack.c.b16 %v10366, %v10364
  %v10547 = vpack.c.b16 %v10369, %v10367
  %v10548 = vpack.c.b16 %v10370, %v10368
  %v10549 = vpack.c.b16 %v10373, %v10371
  %v10550 = vpack.c.b16 %v10374, %v10372
  %v10551 = vpack.c.b16 %v10377, %v10375
  %v10552 = vpack.c.b16 %v10378, %v10376
  %v10553 = vpack.c.b16 %v10381, %v10379
  %v10554 = vpack.c.b16 %v10382, %v10380
  %v10555 = vpack.c.b16 %v10385, %v10383
  %v10556 = vpack.c.b16 %v10386, %v10384
  %v10557 = vpack.c.b16 %v10389, %v10387
  %v10558 = vpack.c.b16 %v10390, %v10388
  %v10559 = vpack.c.b16 %v10393, %v10391
  %v10560 = vpack.c.b16 %v10394, %v10392
  %v10561 = vpack.c.b16 %v10397, %v10395
  %v10562 = vpack.c.b16 %v10398, %v10396
  %v10563 = vpack.c.b16 %v10401, %v10399
  %v10564 = vpack.c.b16 %v10402, %v10400
  %v10565 = vpack.c.b16 %v10405, %v10403
  %v10566 = vpack.c.b16 %v10406, %v10404
  %v10567 = vpack.c.b16 %v10409, %v10407
  %v10568 = vpack.c.b16 %v10410, %v10408
  %v10569 = vpack.c.b16 %v10413, %v10411
  %v10570 = vpack.c.b16 %v10414, %v10412
  %v10571 = vpack.c.b16 %v10417, %v10415
  %v10572 = vpack.c.b16 %v10418, %v10416
  %v10573 = vpack.c.b16 %v10421, %v10419
  %v10574 = vpack.c.b16 %v10422, %v10420
  %v10575 = vpack.c.b16 %v10425, %v10423
  %v10576 = vpack.c.b16 %v10426, %v10424
  %v10577 = vpack.c.b16 %v10429, %v10427
  %v10578 = vpack.c.b16 %v10430, %v10428
  %v10579 = vpack.c.b16 %v10433, %v10431
  %v10580 = vpack.c.b16 %v10434, %v10432
  %v10581 = vpack.c.b16 %v10437, %v10435
  %v10582 = vpack.c.b16 %v10438, %v10436
  %v10583 = vpack.c.b16 %v10441, %v10439
  %v10584 = vpack.c.b16 %v10442, %v10440
  %v10585 = vpack.c.b16 %v10445, %v10443
  %v10586 = vpack.c.b16 %v10446, %v10444
  %v10587 = vpack.c.b16 %v10449, %v10447
  %v10588 = vpack.c.b16 %v10450, %v10448
  %v10589 = vpack.c.b16 %v10453, %v10451
  %v10590 = vpack.c.b16 %v10454, %v10452
  %v10591 = vpack.c.b16 %v10457, %v10455
  %v10592 = vpack.c.b16 %v10458, %v10456
  %v10593 = vpack.c.b16 %v10461, %v10459
  %v10594 = vpack.c.b16 %v10462, %v10460
  %v10595 = vpack.c.b16 %v10465, %v10463
  %v10596 = vpack.c.b16 %v10466, %v10464
  %v10597 = vpack.c.b16 %v10469, %v10467
  %v10598 = vpack.c.b16 %v10470, %v10468
  %10727 = vmatprep.subr.bf16.mxu0 %v10472
  %10728 = vmatpush1.bf16.msra.mxu0 %v10471
  %10729 = vmatprep.subr.bf16.mxu0 %v10474
  %10730 = vmatpush1.bf16.msra.mxu0 %v10473
  %10731 = vmatprep.subr.bf16.mxu0 %v10476
  %10732 = vmatpush1.bf16.msra.mxu0 %v10475
  %10733 = vmatprep.subr.bf16.mxu0 %v10478
  %10734 = vmatpush1.bf16.msra.mxu0 %v10477
  %10735 = vmatprep.subr.bf16.mxu0 %v10480
  %10736 = vmatpush1.bf16.msra.mxu0 %v10479
  %10737 = vmatprep.subr.bf16.mxu0 %v10482
  %10738 = vmatpush1.bf16.msra.mxu0 %v10481
  %10739 = vmatprep.subr.bf16.mxu0 %v10484
  %10740 = vmatpush1.bf16.msra.mxu0 %v10483
  %10741 = vmatprep.subr.bf16.mxu0 %v10486
  %10742 = vmatpush1.bf16.msra.mxu0 %v10485
  %10743 = vmatprep.subr.bf16.mxu0 %v10488
  %10744 = vmatpush1.bf16.msra.mxu0 %v10487
  %10745 = vmatprep.subr.bf16.mxu0 %v10490
  %10746 = vmatpush1.bf16.msra.mxu0 %v10489
  %10747 = vmatprep.subr.bf16.mxu0 %v10492
  %10748 = vmatpush1.bf16.msra.mxu0 %v10491
  %10749 = vmatprep.subr.bf16.mxu0 %v10494
  %10750 = vmatpush1.bf16.msra.mxu0 %v10493
  %10751 = vmatprep.subr.bf16.mxu0 %v10496
  %10752 = vmatpush1.bf16.msra.mxu0 %v10495
  %10753 = vmatprep.subr.bf16.mxu0 %v10498
  %10754 = vmatpush1.bf16.msra.mxu0 %v10497
  %10755 = vmatprep.subr.bf16.mxu0 %v10500
  %10756 = vmatpush1.bf16.msra.mxu0 %v10499
  %10757 = vmatprep.subr.bf16.mxu0 %v10502
  %10758 = vmatpush1.bf16.msra.mxu0 %v10501
  %10759 = vmatprep.mubr.bf16.mxu0 %v10072
  %10760 = vmatmul.mubr.bf16.gmra.mrb[0].mxu0 %v10071
  %v10761 = vpop.f32.mrb[0].mxu0
  %v10762 = vadd.f32 %v9881, %v10761
  %v10763 = vpop.f32.mrb[0].mxu0
  %v10764 = vadd.f32 %v9885, %v10763
  %v10765 = vpop.f32.mrb[0].mxu0
  %v10766 = vpop.f32.mrb[0].mxu0
  %10767 = vdwg.mxu0
  %10768 = vmatprep.subr.bf16.mxu0 %v10504
  %10769 = vmatpush1.bf16.msra.mxu0 %v10503
  %10770 = vmatprep.subr.bf16.mxu0 %v10506
  %10771 = vmatpush1.bf16.msra.mxu0 %v10505
  %10772 = vmatprep.subr.bf16.mxu0 %v10508
  %10773 = vmatpush1.bf16.msra.mxu0 %v10507
  %10774 = vmatprep.subr.bf16.mxu0 %v10510
  %10775 = vmatpush1.bf16.msra.mxu0 %v10509
  %10776 = vmatprep.subr.bf16.mxu0 %v10512
  %10777 = vmatpush1.bf16.msra.mxu0 %v10511
  %10778 = vmatprep.subr.bf16.mxu0 %v10514
  %10779 = vmatpush1.bf16.msra.mxu0 %v10513
  %10780 = vmatprep.subr.bf16.mxu0 %v10516
  %10781 = vmatpush1.bf16.msra.mxu0 %v10515
  %10782 = vmatprep.subr.bf16.mxu0 %v10518
  %10783 = vmatpush1.bf16.msra.mxu0 %v10517
  %10784 = vmatprep.subr.bf16.mxu0 %v10520
  %10785 = vmatpush1.bf16.msra.mxu0 %v10519
  %10786 = vmatprep.subr.bf16.mxu0 %v10522
  %10787 = vmatpush1.bf16.msra.mxu0 %v10521
  %10788 = vmatprep.subr.bf16.mxu0 %v10524
  %10789 = vmatpush1.bf16.msra.mxu0 %v10523
  %10790 = vmatprep.subr.bf16.mxu0 %v10526
  %10791 = vmatpush1.bf16.msra.mxu0 %v10525
  %10792 = vmatprep.subr.bf16.mxu0 %v10528
  %10793 = vmatpush1.bf16.msra.mxu0 %v10527
  %10794 = vmatprep.subr.bf16.mxu0 %v10530
  %10795 = vmatpush1.bf16.msra.mxu0 %v10529
  %10796 = vmatprep.subr.bf16.mxu0 %v10532
  %10797 = vmatpush1.bf16.msra.mxu0 %v10531
  %10798 = vmatprep.subr.bf16.mxu0 %v10534
  %10799 = vmatpush1.bf16.msra.mxu0 %v10533
  %10800 = vmatprep.mubr.bf16.mxu0 %v10074
  %10801 = vmatmul.mubr.bf16.gmra.mrb[0].mxu0 %v10073
  %v10802 = vpop.f32.mrb[0].mxu0
  %v10803 = vadd.f32 %v10762, %v10802
  %v10804 = vpop.f32.mrb[0].mxu0
  %v10805 = vadd.f32 %v10764, %v10804
  %v10806 = vpop.f32.mrb[0].mxu0
  %v10807 = vpop.f32.mrb[0].mxu0
  %10808 = vdwg.mxu0
  %10809 = vmatprep.subr.bf16.mxu0 %v10536
  %10810 = vmatpush1.bf16.msra.mxu0 %v10535
  %10811 = vmatprep.subr.bf16.mxu0 %v10538
  %10812 = vmatpush1.bf16.msra.mxu0 %v10537
  %10813 = vmatprep.subr.bf16.mxu0 %v10540
  %10814 = vmatpush1.bf16.msra.mxu0 %v10539
  %10815 = vmatprep.subr.bf16.mxu0 %v10542
  %10816 = vmatpush1.bf16.msra.mxu0 %v10541
  %10817 = vmatprep.subr.bf16.mxu0 %v10544
  %10818 = vmatpush1.bf16.msra.mxu0 %v10543
  %10819 = vmatprep.subr.bf16.mxu0 %v10546
  %10820 = vmatpush1.bf16.msra.mxu0 %v10545
  %10821 = vmatprep.subr.bf16.mxu0 %v10548
  %10822 = vmatpush1.bf16.msra.mxu0 %v10547
  %10823 = vmatprep.subr.bf16.mxu0 %v10550
  %10824 = vmatpush1.bf16.msra.mxu0 %v10549
  %10825 = vmatprep.subr.bf16.mxu0 %v10552
  %10826 = vmatpush1.bf16.msra.mxu0 %v10551
  %10827 = vmatprep.subr.bf16.mxu0 %v10554
  %10828 = vmatpush1.bf16.msra.mxu0 %v10553
  %10829 = vmatprep.subr.bf16.mxu0 %v10556
  %10830 = vmatpush1.bf16.msra.mxu0 %v10555
  %10831 = vmatprep.subr.bf16.mxu0 %v10558
  %10832 = vmatpush1.bf16.msra.mxu0 %v10557
  %10833 = vmatprep.subr.bf16.mxu0 %v10560
  %10834 = vmatpush1.bf16.msra.mxu0 %v10559
  %10835 = vmatprep.subr.bf16.mxu0 %v10562
  %10836 = vmatpush1.bf16.msra.mxu0 %v10561
  %10837 = vmatprep.subr.bf16.mxu0 %v10564
  %10838 = vmatpush1.bf16.msra.mxu0 %v10563
  %10839 = vmatprep.subr.bf16.mxu0 %v10566
  %10840 = vmatpush1.bf16.msra.mxu0 %v10565
  %10841 = vmatprep.mubr.bf16.mxu0 %v10076
  %10842 = vmatmul.mubr.bf16.gmra.mrb[0].mxu0 %v10075
  %v10843 = vpop.f32.mrb[0].mxu0
  %v10844 = vadd.f32 %v10803, %v10843
  %v10845 = vpop.f32.mrb[0].mxu0
  %v10846 = vadd.f32 %v10805, %v10845
  %v10847 = vpop.f32.mrb[0].mxu0
  %v10848 = vpop.f32.mrb[0].mxu0
  %10849 = vdwg.mxu0
  %10850 = vmatprep.subr.bf16.mxu0 %v10568
  %10851 = vmatpush1.bf16.msra.mxu0 %v10567
  %10852 = vmatprep.subr.bf16.mxu0 %v10570
  %10853 = vmatpush1.bf16.msra.mxu0 %v10569
  %10854 = vmatprep.subr.bf16.mxu0 %v10572
  %10855 = vmatpush1.bf16.msra.mxu0 %v10571
  %10856 = vmatprep.subr.bf16.mxu0 %v10574
  %10857 = vmatpush1.bf16.msra.mxu0 %v10573
  %10858 = vmatprep.subr.bf16.mxu0 %v10576
  %10859 = vmatpush1.bf16.msra.mxu0 %v10575
  %10860 = vmatprep.subr.bf16.mxu0 %v10578
  %10861 = vmatpush1.bf16.msra.mxu0 %v10577
  %10862 = vmatprep.subr.bf16.mxu0 %v10580
  %10863 = vmatpush1.bf16.msra.mxu0 %v10579
  %10864 = vmatprep.subr.bf16.mxu0 %v10582
  %10865 = vmatpush1.bf16.msra.mxu0 %v10581
  %10866 = vmatprep.subr.bf16.mxu0 %v10584
  %10867 = vmatpush1.bf16.msra.mxu0 %v10583
  %10868 = vmatprep.subr.bf16.mxu0 %v10586
  %10869 = vmatpush1.bf16.msra.mxu0 %v10585
  %10870 = vmatprep.subr.bf16.mxu0 %v10588
  %10871 = vmatpush1.bf16.msra.mxu0 %v10587
  %10872 = vmatprep.subr.bf16.mxu0 %v10590
  %10873 = vmatpush1.bf16.msra.mxu0 %v10589
  %10874 = vmatprep.subr.bf16.mxu0 %v10592
  %10875 = vmatpush1.bf16.msra.mxu0 %v10591
  %10876 = vmatprep.subr.bf16.mxu0 %v10594
  %10877 = vmatpush1.bf16.msra.mxu0 %v10593
  %10878 = vmatprep.subr.bf16.mxu0 %v10596
  %10879 = vmatpush1.bf16.msra.mxu0 %v10595
  %10880 = vmatprep.subr.bf16.mxu0 %v10598
  %10881 = vmatpush1.bf16.msra.mxu0 %v10597
  %10882 = vmatprep.mubr.bf16.mxu0 %v10078
  %10883 = vmatmul.mubr.bf16.gmra.mrb[0].mxu0 %v10077
  %v10884 = vpop.f32.mrb[0].mxu0
  %v10885 = vadd.f32 %v10844, %v10884
  %v10886 = vpop.f32.mrb[0].mxu0
  %v10887 = vadd.f32 %v10846, %v10886
  %v10888 = vpop.f32.mrb[0].mxu0
  %v10889 = vpop.f32.mrb[0].mxu0
  %10890 = vdwg.mxu0
  %v10891 = vmax.f32 %v10885, 0.0
  %v10892 = vmax.f32 %v10887, 0.0
  %v10893 = vpack.c.bf16 %v10891, %v10891
  %v10894 = vpack.c.bf16 %v10892, %v10892
  %v10895 = vld [vmem:[%s11] sm:$0xff]
  %v10896 = vld [vmem:[%s11 + $0x8] sm:$0xff]
  %v10897 = vld [vmem:[%s11 + $0x10] sm:$0xff]
  %v10898 = vld [vmem:[%s11 + $0x18] sm:$0xff]
  %v10899 = vld [vmem:[%s11 + $0x20] sm:$0xff]
  %v10900 = vld [vmem:[%s11 + $0x28] sm:$0xff]
  %v10901 = vld [vmem:[%s11 + $0x30] sm:$0xff]
  %v10902 = vld [vmem:[%s11 + $0x38] sm:$0xff]
  %v10903 = vld [vmem:[%s11 + $0x40] sm:$0xff]
  %v10904 = vld [vmem:[%s11 + $0x48] sm:$0xff]
  %v10905 = vld [vmem:[%s11 + $0x50] sm:$0xff]
  %v10906 = vld [vmem:[%s11 + $0x58] sm:$0xff]
  %v10907 = vld [vmem:[%s11 + $0x60] sm:$0xff]
  %v10908 = vld [vmem:[%s11 + $0x68] sm:$0xff]
  %v10909 = vld [vmem:[%s11 + $0x70] sm:$0xff]
  %v10910 = vld [vmem:[%s11 + $0x78] sm:$0xff]
  %v10911 = vld [vmem:[%s11 + $0x80] sm:$0xff]
  %v10912 = vld [vmem:[%s11 + $0x88] sm:$0xff]
  %v10913 = vld [vmem:[%s11 + $0x90] sm:$0xff]
  %v10914 = vld [vmem:[%s11 + $0x98] sm:$0xff]
  %v10915 = vld [vmem:[%s11 + $0xa0] sm:$0xff]
  %v10916 = vld [vmem:[%s11 + $0xa8] sm:$0xff]
  %v10917 = vld [vmem:[%s11 + $0xb0] sm:$0xff]
  %v10918 = vld [vmem:[%s11 + $0xb8] sm:$0xff]
  %v10919 = vld [vmem:[%s11 + $0xc0] sm:$0xff]
  %v10920 = vld [vmem:[%s11 + $0xc8] sm:$0xff]
  %v10921 = vld [vmem:[%s11 + $0xd0] sm:$0xff]
  %v10922 = vld [vmem:[%s11 + $0xd8] sm:$0xff]
  %v10923 = vld [vmem:[%s11 + $0xe0] sm:$0xff]
  %v10924 = vld [vmem:[%s11 + $0xe8] sm:$0xff]
  %v10925 = vld [vmem:[%s11 + $0xf0] sm:$0xff]
  %v10926 = vld [vmem:[%s11 + $0xf8] sm:$0xff]
  %v10927 = vld [vmem:[%s12] sm:$0x3]
  %v10929 = vlaneseq
  %v10930 = vshrl.u32 %v10929, 7
  %v10931 = vsub.s32 0, %v10930
  %v10932 = vrot.slane %v10927, %v10931
  %v10933 = vlaneseq
  %v10934 = vshrl.u32 %v10933, 7
  %v10935 = vsub.s32 1, %v10934
  %v10936 = vrot.slane %v10927, %v10935
  %v10971 = vunpack.c.l.b16 %v10895
  %v10972 = vunpack.c.h.b16 %v10895
  %v10973 = vunpack.c.l.b16 %v10896
  %v10974 = vunpack.c.h.b16 %v10896
  %v10975 = vunpack.c.l.b16 %v10897
  %v10976 = vunpack.c.h.b16 %v10897
  %v10977 = vunpack.c.l.b16 %v10898
  %v10978 = vunpack.c.h.b16 %v10898
  %v10979 = vunpack.c.l.b16 %v10899
  %v10980 = vunpack.c.h.b16 %v10899
  %v10981 = vunpack.c.l.b16 %v10900
  %v10982 = vunpack.c.h.b16 %v10900
  %v10983 = vunpack.c.l.b16 %v10901
  %v10984 = vunpack.c.h.b16 %v10901
  %v10985 = vunpack.c.l.b16 %v10902
  %v10986 = vunpack.c.h.b16 %v10902
  %v10987 = vunpack.c.l.b16 %v10903
  %v10988 = vunpack.c.h.b16 %v10903
  %v10989 = vunpack.c.l.b16 %v10904
  %v10990 = vunpack.c.h.b16 %v10904
  %v10991 = vunpack.c.l.b16 %v10905
  %v10992 = vunpack.c.h.b16 %v10905
  %v10993 = vunpack.c.l.b16 %v10906
  %v10994 = vunpack.c.h.b16 %v10906
  %v10995 = vunpack.c.l.b16 %v10907
  %v10996 = vunpack.c.h.b16 %v10907
  %v10997 = vunpack.c.l.b16 %v10908
  %v10998 = vunpack.c.h.b16 %v10908
  %v10999 = vunpack.c.l.b16 %v10909
  %v11000 = vunpack.c.h.b16 %v10909
  %v11001 = vunpack.c.l.b16 %v10910
  %v11002 = vunpack.c.h.b16 %v10910
  %v11003 = vunpack.c.l.b16 %v10911
  %v11004 = vunpack.c.h.b16 %v10911
  %v11005 = vunpack.c.l.b16 %v10912
  %v11006 = vunpack.c.h.b16 %v10912
  %v11007 = vunpack.c.l.b16 %v10913
  %v11008 = vunpack.c.h.b16 %v10913
  %v11009 = vunpack.c.l.b16 %v10914
  %v11010 = vunpack.c.h.b16 %v10914
  %v11011 = vunpack.c.l.b16 %v10915
  %v11012 = vunpack.c.h.b16 %v10915
  %v11013 = vunpack.c.l.b16 %v10916
  %v11014 = vunpack.c.h.b16 %v10916
  %v11015 = vunpack.c.l.b16 %v10917
  %v11016 = vunpack.c.h.b16 %v10917
  %v11017 = vunpack.c.l.b16 %v10918
  %v11018 = vunpack.c.h.b16 %v10918
  %v11019 = vunpack.c.l.b16 %v10919
  %v11020 = vunpack.c.h.b16 %v10919
  %v11021 = vunpack.c.l.b16 %v10920
  %v11022 = vunpack.c.h.b16 %v10920
  %v11023 = vunpack.c.l.b16 %v10921
  %v11024 = vunpack.c.h.b16 %v10921
  %v11025 = vunpack.c.l.b16 %v10922
  %v11026 = vunpack.c.h.b16 %v10922
  %v11027 = vunpack.c.l.b16 %v10923
  %v11028 = vunpack.c.h.b16 %v10923
  %v11029 = vunpack.c.l.b16 %v10924
  %v11030 = vunpack.c.h.b16 %v10924
  %v11031 = vunpack.c.l.b16 %v10925
  %v11032 = vunpack.c.h.b16 %v10925
  %v11033 = vunpack.c.l.b16 %v10926
  %v11034 = vunpack.c.h.b16 %v10926
  %v11035 = vpack.c.b16 %v10973, %v10971
  %v11036 = vpack.c.b16 %v10974, %v10972
  %v11037 = vpack.c.b16 %v10977, %v10975
  %v11038 = vpack.c.b16 %v10978, %v10976
  %v11039 = vpack.c.b16 %v10981, %v10979
  %v11040 = vpack.c.b16 %v10982, %v10980
  %v11041 = vpack.c.b16 %v10985, %v10983
  %v11042 = vpack.c.b16 %v10986, %v10984
  %v11043 = vpack.c.b16 %v10989, %v10987
  %v11044 = vpack.c.b16 %v10990, %v10988
  %v11045 = vpack.c.b16 %v10993, %v10991
  %v11046 = vpack.c.b16 %v10994, %v10992
  %v11047 = vpack.c.b16 %v10997, %v10995
  %v11048 = vpack.c.b16 %v10998, %v10996
  %v11049 = vpack.c.b16 %v11001, %v10999
  %v11050 = vpack.c.b16 %v11002, %v11000
  %v11051 = vpack.c.b16 %v11005, %v11003
  %v11052 = vpack.c.b16 %v11006, %v11004
  %v11053 = vpack.c.b16 %v11009, %v11007
  %v11054 = vpack.c.b16 %v11010, %v11008
  %v11055 = vpack.c.b16 %v11013, %v11011
  %v11056 = vpack.c.b16 %v11014, %v11012
  %v11057 = vpack.c.b16 %v11017, %v11015
  %v11058 = vpack.c.b16 %v11018, %v11016
  %v11059 = vpack.c.b16 %v11021, %v11019
  %v11060 = vpack.c.b16 %v11022, %v11020
  %v11061 = vpack.c.b16 %v11025, %v11023
  %v11062 = vpack.c.b16 %v11026, %v11024
  %v11063 = vpack.c.b16 %v11029, %v11027
  %v11064 = vpack.c.b16 %v11030, %v11028
  %v11065 = vpack.c.b16 %v11033, %v11031
  %v11066 = vpack.c.b16 %v11034, %v11032
  %11099 = vmatprep.subr.bf16.mxu0 %v11036
  %11100 = vmatpush1.bf16.msra.mxu0 %v11035
  %11101 = vmatprep.subr.bf16.mxu0 %v11038
  %11102 = vmatpush1.bf16.msra.mxu0 %v11037
  %11103 = vmatprep.subr.bf16.mxu0 %v11040
  %11104 = vmatpush1.bf16.msra.mxu0 %v11039
  %11105 = vmatprep.subr.bf16.mxu0 %v11042
  %11106 = vmatpush1.bf16.msra.mxu0 %v11041
  %11107 = vmatprep.subr.bf16.mxu0 %v11044
  %11108 = vmatpush1.bf16.msra.mxu0 %v11043
  %11109 = vmatprep.subr.bf16.mxu0 %v11046
  %11110 = vmatpush1.bf16.msra.mxu0 %v11045
  %11111 = vmatprep.subr.bf16.mxu0 %v11048
  %11112 = vmatpush1.bf16.msra.mxu0 %v11047
  %11113 = vmatprep.subr.bf16.mxu0 %v11050
  %11114 = vmatpush1.bf16.msra.mxu0 %v11049
  %11115 = vmatprep.subr.bf16.mxu0 %v11052
  %11116 = vmatpush1.bf16.msra.mxu0 %v11051
  %11117 = vmatprep.subr.bf16.mxu0 %v11054
  %11118 = vmatpush1.bf16.msra.mxu0 %v11053
  %11119 = vmatprep.subr.bf16.mxu0 %v11056
  %11120 = vmatpush1.bf16.msra.mxu0 %v11055
  %11121 = vmatprep.subr.bf16.mxu0 %v11058
  %11122 = vmatpush1.bf16.msra.mxu0 %v11057
  %11123 = vmatprep.subr.bf16.mxu0 %v11060
  %11124 = vmatpush1.bf16.msra.mxu0 %v11059
  %11125 = vmatprep.subr.bf16.mxu0 %v11062
  %11126 = vmatpush1.bf16.msra.mxu0 %v11061
  %11127 = vmatprep.subr.bf16.mxu0 %v11064
  %11128 = vmatpush1.bf16.msra.mxu0 %v11063
  %11129 = vmatprep.subr.bf16.mxu0 %v11066
  %11130 = vmatpush1.bf16.msra.mxu0 %v11065
  %11131 = vmatprep.mubr.bf16.mxu0 %v10894
  %11132 = vmatmul.mubr.bf16.gmra.mrb[0].mxu0 %v10893
  %v11133 = vpop.f32.mrb[0].mxu0
  %v11134 = vadd.f32 %v10932, %v11133
  %v11135 = vpop.f32.mrb[0].mxu0
  %v11136 = vadd.f32 %v10936, %v11135
  %v11137 = vpop.f32.mrb[0].mxu0
  %v11138 = vpop.f32.mrb[0].mxu0
  %11139 = vdwg.mxu0
  %v11140 = vmax.f32 %v11134, 0.0
  %v11141 = vmax.f32 %v11136, 0.0
  %v11142 = vld [vmem:[%s13] sm:$0x3]
  %v11144 = vlaneseq
  %v11145 = vshrl.u32 %v11144, 7
  %v11146 = vsub.s32 0, %v11145
  %v11147 = vrot.slane %v11142, %v11146
  %v11148 = vlaneseq
  %v11149 = vshrl.u32 %v11148, 7
  %v11150 = vsub.s32 1, %v11149
  %v11151 = vrot.slane %v11142, %v11150
  %v11154 = vmul.f32 %v11140, %v11147
  %v11155 = vmul.f32 %v11141, %v11151
  %v11156 = vadd.f32 %v11154, %v11155
  %11157 = vadd.xlane.f32.xlu0 %v11156
  %v11158 = vpop.xlane.xlu0 %11157
  %v11159 = vld [vmem:[#allocation3] sm:$0x1]
  %11161 = vset.pattern.permute.xlu0 0
  %11162 = vperm.xlu0 %11161, %v11159
  %v11163 = vpop.permute.xlu0 %11162
  %v11165 = vlaneseq
  %v11166 = vshrl.u32 %v11165, 7
  %v11167 = vsub.s32 0, %v11166
  %v11168 = vrot.slane %v11163, %v11167
  %v11169 = vadd.f32 %v11158, %v11168
  %v11171 = vlaneseq
  %v11172 = vand.u32 %v11171, 127
  %v11173 = vlaneseq
  %v11174 = vshrl.u32 %v11173, 7
  %v11175 = vsub.s32 %v11172, %v11174
  %v11176 = vrot.slane %v11169, %v11175
  %vm11178 = vcmask 57344
  %11179 = vst.msk [vmem:[%s15] sm:$0x1] %vm11178, %v11176
  // Predicated region
  $region62: #{model_forward.1} parent=0 // pred_check
    _
  $region63: #{model_forward.1} parent=0 // pred_check_branch
    %11181 = sbr.rel (0) target = $region65
  $region64: #{model_forward.1} parent=0 // pred_region
    _
  $region65: #{model_forward.1} parent=0 // pred_fallthru
    _
  // Predicated region
  $region66: #{model_forward.1} parent=0 // pred_check
    _
  $region67: #{model_forward.1} parent=0 // pred_check_branch
    %11183 = sbr.rel (0) target = $region69
  $region68: #{model_forward.1} parent=0 // pred_region
    _
  $region69: #{model_forward.1} parent=0 // pred_fallthru
    _

</llo_original>
